<compile_context>
chip_gen: v5e
topology: v5e:2x2
jax: 0.10.0
libtpu: 0.0.40
codegen_flags: <defaults>
</compile_context>

<pallas_src>
import functools

import jax
import jax.numpy as jnp
import numpy as np
from jax.experimental import pallas as pl
from jax.experimental.pallas import tpu as pltpu


# ----------------------------------------------------------------------------
# Kernels
# ----------------------------------------------------------------------------
def _weightgen_kernel(x_ref, w1_ref, sc_ref, bi_ref, w2_ref, b2_ref, o_ref):
    """Per-row-tile: conv1(1x1) + folded BN affine + ReLU + conv2(1x1).

    x_ref:  [TN, C]       rows are flattened (b, ho, wo) positions
    w1_ref: [C, Cr]       conv1 weight, transposed
    sc_ref: [1, Cr]       gamma * rsqrt(var + eps)            (global BN stats)
    bi_ref: [1, Cr]       (b1 - mu) * scale + beta
    w2_ref: [Cr, K*K*C]   conv2 weight, transposed, columns (k-major, c-minor)
    b2_ref: [1, K*K*C]
    o_ref:  [TN, K*K*C]
    """
    z = jnp.dot(x_ref[...], w1_ref[...], preferred_element_type=jnp.float32)
    h = jnp.maximum(z * sc_ref[...] + bi_ref[...], 0.0)          # BN + ReLU
    o_ref[...] = (jnp.dot(h, w2_ref[...], preferred_element_type=jnp.float32)
                  + b2_ref[...])


def _involution_kernel(x_ref, w_ref, o_ref, *, K, S):
    """out[h,w,c] = sum_{kh,kw} w[h,w,kh*K+kw,c] * x_pad[h*S+kh, w*S+kw, c].

    x_ref: [1, Hp, Wp, C]        spatially padded input (one batch element,
                                 VMEM-resident across all Ho tiles of b)
    w_ref: [1, TH, Wo, K*K, C]   per-position, per-channel involution kernels
    o_ref: [1, TH, Wo, C]
    """
    _, TH, Wo, C = o_ref.shape
    nrows = S * (TH - 1) + 1
    # First padded-input row touched by this output row tile.
    row0 = pl.multiple_of(pl.program_id(1) * (TH * S), TH * S)

    # Static K*K tap loop (K is small); accumulate into the resident output
    # block so live ranges stay short.
    for kh in range(K):
        rows = x_ref[0, pl.ds(row0 + kh, nrows), :, :]           # [nrows, Wp, C]
        for kw in range(K):
            patch = jax.lax.slice(
                rows, (0, kw, 0),
                (nrows, kw + S * (Wo - 1) + 1, C), (S, S, 1))    # [TH, Wo, C]
            tap = w_ref[0, :, :, kh * K + kw, :] * patch
            if kh == 0 and kw == 0:
                o_ref[0] = tap
            else:
                o_ref[0] += tap


# ----------------------------------------------------------------------------
# Tile-size selection (VMEM-budget driven so it also fits v7x's 64 MiB)
# ----------------------------------------------------------------------------
def _pick_block_n(N, K2C, override=None):
    if override is not None and N % override == 0:
        return override
    budget = 8 * 1024 * 1024                      # per output buffer (f32)
    for cand in (1024, 512, 256, 128, 64, 32, 16, 8):
        if N % cand == 0 and cand * K2C * 4 <= budget:
            return cand
    return N


def _pick_block_h(Ho, Wo, K, C, override=None):
    if override is not None and Ho % override == 0:
        return override
    budget = 4 * 1024 * 1024                      # per weight-slab buffer (f32)
    for th in range(Ho, 0, -1):
        if Ho % th == 0 and th * Wo * K * K * C * 4 <= budget:
            return th
    return 1


# ----------------------------------------------------------------------------
# Public wrapper (NCHW in / NCHW out, matching the PyTorch module)
# ----------------------------------------------------------------------------
def involution_pallas(x_nchw, params, *, kernel_size, stride,
                      block_n=None, block_h=None):
    K, S = kernel_size, stride
    B, C, H, W = x_nchw.shape
    Cr = params["w1"].shape[0]
    K2 = K * K
    K2C = K2 * C

    # NCHW -> NHWC (channels on the lane axis).  Kept only because the public
    # interface is NCHW; a NHWC-native model would skip these two HBM passes.
    x_nhwc = jnp.transpose(x_nchw, (0, 2, 3, 1)).astype(jnp.float32)

    # ----- weight-generation branch -----
    if S > 1:
        xp = jax.lax.reduce_window(x_nhwc, 0.0, jax.lax.add,
                                   (1, S, S, 1), (1, S, S, 1), "VALID")
        xp = xp / float(S * S)                    # AvgPool2d(stride, stride)
    else:
        xp = x_nhwc
    Ho, Wo = xp.shape[1], xp.shape[2]
    N = B * Ho * Wo
    x_flat = xp.reshape(N, C)

    w1t = jnp.transpose(params["w1"]).astype(jnp.float32)        # [C, Cr]

    # BatchNorm (training-mode) statistics are global over (B, Ho, Wo): compute
    # them once with a cheap [N, Cr] reduction outside the tiled kernel and
    # fold conv1-bias + BN into a single per-column affine.
    h_stats = jnp.dot(x_flat, w1t) + params["b1"][None, :]
    mu = jnp.mean(h_stats, axis=0)
    var = jnp.mean(jnp.square(h_stats - mu), axis=0)             # biased var
    scale = params["gamma"] * jax.lax.rsqrt(var + 1e-5)          # [Cr]
    bias = (params["b1"] - mu) * scale + params["beta"]          # [Cr]
    scale = scale.reshape(1, Cr)
    bias = bias.reshape(1, Cr)

    # Permute conv2 output columns (c-major, k-minor) -> (k-major, c-minor) so
    # the generated weights reshape for free to [B, Ho, Wo, K*K, C]; this
    # removes the full-HBM transpose of the largest tensor in the problem.
    col_perm = np.arange(K2C).reshape(C, K2).T.reshape(-1)
    w2p = jnp.transpose(params["w2"]).astype(jnp.float32)[:, col_perm]  # [Cr,K2C]
    b2p = params["b2"][col_perm].reshape(1, K2C)

    TN = _pick_block_n(N, K2C, block_n)
    nN = N // TN

    wgt_flat = pl.pallas_call(
        _weightgen_kernel,
        out_shape=jax.ShapeDtypeStruct((N, K2C), jnp.float32),
        grid=(nN,),
        in_specs=[
            pl.BlockSpec((TN, C), lambda i: (i, 0)),
            pl.BlockSpec((C, Cr), lambda i: (0, 0)),
            pl.BlockSpec((1, Cr), lambda i: (0, 0)),
            pl.BlockSpec((1, Cr), lambda i: (0, 0)),
            pl.BlockSpec((Cr, K2C), lambda i: (0, 0)),
            pl.BlockSpec((1, K2C), lambda i: (0, 0)),
        ],
        out_specs=pl.BlockSpec((TN, K2C), lambda i: (i, 0)),
        compiler_params=pltpu.CompilerParams(
            dimension_semantics=("parallel",),
            vmem_limit_bytes=64 * 1024 * 1024),
    )(x_flat, w1t, scale, bias, w2p, b2p)

    # Row-major metadata reshape only (no data movement): columns are already
    # ordered (k, c).
    wgt = wgt_flat.reshape(B, Ho, Wo, K2, C)

    # ----- involution aggregation (unfold * weight, summed over K*K) -----
    pad = (K - 1) // 2
    # TODO(synk): the halo could be handled in-kernel (masked edges) to avoid
    # this extra HBM pass over x; it is small next to the K^2-sized wgt stream.
    x_pad = jnp.pad(x_nhwc, ((0, 0), (pad, pad), (pad, pad), (0, 0)))
    Hp, Wp = x_pad.shape[1], x_pad.shape[2]

    TH = _pick_block_h(Ho, Wo, K, C, block_h)
    nH = Ho // TH

    out_nhwc = pl.pallas_call(
        functools.partial(_involution_kernel, K=K, S=S),
        out_shape=jax.ShapeDtypeStruct((B, Ho, Wo, C), jnp.float32),
        grid=(B, nH),
        in_specs=[
            # whole padded image per batch, reused across all Ho tiles
            pl.BlockSpec((1, Hp, Wp, C), lambda b, h: (b, 0, 0, 0)),
            # per-(batch, Ho-tile) weight slab: the dominant HBM stream
            pl.BlockSpec((1, TH, Wo, K2, C), lambda b, h: (b, h, 0, 0, 0)),
        ],
        out_specs=pl.BlockSpec((1, TH, Wo, C), lambda b, h: (b, h, 0, 0)),
        compiler_params=pltpu.CompilerParams(
            dimension_semantics=("parallel", "parallel"),
            vmem_limit_bytes=64 * 1024 * 1024),
    )(x_pad, wgt)

    return jnp.transpose(out_nhwc, (0, 3, 1, 2))                 # back to NCHW


# ----------------------------------------------------------------------------
# Pure-JAX reference (NCHW), mirrors the PyTorch forward
# ----------------------------------------------------------------------------
def involution_ref(x, p, K, S):
    B, C, H, W = x.shape
    xp = x
    if S > 1:
        xp = jax.lax.reduce_window(x, 0.0, jax.lax.add,
                                   (1, 1, S, S), (1, 1, S, S), "VALID") / (S * S)
    h = jnp.einsum("bchw,oc->bohw", xp, p["w1"]) + p["b1"][None, :, None, None]
    mu = jnp.mean(h, axis=(0, 2, 3), keepdims=True)
    var = jnp.mean(jnp.square(h - mu), axis=(0, 2, 3), keepdims=True)
    h = (h - mu) / jnp.sqrt(var + 1e-5) * p["gamma"][None, :, None, None] \
        + p["beta"][None, :, None, None]
    h = jnp.maximum(h, 0.0)
    wgt = jnp.einsum("bchw,oc->bohw", h, p["w2"]) + p["b2"][None, :, None, None]
    Ho, Wo = wgt.shape[2], wgt.shape[3]
    wgt = wgt.reshape(B, C, K * K, Ho, Wo)
    pad = (K - 1) // 2
    xpad = jnp.pad(x, ((0, 0), (0, 0), (pad, pad), (pad, pad)))
    out = jnp.zeros((B, C, Ho, Wo), jnp.float32)
    for kh in range(K):
        for kw in range(K):
            patch = xpad[:, :, kh:kh + S * (Ho - 1) + 1:S, kw:kw + S * (Wo - 1) + 1:S]
            out = out + wgt[:, :, kh * K + kw] * patch
    return out


def init_params(key, channels, kernel_size):
    reduction_ratio = 4
    Cr = channels // reduction_ratio
    K2C = kernel_size * kernel_size * channels
    ks = jax.random.split(key, 6)
    return {
        "w1": 0.3 * jax.random.normal(ks[0], (Cr, channels), jnp.float32),
        "b1": 0.1 * jax.random.normal(ks[1], (Cr,), jnp.float32),
        "gamma": 1.0 + 0.1 * jax.random.normal(ks[2], (Cr,), jnp.float32),
        "beta": 0.1 * jax.random.normal(ks[3], (Cr,), jnp.float32),
        "w2": 0.3 * jax.random.normal(ks[4], (K2C, Cr), jnp.float32),
        "b2": 0.1 * jax.random.normal(ks[5], (K2C,), jnp.float32),
    }


if __name__ == "__main__":
    B, C, H, W = 2, 16, 16, 16
    K, S = 3, 1

    root = jax.random.PRNGKey(0)
    kx, kp = jax.random.split(root)
    x = jax.random.normal(kx, (B, C, H, W), jnp.float32)
    params = init_params(kp, C, K)

    # Explicit small blocks so the tiled paths (nN=4, nH=2) are exercised even
    # at these toy shapes; pass None to auto-size against the VMEM budget.
    fwd = jax.jit(functools.partial(involution_pallas, kernel_size=K, stride=S,
                                    block_n=128, block_h=8))
    out = jax.block_until_ready(fwd(x, params))

    ref = involution_ref(x, params, K, S)
    np.testing.assert_allclose(np.asarray(out), np.asarray(ref),
                               rtol=2e-4, atol=2e-4)
    print("KERNEL_OK")
</pallas_src>

<mosaic_0001>
module attributes {stable_mosaic.version = 11 : i64} {
  func.func @_weightgen_kernel(%arg0: i32, %arg1: memref<128x16xf32, #tpu.memory_space<vmem>>, %arg2: memref<16x4xf32, #tpu.memory_space<vmem>>, %arg3: memref<1x4xf32, #tpu.memory_space<vmem>>, %arg4: memref<1x4xf32, #tpu.memory_space<vmem>>, %arg5: memref<4x144xf32, #tpu.memory_space<vmem>>, %arg6: memref<1x144xf32, #tpu.memory_space<vmem>>, %arg7: memref<128x144xf32, #tpu.memory_space<vmem>>) attributes {dimension_semantics = [#tpu.dimension_semantics<parallel>], iteration_bounds = array<i64: 4>, scalar_prefetch = 0 : i64, scratch_operands = 0 : i64, tpu.core_type = #tpu.core_type<tc>, window_params = [{transform_indices = @transform_0, window_bounds = array<i64: 128, 16>}, {pipeline_mode = #tpu.pipeline_mode<synchronous>, transform_indices = @transform_1, window_bounds = array<i64: 16, 4>}, {pipeline_mode = #tpu.pipeline_mode<synchronous>, transform_indices = @transform_2, window_bounds = array<i64: 1, 4>}, {pipeline_mode = #tpu.pipeline_mode<synchronous>, transform_indices = @transform_3, window_bounds = array<i64: 1, 4>}, {pipeline_mode = #tpu.pipeline_mode<synchronous>, transform_indices = @transform_4, window_bounds = array<i64: 4, 144>}, {pipeline_mode = #tpu.pipeline_mode<synchronous>, transform_indices = @transform_5, window_bounds = array<i64: 1, 144>}, {transform_indices = @transform_6, window_bounds = array<i64: 128, 144>}]} {
    %c0 = arith.constant 0 : index
    %c0_0 = arith.constant 0 : index
    %0 = vector.load %arg1[%c0, %c0_0] : memref<128x16xf32, #tpu.memory_space<vmem>>, vector<128x16xf32>
    %c0_1 = arith.constant 0 : index
    %c0_2 = arith.constant 0 : index
    %1 = vector.load %arg2[%c0_1, %c0_2] : memref<16x4xf32, #tpu.memory_space<vmem>>, vector<16x4xf32>
    %cst = arith.constant dense<0.000000e+00> : vector<128x4xf32>
    %2 = tpu.matmul %0, %1, %cst {dimension_numbers = #tpu.dot_dimension_numbers<[1], [0], [0], [1], [0, 0, 1, 1], [], []>} : vector<128x16xf32>, vector<16x4xf32>, vector<128x4xf32> -> vector<128x4xf32>
    %c0_3 = arith.constant 0 : index
    %c0_4 = arith.constant 0 : index
    %3 = vector.load %arg3[%c0_3, %c0_4] : memref<1x4xf32, #tpu.memory_space<vmem>>, vector<1x4xf32>
    %4 = vector.broadcast %3 : vector<1x4xf32> to vector<128x4xf32>
    %5 = arith.mulf %2, %4 : vector<128x4xf32>
    %c0_5 = arith.constant 0 : index
    %c0_6 = arith.constant 0 : index
    %6 = vector.load %arg4[%c0_5, %c0_6] : memref<1x4xf32, #tpu.memory_space<vmem>>, vector<1x4xf32>
    %7 = vector.broadcast %6 : vector<1x4xf32> to vector<128x4xf32>
    %8 = arith.addf %5, %7 : vector<128x4xf32>
    %cst_7 = arith.constant 0.000000e+00 : f32
    %9 = vector.broadcast %cst_7 : f32 to vector<128x4xf32>
    %10 = arith.maximumf %8, %9 : vector<128x4xf32>
    %c0_8 = arith.constant 0 : index
    %c0_9 = arith.constant 0 : index
    %11 = vector.load %arg5[%c0_8, %c0_9] : memref<4x144xf32, #tpu.memory_space<vmem>>, vector<4x144xf32>
    %cst_10 = arith.constant dense<0.000000e+00> : vector<128x144xf32>
    %12 = tpu.matmul %10, %11, %cst_10 {dimension_numbers = #tpu.dot_dimension_numbers<[1], [0], [0], [1], [0, 0, 1, 1], [], []>} : vector<128x4xf32>, vector<4x144xf32>, vector<128x144xf32> -> vector<128x144xf32>
    %c0_11 = arith.constant 0 : index
    %c0_12 = arith.constant 0 : index
    %13 = vector.load %arg6[%c0_11, %c0_12] : memref<1x144xf32, #tpu.memory_space<vmem>>, vector<1x144xf32>
    %14 = vector.broadcast %13 : vector<1x144xf32> to vector<128x144xf32>
    %15 = arith.addf %12, %14 : vector<128x144xf32>
    %c0_13 = arith.constant 0 : index
    %c0_14 = arith.constant 0 : index
    %16 = vector.load %arg7[%c0_13, %c0_14] : memref<128x144xf32, #tpu.memory_space<vmem>>, vector<128x144xf32>
    tpu.vector_store %arg7[%c0_13, %c0_14], %15 {strides = array<i32>} : memref<128x144xf32, #tpu.memory_space<vmem>>, vector<128x144xf32>,
    return
  }
  func.func @transform_0(%arg0: i32) -> (i32, i32) {
    %c0_i32 = arith.constant 0 : i32
    %c0_i32_0 = arith.constant 0 : i32
    return %arg0, %c0_i32 : i32, i32
  }
  func.func @transform_1(%arg0: i32) -> (i32, i32) {
    %c0_i32 = arith.constant 0 : i32
    %c0_i32_0 = arith.constant 0 : i32
    %c0_i32_1 = arith.constant 0 : i32
    return %c0_i32, %c0_i32_0 : i32, i32
  }
  func.func @transform_2(%arg0: i32) -> (i32, i32) {
    %c0_i32 = arith.constant 0 : i32
    %c0_i32_0 = arith.constant 0 : i32
    %c0_i32_1 = arith.constant 0 : i32
    return %c0_i32, %c0_i32_0 : i32, i32
  }
  func.func @transform_3(%arg0: i32) -> (i32, i32) {
    %c0_i32 = arith.constant 0 : i32
    %c0_i32_0 = arith.constant 0 : i32
    %c0_i32_1 = arith.constant 0 : i32
    return %c0_i32, %c0_i32_0 : i32, i32
  }
  func.func @transform_4(%arg0: i32) -> (i32, i32) {
    %c0_i32 = arith.constant 0 : i32
    %c0_i32_0 = arith.constant 0 : i32
    %c0_i32_1 = arith.constant 0 : i32
    return %c0_i32, %c0_i32_0 : i32, i32
  }
  func.func @transform_5(%arg0: i32) -> (i32, i32) {
    %c0_i32 = arith.constant 0 : i32
    %c0_i32_0 = arith.constant 0 : i32
    %c0_i32_1 = arith.constant 0 : i32
    return %c0_i32, %c0_i32_0 : i32, i32
  }
  func.func @transform_6(%arg0: i32) -> (i32, i32) {
    %c0_i32 = arith.constant 0 : i32
    %c0_i32_0 = arith.constant 0 : i32
    return %arg0, %c0_i32 : i32, i32
  }
}

module attributes {stable_mosaic.version = 11 : i64} {
  func.func @_involution_kernel(%arg0: i32, %arg1: i32, %arg2: memref<1x18x18x16xf32, #tpu.memory_space<vmem>>, %arg3: memref<1x8x16x9x16xf32, #tpu.memory_space<vmem>>, %arg4: memref<1x8x16x16xf32, #tpu.memory_space<vmem>>) attributes {dimension_semantics = [#tpu.dimension_semantics<parallel>, #tpu.dimension_semantics<parallel>], iteration_bounds = array<i64: 2, 2>, scalar_prefetch = 0 : i64, scratch_operands = 0 : i64, tpu.core_type = #tpu.core_type<tc>, window_params = [{transform_indices = @transform_0, window_bounds = array<i64: 1, 18, 18, 16>}, {transform_indices = @transform_1, window_bounds = array<i64: 1, 8, 16, 9, 16>}, {transform_indices = @transform_2, window_bounds = array<i64: 1, 8, 16, 16>}]} {
    %c8_i32 = arith.constant 8 : i32
    %0 = arith.muli %arg1, %c8_i32 : i32
    %1 = tpu.assume_multiple %0, 8 : i32
    %c0_i32 = arith.constant 0 : i32
    %2 = arith.addi %1, %c0_i32 : i32
    %c0 = arith.constant 0 : index
    %3 = arith.index_cast %2 : i32 to index
    %c0_0 = arith.constant 0 : index
    %c0_1 = arith.constant 0 : index
    %4 = vector.load %arg2[%c0, %3, %c0_0, %c0_1] : memref<1x18x18x16xf32, #tpu.memory_space<vmem>>, vector<1x8x18x16xf32>
    %5 = vector.shape_cast %4 : vector<1x8x18x16xf32> to vector<8x18x16xf32>
    %6 = vector.extract_strided_slice %5 {offsets = [0, 0, 0], sizes = [8, 16, 16], strides = [1, 1, 1]} : vector<8x18x16xf32> to vector<8x16x16xf32>
    %c0_2 = arith.constant 0 : index
    %c0_3 = arith.constant 0 : index
    %c0_4 = arith.constant 0 : index
    %c0_5 = arith.constant 0 : index
    %c0_6 = arith.constant 0 : index
    %7 = vector.load %arg3[%c0_2, %c0_3, %c0_4, %c0_5, %c0_6] : memref<1x8x16x9x16xf32, #tpu.memory_space<vmem>>, vector<1x8x16x1x16xf32>
    %8 = vector.shape_cast %7 : vector<1x8x16x1x16xf32> to vector<8x16x16xf32>
    %9 = arith.mulf %8, %6 : vector<8x16x16xf32>
    %c0_7 = arith.constant 0 : index
    %c0_8 = arith.constant 0 : index
    %c0_9 = arith.constant 0 : index
    %c0_10 = arith.constant 0 : index
    %10 = vector.load %arg4[%c0_7, %c0_8, %c0_9, %c0_10] : memref<1x8x16x16xf32, #tpu.memory_space<vmem>>, vector<1x8x16x16xf32>
    %11 = vector.shape_cast %10 : vector<1x8x16x16xf32> to vector<8x16x16xf32>
    %12 = vector.shape_cast %9 : vector<8x16x16xf32> to vector<1x8x16x16xf32>
    tpu.vector_store %arg4[%c0_7, %c0_8, %c0_9, %c0_10], %12 {strides = array<i32>} : memref<1x8x16x16xf32, #tpu.memory_space<vmem>>, vector<1x8x16x16xf32>,
    %13 = vector.extract_strided_slice %5 {offsets = [0, 1, 0], sizes = [8, 16, 16], strides = [1, 1, 1]} : vector<8x18x16xf32> to vector<8x16x16xf32>
    %c0_11 = arith.constant 0 : index
    %c0_12 = arith.constant 0 : index
    %c0_13 = arith.constant 0 : index
    %c1 = arith.constant 1 : index
    %c0_14 = arith.constant 0 : index
    %14 = vector.load %arg3[%c0_11, %c0_12, %c0_13, %c1, %c0_14] : memref<1x8x16x9x16xf32, #tpu.memory_space<vmem>>, vector<1x8x16x1x16xf32>
    %15 = vector.shape_cast %14 : vector<1x8x16x1x16xf32> to vector<8x16x16xf32>
    %16 = arith.mulf %15, %13 : vector<8x16x16xf32>
    %c0_15 = arith.constant 0 : index
    %c0_16 = arith.constant 0 : index
    %c0_17 = arith.constant 0 : index
    %c0_18 = arith.constant 0 : index
    %17 = vector.load %arg4[%c0_15, %c0_16, %c0_17, %c0_18] : memref<1x8x16x16xf32, #tpu.memory_space<vmem>>, vector<1x8x16x16xf32>
    %18 = vector.shape_cast %17 : vector<1x8x16x16xf32> to vector<8x16x16xf32>
    %19 = arith.addf %18, %16 : vector<8x16x16xf32>
    %c0_19 = arith.constant 0 : index
    %c0_20 = arith.constant 0 : index
    %c0_21 = arith.constant 0 : index
    %c0_22 = arith.constant 0 : index
    %20 = vector.load %arg4[%c0_19, %c0_20, %c0_21, %c0_22] : memref<1x8x16x16xf32, #tpu.memory_space<vmem>>, vector<1x8x16x16xf32>
    %21 = vector.shape_cast %20 : vector<1x8x16x16xf32> to vector<8x16x16xf32>
    %22 = vector.shape_cast %19 : vector<8x16x16xf32> to vector<1x8x16x16xf32>
    tpu.vector_store %arg4[%c0_19, %c0_20, %c0_21, %c0_22], %22 {strides = array<i32>} : memref<1x8x16x16xf32, #tpu.memory_space<vmem>>, vector<1x8x16x16xf32>,
    %23 = vector.extract_strided_slice %5 {offsets = [0, 2, 0], sizes = [8, 16, 16], strides = [1, 1, 1]} : vector<8x18x16xf32> to vector<8x16x16xf32>
    %c0_23 = arith.constant 0 : index
    %c0_24 = arith.constant 0 : index
    %c0_25 = arith.constant 0 : index
    %c2 = arith.constant 2 : index
    %c0_26 = arith.constant 0 : index
    %24 = vector.load %arg3[%c0_23, %c0_24, %c0_25, %c2, %c0_26] : memref<1x8x16x9x16xf32, #tpu.memory_space<vmem>>, vector<1x8x16x1x16xf32>
    %25 = vector.shape_cast %24 : vector<1x8x16x1x16xf32> to vector<8x16x16xf32>
    %26 = arith.mulf %25, %23 : vector<8x16x16xf32>
    %c0_27 = arith.constant 0 : index
    %c0_28 = arith.constant 0 : index
    %c0_29 = arith.constant 0 : index
    %c0_30 = arith.constant 0 : index
    %27 = vector.load %arg4[%c0_27, %c0_28, %c0_29, %c0_30] : memref<1x8x16x16xf32, #tpu.memory_space<vmem>>, vector<1x8x16x16xf32>
    %28 = vector.shape_cast %27 : vector<1x8x16x16xf32> to vector<8x16x16xf32>
    %29 = arith.addf %28, %26 : vector<8x16x16xf32>
    %c0_31 = arith.constant 0 : index
    %c0_32 = arith.constant 0 : index
    %c0_33 = arith.constant 0 : index
    %c0_34 = arith.constant 0 : index
    %30 = vector.load %arg4[%c0_31, %c0_32, %c0_33, %c0_34] : memref<1x8x16x16xf32, #tpu.memory_space<vmem>>, vector<1x8x16x16xf32>
    %31 = vector.shape_cast %30 : vector<1x8x16x16xf32> to vector<8x16x16xf32>
    %32 = vector.shape_cast %29 : vector<8x16x16xf32> to vector<1x8x16x16xf32>
    tpu.vector_store %arg4[%c0_31, %c0_32, %c0_33, %c0_34], %32 {strides = array<i32>} : memref<1x8x16x16xf32, #tpu.memory_space<vmem>>, vector<1x8x16x16xf32>,
    %c1_i32 = arith.constant 1 : i32
    %33 = arith.addi %1, %c1_i32 : i32
    %c0_35 = arith.constant 0 : index
    %34 = arith.index_cast %33 : i32 to index
    %c0_36 = arith.constant 0 : index
    %c0_37 = arith.constant 0 : index
    %35 = vector.load %arg2[%c0_35, %34, %c0_36, %c0_37] : memref<1x18x18x16xf32, #tpu.memory_space<vmem>>, vector<1x8x18x16xf32>
    %36 = vector.shape_cast %35 : vector<1x8x18x16xf32> to vector<8x18x16xf32>
    %37 = vector.extract_strided_slice %36 {offsets = [0, 0, 0], sizes = [8, 16, 16], strides = [1, 1, 1]} : vector<8x18x16xf32> to vector<8x16x16xf32>
    %c0_38 = arith.constant 0 : index
    %c0_39 = arith.constant 0 : index
    %c0_40 = arith.constant 0 : index
    %c3 = arith.constant 3 : index
    %c0_41 = arith.constant 0 : index
    %38 = vector.load %arg3[%c0_38, %c0_39, %c0_40, %c3, %c0_41] : memref<1x8x16x9x16xf32, #tpu.memory_space<vmem>>, vector<1x8x16x1x16xf32>
    %39 = vector.shape_cast %38 : vector<1x8x16x1x16xf32> to vector<8x16x16xf32>
    %40 = arith.mulf %39, %37 : vector<8x16x16xf32>
    %c0_42 = arith.constant 0 : index
    %c0_43 = arith.constant 0 : index
    %c0_44 = arith.constant 0 : index
    %c0_45 = arith.constant 0 : index
    %41 = vector.load %arg4[%c0_42, %c0_43, %c0_44, %c0_45] : memref<1x8x16x16xf32, #tpu.memory_space<vmem>>, vector<1x8x16x16xf32>
    %42 = vector.shape_cast %41 : vector<1x8x16x16xf32> to vector<8x16x16xf32>
    %43 = arith.addf %42, %40 : vector<8x16x16xf32>
    %c0_46 = arith.constant 0 : index
    %c0_47 = arith.constant 0 : index
    %c0_48 = arith.constant 0 : index
    %c0_49 = arith.constant 0 : index
    %44 = vector.load %arg4[%c0_46, %c0_47, %c0_48, %c0_49] : memref<1x8x16x16xf32, #tpu.memory_space<vmem>>, vector<1x8x16x16xf32>
    %45 = vector.shape_cast %44 : vector<1x8x16x16xf32> to vector<8x16x16xf32>
    %46 = vector.shape_cast %43 : vector<8x16x16xf32> to vector<1x8x16x16xf32>
    tpu.vector_store %arg4[%c0_46, %c0_47, %c0_48, %c0_49], %46 {strides = array<i32>} : memref<1x8x16x16xf32, #tpu.memory_space<vmem>>, vector<1x8x16x16xf32>,
    %47 = vector.extract_strided_slice %36 {offsets = [0, 1, 0], sizes = [8, 16, 16], strides = [1, 1, 1]} : vector<8x18x16xf32> to vector<8x16x16xf32>
    %c0_50 = arith.constant 0 : index
    %c0_51 = arith.constant 0 : index
    %c0_52 = arith.constant 0 : index
    %c4 = arith.constant 4 : index
    %c0_53 = arith.constant 0 : index
    %48 = vector.load %arg3[%c0_50, %c0_51, %c0_52, %c4, %c0_53] : memref<1x8x16x9x16xf32, #tpu.memory_space<vmem>>, vector<1x8x16x1x16xf32>
    %49 = vector.shape_cast %48 : vector<1x8x16x1x16xf32> to vector<8x16x16xf32>
    %50 = arith.mulf %49, %47 : vector<8x16x16xf32>
    %c0_54 = arith.constant 0 : index
    %c0_55 = arith.constant 0 : index
    %c0_56 = arith.constant 0 : index
    %c0_57 = arith.constant 0 : index
    %51 = vector.load %arg4[%c0_54, %c0_55, %c0_56, %c0_57] : memref<1x8x16x16xf32, #tpu.memory_space<vmem>>, vector<1x8x16x16xf32>
    %52 = vector.shape_cast %51 : vector<1x8x16x16xf32> to vector<8x16x16xf32>
    %53 = arith.addf %52, %50 : vector<8x16x16xf32>
    %c0_58 = arith.constant 0 : index
    %c0_59 = arith.constant 0 : index
    %c0_60 = arith.constant 0 : index
    %c0_61 = arith.constant 0 : index
    %54 = vector.load %arg4[%c0_58, %c0_59, %c0_60, %c0_61] : memref<1x8x16x16xf32, #tpu.memory_space<vmem>>, vector<1x8x16x16xf32>
    %55 = vector.shape_cast %54 : vector<1x8x16x16xf32> to vector<8x16x16xf32>
    %56 = vector.shape_cast %53 : vector<8x16x16xf32> to vector<1x8x16x16xf32>
    tpu.vector_store %arg4[%c0_58, %c0_59, %c0_60, %c0_61], %56 {strides = array<i32>} : memref<1x8x16x16xf32, #tpu.memory_space<vmem>>, vector<1x8x16x16xf32>,
    %57 = vector.extract_strided_slice %36 {offsets = [0, 2, 0], sizes = [8, 16, 16], strides = [1, 1, 1]} : vector<8x18x16xf32> to vector<8x16x16xf32>
    %c0_62 = arith.constant 0 : index
    %c0_63 = arith.constant 0 : index
    %c0_64 = arith.constant 0 : index
    %c5 = arith.constant 5 : index
    %c0_65 = arith.constant 0 : index
    %58 = vector.load %arg3[%c0_62, %c0_63, %c0_64, %c5, %c0_65] : memref<1x8x16x9x16xf32, #tpu.memory_space<vmem>>, vector<1x8x16x1x16xf32>
    %59 = vector.shape_cast %58 : vector<1x8x16x1x16xf32> to vector<8x16x16xf32>
    %60 = arith.mulf %59, %57 : vector<8x16x16xf32>
    %c0_66 = arith.constant 0 : index
    %c0_67 = arith.constant 0 : index
    %c0_68 = arith.constant 0 : index
    %c0_69 = arith.constant 0 : index
    %61 = vector.load %arg4[%c0_66, %c0_67, %c0_68, %c0_69] : memref<1x8x16x16xf32, #tpu.memory_space<vmem>>, vector<1x8x16x16xf32>
    %62 = vector.shape_cast %61 : vector<1x8x16x16xf32> to vector<8x16x16xf32>
    %63 = arith.addf %62, %60 : vector<8x16x16xf32>
    %c0_70 = arith.constant 0 : index
    %c0_71 = arith.constant 0 : index
    %c0_72 = arith.constant 0 : index
    %c0_73 = arith.constant 0 : index
    %64 = vector.load %arg4[%c0_70, %c0_71, %c0_72, %c0_73] : memref<1x8x16x16xf32, #tpu.memory_space<vmem>>, vector<1x8x16x16xf32>
    %65 = vector.shape_cast %64 : vector<1x8x16x16xf32> to vector<8x16x16xf32>
    %66 = vector.shape_cast %63 : vector<8x16x16xf32> to vector<1x8x16x16xf32>
    tpu.vector_store %arg4[%c0_70, %c0_71, %c0_72, %c0_73], %66 {strides = array<i32>} : memref<1x8x16x16xf32, #tpu.memory_space<vmem>>, vector<1x8x16x16xf32>,
    %c2_i32 = arith.constant 2 : i32
    %67 = arith.addi %1, %c2_i32 : i32
    %c0_74 = arith.constant 0 : index
    %68 = arith.index_cast %67 : i32 to index
    %c0_75 = arith.constant 0 : index
    %c0_76 = arith.constant 0 : index
    %69 = vector.load %arg2[%c0_74, %68, %c0_75, %c0_76] : memref<1x18x18x16xf32, #tpu.memory_space<vmem>>, vector<1x8x18x16xf32>
    %70 = vector.shape_cast %69 : vector<1x8x18x16xf32> to vector<8x18x16xf32>
    %71 = vector.extract_strided_slice %70 {offsets = [0, 0, 0], sizes = [8, 16, 16], strides = [1, 1, 1]} : vector<8x18x16xf32> to vector<8x16x16xf32>
    %c0_77 = arith.constant 0 : index
    %c0_78 = arith.constant 0 : index
    %c0_79 = arith.constant 0 : index
    %c6 = arith.constant 6 : index
    %c0_80 = arith.constant 0 : index
    %72 = vector.load %arg3[%c0_77, %c0_78, %c0_79, %c6, %c0_80] : memref<1x8x16x9x16xf32, #tpu.memory_space<vmem>>, vector<1x8x16x1x16xf32>
    %73 = vector.shape_cast %72 : vector<1x8x16x1x16xf32> to vector<8x16x16xf32>
    %74 = arith.mulf %73, %71 : vector<8x16x16xf32>
    %c0_81 = arith.constant 0 : index
    %c0_82 = arith.constant 0 : index
    %c0_83 = arith.constant 0 : index
    %c0_84 = arith.constant 0 : index
    %75 = vector.load %arg4[%c0_81, %c0_82, %c0_83, %c0_84] : memref<1x8x16x16xf32, #tpu.memory_space<vmem>>, vector<1x8x16x16xf32>
    %76 = vector.shape_cast %75 : vector<1x8x16x16xf32> to vector<8x16x16xf32>
    %77 = arith.addf %76, %74 : vector<8x16x16xf32>
    %c0_85 = arith.constant 0 : index
    %c0_86 = arith.constant 0 : index
    %c0_87 = arith.constant 0 : index
    %c0_88 = arith.constant 0 : index
    %78 = vector.load %arg4[%c0_85, %c0_86, %c0_87, %c0_88] : memref<1x8x16x16xf32, #tpu.memory_space<vmem>>, vector<1x8x16x16xf32>
    %79 = vector.shape_cast %78 : vector<1x8x16x16xf32> to vector<8x16x16xf32>
    %80 = vector.shape_cast %77 : vector<8x16x16xf32> to vector<1x8x16x16xf32>
    tpu.vector_store %arg4[%c0_85, %c0_86, %c0_87, %c0_88], %80 {strides = array<i32>} : memref<1x8x16x16xf32, #tpu.memory_space<vmem>>, vector<1x8x16x16xf32>,
    %81 = vector.extract_strided_slice %70 {offsets = [0, 1, 0], sizes = [8, 16, 16], strides = [1, 1, 1]} : vector<8x18x16xf32> to vector<8x16x16xf32>
    %c0_89 = arith.constant 0 : index
    %c0_90 = arith.constant 0 : index
    %c0_91 = arith.constant 0 : index
    %c7 = arith.constant 7 : index
    %c0_92 = arith.constant 0 : index
    %82 = vector.load %arg3[%c0_89, %c0_90, %c0_91, %c7, %c0_92] : memref<1x8x16x9x16xf32, #tpu.memory_space<vmem>>, vector<1x8x16x1x16xf32>
    %83 = vector.shape_cast %82 : vector<1x8x16x1x16xf32> to vector<8x16x16xf32>
    %84 = arith.mulf %83, %81 : vector<8x16x16xf32>
    %c0_93 = arith.constant 0 : index
    %c0_94 = arith.constant 0 : index
    %c0_95 = arith.constant 0 : index
    %c0_96 = arith.constant 0 : index
    %85 = vector.load %arg4[%c0_93, %c0_94, %c0_95, %c0_96] : memref<1x8x16x16xf32, #tpu.memory_space<vmem>>, vector<1x8x16x16xf32>
    %86 = vector.shape_cast %85 : vector<1x8x16x16xf32> to vector<8x16x16xf32>
    %87 = arith.addf %86, %84 : vector<8x16x16xf32>
    %c0_97 = arith.constant 0 : index
    %c0_98 = arith.constant 0 : index
    %c0_99 = arith.constant 0 : index
    %c0_100 = arith.constant 0 : index
    %88 = vector.load %arg4[%c0_97, %c0_98, %c0_99, %c0_100] : memref<1x8x16x16xf32, #tpu.memory_space<vmem>>, vector<1x8x16x16xf32>
    %89 = vector.shape_cast %88 : vector<1x8x16x16xf32> to vector<8x16x16xf32>
    %90 = vector.shape_cast %87 : vector<8x16x16xf32> to vector<1x8x16x16xf32>
    tpu.vector_store %arg4[%c0_97, %c0_98, %c0_99, %c0_100], %90 {strides = array<i32>} : memref<1x8x16x16xf32, #tpu.memory_space<vmem>>, vector<1x8x16x16xf32>,
    %91 = vector.extract_strided_slice %70 {offsets = [0, 2, 0], sizes = [8, 16, 16], strides = [1, 1, 1]} : vector<8x18x16xf32> to vector<8x16x16xf32>
    %c0_101 = arith.constant 0 : index
    %c0_102 = arith.constant 0 : index
    %c0_103 = arith.constant 0 : index
    %c8 = arith.constant 8 : index
    %c0_104 = arith.constant 0 : index
    %92 = vector.load %arg3[%c0_101, %c0_102, %c0_103, %c8, %c0_104] : memref<1x8x16x9x16xf32, #tpu.memory_space<vmem>>, vector<1x8x16x1x16xf32>
    %93 = vector.shape_cast %92 : vector<1x8x16x1x16xf32> to vector<8x16x16xf32>
    %94 = arith.mulf %93, %91 : vector<8x16x16xf32>
    %c0_105 = arith.constant 0 : index
    %c0_106 = arith.constant 0 : index
    %c0_107 = arith.constant 0 : index
    %c0_108 = arith.constant 0 : index
    %95 = vector.load %arg4[%c0_105, %c0_106, %c0_107, %c0_108] : memref<1x8x16x16xf32, #tpu.memory_space<vmem>>, vector<1x8x16x16xf32>
    %96 = vector.shape_cast %95 : vector<1x8x16x16xf32> to vector<8x16x16xf32>
    %97 = arith.addf %96, %94 : vector<8x16x16xf32>
    %c0_109 = arith.constant 0 : index
    %c0_110 = arith.constant 0 : index
    %c0_111 = arith.constant 0 : index
    %c0_112 = arith.constant 0 : index
    %98 = vector.load %arg4[%c0_109, %c0_110, %c0_111, %c0_112] : memref<1x8x16x16xf32, #tpu.memory_space<vmem>>, vector<1x8x16x16xf32>
    %99 = vector.shape_cast %98 : vector<1x8x16x16xf32> to vector<8x16x16xf32>
    %100 = vector.shape_cast %97 : vector<8x16x16xf32> to vector<1x8x16x16xf32>
    tpu.vector_store %arg4[%c0_109, %c0_110, %c0_111, %c0_112], %100 {strides = array<i32>} : memref<1x8x16x16xf32, #tpu.memory_space<vmem>>, vector<1x8x16x16xf32>,
    return
  }
  func.func @transform_0(%arg0: i32, %arg1: i32) -> (i32, i32, i32, i32) {
    %c0_i32 = arith.constant 0 : i32
    %c0_i32_0 = arith.constant 0 : i32
    %c0_i32_1 = arith.constant 0 : i32
    %c0_i32_2 = arith.constant 0 : i32
    return %arg0, %c0_i32, %c0_i32_0, %c0_i32_1 : i32, i32, i32, i32
  }
  func.func @transform_1(%arg0: i32, %arg1: i32) -> (i32, i32, i32, i32, i32) {
    %c0_i32 = arith.constant 0 : i32
    %c0_i32_0 = arith.constant 0 : i32
    %c0_i32_1 = arith.constant 0 : i32
    %c0_i32_2 = arith.constant 0 : i32
    return %arg0, %arg1, %c0_i32, %c0_i32_0, %c0_i32_1 : i32, i32, i32, i32, i32
  }
  func.func @transform_2(%arg0: i32, %arg1: i32) -> (i32, i32, i32, i32) {
    %c0_i32 = arith.constant 0 : i32
    %c0_i32_0 = arith.constant 0 : i32
    %c0_i32_1 = arith.constant 0 : i32
    return %arg0, %arg1, %c0_i32, %c0_i32_0 : i32, i32, i32, i32
  }
}

</mosaic_0001>

<llo_original>
// kernel: involution_pallas.2
$region0: #{involution_pallas.2}
  #allocation0 [shape = 'u32[]', space=smem, size = 0x4, offset = 0x4, fixed_abs, tag = 'smem constant byte address 0x4 - core index']
  #allocation1 [shape = 'u32[72,128]{1,0:T(1,128)}', space=vmem, size = 0x9000, scoped, tag = 'internal scratch']
  %s0 = inlined_call_operand.vmem [shape: f32[512,16], index: 0, kind: input, shape index: {}]
  %s1 = inlined_call_operand.vmem [shape: f32[16,4], index: 1, kind: input, shape index: {}]
  %s2 = inlined_call_operand.vmem [shape: f32[1,4], index: 2, kind: input, shape index: {}]
  %s3 = inlined_call_operand.vmem [shape: f32[1,4], index: 3, kind: input, shape index: {}]
  %s4 = inlined_call_operand.vmem [shape: f32[4,144], index: 4, kind: input, shape index: {}]
  %s5 = inlined_call_operand.vmem [shape: f32[1,144], index: 5, kind: input, shape index: {}]
  %s6 = inlined_call_operand.vmem [shape: f32[512,144], index: 6, kind: output, shape index: {}]
  %s7 = sld [smem:[#allocation0]]
  $region57: #{involution_pallas.2} parent=0
    _
  %s9 = ssub.s32 1, %s7
  %s10 = scalar_select 0, %s9, %s7
  loop: start=0, step=1, limit=6
  $region2: #{involution_pallas.2} parent=0 // loop_pre_header
    _
  $region3: #{involution_pallas.2} parent=0 // loop_header
    %s12 = sphi 0, %s16
    %p13 = scmp.ge.s32.totalorder %s12, 6
    %s22 = sphi 0, %s24
    %s25 = sphi 0, %s22
    %s26 = sphi 0, %s25
    %s42 = sphi 0, %s26
    %s46 = sphi 0, %s46
    %s48 = sphi 0, %s46
    %s49 = sphi 0, %s48
    %s63 = sphi 0, %s49
    %s67 = sphi 0, %s67
    %s69 = sphi 0, %s67
    %s70 = sphi 0, %s69
    %s84 = sphi 0, %s70
    %s88 = sphi 0, %s88
    %s90 = sphi 0, %s88
    %s91 = sphi 0, %s90
    %s105 = sphi 0, %s91
    %s109 = sphi 0, %s109
    %s111 = sphi 0, %s109
    %s112 = sphi 0, %s111
    %s126 = sphi 0, %s112
    %s130 = sphi 0, %s130
    %s132 = sphi 0, %s130
    %s133 = sphi 0, %s132
    %s147 = sphi 0, %s133
    %s153 = sphi 0, %s155
    %s156 = sphi 0, %s153
    %s157 = sphi 0, %s156
    %s173 = sphi 0, %s157
  $region4: #{involution_pallas.2} parent=0 // loop_header_branch
    %15 = sbr.rel (%p13) target = $region8
  $region5: #{involution_pallas.2} parent=0 // loop_body
    %s17 = ssub.s32 %s12, 1
    %s18 = ssub.s32 %s12, 2
    %s19 = sadd.s32 %s12, 1
    %s20 = ssub.s32 %s12, %s19
    %p21 = scmp.eq.s32.totalorder %s20, 0
    %s23 = sadd.s32 %s22, 1
    %s24 = scalar_select %p21, %s22, %s23
    %p27 = pneg %p21
    %p28 = scmp.eq.s32.totalorder %s12, 3
    %p29 = por %p27, %p28
    %p30 = scmp.ne.s32.totalorder %s22, %s25
    %p31 = scmp.eq.s32.totalorder %s12, 0
    %p32 = por %p30, %p31
    %p33 = scmp.ne.s32.totalorder %s22, %s25
    %p34 = scmp.eq.s32.totalorder %s17, 3
    %p35 = por %p33, %p34
    %p36 = scmp.ne.s32.totalorder %s25, %s26
    %p37 = scmp.eq.s32.totalorder %s17, 0
    %p38 = por %p36, %p37
    %p39 = scmp.ne.s32.totalorder %s25, %s26
    %p40 = scmp.eq.s32.totalorder %s18, 3
    %p41 = por %p39, %p40
    %p43 = scmp.ne.s32.totalorder %s26, %s42
    %p44 = scmp.eq.s32.totalorder %s18, 0
    %p45 = por %p43, %p44
    %s47 = sadd.s32 %s46, 1
    %p50 = scmp.eq.s32.totalorder %s12, 3
    %p51 = scmp.ne.s32.totalorder %s46, %s48
    %p52 = scmp.eq.s32.totalorder %s12, 0
    %p53 = por %p51, %p52
    %p54 = scmp.ne.s32.totalorder %s46, %s48
    %p55 = scmp.eq.s32.totalorder %s17, 3
    %p56 = por %p54, %p55
    %p57 = scmp.ne.s32.totalorder %s48, %s49
    %p58 = scmp.eq.s32.totalorder %s17, 0
    %p59 = por %p57, %p58
    %p60 = scmp.ne.s32.totalorder %s48, %s49
    %p61 = scmp.eq.s32.totalorder %s18, 3
    %p62 = por %p60, %p61
    %p64 = scmp.ne.s32.totalorder %s49, %s63
    %p65 = scmp.eq.s32.totalorder %s18, 0
    %p66 = por %p64, %p65
    %s68 = sadd.s32 %s67, 1
    %p71 = scmp.eq.s32.totalorder %s12, 3
    %p72 = scmp.ne.s32.totalorder %s67, %s69
    %p73 = scmp.eq.s32.totalorder %s12, 0
    %p74 = por %p72, %p73
    %p75 = scmp.ne.s32.totalorder %s67, %s69
    %p76 = scmp.eq.s32.totalorder %s17, 3
    %p77 = por %p75, %p76
    %p78 = scmp.ne.s32.totalorder %s69, %s70
    %p79 = scmp.eq.s32.totalorder %s17, 0
    %p80 = por %p78, %p79
    %p81 = scmp.ne.s32.totalorder %s69, %s70
    %p82 = scmp.eq.s32.totalorder %s18, 3
    %p83 = por %p81, %p82
    %p85 = scmp.ne.s32.totalorder %s70, %s84
    %p86 = scmp.eq.s32.totalorder %s18, 0
    %p87 = por %p85, %p86
    %s89 = sadd.s32 %s88, 1
    %p92 = scmp.eq.s32.totalorder %s12, 3
    %p93 = scmp.ne.s32.totalorder %s88, %s90
    %p94 = scmp.eq.s32.totalorder %s12, 0
    %p95 = por %p93, %p94
    %p96 = scmp.ne.s32.totalorder %s88, %s90
    %p97 = scmp.eq.s32.totalorder %s17, 3
    %p98 = por %p96, %p97
    %p99 = scmp.ne.s32.totalorder %s90, %s91
    %p100 = scmp.eq.s32.totalorder %s17, 0
    %p101 = por %p99, %p100
    %p102 = scmp.ne.s32.totalorder %s90, %s91
    %p103 = scmp.eq.s32.totalorder %s18, 3
    %p104 = por %p102, %p103
    %p106 = scmp.ne.s32.totalorder %s91, %s105
    %p107 = scmp.eq.s32.totalorder %s18, 0
    %p108 = por %p106, %p107
    %s110 = sadd.s32 %s109, 1
    %p113 = scmp.eq.s32.totalorder %s12, 3
    %p114 = scmp.ne.s32.totalorder %s109, %s111
    %p115 = scmp.eq.s32.totalorder %s12, 0
    %p116 = por %p114, %p115
    %p117 = scmp.ne.s32.totalorder %s109, %s111
    %p118 = scmp.eq.s32.totalorder %s17, 3
    %p119 = por %p117, %p118
    %p120 = scmp.ne.s32.totalorder %s111, %s112
    %p121 = scmp.eq.s32.totalorder %s17, 0
    %p122 = por %p120, %p121
    %p123 = scmp.ne.s32.totalorder %s111, %s112
    %p124 = scmp.eq.s32.totalorder %s18, 3
    %p125 = por %p123, %p124
    %p127 = scmp.ne.s32.totalorder %s112, %s126
    %p128 = scmp.eq.s32.totalorder %s18, 0
    %p129 = por %p127, %p128
    %s131 = sadd.s32 %s130, 1
    %p134 = scmp.eq.s32.totalorder %s12, 3
    %p135 = scmp.ne.s32.totalorder %s130, %s132
    %p136 = scmp.eq.s32.totalorder %s12, 0
    %p137 = por %p135, %p136
    %p138 = scmp.ne.s32.totalorder %s130, %s132
    %p139 = scmp.eq.s32.totalorder %s17, 3
    %p140 = por %p138, %p139
    %p141 = scmp.ne.s32.totalorder %s132, %s133
    %p142 = scmp.eq.s32.totalorder %s17, 0
    %p143 = por %p141, %p142
    %p144 = scmp.ne.s32.totalorder %s132, %s133
    %p145 = scmp.eq.s32.totalorder %s18, 3
    %p146 = por %p144, %p145
    %p148 = scmp.ne.s32.totalorder %s133, %s147
    %p149 = scmp.eq.s32.totalorder %s18, 0
    %p150 = por %p148, %p149
    %s151 = ssub.s32 %s12, %s19
    %p152 = scmp.eq.s32.totalorder %s151, 0
    %s154 = sadd.s32 %s153, 1
    %s155 = scalar_select %p152, %s153, %s154
    %p158 = pneg %p152
    %p159 = scmp.eq.s32.totalorder %s12, 3
    %p160 = por %p158, %p159
    %p161 = scmp.ne.s32.totalorder %s153, %s156
    %p162 = scmp.eq.s32.totalorder %s12, 0
    %p163 = por %p161, %p162
    %p164 = scmp.ne.s32.totalorder %s153, %s156
    %p165 = scmp.eq.s32.totalorder %s17, 3
    %p166 = por %p164, %p165
    %p167 = scmp.ne.s32.totalorder %s156, %s157
    %p168 = scmp.eq.s32.totalorder %s17, 0
    %p169 = por %p167, %p168
    %p170 = scmp.ne.s32.totalorder %s156, %s157
    %p171 = scmp.eq.s32.totalorder %s18, 3
    %p172 = por %p170, %p171
    %p174 = scmp.ne.s32.totalorder %s157, %s173
    %p175 = scmp.eq.s32.totalorder %s18, 0
    %p176 = por %p174, %p175
    %p177 = scmp.le.s32.totalorder 1, %s12
    %p178 = scmp.lt.s32.totalorder %s12, 5
    %p179 = pnand %p177, %p178
    %p180 = pneg %p179
    // Predicated region
    $region9: #{involution_pallas.2} parent=5 // pred_check
      _
    $region10: #{involution_pallas.2} parent=5 // pred_check_branch
      %182 = sbr.rel (%p179) target = $region12
    $region11: #{involution_pallas.2} parent=5 // pred_region
      %s183 = ssub.s32 %s12, 1
      // Predicated region
      $region13: #{involution_pallas.2} parent=11 // pred_check
        %p184 = pneg %p59
      $region14: #{involution_pallas.2} parent=11 // pred_check_branch
        %186 = sbr.rel (%p184) target = $region16
      $region15: #{involution_pallas.2} parent=11 // pred_region
        _
      $region16: #{involution_pallas.2} parent=11 // pred_fallthru
        _
      // Predicated region
      $region17: #{involution_pallas.2} parent=11 // pred_check
        %p187 = pneg %p80
      $region18: #{involution_pallas.2} parent=11 // pred_check_branch
        %189 = sbr.rel (%p187) target = $region20
      $region19: #{involution_pallas.2} parent=11 // pred_region
        _
      $region20: #{involution_pallas.2} parent=11 // pred_fallthru
        _
      // Predicated region
      $region21: #{involution_pallas.2} parent=11 // pred_check
        %p190 = pneg %p101
      $region22: #{involution_pallas.2} parent=11 // pred_check_branch
        %192 = sbr.rel (%p190) target = $region24
      $region23: #{involution_pallas.2} parent=11 // pred_region
        _
      $region24: #{involution_pallas.2} parent=11 // pred_fallthru
        _
      // Predicated region
      $region25: #{involution_pallas.2} parent=11 // pred_check
        %p193 = pneg %p122
      $region26: #{involution_pallas.2} parent=11 // pred_check_branch
        %195 = sbr.rel (%p193) target = $region28
      $region27: #{involution_pallas.2} parent=11 // pred_region
        _
      $region28: #{involution_pallas.2} parent=11 // pred_fallthru
        _
      // Predicated region
      $region29: #{involution_pallas.2} parent=11 // pred_check
        %p196 = pneg %p143
      $region30: #{involution_pallas.2} parent=11 // pred_check_branch
        %198 = sbr.rel (%p196) target = $region32
      $region31: #{involution_pallas.2} parent=11 // pred_region
        _
      $region32: #{involution_pallas.2} parent=11 // pred_fallthru
        _
    $region12: #{involution_pallas.2} parent=5 // pred_fallthru
      _
    %p199 = scmp.lt.s32.totalorder %s12, 4
    // Predicated region
    $region33: #{involution_pallas.2} parent=5 // pred_check
      %p200 = pneg %p199
    $region34: #{involution_pallas.2} parent=5 // pred_check_branch
      %202 = sbr.rel (%p200) target = $region36
    $region35: #{involution_pallas.2} parent=5 // pred_region
      // Predicated region
      $region37: #{involution_pallas.2} parent=35 // pred_check
        %p203 = pneg %p32
      $region38: #{involution_pallas.2} parent=35 // pred_check_branch
        %205 = sbr.rel (%p203) target = $region40
      $region39: #{involution_pallas.2} parent=35 // pred_region
        %s206 = smul.u32 16, %s12
        %p207 = scmp.lt.s32.totalorder %s206, 63
        %s208 = scalar_select %p207, %s206, 63
        %s209 = smul.addr %s208, 8
        %s210 = scalar_lea.vmem %s0, %s209
        %s211 = smul.u32 16, %s12
      $region40: #{involution_pallas.2} parent=35 // pred_fallthru
        _
    $region36: #{involution_pallas.2} parent=5 // pred_fallthru
      _
    %p212 = scmp.le.s32.totalorder 1, %s12
    %p213 = scmp.lt.s32.totalorder %s12, 5
    %p214 = pnand %p212, %p213
    %p215 = pneg %p214
    // Predicated region
    $region41: #{involution_pallas.2} parent=5 // pred_check
      _
    $region42: #{involution_pallas.2} parent=5 // pred_check_branch
      %217 = sbr.rel (%p214) target = $region44
    $region43: #{involution_pallas.2} parent=5 // pred_region
      %s218 = ssub.s32 %s12, 1
      %s219 = smul.u32 16, %s17
      %p220 = scmp.lt.s32.totalorder %s219, 63
      %s221 = scalar_select %p220, %s219, 63
      %s222 = smul.addr %s221, 8
      %s223 = scalar_lea.vmem %s0, %s222
      %p224 = pneg %p38
      %p225 = pneg %p35
      %p226 = pneg %p59
      %p227 = pneg %p56
      %p228 = pneg %p80
      %p229 = pneg %p77
      %p230 = pneg %p101
      %p231 = pneg %p98
      %p232 = pneg %p122
      %p233 = pneg %p119
      %p234 = pneg %p143
      %p235 = pneg %p140
      %p236 = pneg %p169
      %p237 = pneg %p166
      %s238 = smul.u32 16, %s17
      %p239 = scmp.lt.s32.totalorder %s238, 63
      %s240 = scalar_select %p239, %s238, 63
      %s241 = smul.addr %s240, 2
      %s242 = smul.addr %s241, 8
      %s243 = scalar_lea.vmem %s6, %s242
      %s244 = smul.u32 16, %s17
      %p245 = scmp.lt.s32.totalorder %s244, 63
      %s246 = scalar_select %p245, %s244, 63
      %s247 = smul.addr %s246, 8
      %s248 = scalar_lea.vmem %s0, %s247
      %s249 = smul.u32 16, %s17
      %s250 = smul.u32 16, %s17
      %p251 = scmp.lt.s32.totalorder %s250, 63
      %s252 = scalar_select %p251, %s250, 63
      %s253 = smul.addr %s252, 2
      %s254 = smul.addr %s253, 8
      %s255 = scalar_lea.vmem %s6, %s254
      %s256 = smul.u32 16, %s17
      %v257 = vld [vmem:[%s248] sm:$0xff]
      %v258 = vld [vmem:[%s248 + $0x8] sm:$0xff]
      %v259 = vld [vmem:[%s248 + $0x10] sm:$0xff]
      %v260 = vld [vmem:[%s248 + $0x18] sm:$0xff]
      %v261 = vld [vmem:[%s248 + $0x20] sm:$0xff]
      %v262 = vld [vmem:[%s248 + $0x28] sm:$0xff]
      %v263 = vld [vmem:[%s248 + $0x30] sm:$0xff]
      %v264 = vld [vmem:[%s248 + $0x38] sm:$0xff]
      %v265 = vld [vmem:[%s248 + $0x40] sm:$0xff]
      %v266 = vld [vmem:[%s248 + $0x48] sm:$0xff]
      %v267 = vld [vmem:[%s248 + $0x50] sm:$0xff]
      %v268 = vld [vmem:[%s248 + $0x58] sm:$0xff]
      %v269 = vld [vmem:[%s248 + $0x60] sm:$0xff]
      %v270 = vld [vmem:[%s248 + $0x68] sm:$0xff]
      %v271 = vld [vmem:[%s248 + $0x70] sm:$0xff]
      %v272 = vld [vmem:[%s248 + $0x78] sm:$0xff]
      %v273 = vld [vmem:[%s1] sm:$0xff]
      %v274 = vld [vmem:[%s1 + $0x8] sm:$0xff]
      %vm275 = vcmask 130048
      %v277 = vsel %vm275, %v257, 0
      %v280 = vsel %vm275, %v258, 0
      %v283 = vsel %vm275, %v259, 0
      %v286 = vsel %vm275, %v260, 0
      %v289 = vsel %vm275, %v261, 0
      %v292 = vsel %vm275, %v262, 0
      %v295 = vsel %vm275, %v263, 0
      %v298 = vsel %vm275, %v264, 0
      %v301 = vsel %vm275, %v265, 0
      %v304 = vsel %vm275, %v266, 0
      %v307 = vsel %vm275, %v267, 0
      %v310 = vsel %vm275, %v268, 0
      %v313 = vsel %vm275, %v269, 0
      %v316 = vsel %vm275, %v270, 0
      %v319 = vsel %vm275, %v271, 0
      %v322 = vsel %vm275, %v272, 0
      %324 = vmatpush.msra.mxu0 0.0
      %325 = vmatpush.msra.mxu0 0.0
      %326 = vmatpush.msra.mxu0 0.0
      %327 = vmatpush.msra.mxu0 0.0
      %328 = vmatpush.msra.mxu0 0.0
      %329 = vmatpush.msra.mxu0 0.0
      %330 = vmatpush.msra.mxu0 0.0
      %331 = vmatpush.msra.mxu0 0.0
      %332 = vmatpush.msra.mxu0 0.0
      %333 = vmatpush.msra.mxu0 0.0
      %334 = vmatpush.msra.mxu0 0.0
      %335 = vmatpush.msra.mxu0 0.0
      %336 = vmatpush.msra.mxu0 0.0
      %337 = vmatpush.msra.mxu0 0.0
      %338 = vmatpush.msra.mxu0 %v274
      %339 = vmatpush.msra.mxu0 %v273
      %340 = vmatmul.f32.gmra.mxu0 %v277
      %v341 = vpop.f32.mrf.mxu0
      %v342 = vadd.f32 0.0, %v341
      %343 = vmatmul.f32.gmra.mxu0 %v280
      %v344 = vpop.f32.mrf.mxu0
      %v345 = vadd.f32 0.0, %v344
      %346 = vmatmul.f32.gmra.mxu0 %v283
      %v347 = vpop.f32.mrf.mxu0
      %v348 = vadd.f32 0.0, %v347
      %349 = vmatmul.f32.gmra.mxu0 %v286
      %v350 = vpop.f32.mrf.mxu0
      %v351 = vadd.f32 0.0, %v350
      %352 = vmatmul.f32.gmra.mxu0 %v289
      %v353 = vpop.f32.mrf.mxu0
      %v354 = vadd.f32 0.0, %v353
      %355 = vmatmul.f32.gmra.mxu0 %v292
      %v356 = vpop.f32.mrf.mxu0
      %v357 = vadd.f32 0.0, %v356
      %358 = vmatmul.f32.gmra.mxu0 %v295
      %v359 = vpop.f32.mrf.mxu0
      %v360 = vadd.f32 0.0, %v359
      %361 = vmatmul.f32.gmra.mxu0 %v298
      %v362 = vpop.f32.mrf.mxu0
      %v363 = vadd.f32 0.0, %v362
      %364 = vmatmul.f32.gmra.mxu0 %v301
      %v365 = vpop.f32.mrf.mxu0
      %v366 = vadd.f32 0.0, %v365
      %367 = vmatmul.f32.gmra.mxu0 %v304
      %v368 = vpop.f32.mrf.mxu0
      %v369 = vadd.f32 0.0, %v368
      %370 = vmatmul.f32.gmra.mxu0 %v307
      %v371 = vpop.f32.mrf.mxu0
      %v372 = vadd.f32 0.0, %v371
      %373 = vmatmul.f32.gmra.mxu0 %v310
      %v374 = vpop.f32.mrf.mxu0
      %v375 = vadd.f32 0.0, %v374
      %376 = vmatmul.f32.gmra.mxu0 %v313
      %v377 = vpop.f32.mrf.mxu0
      %v378 = vadd.f32 0.0, %v377
      %379 = vmatmul.f32.gmra.mxu0 %v316
      %v380 = vpop.f32.mrf.mxu0
      %v381 = vadd.f32 0.0, %v380
      %382 = vmatmul.f32.gmra.mxu0 %v319
      %v383 = vpop.f32.mrf.mxu0
      %v384 = vadd.f32 0.0, %v383
      %385 = vmatmul.f32.gmra.mxu0 %v322
      %v386 = vpop.f32.mrf.mxu0
      %v387 = vadd.f32 0.0, %v386
      %388 = vdwg.mxu0
      %v389 = vld [vmem:[%s2] sm:$0x1]
      %v391 = vperm.slane %v389, 0
      %v393 = vmul.f32 %v342, %v391
      %v394 = vmul.f32 %v345, %v391
      %v395 = vmul.f32 %v348, %v391
      %v396 = vmul.f32 %v351, %v391
      %v397 = vmul.f32 %v354, %v391
      %v398 = vmul.f32 %v357, %v391
      %v399 = vmul.f32 %v360, %v391
      %v400 = vmul.f32 %v363, %v391
      %v401 = vmul.f32 %v366, %v391
      %v402 = vmul.f32 %v369, %v391
      %v403 = vmul.f32 %v372, %v391
      %v404 = vmul.f32 %v375, %v391
      %v405 = vmul.f32 %v378, %v391
      %v406 = vmul.f32 %v381, %v391
      %v407 = vmul.f32 %v384, %v391
      %v408 = vmul.f32 %v387, %v391
      %v409 = vld [vmem:[%s3] sm:$0x1]
      %v411 = vperm.slane %v409, 0
      %v413 = vadd.f32 %v393, %v411
      %v414 = vadd.f32 %v394, %v411
      %v415 = vadd.f32 %v395, %v411
      %v416 = vadd.f32 %v396, %v411
      %v417 = vadd.f32 %v397, %v411
      %v418 = vadd.f32 %v398, %v411
      %v419 = vadd.f32 %v399, %v411
      %v420 = vadd.f32 %v400, %v411
      %v421 = vadd.f32 %v401, %v411
      %v422 = vadd.f32 %v402, %v411
      %v423 = vadd.f32 %v403, %v411
      %v424 = vadd.f32 %v404, %v411
      %v425 = vadd.f32 %v405, %v411
      %v426 = vadd.f32 %v406, %v411
      %v427 = vadd.f32 %v407, %v411
      %v428 = vadd.f32 %v408, %v411
      %v429 = vmax.f32 %v413, 0.0
      %v430 = vmax.f32 %v414, 0.0
      %v431 = vmax.f32 %v415, 0.0
      %v432 = vmax.f32 %v416, 0.0
      %v433 = vmax.f32 %v417, 0.0
      %v434 = vmax.f32 %v418, 0.0
      %v435 = vmax.f32 %v419, 0.0
      %v436 = vmax.f32 %v420, 0.0
      %v437 = vmax.f32 %v421, 0.0
      %v438 = vmax.f32 %v422, 0.0
      %v439 = vmax.f32 %v423, 0.0
      %v440 = vmax.f32 %v424, 0.0
      %v441 = vmax.f32 %v425, 0.0
      %v442 = vmax.f32 %v426, 0.0
      %v443 = vmax.f32 %v427, 0.0
      %v444 = vmax.f32 %v428, 0.0
      %v445 = vld [vmem:[%s4] sm:$0xff]
      %v446 = vld [vmem:[%s5] sm:$0x3]
      %v448 = vperm.slane %v446, 0
      %v449 = vperm.slane %v446, 1
      %453 = vst [vmem:[#allocation1] ss:$2 sm:$0xff] %v445
      %v454 = vld.sshfl [vmem:[#allocation1] sm:$0xff pattern:$0x75316420]
      %v455 = vld.sshfl [vmem:[#allocation1 + $0x8] sm:$0xff pattern:$0x75316420]
      %vm456 = vcmask 31744
      %v458 = vsel %vm456, %v429, 0
      %v461 = vsel %vm456, %v430, 0
      %v464 = vsel %vm456, %v431, 0
      %v467 = vsel %vm456, %v432, 0
      %v470 = vsel %vm456, %v433, 0
      %v473 = vsel %vm456, %v434, 0
      %v476 = vsel %vm456, %v435, 0
      %v479 = vsel %vm456, %v436, 0
      %v482 = vsel %vm456, %v437, 0
      %v485 = vsel %vm456, %v438, 0
      %v488 = vsel %vm456, %v439, 0
      %v491 = vsel %vm456, %v440, 0
      %v494 = vsel %vm456, %v441, 0
      %v497 = vsel %vm456, %v442, 0
      %v500 = vsel %vm456, %v443, 0
      %v503 = vsel %vm456, %v444, 0
      %vm505 = vcmask 1043456
      %v506 = vsel %vm505, %v454, 0
      %v508 = vsel %vm505, %v455, 0
      %510 = vmatpush.msra.mxu0 0.0
      %511 = vmatpush.msra.mxu0 0.0
      %512 = vmatpush.msra.mxu0 0.0
      %513 = vmatpush.msra.mxu0 0.0
      %514 = vmatpush.msra.mxu0 0.0
      %515 = vmatpush.msra.mxu0 0.0
      %516 = vmatpush.msra.mxu0 0.0
      %517 = vmatpush.msra.mxu0 0.0
      %518 = vmatpush.msra.mxu0 0.0
      %519 = vmatpush.msra.mxu0 0.0
      %520 = vmatpush.msra.mxu0 0.0
      %521 = vmatpush.msra.mxu0 0.0
      %522 = vmatpush.msra.mxu0 0.0
      %523 = vmatpush.msra.mxu0 0.0
      %524 = vmatpush.msra.mxu0 0.0
      %525 = vmatpush.msra.mxu0 %v506
      %526 = vmatmul.f32.gmra.mxu0 %v458
      %v527 = vpop.f32.mrf.mxu0
      %v528 = vadd.f32 %v448, %v527
      %529 = vmatmul.f32.gmra.mxu0 %v461
      %v530 = vpop.f32.mrf.mxu0
      %v531 = vadd.f32 %v448, %v530
      %532 = vmatmul.f32.gmra.mxu0 %v464
      %v533 = vpop.f32.mrf.mxu0
      %v534 = vadd.f32 %v448, %v533
      %535 = vmatmul.f32.gmra.mxu0 %v467
      %v536 = vpop.f32.mrf.mxu0
      %v537 = vadd.f32 %v448, %v536
      %538 = vmatmul.f32.gmra.mxu0 %v470
      %v539 = vpop.f32.mrf.mxu0
      %v540 = vadd.f32 %v448, %v539
      %541 = vmatmul.f32.gmra.mxu0 %v473
      %v542 = vpop.f32.mrf.mxu0
      %v543 = vadd.f32 %v448, %v542
      %544 = vmatmul.f32.gmra.mxu0 %v476
      %v545 = vpop.f32.mrf.mxu0
      %v546 = vadd.f32 %v448, %v545
      %547 = vmatmul.f32.gmra.mxu0 %v479
      %v548 = vpop.f32.mrf.mxu0
      %v549 = vadd.f32 %v448, %v548
      %550 = vmatmul.f32.gmra.mxu0 %v482
      %v551 = vpop.f32.mrf.mxu0
      %v552 = vadd.f32 %v448, %v551
      %553 = vmatmul.f32.gmra.mxu0 %v485
      %v554 = vpop.f32.mrf.mxu0
      %v555 = vadd.f32 %v448, %v554
      %556 = vmatmul.f32.gmra.mxu0 %v488
      %v557 = vpop.f32.mrf.mxu0
      %v558 = vadd.f32 %v448, %v557
      %559 = vmatmul.f32.gmra.mxu0 %v491
      %v560 = vpop.f32.mrf.mxu0
      %v561 = vadd.f32 %v448, %v560
      %562 = vmatmul.f32.gmra.mxu0 %v494
      %v563 = vpop.f32.mrf.mxu0
      %v564 = vadd.f32 %v448, %v563
      %565 = vmatmul.f32.gmra.mxu0 %v497
      %v566 = vpop.f32.mrf.mxu0
      %v567 = vadd.f32 %v448, %v566
      %568 = vmatmul.f32.gmra.mxu0 %v500
      %v569 = vpop.f32.mrf.mxu0
      %v570 = vadd.f32 %v448, %v569
      %571 = vmatmul.f32.gmra.mxu0 %v503
      %v572 = vpop.f32.mrf.mxu0
      %v573 = vadd.f32 %v448, %v572
      %574 = vdwg.mxu0
      %575 = vmatpush.msra.mxu0 0.0
      %576 = vmatpush.msra.mxu0 0.0
      %577 = vmatpush.msra.mxu0 0.0
      %578 = vmatpush.msra.mxu0 0.0
      %579 = vmatpush.msra.mxu0 0.0
      %580 = vmatpush.msra.mxu0 0.0
      %581 = vmatpush.msra.mxu0 0.0
      %582 = vmatpush.msra.mxu0 0.0
      %583 = vmatpush.msra.mxu0 0.0
      %584 = vmatpush.msra.mxu0 0.0
      %585 = vmatpush.msra.mxu0 0.0
      %586 = vmatpush.msra.mxu0 0.0
      %587 = vmatpush.msra.mxu0 0.0
      %588 = vmatpush.msra.mxu0 0.0
      %589 = vmatpush.msra.mxu0 0.0
      %590 = vmatpush.msra.mxu0 %v508
      %591 = vmatmul.f32.gmra.mxu0 %v458
      %v592 = vpop.f32.mrf.mxu0
      %v593 = vadd.f32 %v449, %v592
      %594 = vmatmul.f32.gmra.mxu0 %v461
      %v595 = vpop.f32.mrf.mxu0
      %v596 = vadd.f32 %v449, %v595
      %597 = vmatmul.f32.gmra.mxu0 %v464
      %v598 = vpop.f32.mrf.mxu0
      %v599 = vadd.f32 %v449, %v598
      %600 = vmatmul.f32.gmra.mxu0 %v467
      %v601 = vpop.f32.mrf.mxu0
      %v602 = vadd.f32 %v449, %v601
      %603 = vmatmul.f32.gmra.mxu0 %v470
      %v604 = vpop.f32.mrf.mxu0
      %v605 = vadd.f32 %v449, %v604
      %606 = vmatmul.f32.gmra.mxu0 %v473
      %v607 = vpop.f32.mrf.mxu0
      %v608 = vadd.f32 %v449, %v607
      %609 = vmatmul.f32.gmra.mxu0 %v476
      %v610 = vpop.f32.mrf.mxu0
      %v611 = vadd.f32 %v449, %v610
      %612 = vmatmul.f32.gmra.mxu0 %v479
      %v613 = vpop.f32.mrf.mxu0
      %v614 = vadd.f32 %v449, %v613
      %615 = vmatmul.f32.gmra.mxu0 %v482
      %v616 = vpop.f32.mrf.mxu0
      %v617 = vadd.f32 %v449, %v616
      %618 = vmatmul.f32.gmra.mxu0 %v485
      %v619 = vpop.f32.mrf.mxu0
      %v620 = vadd.f32 %v449, %v619
      %621 = vmatmul.f32.gmra.mxu0 %v488
      %v622 = vpop.f32.mrf.mxu0
      %v623 = vadd.f32 %v449, %v622
      %624 = vmatmul.f32.gmra.mxu0 %v491
      %v625 = vpop.f32.mrf.mxu0
      %v626 = vadd.f32 %v449, %v625
      %627 = vmatmul.f32.gmra.mxu0 %v494
      %v628 = vpop.f32.mrf.mxu0
      %v629 = vadd.f32 %v449, %v628
      %630 = vmatmul.f32.gmra.mxu0 %v497
      %v631 = vpop.f32.mrf.mxu0
      %v632 = vadd.f32 %v449, %v631
      %633 = vmatmul.f32.gmra.mxu0 %v500
      %v634 = vpop.f32.mrf.mxu0
      %v635 = vadd.f32 %v449, %v634
      %636 = vmatmul.f32.gmra.mxu0 %v503
      %v637 = vpop.f32.mrf.mxu0
      %v638 = vadd.f32 %v449, %v637
      %639 = vdwg.mxu0
      %640 = vst [vmem:[%s255] sm:$0xff] %v528
      %641 = vst.msk [vmem:[%s255 + $0x8] sm:$0xff] %vm275, %v593
      %642 = vst [vmem:[%s255 + $0x10] sm:$0xff] %v531
      %643 = vst.msk [vmem:[%s255 + $0x18] sm:$0xff] %vm275, %v596
      %644 = vst [vmem:[%s255 + $0x20] sm:$0xff] %v534
      %645 = vst.msk [vmem:[%s255 + $0x28] sm:$0xff] %vm275, %v599
      %646 = vst [vmem:[%s255 + $0x30] sm:$0xff] %v537
      %647 = vst.msk [vmem:[%s255 + $0x38] sm:$0xff] %vm275, %v602
      %648 = vst [vmem:[%s255 + $0x40] sm:$0xff] %v540
      %649 = vst.msk [vmem:[%s255 + $0x48] sm:$0xff] %vm275, %v605
      %650 = vst [vmem:[%s255 + $0x50] sm:$0xff] %v543
      %651 = vst.msk [vmem:[%s255 + $0x58] sm:$0xff] %vm275, %v608
      %652 = vst [vmem:[%s255 + $0x60] sm:$0xff] %v546
      %653 = vst.msk [vmem:[%s255 + $0x68] sm:$0xff] %vm275, %v611
      %654 = vst [vmem:[%s255 + $0x70] sm:$0xff] %v549
      %655 = vst.msk [vmem:[%s255 + $0x78] sm:$0xff] %vm275, %v614
      %656 = vst [vmem:[%s255 + $0x80] sm:$0xff] %v552
      %657 = vst.msk [vmem:[%s255 + $0x88] sm:$0xff] %vm275, %v617
      %658 = vst [vmem:[%s255 + $0x90] sm:$0xff] %v555
      %659 = vst.msk [vmem:[%s255 + $0x98] sm:$0xff] %vm275, %v620
      %660 = vst [vmem:[%s255 + $0xa0] sm:$0xff] %v558
      %661 = vst.msk [vmem:[%s255 + $0xa8] sm:$0xff] %vm275, %v623
      %662 = vst [vmem:[%s255 + $0xb0] sm:$0xff] %v561
      %663 = vst.msk [vmem:[%s255 + $0xb8] sm:$0xff] %vm275, %v626
      %664 = vst [vmem:[%s255 + $0xc0] sm:$0xff] %v564
      %665 = vst.msk [vmem:[%s255 + $0xc8] sm:$0xff] %vm275, %v629
      %666 = vst [vmem:[%s255 + $0xd0] sm:$0xff] %v567
      %667 = vst.msk [vmem:[%s255 + $0xd8] sm:$0xff] %vm275, %v632
      %668 = vst [vmem:[%s255 + $0xe0] sm:$0xff] %v570
      %669 = vst.msk [vmem:[%s255 + $0xe8] sm:$0xff] %vm275, %v635
      %670 = vst [vmem:[%s255 + $0xf0] sm:$0xff] %v573
      %671 = vst.msk [vmem:[%s255 + $0xf8] sm:$0xff] %vm275, %v638
      %s672 = smul.u32 16, %s17
      %p673 = scmp.lt.s32.totalorder %s672, 63
      %s674 = scalar_select %p673, %s672, 63
      %s675 = smul.addr %s674, 2
      %s676 = smul.addr %s675, 8
      %s677 = scalar_lea.vmem %s6, %s676
      // Predicated region
      $region45: #{involution_pallas.2} parent=43 // pred_check
        %p678 = pneg %p166
      $region46: #{involution_pallas.2} parent=43 // pred_check_branch
        %680 = sbr.rel (%p678) target = $region48
      $region47: #{involution_pallas.2} parent=43 // pred_region
        %s681 = smul.u32 16, %s17
      $region48: #{involution_pallas.2} parent=43 // pred_fallthru
        _
    $region44: #{involution_pallas.2} parent=5 // pred_fallthru
      _
    %p682 = scmp.le.s32.totalorder 2, %s12
    // Predicated region
    $region49: #{involution_pallas.2} parent=5 // pred_check
      %p683 = pneg %p682
    $region50: #{involution_pallas.2} parent=5 // pred_check_branch
      %685 = sbr.rel (%p683) target = $region52
    $region51: #{involution_pallas.2} parent=5 // pred_region
      %s686 = ssub.s32 %s12, 2
      // Predicated region
      $region53: #{involution_pallas.2} parent=51 // pred_check
        %p687 = pneg %p172
      $region54: #{involution_pallas.2} parent=51 // pred_check_branch
        %689 = sbr.rel (%p687) target = $region56
      $region55: #{involution_pallas.2} parent=51 // pred_region
        %s690 = smul.u32 16, %s18
        %p691 = scmp.lt.s32.totalorder %s690, 63
        %s692 = scalar_select %p691, %s690, 63
        %s693 = smul.addr %s692, 2
        %s694 = smul.addr %s693, 8
        %s695 = scalar_lea.vmem %s6, %s694
      $region56: #{involution_pallas.2} parent=51 // pred_fallthru
        _
    $region52: #{involution_pallas.2} parent=5 // pred_fallthru
      _
  $region6: #{involution_pallas.2} parent=0 // loop_footer
    %s16 = sadd.s32 1, %s12
  $region7: #{involution_pallas.2} parent=0 // loop_footer_branch
    %11 = sbr.rel target = $region3
  $region8: #{involution_pallas.2} parent=0 // loop_exit
    _

// kernel: involution_pallas.3
$region0: #{involution_pallas.3}
  #allocation0 [shape = 'u32[]', space=smem, size = 0x4, offset = 0x4, fixed_abs, tag = 'smem constant byte address 0x4 - core index']
  #allocation1 [shape = 'u32[72,128]{1,0:T(1,128)}', space=vmem, size = 0x9000, scoped, tag = 'internal scratch']
  %s0 = inlined_call_operand.vmem [shape: f32[2,18,18,16], index: 0, kind: input, shape index: {}]
  %s1 = inlined_call_operand.vmem [shape: f32[2,16,16,9,16], index: 1, kind: input, shape index: {}]
  %s2 = inlined_call_operand.vmem [shape: f32[2,16,16,16], index: 2, kind: output, shape index: {}]
  %s3 = sld [smem:[#allocation0]]
  $region41: #{involution_pallas.3} parent=0
    _
  %s5 = ssub.s32 1, %s3
  %s6 = scalar_select 0, %s5, %s3
  loop: start=0, step=1, limit=6
  $region2: #{involution_pallas.3} parent=0 // loop_pre_header
    _
  $region3: #{involution_pallas.3} parent=0 // loop_header
    %s8 = sphi 0, %s12
    %p9 = scmp.ge.s32.totalorder %s8, 6
    %s15 = sphi 0, %s27
    %s16 = sphi 0, %s23
    %s17 = sphi 0, %s15
    %s18 = sphi 0, %s16
    %s19 = sphi 0, %s17
    %s20 = sphi 0, %s18
    %s30 = sphi 0, %s32
    %s33 = sphi 0, %s30
    %s34 = sphi 0, %s33
    %s50 = sphi 0, %s34
    %s58 = sphi 0, %s60
    %s61 = sphi 0, %s58
    %s62 = sphi 0, %s61
    %s78 = sphi 0, %s62
    %s86 = sphi 0, %s88
    %s89 = sphi 0, %s86
    %s90 = sphi 0, %s89
    %s106 = sphi 0, %s90
  $region4: #{involution_pallas.3} parent=0 // loop_header_branch
    %11 = sbr.rel (%p9) target = $region8
  $region5: #{involution_pallas.3} parent=0 // loop_body
    %s13 = ssub.s32 %s8, 1
    %s14 = ssub.s32 %s8, 2
    %s21 = sadd.s32 1, %s16
    %p22 = scmp.ge.s32.totalorder %s21, 2
    %s23 = scalar_select %p22, 0, %s21
    %s24 = sadd.s32 1, %s15
    %s25 = scalar_select %p22, %s24, %s15
    %p26 = scmp.ge.s32.totalorder %s25, 2
    %s27 = scalar_select %p26, 0, %s25
    %s28 = ssub.s32 %s15, %s27
    %p29 = scmp.eq.s32.totalorder %s28, 0
    %s31 = sadd.s32 %s30, 1
    %s32 = scalar_select %p29, %s30, %s31
    %p35 = pneg %p29
    %p36 = scmp.eq.s32.totalorder %s8, 3
    %p37 = por %p35, %p36
    %p38 = scmp.ne.s32.totalorder %s30, %s33
    %p39 = scmp.eq.s32.totalorder %s8, 0
    %p40 = por %p38, %p39
    %p41 = scmp.ne.s32.totalorder %s30, %s33
    %p42 = scmp.eq.s32.totalorder %s13, 3
    %p43 = por %p41, %p42
    %p44 = scmp.ne.s32.totalorder %s33, %s34
    %p45 = scmp.eq.s32.totalorder %s13, 0
    %p46 = por %p44, %p45
    %p47 = scmp.ne.s32.totalorder %s33, %s34
    %p48 = scmp.eq.s32.totalorder %s14, 3
    %p49 = por %p47, %p48
    %p51 = scmp.ne.s32.totalorder %s34, %s50
    %p52 = scmp.eq.s32.totalorder %s14, 0
    %p53 = por %p51, %p52
    %s54 = ssub.s32 %s15, %s27
    %s55 = ssub.s32 %s16, %s23
    %s56 = sor.u32 %s54, %s55
    %p57 = scmp.eq.s32.totalorder %s56, 0
    %s59 = sadd.s32 %s58, 1
    %s60 = scalar_select %p57, %s58, %s59
    %p63 = pneg %p57
    %p64 = scmp.eq.s32.totalorder %s8, 3
    %p65 = por %p63, %p64
    %p66 = scmp.ne.s32.totalorder %s58, %s61
    %p67 = scmp.eq.s32.totalorder %s8, 0
    %p68 = por %p66, %p67
    %p69 = scmp.ne.s32.totalorder %s58, %s61
    %p70 = scmp.eq.s32.totalorder %s13, 3
    %p71 = por %p69, %p70
    %p72 = scmp.ne.s32.totalorder %s61, %s62
    %p73 = scmp.eq.s32.totalorder %s13, 0
    %p74 = por %p72, %p73
    %p75 = scmp.ne.s32.totalorder %s61, %s62
    %p76 = scmp.eq.s32.totalorder %s14, 3
    %p77 = por %p75, %p76
    %p79 = scmp.ne.s32.totalorder %s62, %s78
    %p80 = scmp.eq.s32.totalorder %s14, 0
    %p81 = por %p79, %p80
    %s82 = ssub.s32 %s15, %s27
    %s83 = ssub.s32 %s16, %s23
    %s84 = sor.u32 %s82, %s83
    %p85 = scmp.eq.s32.totalorder %s84, 0
    %s87 = sadd.s32 %s86, 1
    %s88 = scalar_select %p85, %s86, %s87
    %p91 = pneg %p85
    %p92 = scmp.eq.s32.totalorder %s8, 3
    %p93 = por %p91, %p92
    %p94 = scmp.ne.s32.totalorder %s86, %s89
    %p95 = scmp.eq.s32.totalorder %s8, 0
    %p96 = por %p94, %p95
    %p97 = scmp.ne.s32.totalorder %s86, %s89
    %p98 = scmp.eq.s32.totalorder %s13, 3
    %p99 = por %p97, %p98
    %p100 = scmp.ne.s32.totalorder %s89, %s90
    %p101 = scmp.eq.s32.totalorder %s13, 0
    %p102 = por %p100, %p101
    %p103 = scmp.ne.s32.totalorder %s89, %s90
    %p104 = scmp.eq.s32.totalorder %s14, 3
    %p105 = por %p103, %p104
    %p107 = scmp.ne.s32.totalorder %s90, %s106
    %p108 = scmp.eq.s32.totalorder %s14, 0
    %p109 = por %p107, %p108
    %p110 = scmp.le.s32.totalorder 1, %s8
    %p111 = scmp.lt.s32.totalorder %s8, 5
    %p112 = pnand %p110, %p111
    %p113 = pneg %p112
    // Predicated region
    $region9: #{involution_pallas.3} parent=5 // pred_check
      _
    $region10: #{involution_pallas.3} parent=5 // pred_check_branch
      %115 = sbr.rel (%p112) target = $region12
    $region11: #{involution_pallas.3} parent=5 // pred_region
      %s116 = ssub.s32 %s8, 1
    $region12: #{involution_pallas.3} parent=5 // pred_fallthru
      _
    %p117 = scmp.lt.s32.totalorder %s8, 4
    // Predicated region
    $region13: #{involution_pallas.3} parent=5 // pred_check
      %p118 = pneg %p117
    $region14: #{involution_pallas.3} parent=5 // pred_check_branch
      %120 = sbr.rel (%p118) target = $region16
    $region15: #{involution_pallas.3} parent=5 // pred_region
      // Predicated region
      $region17: #{involution_pallas.3} parent=15 // pred_check
        %p121 = pneg %p40
      $region18: #{involution_pallas.3} parent=15 // pred_check_branch
        %123 = sbr.rel (%p121) target = $region20
      $region19: #{involution_pallas.3} parent=15 // pred_region
        %p124 = scmp.lt.s32.totalorder %s15, 1
        %s125 = scalar_select %p124, %s15, 1
        %s126 = smul.addr %s125, 54
        %s127 = smul.addr %s126, 8
        %s128 = scalar_lea.vmem %s0, %s127
      $region20: #{involution_pallas.3} parent=15 // pred_fallthru
        _
      // Predicated region
      $region21: #{involution_pallas.3} parent=15 // pred_check
        %p129 = pneg %p68
      $region22: #{involution_pallas.3} parent=15 // pred_check_branch
        %131 = sbr.rel (%p129) target = $region24
      $region23: #{involution_pallas.3} parent=15 // pred_region
        %s132 = smul.u32 8, %s16
        %p133 = scmp.lt.s32.totalorder %s15, 1
        %s134 = scalar_select %p133, %s15, 1
        %p135 = scmp.lt.s32.totalorder %s132, 15
        %s136 = scalar_select %p135, %s132, 15
        %s137 = smul.addr %s136, 32
        %s138 = smul.addr %s134, 512
        %s139 = sadd.s32 %s137, %s138
        %s140 = smul.addr %s139, 8
        %s141 = scalar_lea.vmem %s1, %s140
        %s142 = smul.u32 8, %s16
      $region24: #{involution_pallas.3} parent=15 // pred_fallthru
        _
    $region16: #{involution_pallas.3} parent=5 // pred_fallthru
      _
    %p143 = scmp.le.s32.totalorder 1, %s8
    %p144 = scmp.lt.s32.totalorder %s8, 5
    %p145 = pnand %p143, %p144
    %p146 = pneg %p145
    // Predicated region
    $region25: #{involution_pallas.3} parent=5 // pred_check
      _
    $region26: #{involution_pallas.3} parent=5 // pred_check_branch
      %148 = sbr.rel (%p145) target = $region28
    $region27: #{involution_pallas.3} parent=5 // pred_region
      %s149 = ssub.s32 %s8, 1
      %p150 = scmp.lt.s32.totalorder %s17, 1
      %s151 = scalar_select %p150, %s17, 1
      %s152 = smul.addr %s151, 54
      %s153 = smul.addr %s152, 8
      %s154 = scalar_lea.vmem %s0, %s153
      %p155 = pneg %p46
      %p156 = pneg %p43
      %s157 = smul.u32 8, %s18
      %p158 = scmp.lt.s32.totalorder %s17, 1
      %s159 = scalar_select %p158, %s17, 1
      %p160 = scmp.lt.s32.totalorder %s157, 15
      %s161 = scalar_select %p160, %s157, 15
      %s162 = smul.addr %s161, 32
      %s163 = smul.addr %s159, 512
      %s164 = sadd.s32 %s162, %s163
      %s165 = smul.addr %s164, 8
      %s166 = scalar_lea.vmem %s1, %s165
      %p167 = pneg %p74
      %p168 = pneg %p71
      %p169 = pneg %p102
      %p170 = pneg %p99
      %s171 = smul.u32 8, %s18
      %p172 = scmp.lt.s32.totalorder %s17, 1
      %s173 = scalar_select %p172, %s17, 1
      %p174 = scmp.lt.s32.totalorder %s171, 15
      %s175 = scalar_select %p174, %s171, 15
      %s176 = smul.addr %s175, 2
      %s177 = smul.addr %s173, 32
      %s178 = sadd.s32 %s176, %s177
      %s179 = smul.addr %s178, 8
      %s180 = scalar_lea.vmem %s2, %s179
      %p181 = scmp.lt.s32.totalorder %s17, 1
      %s182 = scalar_select %p181, %s17, 1
      %s183 = smul.addr %s182, 54
      %s184 = smul.addr %s183, 8
      %s185 = scalar_lea.vmem %s0, %s184
      %s186 = smul.u32 8, %s18
      %p187 = scmp.lt.s32.totalorder %s17, 1
      %s188 = scalar_select %p187, %s17, 1
      %p189 = scmp.lt.s32.totalorder %s186, 15
      %s190 = scalar_select %p189, %s186, 15
      %s191 = smul.addr %s190, 32
      %s192 = smul.addr %s188, 512
      %s193 = sadd.s32 %s191, %s192
      %s194 = smul.addr %s193, 8
      %s195 = scalar_lea.vmem %s1, %s194
      %s196 = smul.u32 8, %s18
      %s197 = smul.u32 8, %s18
      %p198 = scmp.lt.s32.totalorder %s17, 1
      %s199 = scalar_select %p198, %s17, 1
      %p200 = scmp.lt.s32.totalorder %s197, 15
      %s201 = scalar_select %p200, %s197, 15
      %s202 = smul.addr %s201, 2
      %s203 = smul.addr %s199, 32
      %s204 = sadd.s32 %s202, %s203
      %s205 = smul.addr %s204, 8
      %s206 = scalar_lea.vmem %s2, %s205
      %s207 = smul.u32 8, %s18
      %s208 = smul.u32 %s18, 8
      %s209 = smul.u32 %s208, 24
      %s210 = scalar_lea.vmem %s185, %s209
      %v211 = vld [vmem:[%s210] sm:$0xff]
      %v212 = vld [vmem:[%s210 + $0x8] sm:$0xff]
      %v213 = vld [vmem:[%s210 + $0x10] sm:$0x3]
      %v214 = vld [vmem:[%s210 + $0x18] sm:$0xff]
      %v215 = vld [vmem:[%s210 + $0x20] sm:$0xff]
      %v216 = vld [vmem:[%s210 + $0x28] sm:$0x3]
      %v217 = vld [vmem:[%s210 + $0x30] sm:$0xff]
      %v218 = vld [vmem:[%s210 + $0x38] sm:$0xff]
      %v219 = vld [vmem:[%s210 + $0x40] sm:$0x3]
      %v220 = vld [vmem:[%s210 + $0x48] sm:$0xff]
      %v221 = vld [vmem:[%s210 + $0x50] sm:$0xff]
      %v222 = vld [vmem:[%s210 + $0x58] sm:$0x3]
      %v223 = vld [vmem:[%s210 + $0x60] sm:$0xff]
      %v224 = vld [vmem:[%s210 + $0x68] sm:$0xff]
      %v225 = vld [vmem:[%s210 + $0x70] sm:$0x3]
      %v226 = vld [vmem:[%s210 + $0x78] sm:$0xff]
      %v227 = vld [vmem:[%s210 + $0x80] sm:$0xff]
      %v228 = vld [vmem:[%s210 + $0x88] sm:$0x3]
      %v229 = vld [vmem:[%s210 + $0x90] sm:$0xff]
      %v230 = vld [vmem:[%s210 + $0x98] sm:$0xff]
      %v231 = vld [vmem:[%s210 + $0xa0] sm:$0x3]
      %v232 = vld [vmem:[%s210 + $0xa8] sm:$0xff]
      %v233 = vld [vmem:[%s210 + $0xb0] sm:$0xff]
      %v234 = vld [vmem:[%s210 + $0xb8] sm:$0x3]
      %v235 = vld [vmem:[%s195] sm:$0x1]
      %v236 = vld [vmem:[%s195 + $0x10] sm:$0x1]
      %v237 = vld [vmem:[%s195 + $0x20] sm:$0x1]
      %v238 = vld [vmem:[%s195 + $0x30] sm:$0x1]
      %v239 = vld [vmem:[%s195 + $0x40] sm:$0x1]
      %v240 = vld [vmem:[%s195 + $0x50] sm:$0x1]
      %v241 = vld [vmem:[%s195 + $0x60] sm:$0x1]
      %v242 = vld [vmem:[%s195 + $0x70] sm:$0x1]
      %v243 = vld [vmem:[%s195 + $0x80] sm:$0x1]
      %v244 = vld [vmem:[%s195 + $0x90] sm:$0x1]
      %v245 = vld [vmem:[%s195 + $0xa0] sm:$0x1]
      %v246 = vld [vmem:[%s195 + $0xb0] sm:$0x1]
      %v247 = vld [vmem:[%s195 + $0xc0] sm:$0x1]
      %v248 = vld [vmem:[%s195 + $0xd0] sm:$0x1]
      %v249 = vld [vmem:[%s195 + $0xe0] sm:$0x1]
      %v250 = vld [vmem:[%s195 + $0xf0] sm:$0x1]
      %v251 = vld [vmem:[%s195 + $0x100] sm:$0x1]
      %v252 = vld [vmem:[%s195 + $0x110] sm:$0x1]
      %v253 = vld [vmem:[%s195 + $0x120] sm:$0x1]
      %v254 = vld [vmem:[%s195 + $0x130] sm:$0x1]
      %v255 = vld [vmem:[%s195 + $0x140] sm:$0x1]
      %v256 = vld [vmem:[%s195 + $0x150] sm:$0x1]
      %v257 = vld [vmem:[%s195 + $0x160] sm:$0x1]
      %v258 = vld [vmem:[%s195 + $0x170] sm:$0x1]
      %v259 = vld [vmem:[%s195 + $0x180] sm:$0x1]
      %v260 = vld [vmem:[%s195 + $0x190] sm:$0x1]
      %v261 = vld [vmem:[%s195 + $0x1a0] sm:$0x1]
      %v262 = vld [vmem:[%s195 + $0x1b0] sm:$0x1]
      %v263 = vld [vmem:[%s195 + $0x1c0] sm:$0x1]
      %v264 = vld [vmem:[%s195 + $0x1d0] sm:$0x1]
      %v265 = vld [vmem:[%s195 + $0x1e0] sm:$0x1]
      %v266 = vld [vmem:[%s195 + $0x1f0] sm:$0x1]
      %v267 = vld [vmem:[%s195 + $0x200] sm:$0x1]
      %v268 = vld [vmem:[%s195 + $0x210] sm:$0x1]
      %v269 = vld [vmem:[%s195 + $0x220] sm:$0x1]
      %v270 = vld [vmem:[%s195 + $0x230] sm:$0x1]
      %v271 = vld [vmem:[%s195 + $0x240] sm:$0x1]
      %v272 = vld [vmem:[%s195 + $0x250] sm:$0x1]
      %v273 = vld [vmem:[%s195 + $0x260] sm:$0x1]
      %v274 = vld [vmem:[%s195 + $0x270] sm:$0x1]
      %v275 = vld [vmem:[%s195 + $0x280] sm:$0x1]
      %v276 = vld [vmem:[%s195 + $0x290] sm:$0x1]
      %v277 = vld [vmem:[%s195 + $0x2a0] sm:$0x1]
      %v278 = vld [vmem:[%s195 + $0x2b0] sm:$0x1]
      %v279 = vld [vmem:[%s195 + $0x2c0] sm:$0x1]
      %v280 = vld [vmem:[%s195 + $0x2d0] sm:$0x1]
      %v281 = vld [vmem:[%s195 + $0x2e0] sm:$0x1]
      %v282 = vld [vmem:[%s195 + $0x2f0] sm:$0x1]
      %v283 = vld [vmem:[%s195 + $0x300] sm:$0x1]
      %v284 = vld [vmem:[%s195 + $0x310] sm:$0x1]
      %v285 = vld [vmem:[%s195 + $0x320] sm:$0x1]
      %v286 = vld [vmem:[%s195 + $0x330] sm:$0x1]
      %v287 = vld [vmem:[%s195 + $0x340] sm:$0x1]
      %v288 = vld [vmem:[%s195 + $0x350] sm:$0x1]
      %v289 = vld [vmem:[%s195 + $0x360] sm:$0x1]
      %v290 = vld [vmem:[%s195 + $0x370] sm:$0x1]
      %v291 = vld [vmem:[%s195 + $0x380] sm:$0x1]
      %v292 = vld [vmem:[%s195 + $0x390] sm:$0x1]
      %v293 = vld [vmem:[%s195 + $0x3a0] sm:$0x1]
      %v294 = vld [vmem:[%s195 + $0x3b0] sm:$0x1]
      %v295 = vld [vmem:[%s195 + $0x3c0] sm:$0x1]
      %v296 = vld [vmem:[%s195 + $0x3d0] sm:$0x1]
      %v297 = vld [vmem:[%s195 + $0x3e0] sm:$0x1]
      %v298 = vld [vmem:[%s195 + $0x3f0] sm:$0x1]
      %v299 = vld [vmem:[%s195 + $0x400] sm:$0x1]
      %v300 = vld [vmem:[%s195 + $0x410] sm:$0x1]
      %v301 = vld [vmem:[%s195 + $0x420] sm:$0x1]
      %v302 = vld [vmem:[%s195 + $0x430] sm:$0x1]
      %v303 = vld [vmem:[%s195 + $0x440] sm:$0x1]
      %v304 = vld [vmem:[%s195 + $0x450] sm:$0x1]
      %v305 = vld [vmem:[%s195 + $0x460] sm:$0x1]
      %v306 = vld [vmem:[%s195 + $0x470] sm:$0x1]
      %v307 = vld [vmem:[%s195 + $0x480] sm:$0x1]
      %v308 = vld [vmem:[%s195 + $0x490] sm:$0x1]
      %v309 = vld [vmem:[%s195 + $0x4a0] sm:$0x1]
      %v310 = vld [vmem:[%s195 + $0x4b0] sm:$0x1]
      %v311 = vld [vmem:[%s195 + $0x4c0] sm:$0x1]
      %v312 = vld [vmem:[%s195 + $0x4d0] sm:$0x1]
      %v313 = vld [vmem:[%s195 + $0x4e0] sm:$0x1]
      %v314 = vld [vmem:[%s195 + $0x4f0] sm:$0x1]
      %v315 = vld [vmem:[%s195 + $0x500] sm:$0x1]
      %v316 = vld [vmem:[%s195 + $0x510] sm:$0x1]
      %v317 = vld [vmem:[%s195 + $0x520] sm:$0x1]
      %v318 = vld [vmem:[%s195 + $0x530] sm:$0x1]
      %v319 = vld [vmem:[%s195 + $0x540] sm:$0x1]
      %v320 = vld [vmem:[%s195 + $0x550] sm:$0x1]
      %v321 = vld [vmem:[%s195 + $0x560] sm:$0x1]
      %v322 = vld [vmem:[%s195 + $0x570] sm:$0x1]
      %v323 = vld [vmem:[%s195 + $0x580] sm:$0x1]
      %v324 = vld [vmem:[%s195 + $0x590] sm:$0x1]
      %v325 = vld [vmem:[%s195 + $0x5a0] sm:$0x1]
      %v326 = vld [vmem:[%s195 + $0x5b0] sm:$0x1]
      %v327 = vld [vmem:[%s195 + $0x5c0] sm:$0x1]
      %v328 = vld [vmem:[%s195 + $0x5d0] sm:$0x1]
      %v329 = vld [vmem:[%s195 + $0x5e0] sm:$0x1]
      %v330 = vld [vmem:[%s195 + $0x5f0] sm:$0x1]
      %v331 = vld [vmem:[%s195 + $0x600] sm:$0x1]
      %v332 = vld [vmem:[%s195 + $0x610] sm:$0x1]
      %v333 = vld [vmem:[%s195 + $0x620] sm:$0x1]
      %v334 = vld [vmem:[%s195 + $0x630] sm:$0x1]
      %v335 = vld [vmem:[%s195 + $0x640] sm:$0x1]
      %v336 = vld [vmem:[%s195 + $0x650] sm:$0x1]
      %v337 = vld [vmem:[%s195 + $0x660] sm:$0x1]
      %v338 = vld [vmem:[%s195 + $0x670] sm:$0x1]
      %v339 = vld [vmem:[%s195 + $0x680] sm:$0x1]
      %v340 = vld [vmem:[%s195 + $0x690] sm:$0x1]
      %v341 = vld [vmem:[%s195 + $0x6a0] sm:$0x1]
      %v342 = vld [vmem:[%s195 + $0x6b0] sm:$0x1]
      %v343 = vld [vmem:[%s195 + $0x6c0] sm:$0x1]
      %v344 = vld [vmem:[%s195 + $0x6d0] sm:$0x1]
      %v345 = vld [vmem:[%s195 + $0x6e0] sm:$0x1]
      %v346 = vld [vmem:[%s195 + $0x6f0] sm:$0x1]
      %v347 = vld [vmem:[%s195 + $0x700] sm:$0x1]
      %v348 = vld [vmem:[%s195 + $0x710] sm:$0x1]
      %v349 = vld [vmem:[%s195 + $0x720] sm:$0x1]
      %v350 = vld [vmem:[%s195 + $0x730] sm:$0x1]
      %v351 = vld [vmem:[%s195 + $0x740] sm:$0x1]
      %v352 = vld [vmem:[%s195 + $0x750] sm:$0x1]
      %v353 = vld [vmem:[%s195 + $0x760] sm:$0x1]
      %v354 = vld [vmem:[%s195 + $0x770] sm:$0x1]
      %v355 = vld [vmem:[%s195 + $0x780] sm:$0x1]
      %v356 = vld [vmem:[%s195 + $0x790] sm:$0x1]
      %v357 = vld [vmem:[%s195 + $0x7a0] sm:$0x1]
      %v358 = vld [vmem:[%s195 + $0x7b0] sm:$0x1]
      %v359 = vld [vmem:[%s195 + $0x7c0] sm:$0x1]
      %v360 = vld [vmem:[%s195 + $0x7d0] sm:$0x1]
      %v361 = vld [vmem:[%s195 + $0x7e0] sm:$0x1]
      %v362 = vld [vmem:[%s195 + $0x7f0] sm:$0x1]
      %v379 = vrot.slane %v211, 1
      %v380 = vrot.slane %v211, 2
      %v381 = vrot.slane %v211, 3
      %v382 = vrot.slane %v211, 4
      %v383 = vrot.slane %v211, 5
      %v384 = vrot.slane %v211, 6
      %v385 = vrot.slane %v211, 7
      %v386 = vrot.slane %v212, 1
      %v387 = vrot.slane %v212, 2
      %v388 = vrot.slane %v212, 3
      %v389 = vrot.slane %v212, 4
      %v390 = vrot.slane %v212, 5
      %v391 = vrot.slane %v212, 6
      %v392 = vrot.slane %v212, 7
      %v393 = vrot.slane %v214, 1
      %v394 = vrot.slane %v214, 2
      %v395 = vrot.slane %v214, 3
      %v396 = vrot.slane %v214, 4
      %v397 = vrot.slane %v214, 5
      %v398 = vrot.slane %v214, 6
      %v399 = vrot.slane %v214, 7
      %v400 = vrot.slane %v215, 1
      %v401 = vrot.slane %v215, 2
      %v402 = vrot.slane %v215, 3
      %v403 = vrot.slane %v215, 4
      %v404 = vrot.slane %v215, 5
      %v405 = vrot.slane %v215, 6
      %v406 = vrot.slane %v215, 7
      %v407 = vrot.slane %v217, 1
      %v408 = vrot.slane %v217, 2
      %v409 = vrot.slane %v217, 3
      %v410 = vrot.slane %v217, 4
      %v411 = vrot.slane %v217, 5
      %v412 = vrot.slane %v217, 6
      %v413 = vrot.slane %v217, 7
      %v414 = vrot.slane %v218, 1
      %v415 = vrot.slane %v218, 2
      %v416 = vrot.slane %v218, 3
      %v417 = vrot.slane %v218, 4
      %v418 = vrot.slane %v218, 5
      %v419 = vrot.slane %v218, 6
      %v420 = vrot.slane %v218, 7
      %v421 = vrot.slane %v220, 1
      %v422 = vrot.slane %v220, 2
      %v423 = vrot.slane %v220, 3
      %v424 = vrot.slane %v220, 4
      %v425 = vrot.slane %v220, 5
      %v426 = vrot.slane %v220, 6
      %v427 = vrot.slane %v220, 7
      %v428 = vrot.slane %v221, 1
      %v429 = vrot.slane %v221, 2
      %v430 = vrot.slane %v221, 3
      %v431 = vrot.slane %v221, 4
      %v432 = vrot.slane %v221, 5
      %v433 = vrot.slane %v221, 6
      %v434 = vrot.slane %v221, 7
      %v435 = vrot.slane %v223, 1
      %v436 = vrot.slane %v223, 2
      %v437 = vrot.slane %v223, 3
      %v438 = vrot.slane %v223, 4
      %v439 = vrot.slane %v223, 5
      %v440 = vrot.slane %v223, 6
      %v441 = vrot.slane %v223, 7
      %v442 = vrot.slane %v224, 1
      %v443 = vrot.slane %v224, 2
      %v444 = vrot.slane %v224, 3
      %v445 = vrot.slane %v224, 4
      %v446 = vrot.slane %v224, 5
      %v447 = vrot.slane %v224, 6
      %v448 = vrot.slane %v224, 7
      %v449 = vrot.slane %v226, 1
      %v450 = vrot.slane %v226, 2
      %v451 = vrot.slane %v226, 3
      %v452 = vrot.slane %v226, 4
      %v453 = vrot.slane %v226, 5
      %v454 = vrot.slane %v226, 6
      %v455 = vrot.slane %v226, 7
      %v456 = vrot.slane %v227, 1
      %v457 = vrot.slane %v227, 2
      %v458 = vrot.slane %v227, 3
      %v459 = vrot.slane %v227, 4
      %v460 = vrot.slane %v227, 5
      %v461 = vrot.slane %v227, 6
      %v462 = vrot.slane %v227, 7
      %v463 = vrot.slane %v229, 1
      %v464 = vrot.slane %v229, 2
      %v465 = vrot.slane %v229, 3
      %v466 = vrot.slane %v229, 4
      %v467 = vrot.slane %v229, 5
      %v468 = vrot.slane %v229, 6
      %v469 = vrot.slane %v229, 7
      %v470 = vrot.slane %v230, 1
      %v471 = vrot.slane %v230, 2
      %v472 = vrot.slane %v230, 3
      %v473 = vrot.slane %v230, 4
      %v474 = vrot.slane %v230, 5
      %v475 = vrot.slane %v230, 6
      %v476 = vrot.slane %v230, 7
      %v477 = vrot.slane %v232, 1
      %v478 = vrot.slane %v232, 2
      %v479 = vrot.slane %v232, 3
      %v480 = vrot.slane %v232, 4
      %v481 = vrot.slane %v232, 5
      %v482 = vrot.slane %v232, 6
      %v483 = vrot.slane %v232, 7
      %v484 = vrot.slane %v233, 1
      %v485 = vrot.slane %v233, 2
      %v486 = vrot.slane %v233, 3
      %v487 = vrot.slane %v233, 4
      %v488 = vrot.slane %v233, 5
      %v489 = vrot.slane %v233, 6
      %v490 = vrot.slane %v233, 7
      %v619 = vmul.f32 %v235, %v211
      %v620 = vmul.f32 %v236, %v379
      %v621 = vmul.f32 %v237, %v380
      %v622 = vmul.f32 %v238, %v381
      %v623 = vmul.f32 %v239, %v382
      %v624 = vmul.f32 %v240, %v383
      %v625 = vmul.f32 %v241, %v384
      %v626 = vmul.f32 %v242, %v385
      %v627 = vmul.f32 %v243, %v212
      %v628 = vmul.f32 %v244, %v386
      %v629 = vmul.f32 %v245, %v387
      %v630 = vmul.f32 %v246, %v388
      %v631 = vmul.f32 %v247, %v389
      %v632 = vmul.f32 %v248, %v390
      %v633 = vmul.f32 %v249, %v391
      %v634 = vmul.f32 %v250, %v392
      %v635 = vmul.f32 %v251, %v214
      %v636 = vmul.f32 %v252, %v393
      %v637 = vmul.f32 %v253, %v394
      %v638 = vmul.f32 %v254, %v395
      %v639 = vmul.f32 %v255, %v396
      %v640 = vmul.f32 %v256, %v397
      %v641 = vmul.f32 %v257, %v398
      %v642 = vmul.f32 %v258, %v399
      %v643 = vmul.f32 %v259, %v215
      %v644 = vmul.f32 %v260, %v400
      %v645 = vmul.f32 %v261, %v401
      %v646 = vmul.f32 %v262, %v402
      %v647 = vmul.f32 %v263, %v403
      %v648 = vmul.f32 %v264, %v404
      %v649 = vmul.f32 %v265, %v405
      %v650 = vmul.f32 %v266, %v406
      %v651 = vmul.f32 %v267, %v217
      %v652 = vmul.f32 %v268, %v407
      %v653 = vmul.f32 %v269, %v408
      %v654 = vmul.f32 %v270, %v409
      %v655 = vmul.f32 %v271, %v410
      %v656 = vmul.f32 %v272, %v411
      %v657 = vmul.f32 %v273, %v412
      %v658 = vmul.f32 %v274, %v413
      %v659 = vmul.f32 %v275, %v218
      %v660 = vmul.f32 %v276, %v414
      %v661 = vmul.f32 %v277, %v415
      %v662 = vmul.f32 %v278, %v416
      %v663 = vmul.f32 %v279, %v417
      %v664 = vmul.f32 %v280, %v418
      %v665 = vmul.f32 %v281, %v419
      %v666 = vmul.f32 %v282, %v420
      %v667 = vmul.f32 %v283, %v220
      %v668 = vmul.f32 %v284, %v421
      %v669 = vmul.f32 %v285, %v422
      %v670 = vmul.f32 %v286, %v423
      %v671 = vmul.f32 %v287, %v424
      %v672 = vmul.f32 %v288, %v425
      %v673 = vmul.f32 %v289, %v426
      %v674 = vmul.f32 %v290, %v427
      %v675 = vmul.f32 %v291, %v221
      %v676 = vmul.f32 %v292, %v428
      %v677 = vmul.f32 %v293, %v429
      %v678 = vmul.f32 %v294, %v430
      %v679 = vmul.f32 %v295, %v431
      %v680 = vmul.f32 %v296, %v432
      %v681 = vmul.f32 %v297, %v433
      %v682 = vmul.f32 %v298, %v434
      %v683 = vmul.f32 %v299, %v223
      %v684 = vmul.f32 %v300, %v435
      %v685 = vmul.f32 %v301, %v436
      %v686 = vmul.f32 %v302, %v437
      %v687 = vmul.f32 %v303, %v438
      %v688 = vmul.f32 %v304, %v439
      %v689 = vmul.f32 %v305, %v440
      %v690 = vmul.f32 %v306, %v441
      %v691 = vmul.f32 %v307, %v224
      %v692 = vmul.f32 %v308, %v442
      %v693 = vmul.f32 %v309, %v443
      %v694 = vmul.f32 %v310, %v444
      %v695 = vmul.f32 %v311, %v445
      %v696 = vmul.f32 %v312, %v446
      %v697 = vmul.f32 %v313, %v447
      %v698 = vmul.f32 %v314, %v448
      %v699 = vmul.f32 %v315, %v226
      %v700 = vmul.f32 %v316, %v449
      %v701 = vmul.f32 %v317, %v450
      %v702 = vmul.f32 %v318, %v451
      %v703 = vmul.f32 %v319, %v452
      %v704 = vmul.f32 %v320, %v453
      %v705 = vmul.f32 %v321, %v454
      %v706 = vmul.f32 %v322, %v455
      %v707 = vmul.f32 %v323, %v227
      %v708 = vmul.f32 %v324, %v456
      %v709 = vmul.f32 %v325, %v457
      %v710 = vmul.f32 %v326, %v458
      %v711 = vmul.f32 %v327, %v459
      %v712 = vmul.f32 %v328, %v460
      %v713 = vmul.f32 %v329, %v461
      %v714 = vmul.f32 %v330, %v462
      %v715 = vmul.f32 %v331, %v229
      %v716 = vmul.f32 %v332, %v463
      %v717 = vmul.f32 %v333, %v464
      %v718 = vmul.f32 %v334, %v465
      %v719 = vmul.f32 %v335, %v466
      %v720 = vmul.f32 %v336, %v467
      %v721 = vmul.f32 %v337, %v468
      %v722 = vmul.f32 %v338, %v469
      %v723 = vmul.f32 %v339, %v230
      %v724 = vmul.f32 %v340, %v470
      %v725 = vmul.f32 %v341, %v471
      %v726 = vmul.f32 %v342, %v472
      %v727 = vmul.f32 %v343, %v473
      %v728 = vmul.f32 %v344, %v474
      %v729 = vmul.f32 %v345, %v475
      %v730 = vmul.f32 %v346, %v476
      %v731 = vmul.f32 %v347, %v232
      %v732 = vmul.f32 %v348, %v477
      %v733 = vmul.f32 %v349, %v478
      %v734 = vmul.f32 %v350, %v479
      %v735 = vmul.f32 %v351, %v480
      %v736 = vmul.f32 %v352, %v481
      %v737 = vmul.f32 %v353, %v482
      %v738 = vmul.f32 %v354, %v483
      %v739 = vmul.f32 %v355, %v233
      %v740 = vmul.f32 %v356, %v484
      %v741 = vmul.f32 %v357, %v485
      %v742 = vmul.f32 %v358, %v486
      %v743 = vmul.f32 %v359, %v487
      %v744 = vmul.f32 %v360, %v488
      %v745 = vmul.f32 %v361, %v489
      %v746 = vmul.f32 %v362, %v490
      %v875 = vrot.slane %v620, 7
      %vm876 = vcmask 1041409
      %v877 = vsel %vm876, %v875, %v619
      %v878 = vrot.slane %v621, 6
      %vm879 = vcmask 1042434
      %v880 = vsel %vm879, %v878, %v877
      %v881 = vrot.slane %v622, 5
      %vm882 = vcmask 1043459
      %v883 = vsel %vm882, %v881, %v880
      %v884 = vrot.slane %v623, 4
      %vm885 = vcmask 1044484
      %v886 = vsel %vm885, %v884, %v883
      %v887 = vrot.slane %v624, 3
      %vm888 = vcmask 1045509
      %v889 = vsel %vm888, %v887, %v886
      %v890 = vrot.slane %v625, 2
      %vm891 = vcmask 1046534
      %v892 = vsel %vm891, %v890, %v889
      %v893 = vrot.slane %v626, 1
      %vm894 = vcmask 1047559
      %v895 = vsel %vm894, %v893, %v892
      %v896 = vrot.slane %v628, 7
      %v897 = vsel %vm876, %v896, %v627
      %v898 = vrot.slane %v629, 6
      %v899 = vsel %vm879, %v898, %v897
      %v900 = vrot.slane %v630, 5
      %v901 = vsel %vm882, %v900, %v899
      %v902 = vrot.slane %v631, 4
      %v903 = vsel %vm885, %v902, %v901
      %v904 = vrot.slane %v632, 3
      %v905 = vsel %vm888, %v904, %v903
      %v906 = vrot.slane %v633, 2
      %v907 = vsel %vm891, %v906, %v905
      %v908 = vrot.slane %v634, 1
      %v909 = vsel %vm894, %v908, %v907
      %v910 = vrot.slane %v636, 7
      %v911 = vsel %vm876, %v910, %v635
      %v912 = vrot.slane %v637, 6
      %v913 = vsel %vm879, %v912, %v911
      %v914 = vrot.slane %v638, 5
      %v915 = vsel %vm882, %v914, %v913
      %v916 = vrot.slane %v639, 4
      %v917 = vsel %vm885, %v916, %v915
      %v918 = vrot.slane %v640, 3
      %v919 = vsel %vm888, %v918, %v917
      %v920 = vrot.slane %v641, 2
      %v921 = vsel %vm891, %v920, %v919
      %v922 = vrot.slane %v642, 1
      %v923 = vsel %vm894, %v922, %v921
      %v924 = vrot.slane %v644, 7
      %v925 = vsel %vm876, %v924, %v643
      %v926 = vrot.slane %v645, 6
      %v927 = vsel %vm879, %v926, %v925
      %v928 = vrot.slane %v646, 5
      %v929 = vsel %vm882, %v928, %v927
      %v930 = vrot.slane %v647, 4
      %v931 = vsel %vm885, %v930, %v929
      %v932 = vrot.slane %v648, 3
      %v933 = vsel %vm888, %v932, %v931
      %v934 = vrot.slane %v649, 2
      %v935 = vsel %vm891, %v934, %v933
      %v936 = vrot.slane %v650, 1
      %v937 = vsel %vm894, %v936, %v935
      %v938 = vrot.slane %v652, 7
      %v939 = vsel %vm876, %v938, %v651
      %v940 = vrot.slane %v653, 6
      %v941 = vsel %vm879, %v940, %v939
      %v942 = vrot.slane %v654, 5
      %v943 = vsel %vm882, %v942, %v941
      %v944 = vrot.slane %v655, 4
      %v945 = vsel %vm885, %v944, %v943
      %v946 = vrot.slane %v656, 3
      %v947 = vsel %vm888, %v946, %v945
      %v948 = vrot.slane %v657, 2
      %v949 = vsel %vm891, %v948, %v947
      %v950 = vrot.slane %v658, 1
      %v951 = vsel %vm894, %v950, %v949
      %v952 = vrot.slane %v660, 7
      %v953 = vsel %vm876, %v952, %v659
      %v954 = vrot.slane %v661, 6
      %v955 = vsel %vm879, %v954, %v953
      %v956 = vrot.slane %v662, 5
      %v957 = vsel %vm882, %v956, %v955
      %v958 = vrot.slane %v663, 4
      %v959 = vsel %vm885, %v958, %v957
      %v960 = vrot.slane %v664, 3
      %v961 = vsel %vm888, %v960, %v959
      %v962 = vrot.slane %v665, 2
      %v963 = vsel %vm891, %v962, %v961
      %v964 = vrot.slane %v666, 1
      %v965 = vsel %vm894, %v964, %v963
      %v966 = vrot.slane %v668, 7
      %v967 = vsel %vm876, %v966, %v667
      %v968 = vrot.slane %v669, 6
      %v969 = vsel %vm879, %v968, %v967
      %v970 = vrot.slane %v670, 5
      %v971 = vsel %vm882, %v970, %v969
      %v972 = vrot.slane %v671, 4
      %v973 = vsel %vm885, %v972, %v971
      %v974 = vrot.slane %v672, 3
      %v975 = vsel %vm888, %v974, %v973
      %v976 = vrot.slane %v673, 2
      %v977 = vsel %vm891, %v976, %v975
      %v978 = vrot.slane %v674, 1
      %v979 = vsel %vm894, %v978, %v977
      %v980 = vrot.slane %v676, 7
      %v981 = vsel %vm876, %v980, %v675
      %v982 = vrot.slane %v677, 6
      %v983 = vsel %vm879, %v982, %v981
      %v984 = vrot.slane %v678, 5
      %v985 = vsel %vm882, %v984, %v983
      %v986 = vrot.slane %v679, 4
      %v987 = vsel %vm885, %v986, %v985
      %v988 = vrot.slane %v680, 3
      %v989 = vsel %vm888, %v988, %v987
      %v990 = vrot.slane %v681, 2
      %v991 = vsel %vm891, %v990, %v989
      %v992 = vrot.slane %v682, 1
      %v993 = vsel %vm894, %v992, %v991
      %v994 = vrot.slane %v684, 7
      %v995 = vsel %vm876, %v994, %v683
      %v996 = vrot.slane %v685, 6
      %v997 = vsel %vm879, %v996, %v995
      %v998 = vrot.slane %v686, 5
      %v999 = vsel %vm882, %v998, %v997
      %v1000 = vrot.slane %v687, 4
      %v1001 = vsel %vm885, %v1000, %v999
      %v1002 = vrot.slane %v688, 3
      %v1003 = vsel %vm888, %v1002, %v1001
      %v1004 = vrot.slane %v689, 2
      %v1005 = vsel %vm891, %v1004, %v1003
      %v1006 = vrot.slane %v690, 1
      %v1007 = vsel %vm894, %v1006, %v1005
      %v1008 = vrot.slane %v692, 7
      %v1009 = vsel %vm876, %v1008, %v691
      %v1010 = vrot.slane %v693, 6
      %v1011 = vsel %vm879, %v1010, %v1009
      %v1012 = vrot.slane %v694, 5
      %v1013 = vsel %vm882, %v1012, %v1011
      %v1014 = vrot.slane %v695, 4
      %v1015 = vsel %vm885, %v1014, %v1013
      %v1016 = vrot.slane %v696, 3
      %v1017 = vsel %vm888, %v1016, %v1015
      %v1018 = vrot.slane %v697, 2
      %v1019 = vsel %vm891, %v1018, %v1017
      %v1020 = vrot.slane %v698, 1
      %v1021 = vsel %vm894, %v1020, %v1019
      %v1022 = vrot.slane %v700, 7
      %v1023 = vsel %vm876, %v1022, %v699
      %v1024 = vrot.slane %v701, 6
      %v1025 = vsel %vm879, %v1024, %v1023
      %v1026 = vrot.slane %v702, 5
      %v1027 = vsel %vm882, %v1026, %v1025
      %v1028 = vrot.slane %v703, 4
      %v1029 = vsel %vm885, %v1028, %v1027
      %v1030 = vrot.slane %v704, 3
      %v1031 = vsel %vm888, %v1030, %v1029
      %v1032 = vrot.slane %v705, 2
      %v1033 = vsel %vm891, %v1032, %v1031
      %v1034 = vrot.slane %v706, 1
      %v1035 = vsel %vm894, %v1034, %v1033
      %v1036 = vrot.slane %v708, 7
      %v1037 = vsel %vm876, %v1036, %v707
      %v1038 = vrot.slane %v709, 6
      %v1039 = vsel %vm879, %v1038, %v1037
      %v1040 = vrot.slane %v710, 5
      %v1041 = vsel %vm882, %v1040, %v1039
      %v1042 = vrot.slane %v711, 4
      %v1043 = vsel %vm885, %v1042, %v1041
      %v1044 = vrot.slane %v712, 3
      %v1045 = vsel %vm888, %v1044, %v1043
      %v1046 = vrot.slane %v713, 2
      %v1047 = vsel %vm891, %v1046, %v1045
      %v1048 = vrot.slane %v714, 1
      %v1049 = vsel %vm894, %v1048, %v1047
      %v1050 = vrot.slane %v716, 7
      %v1051 = vsel %vm876, %v1050, %v715
      %v1052 = vrot.slane %v717, 6
      %v1053 = vsel %vm879, %v1052, %v1051
      %v1054 = vrot.slane %v718, 5
      %v1055 = vsel %vm882, %v1054, %v1053
      %v1056 = vrot.slane %v719, 4
      %v1057 = vsel %vm885, %v1056, %v1055
      %v1058 = vrot.slane %v720, 3
      %v1059 = vsel %vm888, %v1058, %v1057
      %v1060 = vrot.slane %v721, 2
      %v1061 = vsel %vm891, %v1060, %v1059
      %v1062 = vrot.slane %v722, 1
      %v1063 = vsel %vm894, %v1062, %v1061
      %v1064 = vrot.slane %v724, 7
      %v1065 = vsel %vm876, %v1064, %v723
      %v1066 = vrot.slane %v725, 6
      %v1067 = vsel %vm879, %v1066, %v1065
      %v1068 = vrot.slane %v726, 5
      %v1069 = vsel %vm882, %v1068, %v1067
      %v1070 = vrot.slane %v727, 4
      %v1071 = vsel %vm885, %v1070, %v1069
      %v1072 = vrot.slane %v728, 3
      %v1073 = vsel %vm888, %v1072, %v1071
      %v1074 = vrot.slane %v729, 2
      %v1075 = vsel %vm891, %v1074, %v1073
      %v1076 = vrot.slane %v730, 1
      %v1077 = vsel %vm894, %v1076, %v1075
      %v1078 = vrot.slane %v732, 7
      %v1079 = vsel %vm876, %v1078, %v731
      %v1080 = vrot.slane %v733, 6
      %v1081 = vsel %vm879, %v1080, %v1079
      %v1082 = vrot.slane %v734, 5
      %v1083 = vsel %vm882, %v1082, %v1081
      %v1084 = vrot.slane %v735, 4
      %v1085 = vsel %vm885, %v1084, %v1083
      %v1086 = vrot.slane %v736, 3
      %v1087 = vsel %vm888, %v1086, %v1085
      %v1088 = vrot.slane %v737, 2
      %v1089 = vsel %vm891, %v1088, %v1087
      %v1090 = vrot.slane %v738, 1
      %v1091 = vsel %vm894, %v1090, %v1089
      %v1092 = vrot.slane %v740, 7
      %v1093 = vsel %vm876, %v1092, %v739
      %v1094 = vrot.slane %v741, 6
      %v1095 = vsel %vm879, %v1094, %v1093
      %v1096 = vrot.slane %v742, 5
      %v1097 = vsel %vm882, %v1096, %v1095
      %v1098 = vrot.slane %v743, 4
      %v1099 = vsel %vm885, %v1098, %v1097
      %v1100 = vrot.slane %v744, 3
      %v1101 = vsel %vm888, %v1100, %v1099
      %v1102 = vrot.slane %v745, 2
      %v1103 = vsel %vm891, %v1102, %v1101
      %v1104 = vrot.slane %v746, 1
      %v1105 = vsel %vm894, %v1104, %v1103
      %vm1122 = vcmask 130048
      %1123 = vst.msk [vmem:[%s206] sm:$0xff] %vm1122, %v895
      %1124 = vst.msk [vmem:[%s206 + $0x8] sm:$0xff] %vm1122, %v909
      %1125 = vst.msk [vmem:[%s206 + $0x10] sm:$0xff] %vm1122, %v923
      %1126 = vst.msk [vmem:[%s206 + $0x18] sm:$0xff] %vm1122, %v937
      %1127 = vst.msk [vmem:[%s206 + $0x20] sm:$0xff] %vm1122, %v951
      %1128 = vst.msk [vmem:[%s206 + $0x28] sm:$0xff] %vm1122, %v965
      %1129 = vst.msk [vmem:[%s206 + $0x30] sm:$0xff] %vm1122, %v979
      %1130 = vst.msk [vmem:[%s206 + $0x38] sm:$0xff] %vm1122, %v993
      %1131 = vst.msk [vmem:[%s206 + $0x40] sm:$0xff] %vm1122, %v1007
      %1132 = vst.msk [vmem:[%s206 + $0x48] sm:$0xff] %vm1122, %v1021
      %1133 = vst.msk [vmem:[%s206 + $0x50] sm:$0xff] %vm1122, %v1035
      %1134 = vst.msk [vmem:[%s206 + $0x58] sm:$0xff] %vm1122, %v1049
      %1135 = vst.msk [vmem:[%s206 + $0x60] sm:$0xff] %vm1122, %v1063
      %1136 = vst.msk [vmem:[%s206 + $0x68] sm:$0xff] %vm1122, %v1077
      %1137 = vst.msk [vmem:[%s206 + $0x70] sm:$0xff] %vm1122, %v1091
      %1138 = vst.msk [vmem:[%s206 + $0x78] sm:$0xff] %vm1122, %v1105
      %v1139 = vld [vmem:[%s195 + $0x1] sm:$0x1]
      %v1140 = vld [vmem:[%s195 + $0x11] sm:$0x1]
      %v1141 = vld [vmem:[%s195 + $0x21] sm:$0x1]
      %v1142 = vld [vmem:[%s195 + $0x31] sm:$0x1]
      %v1143 = vld [vmem:[%s195 + $0x41] sm:$0x1]
      %v1144 = vld [vmem:[%s195 + $0x51] sm:$0x1]
      %v1145 = vld [vmem:[%s195 + $0x61] sm:$0x1]
      %v1146 = vld [vmem:[%s195 + $0x71] sm:$0x1]
      %v1147 = vld [vmem:[%s195 + $0x81] sm:$0x1]
      %v1148 = vld [vmem:[%s195 + $0x91] sm:$0x1]
      %v1149 = vld [vmem:[%s195 + $0xa1] sm:$0x1]
      %v1150 = vld [vmem:[%s195 + $0xb1] sm:$0x1]
      %v1151 = vld [vmem:[%s195 + $0xc1] sm:$0x1]
      %v1152 = vld [vmem:[%s195 + $0xd1] sm:$0x1]
      %v1153 = vld [vmem:[%s195 + $0xe1] sm:$0x1]
      %v1154 = vld [vmem:[%s195 + $0xf1] sm:$0x1]
      %v1155 = vld [vmem:[%s195 + $0x101] sm:$0x1]
      %v1156 = vld [vmem:[%s195 + $0x111] sm:$0x1]
      %v1157 = vld [vmem:[%s195 + $0x121] sm:$0x1]
      %v1158 = vld [vmem:[%s195 + $0x131] sm:$0x1]
      %v1159 = vld [vmem:[%s195 + $0x141] sm:$0x1]
      %v1160 = vld [vmem:[%s195 + $0x151] sm:$0x1]
      %v1161 = vld [vmem:[%s195 + $0x161] sm:$0x1]
      %v1162 = vld [vmem:[%s195 + $0x171] sm:$0x1]
      %v1163 = vld [vmem:[%s195 + $0x181] sm:$0x1]
      %v1164 = vld [vmem:[%s195 + $0x191] sm:$0x1]
      %v1165 = vld [vmem:[%s195 + $0x1a1] sm:$0x1]
      %v1166 = vld [vmem:[%s195 + $0x1b1] sm:$0x1]
      %v1167 = vld [vmem:[%s195 + $0x1c1] sm:$0x1]
      %v1168 = vld [vmem:[%s195 + $0x1d1] sm:$0x1]
      %v1169 = vld [vmem:[%s195 + $0x1e1] sm:$0x1]
      %v1170 = vld [vmem:[%s195 + $0x1f1] sm:$0x1]
      %v1171 = vld [vmem:[%s195 + $0x201] sm:$0x1]
      %v1172 = vld [vmem:[%s195 + $0x211] sm:$0x1]
      %v1173 = vld [vmem:[%s195 + $0x221] sm:$0x1]
      %v1174 = vld [vmem:[%s195 + $0x231] sm:$0x1]
      %v1175 = vld [vmem:[%s195 + $0x241] sm:$0x1]
      %v1176 = vld [vmem:[%s195 + $0x251] sm:$0x1]
      %v1177 = vld [vmem:[%s195 + $0x261] sm:$0x1]
      %v1178 = vld [vmem:[%s195 + $0x271] sm:$0x1]
      %v1179 = vld [vmem:[%s195 + $0x281] sm:$0x1]
      %v1180 = vld [vmem:[%s195 + $0x291] sm:$0x1]
      %v1181 = vld [vmem:[%s195 + $0x2a1] sm:$0x1]
      %v1182 = vld [vmem:[%s195 + $0x2b1] sm:$0x1]
      %v1183 = vld [vmem:[%s195 + $0x2c1] sm:$0x1]
      %v1184 = vld [vmem:[%s195 + $0x2d1] sm:$0x1]
      %v1185 = vld [vmem:[%s195 + $0x2e1] sm:$0x1]
      %v1186 = vld [vmem:[%s195 + $0x2f1] sm:$0x1]
      %v1187 = vld [vmem:[%s195 + $0x301] sm:$0x1]
      %v1188 = vld [vmem:[%s195 + $0x311] sm:$0x1]
      %v1189 = vld [vmem:[%s195 + $0x321] sm:$0x1]
      %v1190 = vld [vmem:[%s195 + $0x331] sm:$0x1]
      %v1191 = vld [vmem:[%s195 + $0x341] sm:$0x1]
      %v1192 = vld [vmem:[%s195 + $0x351] sm:$0x1]
      %v1193 = vld [vmem:[%s195 + $0x361] sm:$0x1]
      %v1194 = vld [vmem:[%s195 + $0x371] sm:$0x1]
      %v1195 = vld [vmem:[%s195 + $0x381] sm:$0x1]
      %v1196 = vld [vmem:[%s195 + $0x391] sm:$0x1]
      %v1197 = vld [vmem:[%s195 + $0x3a1] sm:$0x1]
      %v1198 = vld [vmem:[%s195 + $0x3b1] sm:$0x1]
      %v1199 = vld [vmem:[%s195 + $0x3c1] sm:$0x1]
      %v1200 = vld [vmem:[%s195 + $0x3d1] sm:$0x1]
      %v1201 = vld [vmem:[%s195 + $0x3e1] sm:$0x1]
      %v1202 = vld [vmem:[%s195 + $0x3f1] sm:$0x1]
      %v1203 = vld [vmem:[%s195 + $0x401] sm:$0x1]
      %v1204 = vld [vmem:[%s195 + $0x411] sm:$0x1]
      %v1205 = vld [vmem:[%s195 + $0x421] sm:$0x1]
      %v1206 = vld [vmem:[%s195 + $0x431] sm:$0x1]
      %v1207 = vld [vmem:[%s195 + $0x441] sm:$0x1]
      %v1208 = vld [vmem:[%s195 + $0x451] sm:$0x1]
      %v1209 = vld [vmem:[%s195 + $0x461] sm:$0x1]
      %v1210 = vld [vmem:[%s195 + $0x471] sm:$0x1]
      %v1211 = vld [vmem:[%s195 + $0x481] sm:$0x1]
      %v1212 = vld [vmem:[%s195 + $0x491] sm:$0x1]
      %v1213 = vld [vmem:[%s195 + $0x4a1] sm:$0x1]
      %v1214 = vld [vmem:[%s195 + $0x4b1] sm:$0x1]
      %v1215 = vld [vmem:[%s195 + $0x4c1] sm:$0x1]
      %v1216 = vld [vmem:[%s195 + $0x4d1] sm:$0x1]
      %v1217 = vld [vmem:[%s195 + $0x4e1] sm:$0x1]
      %v1218 = vld [vmem:[%s195 + $0x4f1] sm:$0x1]
      %v1219 = vld [vmem:[%s195 + $0x501] sm:$0x1]
      %v1220 = vld [vmem:[%s195 + $0x511] sm:$0x1]
      %v1221 = vld [vmem:[%s195 + $0x521] sm:$0x1]
      %v1222 = vld [vmem:[%s195 + $0x531] sm:$0x1]
      %v1223 = vld [vmem:[%s195 + $0x541] sm:$0x1]
      %v1224 = vld [vmem:[%s195 + $0x551] sm:$0x1]
      %v1225 = vld [vmem:[%s195 + $0x561] sm:$0x1]
      %v1226 = vld [vmem:[%s195 + $0x571] sm:$0x1]
      %v1227 = vld [vmem:[%s195 + $0x581] sm:$0x1]
      %v1228 = vld [vmem:[%s195 + $0x591] sm:$0x1]
      %v1229 = vld [vmem:[%s195 + $0x5a1] sm:$0x1]
      %v1230 = vld [vmem:[%s195 + $0x5b1] sm:$0x1]
      %v1231 = vld [vmem:[%s195 + $0x5c1] sm:$0x1]
      %v1232 = vld [vmem:[%s195 + $0x5d1] sm:$0x1]
      %v1233 = vld [vmem:[%s195 + $0x5e1] sm:$0x1]
      %v1234 = vld [vmem:[%s195 + $0x5f1] sm:$0x1]
      %v1235 = vld [vmem:[%s195 + $0x601] sm:$0x1]
      %v1236 = vld [vmem:[%s195 + $0x611] sm:$0x1]
      %v1237 = vld [vmem:[%s195 + $0x621] sm:$0x1]
      %v1238 = vld [vmem:[%s195 + $0x631] sm:$0x1]
      %v1239 = vld [vmem:[%s195 + $0x641] sm:$0x1]
      %v1240 = vld [vmem:[%s195 + $0x651] sm:$0x1]
      %v1241 = vld [vmem:[%s195 + $0x661] sm:$0x1]
      %v1242 = vld [vmem:[%s195 + $0x671] sm:$0x1]
      %v1243 = vld [vmem:[%s195 + $0x681] sm:$0x1]
      %v1244 = vld [vmem:[%s195 + $0x691] sm:$0x1]
      %v1245 = vld [vmem:[%s195 + $0x6a1] sm:$0x1]
      %v1246 = vld [vmem:[%s195 + $0x6b1] sm:$0x1]
      %v1247 = vld [vmem:[%s195 + $0x6c1] sm:$0x1]
      %v1248 = vld [vmem:[%s195 + $0x6d1] sm:$0x1]
      %v1249 = vld [vmem:[%s195 + $0x6e1] sm:$0x1]
      %v1250 = vld [vmem:[%s195 + $0x6f1] sm:$0x1]
      %v1251 = vld [vmem:[%s195 + $0x701] sm:$0x1]
      %v1252 = vld [vmem:[%s195 + $0x711] sm:$0x1]
      %v1253 = vld [vmem:[%s195 + $0x721] sm:$0x1]
      %v1254 = vld [vmem:[%s195 + $0x731] sm:$0x1]
      %v1255 = vld [vmem:[%s195 + $0x741] sm:$0x1]
      %v1256 = vld [vmem:[%s195 + $0x751] sm:$0x1]
      %v1257 = vld [vmem:[%s195 + $0x761] sm:$0x1]
      %v1258 = vld [vmem:[%s195 + $0x771] sm:$0x1]
      %v1259 = vld [vmem:[%s195 + $0x781] sm:$0x1]
      %v1260 = vld [vmem:[%s195 + $0x791] sm:$0x1]
      %v1261 = vld [vmem:[%s195 + $0x7a1] sm:$0x1]
      %v1262 = vld [vmem:[%s195 + $0x7b1] sm:$0x1]
      %v1263 = vld [vmem:[%s195 + $0x7c1] sm:$0x1]
      %v1264 = vld [vmem:[%s195 + $0x7d1] sm:$0x1]
      %v1265 = vld [vmem:[%s195 + $0x7e1] sm:$0x1]
      %v1266 = vld [vmem:[%s195 + $0x7f1] sm:$0x1]
      %v1283 = vmul.f32 %v1139, %v379
      %v1284 = vmul.f32 %v1140, %v380
      %v1285 = vmul.f32 %v1141, %v381
      %v1286 = vmul.f32 %v1142, %v382
      %v1287 = vmul.f32 %v1143, %v383
      %v1288 = vmul.f32 %v1144, %v384
      %v1289 = vmul.f32 %v1145, %v385
      %v1290 = vmul.f32 %v1146, %v212
      %v1291 = vmul.f32 %v1147, %v386
      %v1292 = vmul.f32 %v1148, %v387
      %v1293 = vmul.f32 %v1149, %v388
      %v1294 = vmul.f32 %v1150, %v389
      %v1295 = vmul.f32 %v1151, %v390
      %v1296 = vmul.f32 %v1152, %v391
      %v1297 = vmul.f32 %v1153, %v392
      %v1298 = vmul.f32 %v1154, %v213
      %v1299 = vmul.f32 %v1155, %v393
      %v1300 = vmul.f32 %v1156, %v394
      %v1301 = vmul.f32 %v1157, %v395
      %v1302 = vmul.f32 %v1158, %v396
      %v1303 = vmul.f32 %v1159, %v397
      %v1304 = vmul.f32 %v1160, %v398
      %v1305 = vmul.f32 %v1161, %v399
      %v1306 = vmul.f32 %v1162, %v215
      %v1307 = vmul.f32 %v1163, %v400
      %v1308 = vmul.f32 %v1164, %v401
      %v1309 = vmul.f32 %v1165, %v402
      %v1310 = vmul.f32 %v1166, %v403
      %v1311 = vmul.f32 %v1167, %v404
      %v1312 = vmul.f32 %v1168, %v405
      %v1313 = vmul.f32 %v1169, %v406
      %v1314 = vmul.f32 %v1170, %v216
      %v1315 = vmul.f32 %v1171, %v407
      %v1316 = vmul.f32 %v1172, %v408
      %v1317 = vmul.f32 %v1173, %v409
      %v1318 = vmul.f32 %v1174, %v410
      %v1319 = vmul.f32 %v1175, %v411
      %v1320 = vmul.f32 %v1176, %v412
      %v1321 = vmul.f32 %v1177, %v413
      %v1322 = vmul.f32 %v1178, %v218
      %v1323 = vmul.f32 %v1179, %v414
      %v1324 = vmul.f32 %v1180, %v415
      %v1325 = vmul.f32 %v1181, %v416
      %v1326 = vmul.f32 %v1182, %v417
      %v1327 = vmul.f32 %v1183, %v418
      %v1328 = vmul.f32 %v1184, %v419
      %v1329 = vmul.f32 %v1185, %v420
      %v1330 = vmul.f32 %v1186, %v219
      %v1331 = vmul.f32 %v1187, %v421
      %v1332 = vmul.f32 %v1188, %v422
      %v1333 = vmul.f32 %v1189, %v423
      %v1334 = vmul.f32 %v1190, %v424
      %v1335 = vmul.f32 %v1191, %v425
      %v1336 = vmul.f32 %v1192, %v426
      %v1337 = vmul.f32 %v1193, %v427
      %v1338 = vmul.f32 %v1194, %v221
      %v1339 = vmul.f32 %v1195, %v428
      %v1340 = vmul.f32 %v1196, %v429
      %v1341 = vmul.f32 %v1197, %v430
      %v1342 = vmul.f32 %v1198, %v431
      %v1343 = vmul.f32 %v1199, %v432
      %v1344 = vmul.f32 %v1200, %v433
      %v1345 = vmul.f32 %v1201, %v434
      %v1346 = vmul.f32 %v1202, %v222
      %v1347 = vmul.f32 %v1203, %v435
      %v1348 = vmul.f32 %v1204, %v436
      %v1349 = vmul.f32 %v1205, %v437
      %v1350 = vmul.f32 %v1206, %v438
      %v1351 = vmul.f32 %v1207, %v439
      %v1352 = vmul.f32 %v1208, %v440
      %v1353 = vmul.f32 %v1209, %v441
      %v1354 = vmul.f32 %v1210, %v224
      %v1355 = vmul.f32 %v1211, %v442
      %v1356 = vmul.f32 %v1212, %v443
      %v1357 = vmul.f32 %v1213, %v444
      %v1358 = vmul.f32 %v1214, %v445
      %v1359 = vmul.f32 %v1215, %v446
      %v1360 = vmul.f32 %v1216, %v447
      %v1361 = vmul.f32 %v1217, %v448
      %v1362 = vmul.f32 %v1218, %v225
      %v1363 = vmul.f32 %v1219, %v449
      %v1364 = vmul.f32 %v1220, %v450
      %v1365 = vmul.f32 %v1221, %v451
      %v1366 = vmul.f32 %v1222, %v452
      %v1367 = vmul.f32 %v1223, %v453
      %v1368 = vmul.f32 %v1224, %v454
      %v1369 = vmul.f32 %v1225, %v455
      %v1370 = vmul.f32 %v1226, %v227
      %v1371 = vmul.f32 %v1227, %v456
      %v1372 = vmul.f32 %v1228, %v457
      %v1373 = vmul.f32 %v1229, %v458
      %v1374 = vmul.f32 %v1230, %v459
      %v1375 = vmul.f32 %v1231, %v460
      %v1376 = vmul.f32 %v1232, %v461
      %v1377 = vmul.f32 %v1233, %v462
      %v1378 = vmul.f32 %v1234, %v228
      %v1379 = vmul.f32 %v1235, %v463
      %v1380 = vmul.f32 %v1236, %v464
      %v1381 = vmul.f32 %v1237, %v465
      %v1382 = vmul.f32 %v1238, %v466
      %v1383 = vmul.f32 %v1239, %v467
      %v1384 = vmul.f32 %v1240, %v468
      %v1385 = vmul.f32 %v1241, %v469
      %v1386 = vmul.f32 %v1242, %v230
      %v1387 = vmul.f32 %v1243, %v470
      %v1388 = vmul.f32 %v1244, %v471
      %v1389 = vmul.f32 %v1245, %v472
      %v1390 = vmul.f32 %v1246, %v473
      %v1391 = vmul.f32 %v1247, %v474
      %v1392 = vmul.f32 %v1248, %v475
      %v1393 = vmul.f32 %v1249, %v476
      %v1394 = vmul.f32 %v1250, %v231
      %v1395 = vmul.f32 %v1251, %v477
      %v1396 = vmul.f32 %v1252, %v478
      %v1397 = vmul.f32 %v1253, %v479
      %v1398 = vmul.f32 %v1254, %v480
      %v1399 = vmul.f32 %v1255, %v481
      %v1400 = vmul.f32 %v1256, %v482
      %v1401 = vmul.f32 %v1257, %v483
      %v1402 = vmul.f32 %v1258, %v233
      %v1403 = vmul.f32 %v1259, %v484
      %v1404 = vmul.f32 %v1260, %v485
      %v1405 = vmul.f32 %v1261, %v486
      %v1406 = vmul.f32 %v1262, %v487
      %v1407 = vmul.f32 %v1263, %v488
      %v1408 = vmul.f32 %v1264, %v489
      %v1409 = vmul.f32 %v1265, %v490
      %v1410 = vmul.f32 %v1266, %v234
      %v1411 = vld [vmem:[%s206] sm:$0xff]
      %v1412 = vld [vmem:[%s206 + $0x8] sm:$0xff]
      %v1413 = vld [vmem:[%s206 + $0x10] sm:$0xff]
      %v1414 = vld [vmem:[%s206 + $0x18] sm:$0xff]
      %v1415 = vld [vmem:[%s206 + $0x20] sm:$0xff]
      %v1416 = vld [vmem:[%s206 + $0x28] sm:$0xff]
      %v1417 = vld [vmem:[%s206 + $0x30] sm:$0xff]
      %v1418 = vld [vmem:[%s206 + $0x38] sm:$0xff]
      %v1419 = vld [vmem:[%s206 + $0x40] sm:$0xff]
      %v1420 = vld [vmem:[%s206 + $0x48] sm:$0xff]
      %v1421 = vld [vmem:[%s206 + $0x50] sm:$0xff]
      %v1422 = vld [vmem:[%s206 + $0x58] sm:$0xff]
      %v1423 = vld [vmem:[%s206 + $0x60] sm:$0xff]
      %v1424 = vld [vmem:[%s206 + $0x68] sm:$0xff]
      %v1425 = vld [vmem:[%s206 + $0x70] sm:$0xff]
      %v1426 = vld [vmem:[%s206 + $0x78] sm:$0xff]
      %v1555 = vrot.slane %v1284, 7
      %v1556 = vsel %vm876, %v1555, %v1283
      %v1557 = vrot.slane %v1285, 6
      %v1558 = vsel %vm879, %v1557, %v1556
      %v1559 = vrot.slane %v1286, 5
      %v1560 = vsel %vm882, %v1559, %v1558
      %v1561 = vrot.slane %v1287, 4
      %v1562 = vsel %vm885, %v1561, %v1560
      %v1563 = vrot.slane %v1288, 3
      %v1564 = vsel %vm888, %v1563, %v1562
      %v1565 = vrot.slane %v1289, 2
      %v1566 = vsel %vm891, %v1565, %v1564
      %v1567 = vrot.slane %v1290, 1
      %v1568 = vsel %vm894, %v1567, %v1566
      %v1569 = vrot.slane %v1292, 7
      %v1570 = vsel %vm876, %v1569, %v1291
      %v1571 = vrot.slane %v1293, 6
      %v1572 = vsel %vm879, %v1571, %v1570
      %v1573 = vrot.slane %v1294, 5
      %v1574 = vsel %vm882, %v1573, %v1572
      %v1575 = vrot.slane %v1295, 4
      %v1576 = vsel %vm885, %v1575, %v1574
      %v1577 = vrot.slane %v1296, 3
      %v1578 = vsel %vm888, %v1577, %v1576
      %v1579 = vrot.slane %v1297, 2
      %v1580 = vsel %vm891, %v1579, %v1578
      %v1581 = vrot.slane %v1298, 1
      %v1582 = vsel %vm894, %v1581, %v1580
      %v1583 = vrot.slane %v1300, 7
      %v1584 = vsel %vm876, %v1583, %v1299
      %v1585 = vrot.slane %v1301, 6
      %v1586 = vsel %vm879, %v1585, %v1584
      %v1587 = vrot.slane %v1302, 5
      %v1588 = vsel %vm882, %v1587, %v1586
      %v1589 = vrot.slane %v1303, 4
      %v1590 = vsel %vm885, %v1589, %v1588
      %v1591 = vrot.slane %v1304, 3
      %v1592 = vsel %vm888, %v1591, %v1590
      %v1593 = vrot.slane %v1305, 2
      %v1594 = vsel %vm891, %v1593, %v1592
      %v1595 = vrot.slane %v1306, 1
      %v1596 = vsel %vm894, %v1595, %v1594
      %v1597 = vrot.slane %v1308, 7
      %v1598 = vsel %vm876, %v1597, %v1307
      %v1599 = vrot.slane %v1309, 6
      %v1600 = vsel %vm879, %v1599, %v1598
      %v1601 = vrot.slane %v1310, 5
      %v1602 = vsel %vm882, %v1601, %v1600
      %v1603 = vrot.slane %v1311, 4
      %v1604 = vsel %vm885, %v1603, %v1602
      %v1605 = vrot.slane %v1312, 3
      %v1606 = vsel %vm888, %v1605, %v1604
      %v1607 = vrot.slane %v1313, 2
      %v1608 = vsel %vm891, %v1607, %v1606
      %v1609 = vrot.slane %v1314, 1
      %v1610 = vsel %vm894, %v1609, %v1608
      %v1611 = vrot.slane %v1316, 7
      %v1612 = vsel %vm876, %v1611, %v1315
      %v1613 = vrot.slane %v1317, 6
      %v1614 = vsel %vm879, %v1613, %v1612
      %v1615 = vrot.slane %v1318, 5
      %v1616 = vsel %vm882, %v1615, %v1614
      %v1617 = vrot.slane %v1319, 4
      %v1618 = vsel %vm885, %v1617, %v1616
      %v1619 = vrot.slane %v1320, 3
      %v1620 = vsel %vm888, %v1619, %v1618
      %v1621 = vrot.slane %v1321, 2
      %v1622 = vsel %vm891, %v1621, %v1620
      %v1623 = vrot.slane %v1322, 1
      %v1624 = vsel %vm894, %v1623, %v1622
      %v1625 = vrot.slane %v1324, 7
      %v1626 = vsel %vm876, %v1625, %v1323
      %v1627 = vrot.slane %v1325, 6
      %v1628 = vsel %vm879, %v1627, %v1626
      %v1629 = vrot.slane %v1326, 5
      %v1630 = vsel %vm882, %v1629, %v1628
      %v1631 = vrot.slane %v1327, 4
      %v1632 = vsel %vm885, %v1631, %v1630
      %v1633 = vrot.slane %v1328, 3
      %v1634 = vsel %vm888, %v1633, %v1632
      %v1635 = vrot.slane %v1329, 2
      %v1636 = vsel %vm891, %v1635, %v1634
      %v1637 = vrot.slane %v1330, 1
      %v1638 = vsel %vm894, %v1637, %v1636
      %v1639 = vrot.slane %v1332, 7
      %v1640 = vsel %vm876, %v1639, %v1331
      %v1641 = vrot.slane %v1333, 6
      %v1642 = vsel %vm879, %v1641, %v1640
      %v1643 = vrot.slane %v1334, 5
      %v1644 = vsel %vm882, %v1643, %v1642
      %v1645 = vrot.slane %v1335, 4
      %v1646 = vsel %vm885, %v1645, %v1644
      %v1647 = vrot.slane %v1336, 3
      %v1648 = vsel %vm888, %v1647, %v1646
      %v1649 = vrot.slane %v1337, 2
      %v1650 = vsel %vm891, %v1649, %v1648
      %v1651 = vrot.slane %v1338, 1
      %v1652 = vsel %vm894, %v1651, %v1650
      %v1653 = vrot.slane %v1340, 7
      %v1654 = vsel %vm876, %v1653, %v1339
      %v1655 = vrot.slane %v1341, 6
      %v1656 = vsel %vm879, %v1655, %v1654
      %v1657 = vrot.slane %v1342, 5
      %v1658 = vsel %vm882, %v1657, %v1656
      %v1659 = vrot.slane %v1343, 4
      %v1660 = vsel %vm885, %v1659, %v1658
      %v1661 = vrot.slane %v1344, 3
      %v1662 = vsel %vm888, %v1661, %v1660
      %v1663 = vrot.slane %v1345, 2
      %v1664 = vsel %vm891, %v1663, %v1662
      %v1665 = vrot.slane %v1346, 1
      %v1666 = vsel %vm894, %v1665, %v1664
      %v1667 = vrot.slane %v1348, 7
      %v1668 = vsel %vm876, %v1667, %v1347
      %v1669 = vrot.slane %v1349, 6
      %v1670 = vsel %vm879, %v1669, %v1668
      %v1671 = vrot.slane %v1350, 5
      %v1672 = vsel %vm882, %v1671, %v1670
      %v1673 = vrot.slane %v1351, 4
      %v1674 = vsel %vm885, %v1673, %v1672
      %v1675 = vrot.slane %v1352, 3
      %v1676 = vsel %vm888, %v1675, %v1674
      %v1677 = vrot.slane %v1353, 2
      %v1678 = vsel %vm891, %v1677, %v1676
      %v1679 = vrot.slane %v1354, 1
      %v1680 = vsel %vm894, %v1679, %v1678
      %v1681 = vrot.slane %v1356, 7
      %v1682 = vsel %vm876, %v1681, %v1355
      %v1683 = vrot.slane %v1357, 6
      %v1684 = vsel %vm879, %v1683, %v1682
      %v1685 = vrot.slane %v1358, 5
      %v1686 = vsel %vm882, %v1685, %v1684
      %v1687 = vrot.slane %v1359, 4
      %v1688 = vsel %vm885, %v1687, %v1686
      %v1689 = vrot.slane %v1360, 3
      %v1690 = vsel %vm888, %v1689, %v1688
      %v1691 = vrot.slane %v1361, 2
      %v1692 = vsel %vm891, %v1691, %v1690
      %v1693 = vrot.slane %v1362, 1
      %v1694 = vsel %vm894, %v1693, %v1692
      %v1695 = vrot.slane %v1364, 7
      %v1696 = vsel %vm876, %v1695, %v1363
      %v1697 = vrot.slane %v1365, 6
      %v1698 = vsel %vm879, %v1697, %v1696
      %v1699 = vrot.slane %v1366, 5
      %v1700 = vsel %vm882, %v1699, %v1698
      %v1701 = vrot.slane %v1367, 4
      %v1702 = vsel %vm885, %v1701, %v1700
      %v1703 = vrot.slane %v1368, 3
      %v1704 = vsel %vm888, %v1703, %v1702
      %v1705 = vrot.slane %v1369, 2
      %v1706 = vsel %vm891, %v1705, %v1704
      %v1707 = vrot.slane %v1370, 1
      %v1708 = vsel %vm894, %v1707, %v1706
      %v1709 = vrot.slane %v1372, 7
      %v1710 = vsel %vm876, %v1709, %v1371
      %v1711 = vrot.slane %v1373, 6
      %v1712 = vsel %vm879, %v1711, %v1710
      %v1713 = vrot.slane %v1374, 5
      %v1714 = vsel %vm882, %v1713, %v1712
      %v1715 = vrot.slane %v1375, 4
      %v1716 = vsel %vm885, %v1715, %v1714
      %v1717 = vrot.slane %v1376, 3
      %v1718 = vsel %vm888, %v1717, %v1716
      %v1719 = vrot.slane %v1377, 2
      %v1720 = vsel %vm891, %v1719, %v1718
      %v1721 = vrot.slane %v1378, 1
      %v1722 = vsel %vm894, %v1721, %v1720
      %v1723 = vrot.slane %v1380, 7
      %v1724 = vsel %vm876, %v1723, %v1379
      %v1725 = vrot.slane %v1381, 6
      %v1726 = vsel %vm879, %v1725, %v1724
      %v1727 = vrot.slane %v1382, 5
      %v1728 = vsel %vm882, %v1727, %v1726
      %v1729 = vrot.slane %v1383, 4
      %v1730 = vsel %vm885, %v1729, %v1728
      %v1731 = vrot.slane %v1384, 3
      %v1732 = vsel %vm888, %v1731, %v1730
      %v1733 = vrot.slane %v1385, 2
      %v1734 = vsel %vm891, %v1733, %v1732
      %v1735 = vrot.slane %v1386, 1
      %v1736 = vsel %vm894, %v1735, %v1734
      %v1737 = vrot.slane %v1388, 7
      %v1738 = vsel %vm876, %v1737, %v1387
      %v1739 = vrot.slane %v1389, 6
      %v1740 = vsel %vm879, %v1739, %v1738
      %v1741 = vrot.slane %v1390, 5
      %v1742 = vsel %vm882, %v1741, %v1740
      %v1743 = vrot.slane %v1391, 4
      %v1744 = vsel %vm885, %v1743, %v1742
      %v1745 = vrot.slane %v1392, 3
      %v1746 = vsel %vm888, %v1745, %v1744
      %v1747 = vrot.slane %v1393, 2
      %v1748 = vsel %vm891, %v1747, %v1746
      %v1749 = vrot.slane %v1394, 1
      %v1750 = vsel %vm894, %v1749, %v1748
      %v1751 = vrot.slane %v1396, 7
      %v1752 = vsel %vm876, %v1751, %v1395
      %v1753 = vrot.slane %v1397, 6
      %v1754 = vsel %vm879, %v1753, %v1752
      %v1755 = vrot.slane %v1398, 5
      %v1756 = vsel %vm882, %v1755, %v1754
      %v1757 = vrot.slane %v1399, 4
      %v1758 = vsel %vm885, %v1757, %v1756
      %v1759 = vrot.slane %v1400, 3
      %v1760 = vsel %vm888, %v1759, %v1758
      %v1761 = vrot.slane %v1401, 2
      %v1762 = vsel %vm891, %v1761, %v1760
      %v1763 = vrot.slane %v1402, 1
      %v1764 = vsel %vm894, %v1763, %v1762
      %v1765 = vrot.slane %v1404, 7
      %v1766 = vsel %vm876, %v1765, %v1403
      %v1767 = vrot.slane %v1405, 6
      %v1768 = vsel %vm879, %v1767, %v1766
      %v1769 = vrot.slane %v1406, 5
      %v1770 = vsel %vm882, %v1769, %v1768
      %v1771 = vrot.slane %v1407, 4
      %v1772 = vsel %vm885, %v1771, %v1770
      %v1773 = vrot.slane %v1408, 3
      %v1774 = vsel %vm888, %v1773, %v1772
      %v1775 = vrot.slane %v1409, 2
      %v1776 = vsel %vm891, %v1775, %v1774
      %v1777 = vrot.slane %v1410, 1
      %v1778 = vsel %vm894, %v1777, %v1776
      %v1795 = vadd.f32 %v1411, %v1568
      %v1796 = vadd.f32 %v1412, %v1582
      %v1797 = vadd.f32 %v1413, %v1596
      %v1798 = vadd.f32 %v1414, %v1610
      %v1799 = vadd.f32 %v1415, %v1624
      %v1800 = vadd.f32 %v1416, %v1638
      %v1801 = vadd.f32 %v1417, %v1652
      %v1802 = vadd.f32 %v1418, %v1666
      %v1803 = vadd.f32 %v1419, %v1680
      %v1804 = vadd.f32 %v1420, %v1694
      %v1805 = vadd.f32 %v1421, %v1708
      %v1806 = vadd.f32 %v1422, %v1722
      %v1807 = vadd.f32 %v1423, %v1736
      %v1808 = vadd.f32 %v1424, %v1750
      %v1809 = vadd.f32 %v1425, %v1764
      %v1810 = vadd.f32 %v1426, %v1778
      %1811 = vst.msk [vmem:[%s206] sm:$0xff] %vm1122, %v1795
      %1812 = vst.msk [vmem:[%s206 + $0x8] sm:$0xff] %vm1122, %v1796
      %1813 = vst.msk [vmem:[%s206 + $0x10] sm:$0xff] %vm1122, %v1797
      %1814 = vst.msk [vmem:[%s206 + $0x18] sm:$0xff] %vm1122, %v1798
      %1815 = vst.msk [vmem:[%s206 + $0x20] sm:$0xff] %vm1122, %v1799
      %1816 = vst.msk [vmem:[%s206 + $0x28] sm:$0xff] %vm1122, %v1800
      %1817 = vst.msk [vmem:[%s206 + $0x30] sm:$0xff] %vm1122, %v1801
      %1818 = vst.msk [vmem:[%s206 + $0x38] sm:$0xff] %vm1122, %v1802
      %1819 = vst.msk [vmem:[%s206 + $0x40] sm:$0xff] %vm1122, %v1803
      %1820 = vst.msk [vmem:[%s206 + $0x48] sm:$0xff] %vm1122, %v1804
      %1821 = vst.msk [vmem:[%s206 + $0x50] sm:$0xff] %vm1122, %v1805
      %1822 = vst.msk [vmem:[%s206 + $0x58] sm:$0xff] %vm1122, %v1806
      %1823 = vst.msk [vmem:[%s206 + $0x60] sm:$0xff] %vm1122, %v1807
      %1824 = vst.msk [vmem:[%s206 + $0x68] sm:$0xff] %vm1122, %v1808
      %1825 = vst.msk [vmem:[%s206 + $0x70] sm:$0xff] %vm1122, %v1809
      %1826 = vst.msk [vmem:[%s206 + $0x78] sm:$0xff] %vm1122, %v1810
      %v1827 = vld [vmem:[%s195 + $0x2] sm:$0x1]
      %v1828 = vld [vmem:[%s195 + $0x12] sm:$0x1]
      %v1829 = vld [vmem:[%s195 + $0x22] sm:$0x1]
      %v1830 = vld [vmem:[%s195 + $0x32] sm:$0x1]
      %v1831 = vld [vmem:[%s195 + $0x42] sm:$0x1]
      %v1832 = vld [vmem:[%s195 + $0x52] sm:$0x1]
      %v1833 = vld [vmem:[%s195 + $0x62] sm:$0x1]
      %v1834 = vld [vmem:[%s195 + $0x72] sm:$0x1]
      %v1835 = vld [vmem:[%s195 + $0x82] sm:$0x1]
      %v1836 = vld [vmem:[%s195 + $0x92] sm:$0x1]
      %v1837 = vld [vmem:[%s195 + $0xa2] sm:$0x1]
      %v1838 = vld [vmem:[%s195 + $0xb2] sm:$0x1]
      %v1839 = vld [vmem:[%s195 + $0xc2] sm:$0x1]
      %v1840 = vld [vmem:[%s195 + $0xd2] sm:$0x1]
      %v1841 = vld [vmem:[%s195 + $0xe2] sm:$0x1]
      %v1842 = vld [vmem:[%s195 + $0xf2] sm:$0x1]
      %v1843 = vld [vmem:[%s195 + $0x102] sm:$0x1]
      %v1844 = vld [vmem:[%s195 + $0x112] sm:$0x1]
      %v1845 = vld [vmem:[%s195 + $0x122] sm:$0x1]
      %v1846 = vld [vmem:[%s195 + $0x132] sm:$0x1]
      %v1847 = vld [vmem:[%s195 + $0x142] sm:$0x1]
      %v1848 = vld [vmem:[%s195 + $0x152] sm:$0x1]
      %v1849 = vld [vmem:[%s195 + $0x162] sm:$0x1]
      %v1850 = vld [vmem:[%s195 + $0x172] sm:$0x1]
      %v1851 = vld [vmem:[%s195 + $0x182] sm:$0x1]
      %v1852 = vld [vmem:[%s195 + $0x192] sm:$0x1]
      %v1853 = vld [vmem:[%s195 + $0x1a2] sm:$0x1]
      %v1854 = vld [vmem:[%s195 + $0x1b2] sm:$0x1]
      %v1855 = vld [vmem:[%s195 + $0x1c2] sm:$0x1]
      %v1856 = vld [vmem:[%s195 + $0x1d2] sm:$0x1]
      %v1857 = vld [vmem:[%s195 + $0x1e2] sm:$0x1]
      %v1858 = vld [vmem:[%s195 + $0x1f2] sm:$0x1]
      %v1859 = vld [vmem:[%s195 + $0x202] sm:$0x1]
      %v1860 = vld [vmem:[%s195 + $0x212] sm:$0x1]
      %v1861 = vld [vmem:[%s195 + $0x222] sm:$0x1]
      %v1862 = vld [vmem:[%s195 + $0x232] sm:$0x1]
      %v1863 = vld [vmem:[%s195 + $0x242] sm:$0x1]
      %v1864 = vld [vmem:[%s195 + $0x252] sm:$0x1]
      %v1865 = vld [vmem:[%s195 + $0x262] sm:$0x1]
      %v1866 = vld [vmem:[%s195 + $0x272] sm:$0x1]
      %v1867 = vld [vmem:[%s195 + $0x282] sm:$0x1]
      %v1868 = vld [vmem:[%s195 + $0x292] sm:$0x1]
      %v1869 = vld [vmem:[%s195 + $0x2a2] sm:$0x1]
      %v1870 = vld [vmem:[%s195 + $0x2b2] sm:$0x1]
      %v1871 = vld [vmem:[%s195 + $0x2c2] sm:$0x1]
      %v1872 = vld [vmem:[%s195 + $0x2d2] sm:$0x1]
      %v1873 = vld [vmem:[%s195 + $0x2e2] sm:$0x1]
      %v1874 = vld [vmem:[%s195 + $0x2f2] sm:$0x1]
      %v1875 = vld [vmem:[%s195 + $0x302] sm:$0x1]
      %v1876 = vld [vmem:[%s195 + $0x312] sm:$0x1]
      %v1877 = vld [vmem:[%s195 + $0x322] sm:$0x1]
      %v1878 = vld [vmem:[%s195 + $0x332] sm:$0x1]
      %v1879 = vld [vmem:[%s195 + $0x342] sm:$0x1]
      %v1880 = vld [vmem:[%s195 + $0x352] sm:$0x1]
      %v1881 = vld [vmem:[%s195 + $0x362] sm:$0x1]
      %v1882 = vld [vmem:[%s195 + $0x372] sm:$0x1]
      %v1883 = vld [vmem:[%s195 + $0x382] sm:$0x1]
      %v1884 = vld [vmem:[%s195 + $0x392] sm:$0x1]
      %v1885 = vld [vmem:[%s195 + $0x3a2] sm:$0x1]
      %v1886 = vld [vmem:[%s195 + $0x3b2] sm:$0x1]
      %v1887 = vld [vmem:[%s195 + $0x3c2] sm:$0x1]
      %v1888 = vld [vmem:[%s195 + $0x3d2] sm:$0x1]
      %v1889 = vld [vmem:[%s195 + $0x3e2] sm:$0x1]
      %v1890 = vld [vmem:[%s195 + $0x3f2] sm:$0x1]
      %v1891 = vld [vmem:[%s195 + $0x402] sm:$0x1]
      %v1892 = vld [vmem:[%s195 + $0x412] sm:$0x1]
      %v1893 = vld [vmem:[%s195 + $0x422] sm:$0x1]
      %v1894 = vld [vmem:[%s195 + $0x432] sm:$0x1]
      %v1895 = vld [vmem:[%s195 + $0x442] sm:$0x1]
      %v1896 = vld [vmem:[%s195 + $0x452] sm:$0x1]
      %v1897 = vld [vmem:[%s195 + $0x462] sm:$0x1]
      %v1898 = vld [vmem:[%s195 + $0x472] sm:$0x1]
      %v1899 = vld [vmem:[%s195 + $0x482] sm:$0x1]
      %v1900 = vld [vmem:[%s195 + $0x492] sm:$0x1]
      %v1901 = vld [vmem:[%s195 + $0x4a2] sm:$0x1]
      %v1902 = vld [vmem:[%s195 + $0x4b2] sm:$0x1]
      %v1903 = vld [vmem:[%s195 + $0x4c2] sm:$0x1]
      %v1904 = vld [vmem:[%s195 + $0x4d2] sm:$0x1]
      %v1905 = vld [vmem:[%s195 + $0x4e2] sm:$0x1]
      %v1906 = vld [vmem:[%s195 + $0x4f2] sm:$0x1]
      %v1907 = vld [vmem:[%s195 + $0x502] sm:$0x1]
      %v1908 = vld [vmem:[%s195 + $0x512] sm:$0x1]
      %v1909 = vld [vmem:[%s195 + $0x522] sm:$0x1]
      %v1910 = vld [vmem:[%s195 + $0x532] sm:$0x1]
      %v1911 = vld [vmem:[%s195 + $0x542] sm:$0x1]
      %v1912 = vld [vmem:[%s195 + $0x552] sm:$0x1]
      %v1913 = vld [vmem:[%s195 + $0x562] sm:$0x1]
      %v1914 = vld [vmem:[%s195 + $0x572] sm:$0x1]
      %v1915 = vld [vmem:[%s195 + $0x582] sm:$0x1]
      %v1916 = vld [vmem:[%s195 + $0x592] sm:$0x1]
      %v1917 = vld [vmem:[%s195 + $0x5a2] sm:$0x1]
      %v1918 = vld [vmem:[%s195 + $0x5b2] sm:$0x1]
      %v1919 = vld [vmem:[%s195 + $0x5c2] sm:$0x1]
      %v1920 = vld [vmem:[%s195 + $0x5d2] sm:$0x1]
      %v1921 = vld [vmem:[%s195 + $0x5e2] sm:$0x1]
      %v1922 = vld [vmem:[%s195 + $0x5f2] sm:$0x1]
      %v1923 = vld [vmem:[%s195 + $0x602] sm:$0x1]
      %v1924 = vld [vmem:[%s195 + $0x612] sm:$0x1]
      %v1925 = vld [vmem:[%s195 + $0x622] sm:$0x1]
      %v1926 = vld [vmem:[%s195 + $0x632] sm:$0x1]
      %v1927 = vld [vmem:[%s195 + $0x642] sm:$0x1]
      %v1928 = vld [vmem:[%s195 + $0x652] sm:$0x1]
      %v1929 = vld [vmem:[%s195 + $0x662] sm:$0x1]
      %v1930 = vld [vmem:[%s195 + $0x672] sm:$0x1]
      %v1931 = vld [vmem:[%s195 + $0x682] sm:$0x1]
      %v1932 = vld [vmem:[%s195 + $0x692] sm:$0x1]
      %v1933 = vld [vmem:[%s195 + $0x6a2] sm:$0x1]
      %v1934 = vld [vmem:[%s195 + $0x6b2] sm:$0x1]
      %v1935 = vld [vmem:[%s195 + $0x6c2] sm:$0x1]
      %v1936 = vld [vmem:[%s195 + $0x6d2] sm:$0x1]
      %v1937 = vld [vmem:[%s195 + $0x6e2] sm:$0x1]
      %v1938 = vld [vmem:[%s195 + $0x6f2] sm:$0x1]
      %v1939 = vld [vmem:[%s195 + $0x702] sm:$0x1]
      %v1940 = vld [vmem:[%s195 + $0x712] sm:$0x1]
      %v1941 = vld [vmem:[%s195 + $0x722] sm:$0x1]
      %v1942 = vld [vmem:[%s195 + $0x732] sm:$0x1]
      %v1943 = vld [vmem:[%s195 + $0x742] sm:$0x1]
      %v1944 = vld [vmem:[%s195 + $0x752] sm:$0x1]
      %v1945 = vld [vmem:[%s195 + $0x762] sm:$0x1]
      %v1946 = vld [vmem:[%s195 + $0x772] sm:$0x1]
      %v1947 = vld [vmem:[%s195 + $0x782] sm:$0x1]
      %v1948 = vld [vmem:[%s195 + $0x792] sm:$0x1]
      %v1949 = vld [vmem:[%s195 + $0x7a2] sm:$0x1]
      %v1950 = vld [vmem:[%s195 + $0x7b2] sm:$0x1]
      %v1951 = vld [vmem:[%s195 + $0x7c2] sm:$0x1]
      %v1952 = vld [vmem:[%s195 + $0x7d2] sm:$0x1]
      %v1953 = vld [vmem:[%s195 + $0x7e2] sm:$0x1]
      %v1954 = vld [vmem:[%s195 + $0x7f2] sm:$0x1]
      %v1955 = vrot.slane %v213, 1
      %v1956 = vrot.slane %v216, 1
      %v1957 = vrot.slane %v219, 1
      %v1958 = vrot.slane %v222, 1
      %v1959 = vrot.slane %v225, 1
      %v1960 = vrot.slane %v228, 1
      %v1961 = vrot.slane %v231, 1
      %v1962 = vrot.slane %v234, 1
      %v1971 = vmul.f32 %v1827, %v380
      %v1972 = vmul.f32 %v1828, %v381
      %v1973 = vmul.f32 %v1829, %v382
      %v1974 = vmul.f32 %v1830, %v383
      %v1975 = vmul.f32 %v1831, %v384
      %v1976 = vmul.f32 %v1832, %v385
      %v1977 = vmul.f32 %v1833, %v212
      %v1978 = vmul.f32 %v1834, %v386
      %v1979 = vmul.f32 %v1835, %v387
      %v1980 = vmul.f32 %v1836, %v388
      %v1981 = vmul.f32 %v1837, %v389
      %v1982 = vmul.f32 %v1838, %v390
      %v1983 = vmul.f32 %v1839, %v391
      %v1984 = vmul.f32 %v1840, %v392
      %v1985 = vmul.f32 %v1841, %v213
      %v1986 = vmul.f32 %v1842, %v1955
      %v1987 = vmul.f32 %v1843, %v394
      %v1988 = vmul.f32 %v1844, %v395
      %v1989 = vmul.f32 %v1845, %v396
      %v1990 = vmul.f32 %v1846, %v397
      %v1991 = vmul.f32 %v1847, %v398
      %v1992 = vmul.f32 %v1848, %v399
      %v1993 = vmul.f32 %v1849, %v215
      %v1994 = vmul.f32 %v1850, %v400
      %v1995 = vmul.f32 %v1851, %v401
      %v1996 = vmul.f32 %v1852, %v402
      %v1997 = vmul.f32 %v1853, %v403
      %v1998 = vmul.f32 %v1854, %v404
      %v1999 = vmul.f32 %v1855, %v405
      %v2000 = vmul.f32 %v1856, %v406
      %v2001 = vmul.f32 %v1857, %v216
      %v2002 = vmul.f32 %v1858, %v1956
      %v2003 = vmul.f32 %v1859, %v408
      %v2004 = vmul.f32 %v1860, %v409
      %v2005 = vmul.f32 %v1861, %v410
      %v2006 = vmul.f32 %v1862, %v411
      %v2007 = vmul.f32 %v1863, %v412
      %v2008 = vmul.f32 %v1864, %v413
      %v2009 = vmul.f32 %v1865, %v218
      %v2010 = vmul.f32 %v1866, %v414
      %v2011 = vmul.f32 %v1867, %v415
      %v2012 = vmul.f32 %v1868, %v416
      %v2013 = vmul.f32 %v1869, %v417
      %v2014 = vmul.f32 %v1870, %v418
      %v2015 = vmul.f32 %v1871, %v419
      %v2016 = vmul.f32 %v1872, %v420
      %v2017 = vmul.f32 %v1873, %v219
      %v2018 = vmul.f32 %v1874, %v1957
      %v2019 = vmul.f32 %v1875, %v422
      %v2020 = vmul.f32 %v1876, %v423
      %v2021 = vmul.f32 %v1877, %v424
      %v2022 = vmul.f32 %v1878, %v425
      %v2023 = vmul.f32 %v1879, %v426
      %v2024 = vmul.f32 %v1880, %v427
      %v2025 = vmul.f32 %v1881, %v221
      %v2026 = vmul.f32 %v1882, %v428
      %v2027 = vmul.f32 %v1883, %v429
      %v2028 = vmul.f32 %v1884, %v430
      %v2029 = vmul.f32 %v1885, %v431
      %v2030 = vmul.f32 %v1886, %v432
      %v2031 = vmul.f32 %v1887, %v433
      %v2032 = vmul.f32 %v1888, %v434
      %v2033 = vmul.f32 %v1889, %v222
      %v2034 = vmul.f32 %v1890, %v1958
      %v2035 = vmul.f32 %v1891, %v436
      %v2036 = vmul.f32 %v1892, %v437
      %v2037 = vmul.f32 %v1893, %v438
      %v2038 = vmul.f32 %v1894, %v439
      %v2039 = vmul.f32 %v1895, %v440
      %v2040 = vmul.f32 %v1896, %v441
      %v2041 = vmul.f32 %v1897, %v224
      %v2042 = vmul.f32 %v1898, %v442
      %v2043 = vmul.f32 %v1899, %v443
      %v2044 = vmul.f32 %v1900, %v444
      %v2045 = vmul.f32 %v1901, %v445
      %v2046 = vmul.f32 %v1902, %v446
      %v2047 = vmul.f32 %v1903, %v447
      %v2048 = vmul.f32 %v1904, %v448
      %v2049 = vmul.f32 %v1905, %v225
      %v2050 = vmul.f32 %v1906, %v1959
      %v2051 = vmul.f32 %v1907, %v450
      %v2052 = vmul.f32 %v1908, %v451
      %v2053 = vmul.f32 %v1909, %v452
      %v2054 = vmul.f32 %v1910, %v453
      %v2055 = vmul.f32 %v1911, %v454
      %v2056 = vmul.f32 %v1912, %v455
      %v2057 = vmul.f32 %v1913, %v227
      %v2058 = vmul.f32 %v1914, %v456
      %v2059 = vmul.f32 %v1915, %v457
      %v2060 = vmul.f32 %v1916, %v458
      %v2061 = vmul.f32 %v1917, %v459
      %v2062 = vmul.f32 %v1918, %v460
      %v2063 = vmul.f32 %v1919, %v461
      %v2064 = vmul.f32 %v1920, %v462
      %v2065 = vmul.f32 %v1921, %v228
      %v2066 = vmul.f32 %v1922, %v1960
      %v2067 = vmul.f32 %v1923, %v464
      %v2068 = vmul.f32 %v1924, %v465
      %v2069 = vmul.f32 %v1925, %v466
      %v2070 = vmul.f32 %v1926, %v467
      %v2071 = vmul.f32 %v1927, %v468
      %v2072 = vmul.f32 %v1928, %v469
      %v2073 = vmul.f32 %v1929, %v230
      %v2074 = vmul.f32 %v1930, %v470
      %v2075 = vmul.f32 %v1931, %v471
      %v2076 = vmul.f32 %v1932, %v472
      %v2077 = vmul.f32 %v1933, %v473
      %v2078 = vmul.f32 %v1934, %v474
      %v2079 = vmul.f32 %v1935, %v475
      %v2080 = vmul.f32 %v1936, %v476
      %v2081 = vmul.f32 %v1937, %v231
      %v2082 = vmul.f32 %v1938, %v1961
      %v2083 = vmul.f32 %v1939, %v478
      %v2084 = vmul.f32 %v1940, %v479
      %v2085 = vmul.f32 %v1941, %v480
      %v2086 = vmul.f32 %v1942, %v481
      %v2087 = vmul.f32 %v1943, %v482
      %v2088 = vmul.f32 %v1944, %v483
      %v2089 = vmul.f32 %v1945, %v233
      %v2090 = vmul.f32 %v1946, %v484
      %v2091 = vmul.f32 %v1947, %v485
      %v2092 = vmul.f32 %v1948, %v486
      %v2093 = vmul.f32 %v1949, %v487
      %v2094 = vmul.f32 %v1950, %v488
      %v2095 = vmul.f32 %v1951, %v489
      %v2096 = vmul.f32 %v1952, %v490
      %v2097 = vmul.f32 %v1953, %v234
      %v2098 = vmul.f32 %v1954, %v1962
      %v2099 = vld [vmem:[%s206] sm:$0xff]
      %v2100 = vld [vmem:[%s206 + $0x8] sm:$0xff]
      %v2101 = vld [vmem:[%s206 + $0x10] sm:$0xff]
      %v2102 = vld [vmem:[%s206 + $0x18] sm:$0xff]
      %v2103 = vld [vmem:[%s206 + $0x20] sm:$0xff]
      %v2104 = vld [vmem:[%s206 + $0x28] sm:$0xff]
      %v2105 = vld [vmem:[%s206 + $0x30] sm:$0xff]
      %v2106 = vld [vmem:[%s206 + $0x38] sm:$0xff]
      %v2107 = vld [vmem:[%s206 + $0x40] sm:$0xff]
      %v2108 = vld [vmem:[%s206 + $0x48] sm:$0xff]
      %v2109 = vld [vmem:[%s206 + $0x50] sm:$0xff]
      %v2110 = vld [vmem:[%s206 + $0x58] sm:$0xff]
      %v2111 = vld [vmem:[%s206 + $0x60] sm:$0xff]
      %v2112 = vld [vmem:[%s206 + $0x68] sm:$0xff]
      %v2113 = vld [vmem:[%s206 + $0x70] sm:$0xff]
      %v2114 = vld [vmem:[%s206 + $0x78] sm:$0xff]
      %v2243 = vrot.slane %v1972, 7
      %v2244 = vsel %vm876, %v2243, %v1971
      %v2245 = vrot.slane %v1973, 6
      %v2246 = vsel %vm879, %v2245, %v2244
      %v2247 = vrot.slane %v1974, 5
      %v2248 = vsel %vm882, %v2247, %v2246
      %v2249 = vrot.slane %v1975, 4
      %v2250 = vsel %vm885, %v2249, %v2248
      %v2251 = vrot.slane %v1976, 3
      %v2252 = vsel %vm888, %v2251, %v2250
      %v2253 = vrot.slane %v1977, 2
      %v2254 = vsel %vm891, %v2253, %v2252
      %v2255 = vrot.slane %v1978, 1
      %v2256 = vsel %vm894, %v2255, %v2254
      %v2257 = vrot.slane %v1980, 7
      %v2258 = vsel %vm876, %v2257, %v1979
      %v2259 = vrot.slane %v1981, 6
      %v2260 = vsel %vm879, %v2259, %v2258
      %v2261 = vrot.slane %v1982, 5
      %v2262 = vsel %vm882, %v2261, %v2260
      %v2263 = vrot.slane %v1983, 4
      %v2264 = vsel %vm885, %v2263, %v2262
      %v2265 = vrot.slane %v1984, 3
      %v2266 = vsel %vm888, %v2265, %v2264
      %v2267 = vrot.slane %v1985, 2
      %v2268 = vsel %vm891, %v2267, %v2266
      %v2269 = vrot.slane %v1986, 1
      %v2270 = vsel %vm894, %v2269, %v2268
      %v2271 = vrot.slane %v1988, 7
      %v2272 = vsel %vm876, %v2271, %v1987
      %v2273 = vrot.slane %v1989, 6
      %v2274 = vsel %vm879, %v2273, %v2272
      %v2275 = vrot.slane %v1990, 5
      %v2276 = vsel %vm882, %v2275, %v2274
      %v2277 = vrot.slane %v1991, 4
      %v2278 = vsel %vm885, %v2277, %v2276
      %v2279 = vrot.slane %v1992, 3
      %v2280 = vsel %vm888, %v2279, %v2278
      %v2281 = vrot.slane %v1993, 2
      %v2282 = vsel %vm891, %v2281, %v2280
      %v2283 = vrot.slane %v1994, 1
      %v2284 = vsel %vm894, %v2283, %v2282
      %v2285 = vrot.slane %v1996, 7
      %v2286 = vsel %vm876, %v2285, %v1995
      %v2287 = vrot.slane %v1997, 6
      %v2288 = vsel %vm879, %v2287, %v2286
      %v2289 = vrot.slane %v1998, 5
      %v2290 = vsel %vm882, %v2289, %v2288
      %v2291 = vrot.slane %v1999, 4
      %v2292 = vsel %vm885, %v2291, %v2290
      %v2293 = vrot.slane %v2000, 3
      %v2294 = vsel %vm888, %v2293, %v2292
      %v2295 = vrot.slane %v2001, 2
      %v2296 = vsel %vm891, %v2295, %v2294
      %v2297 = vrot.slane %v2002, 1
      %v2298 = vsel %vm894, %v2297, %v2296
      %v2299 = vrot.slane %v2004, 7
      %v2300 = vsel %vm876, %v2299, %v2003
      %v2301 = vrot.slane %v2005, 6
      %v2302 = vsel %vm879, %v2301, %v2300
      %v2303 = vrot.slane %v2006, 5
      %v2304 = vsel %vm882, %v2303, %v2302
      %v2305 = vrot.slane %v2007, 4
      %v2306 = vsel %vm885, %v2305, %v2304
      %v2307 = vrot.slane %v2008, 3
      %v2308 = vsel %vm888, %v2307, %v2306
      %v2309 = vrot.slane %v2009, 2
      %v2310 = vsel %vm891, %v2309, %v2308
      %v2311 = vrot.slane %v2010, 1
      %v2312 = vsel %vm894, %v2311, %v2310
      %v2313 = vrot.slane %v2012, 7
      %v2314 = vsel %vm876, %v2313, %v2011
      %v2315 = vrot.slane %v2013, 6
      %v2316 = vsel %vm879, %v2315, %v2314
      %v2317 = vrot.slane %v2014, 5
      %v2318 = vsel %vm882, %v2317, %v2316
      %v2319 = vrot.slane %v2015, 4
      %v2320 = vsel %vm885, %v2319, %v2318
      %v2321 = vrot.slane %v2016, 3
      %v2322 = vsel %vm888, %v2321, %v2320
      %v2323 = vrot.slane %v2017, 2
      %v2324 = vsel %vm891, %v2323, %v2322
      %v2325 = vrot.slane %v2018, 1
      %v2326 = vsel %vm894, %v2325, %v2324
      %v2327 = vrot.slane %v2020, 7
      %v2328 = vsel %vm876, %v2327, %v2019
      %v2329 = vrot.slane %v2021, 6
      %v2330 = vsel %vm879, %v2329, %v2328
      %v2331 = vrot.slane %v2022, 5
      %v2332 = vsel %vm882, %v2331, %v2330
      %v2333 = vrot.slane %v2023, 4
      %v2334 = vsel %vm885, %v2333, %v2332
      %v2335 = vrot.slane %v2024, 3
      %v2336 = vsel %vm888, %v2335, %v2334
      %v2337 = vrot.slane %v2025, 2
      %v2338 = vsel %vm891, %v2337, %v2336
      %v2339 = vrot.slane %v2026, 1
      %v2340 = vsel %vm894, %v2339, %v2338
      %v2341 = vrot.slane %v2028, 7
      %v2342 = vsel %vm876, %v2341, %v2027
      %v2343 = vrot.slane %v2029, 6
      %v2344 = vsel %vm879, %v2343, %v2342
      %v2345 = vrot.slane %v2030, 5
      %v2346 = vsel %vm882, %v2345, %v2344
      %v2347 = vrot.slane %v2031, 4
      %v2348 = vsel %vm885, %v2347, %v2346
      %v2349 = vrot.slane %v2032, 3
      %v2350 = vsel %vm888, %v2349, %v2348
      %v2351 = vrot.slane %v2033, 2
      %v2352 = vsel %vm891, %v2351, %v2350
      %v2353 = vrot.slane %v2034, 1
      %v2354 = vsel %vm894, %v2353, %v2352
      %v2355 = vrot.slane %v2036, 7
      %v2356 = vsel %vm876, %v2355, %v2035
      %v2357 = vrot.slane %v2037, 6
      %v2358 = vsel %vm879, %v2357, %v2356
      %v2359 = vrot.slane %v2038, 5
      %v2360 = vsel %vm882, %v2359, %v2358
      %v2361 = vrot.slane %v2039, 4
      %v2362 = vsel %vm885, %v2361, %v2360
      %v2363 = vrot.slane %v2040, 3
      %v2364 = vsel %vm888, %v2363, %v2362
      %v2365 = vrot.slane %v2041, 2
      %v2366 = vsel %vm891, %v2365, %v2364
      %v2367 = vrot.slane %v2042, 1
      %v2368 = vsel %vm894, %v2367, %v2366
      %v2369 = vrot.slane %v2044, 7
      %v2370 = vsel %vm876, %v2369, %v2043
      %v2371 = vrot.slane %v2045, 6
      %v2372 = vsel %vm879, %v2371, %v2370
      %v2373 = vrot.slane %v2046, 5
      %v2374 = vsel %vm882, %v2373, %v2372
      %v2375 = vrot.slane %v2047, 4
      %v2376 = vsel %vm885, %v2375, %v2374
      %v2377 = vrot.slane %v2048, 3
      %v2378 = vsel %vm888, %v2377, %v2376
      %v2379 = vrot.slane %v2049, 2
      %v2380 = vsel %vm891, %v2379, %v2378
      %v2381 = vrot.slane %v2050, 1
      %v2382 = vsel %vm894, %v2381, %v2380
      %v2383 = vrot.slane %v2052, 7
      %v2384 = vsel %vm876, %v2383, %v2051
      %v2385 = vrot.slane %v2053, 6
      %v2386 = vsel %vm879, %v2385, %v2384
      %v2387 = vrot.slane %v2054, 5
      %v2388 = vsel %vm882, %v2387, %v2386
      %v2389 = vrot.slane %v2055, 4
      %v2390 = vsel %vm885, %v2389, %v2388
      %v2391 = vrot.slane %v2056, 3
      %v2392 = vsel %vm888, %v2391, %v2390
      %v2393 = vrot.slane %v2057, 2
      %v2394 = vsel %vm891, %v2393, %v2392
      %v2395 = vrot.slane %v2058, 1
      %v2396 = vsel %vm894, %v2395, %v2394
      %v2397 = vrot.slane %v2060, 7
      %v2398 = vsel %vm876, %v2397, %v2059
      %v2399 = vrot.slane %v2061, 6
      %v2400 = vsel %vm879, %v2399, %v2398
      %v2401 = vrot.slane %v2062, 5
      %v2402 = vsel %vm882, %v2401, %v2400
      %v2403 = vrot.slane %v2063, 4
      %v2404 = vsel %vm885, %v2403, %v2402
      %v2405 = vrot.slane %v2064, 3
      %v2406 = vsel %vm888, %v2405, %v2404
      %v2407 = vrot.slane %v2065, 2
      %v2408 = vsel %vm891, %v2407, %v2406
      %v2409 = vrot.slane %v2066, 1
      %v2410 = vsel %vm894, %v2409, %v2408
      %v2411 = vrot.slane %v2068, 7
      %v2412 = vsel %vm876, %v2411, %v2067
      %v2413 = vrot.slane %v2069, 6
      %v2414 = vsel %vm879, %v2413, %v2412
      %v2415 = vrot.slane %v2070, 5
      %v2416 = vsel %vm882, %v2415, %v2414
      %v2417 = vrot.slane %v2071, 4
      %v2418 = vsel %vm885, %v2417, %v2416
      %v2419 = vrot.slane %v2072, 3
      %v2420 = vsel %vm888, %v2419, %v2418
      %v2421 = vrot.slane %v2073, 2
      %v2422 = vsel %vm891, %v2421, %v2420
      %v2423 = vrot.slane %v2074, 1
      %v2424 = vsel %vm894, %v2423, %v2422
      %v2425 = vrot.slane %v2076, 7
      %v2426 = vsel %vm876, %v2425, %v2075
      %v2427 = vrot.slane %v2077, 6
      %v2428 = vsel %vm879, %v2427, %v2426
      %v2429 = vrot.slane %v2078, 5
      %v2430 = vsel %vm882, %v2429, %v2428
      %v2431 = vrot.slane %v2079, 4
      %v2432 = vsel %vm885, %v2431, %v2430
      %v2433 = vrot.slane %v2080, 3
      %v2434 = vsel %vm888, %v2433, %v2432
      %v2435 = vrot.slane %v2081, 2
      %v2436 = vsel %vm891, %v2435, %v2434
      %v2437 = vrot.slane %v2082, 1
      %v2438 = vsel %vm894, %v2437, %v2436
      %v2439 = vrot.slane %v2084, 7
      %v2440 = vsel %vm876, %v2439, %v2083
      %v2441 = vrot.slane %v2085, 6
      %v2442 = vsel %vm879, %v2441, %v2440
      %v2443 = vrot.slane %v2086, 5
      %v2444 = vsel %vm882, %v2443, %v2442
      %v2445 = vrot.slane %v2087, 4
      %v2446 = vsel %vm885, %v2445, %v2444
      %v2447 = vrot.slane %v2088, 3
      %v2448 = vsel %vm888, %v2447, %v2446
      %v2449 = vrot.slane %v2089, 2
      %v2450 = vsel %vm891, %v2449, %v2448
      %v2451 = vrot.slane %v2090, 1
      %v2452 = vsel %vm894, %v2451, %v2450
      %v2453 = vrot.slane %v2092, 7
      %v2454 = vsel %vm876, %v2453, %v2091
      %v2455 = vrot.slane %v2093, 6
      %v2456 = vsel %vm879, %v2455, %v2454
      %v2457 = vrot.slane %v2094, 5
      %v2458 = vsel %vm882, %v2457, %v2456
      %v2459 = vrot.slane %v2095, 4
      %v2460 = vsel %vm885, %v2459, %v2458
      %v2461 = vrot.slane %v2096, 3
      %v2462 = vsel %vm888, %v2461, %v2460
      %v2463 = vrot.slane %v2097, 2
      %v2464 = vsel %vm891, %v2463, %v2462
      %v2465 = vrot.slane %v2098, 1
      %v2466 = vsel %vm894, %v2465, %v2464
      %v2483 = vadd.f32 %v2099, %v2256
      %v2484 = vadd.f32 %v2100, %v2270
      %v2485 = vadd.f32 %v2101, %v2284
      %v2486 = vadd.f32 %v2102, %v2298
      %v2487 = vadd.f32 %v2103, %v2312
      %v2488 = vadd.f32 %v2104, %v2326
      %v2489 = vadd.f32 %v2105, %v2340
      %v2490 = vadd.f32 %v2106, %v2354
      %v2491 = vadd.f32 %v2107, %v2368
      %v2492 = vadd.f32 %v2108, %v2382
      %v2493 = vadd.f32 %v2109, %v2396
      %v2494 = vadd.f32 %v2110, %v2410
      %v2495 = vadd.f32 %v2111, %v2424
      %v2496 = vadd.f32 %v2112, %v2438
      %v2497 = vadd.f32 %v2113, %v2452
      %v2498 = vadd.f32 %v2114, %v2466
      %2499 = vst.msk [vmem:[%s206] sm:$0xff] %vm1122, %v2483
      %2500 = vst.msk [vmem:[%s206 + $0x8] sm:$0xff] %vm1122, %v2484
      %2501 = vst.msk [vmem:[%s206 + $0x10] sm:$0xff] %vm1122, %v2485
      %2502 = vst.msk [vmem:[%s206 + $0x18] sm:$0xff] %vm1122, %v2486
      %2503 = vst.msk [vmem:[%s206 + $0x20] sm:$0xff] %vm1122, %v2487
      %2504 = vst.msk [vmem:[%s206 + $0x28] sm:$0xff] %vm1122, %v2488
      %2505 = vst.msk [vmem:[%s206 + $0x30] sm:$0xff] %vm1122, %v2489
      %2506 = vst.msk [vmem:[%s206 + $0x38] sm:$0xff] %vm1122, %v2490
      %2507 = vst.msk [vmem:[%s206 + $0x40] sm:$0xff] %vm1122, %v2491
      %2508 = vst.msk [vmem:[%s206 + $0x48] sm:$0xff] %vm1122, %v2492
      %2509 = vst.msk [vmem:[%s206 + $0x50] sm:$0xff] %vm1122, %v2493
      %2510 = vst.msk [vmem:[%s206 + $0x58] sm:$0xff] %vm1122, %v2494
      %2511 = vst.msk [vmem:[%s206 + $0x60] sm:$0xff] %vm1122, %v2495
      %2512 = vst.msk [vmem:[%s206 + $0x68] sm:$0xff] %vm1122, %v2496
      %2513 = vst.msk [vmem:[%s206 + $0x70] sm:$0xff] %vm1122, %v2497
      %2514 = vst.msk [vmem:[%s206 + $0x78] sm:$0xff] %vm1122, %v2498
      %s2515 = sadd.s32 %s208, 1
      %s2516 = smul.u32 %s2515, 24
      %s2517 = scalar_lea.vmem %s185, %s2516
      %v2518 = vld [vmem:[%s2517] sm:$0xff]
      %v2519 = vld [vmem:[%s2517 + $0x8] sm:$0xff]
      %v2520 = vld [vmem:[%s2517 + $0x10] sm:$0x3]
      %v2521 = vld [vmem:[%s2517 + $0x18] sm:$0xff]
      %v2522 = vld [vmem:[%s2517 + $0x20] sm:$0xff]
      %v2523 = vld [vmem:[%s2517 + $0x28] sm:$0x3]
      %v2524 = vld [vmem:[%s2517 + $0x30] sm:$0xff]
      %v2525 = vld [vmem:[%s2517 + $0x38] sm:$0xff]
      %v2526 = vld [vmem:[%s2517 + $0x40] sm:$0x3]
      %v2527 = vld [vmem:[%s2517 + $0x48] sm:$0xff]
      %v2528 = vld [vmem:[%s2517 + $0x50] sm:$0xff]
      %v2529 = vld [vmem:[%s2517 + $0x58] sm:$0x3]
      %v2530 = vld [vmem:[%s2517 + $0x60] sm:$0xff]
      %v2531 = vld [vmem:[%s2517 + $0x68] sm:$0xff]
      %v2532 = vld [vmem:[%s2517 + $0x70] sm:$0x3]
      %v2533 = vld [vmem:[%s2517 + $0x78] sm:$0xff]
      %v2534 = vld [vmem:[%s2517 + $0x80] sm:$0xff]
      %v2535 = vld [vmem:[%s2517 + $0x88] sm:$0x3]
      %v2536 = vld [vmem:[%s2517 + $0x90] sm:$0xff]
      %v2537 = vld [vmem:[%s2517 + $0x98] sm:$0xff]
      %v2538 = vld [vmem:[%s2517 + $0xa0] sm:$0x3]
      %v2539 = vld [vmem:[%s2517 + $0xa8] sm:$0xff]
      %v2540 = vld [vmem:[%s2517 + $0xb0] sm:$0xff]
      %v2541 = vld [vmem:[%s2517 + $0xb8] sm:$0x3]
      %v2542 = vld [vmem:[%s195 + $0x3] sm:$0x1]
      %v2543 = vld [vmem:[%s195 + $0x13] sm:$0x1]
      %v2544 = vld [vmem:[%s195 + $0x23] sm:$0x1]
      %v2545 = vld [vmem:[%s195 + $0x33] sm:$0x1]
      %v2546 = vld [vmem:[%s195 + $0x43] sm:$0x1]
      %v2547 = vld [vmem:[%s195 + $0x53] sm:$0x1]
      %v2548 = vld [vmem:[%s195 + $0x63] sm:$0x1]
      %v2549 = vld [vmem:[%s195 + $0x73] sm:$0x1]
      %v2550 = vld [vmem:[%s195 + $0x83] sm:$0x1]
      %v2551 = vld [vmem:[%s195 + $0x93] sm:$0x1]
      %v2552 = vld [vmem:[%s195 + $0xa3] sm:$0x1]
      %v2553 = vld [vmem:[%s195 + $0xb3] sm:$0x1]
      %v2554 = vld [vmem:[%s195 + $0xc3] sm:$0x1]
      %v2555 = vld [vmem:[%s195 + $0xd3] sm:$0x1]
      %v2556 = vld [vmem:[%s195 + $0xe3] sm:$0x1]
      %v2557 = vld [vmem:[%s195 + $0xf3] sm:$0x1]
      %v2558 = vld [vmem:[%s195 + $0x103] sm:$0x1]
      %v2559 = vld [vmem:[%s195 + $0x113] sm:$0x1]
      %v2560 = vld [vmem:[%s195 + $0x123] sm:$0x1]
      %v2561 = vld [vmem:[%s195 + $0x133] sm:$0x1]
      %v2562 = vld [vmem:[%s195 + $0x143] sm:$0x1]
      %v2563 = vld [vmem:[%s195 + $0x153] sm:$0x1]
      %v2564 = vld [vmem:[%s195 + $0x163] sm:$0x1]
      %v2565 = vld [vmem:[%s195 + $0x173] sm:$0x1]
      %v2566 = vld [vmem:[%s195 + $0x183] sm:$0x1]
      %v2567 = vld [vmem:[%s195 + $0x193] sm:$0x1]
      %v2568 = vld [vmem:[%s195 + $0x1a3] sm:$0x1]
      %v2569 = vld [vmem:[%s195 + $0x1b3] sm:$0x1]
      %v2570 = vld [vmem:[%s195 + $0x1c3] sm:$0x1]
      %v2571 = vld [vmem:[%s195 + $0x1d3] sm:$0x1]
      %v2572 = vld [vmem:[%s195 + $0x1e3] sm:$0x1]
      %v2573 = vld [vmem:[%s195 + $0x1f3] sm:$0x1]
      %v2574 = vld [vmem:[%s195 + $0x203] sm:$0x1]
      %v2575 = vld [vmem:[%s195 + $0x213] sm:$0x1]
      %v2576 = vld [vmem:[%s195 + $0x223] sm:$0x1]
      %v2577 = vld [vmem:[%s195 + $0x233] sm:$0x1]
      %v2578 = vld [vmem:[%s195 + $0x243] sm:$0x1]
      %v2579 = vld [vmem:[%s195 + $0x253] sm:$0x1]
      %v2580 = vld [vmem:[%s195 + $0x263] sm:$0x1]
      %v2581 = vld [vmem:[%s195 + $0x273] sm:$0x1]
      %v2582 = vld [vmem:[%s195 + $0x283] sm:$0x1]
      %v2583 = vld [vmem:[%s195 + $0x293] sm:$0x1]
      %v2584 = vld [vmem:[%s195 + $0x2a3] sm:$0x1]
      %v2585 = vld [vmem:[%s195 + $0x2b3] sm:$0x1]
      %v2586 = vld [vmem:[%s195 + $0x2c3] sm:$0x1]
      %v2587 = vld [vmem:[%s195 + $0x2d3] sm:$0x1]
      %v2588 = vld [vmem:[%s195 + $0x2e3] sm:$0x1]
      %v2589 = vld [vmem:[%s195 + $0x2f3] sm:$0x1]
      %v2590 = vld [vmem:[%s195 + $0x303] sm:$0x1]
      %v2591 = vld [vmem:[%s195 + $0x313] sm:$0x1]
      %v2592 = vld [vmem:[%s195 + $0x323] sm:$0x1]
      %v2593 = vld [vmem:[%s195 + $0x333] sm:$0x1]
      %v2594 = vld [vmem:[%s195 + $0x343] sm:$0x1]
      %v2595 = vld [vmem:[%s195 + $0x353] sm:$0x1]
      %v2596 = vld [vmem:[%s195 + $0x363] sm:$0x1]
      %v2597 = vld [vmem:[%s195 + $0x373] sm:$0x1]
      %v2598 = vld [vmem:[%s195 + $0x383] sm:$0x1]
      %v2599 = vld [vmem:[%s195 + $0x393] sm:$0x1]
      %v2600 = vld [vmem:[%s195 + $0x3a3] sm:$0x1]
      %v2601 = vld [vmem:[%s195 + $0x3b3] sm:$0x1]
      %v2602 = vld [vmem:[%s195 + $0x3c3] sm:$0x1]
      %v2603 = vld [vmem:[%s195 + $0x3d3] sm:$0x1]
      %v2604 = vld [vmem:[%s195 + $0x3e3] sm:$0x1]
      %v2605 = vld [vmem:[%s195 + $0x3f3] sm:$0x1]
      %v2606 = vld [vmem:[%s195 + $0x403] sm:$0x1]
      %v2607 = vld [vmem:[%s195 + $0x413] sm:$0x1]
      %v2608 = vld [vmem:[%s195 + $0x423] sm:$0x1]
      %v2609 = vld [vmem:[%s195 + $0x433] sm:$0x1]
      %v2610 = vld [vmem:[%s195 + $0x443] sm:$0x1]
      %v2611 = vld [vmem:[%s195 + $0x453] sm:$0x1]
      %v2612 = vld [vmem:[%s195 + $0x463] sm:$0x1]
      %v2613 = vld [vmem:[%s195 + $0x473] sm:$0x1]
      %v2614 = vld [vmem:[%s195 + $0x483] sm:$0x1]
      %v2615 = vld [vmem:[%s195 + $0x493] sm:$0x1]
      %v2616 = vld [vmem:[%s195 + $0x4a3] sm:$0x1]
      %v2617 = vld [vmem:[%s195 + $0x4b3] sm:$0x1]
      %v2618 = vld [vmem:[%s195 + $0x4c3] sm:$0x1]
      %v2619 = vld [vmem:[%s195 + $0x4d3] sm:$0x1]
      %v2620 = vld [vmem:[%s195 + $0x4e3] sm:$0x1]
      %v2621 = vld [vmem:[%s195 + $0x4f3] sm:$0x1]
      %v2622 = vld [vmem:[%s195 + $0x503] sm:$0x1]
      %v2623 = vld [vmem:[%s195 + $0x513] sm:$0x1]
      %v2624 = vld [vmem:[%s195 + $0x523] sm:$0x1]
      %v2625 = vld [vmem:[%s195 + $0x533] sm:$0x1]
      %v2626 = vld [vmem:[%s195 + $0x543] sm:$0x1]
      %v2627 = vld [vmem:[%s195 + $0x553] sm:$0x1]
      %v2628 = vld [vmem:[%s195 + $0x563] sm:$0x1]
      %v2629 = vld [vmem:[%s195 + $0x573] sm:$0x1]
      %v2630 = vld [vmem:[%s195 + $0x583] sm:$0x1]
      %v2631 = vld [vmem:[%s195 + $0x593] sm:$0x1]
      %v2632 = vld [vmem:[%s195 + $0x5a3] sm:$0x1]
      %v2633 = vld [vmem:[%s195 + $0x5b3] sm:$0x1]
      %v2634 = vld [vmem:[%s195 + $0x5c3] sm:$0x1]
      %v2635 = vld [vmem:[%s195 + $0x5d3] sm:$0x1]
      %v2636 = vld [vmem:[%s195 + $0x5e3] sm:$0x1]
      %v2637 = vld [vmem:[%s195 + $0x5f3] sm:$0x1]
      %v2638 = vld [vmem:[%s195 + $0x603] sm:$0x1]
      %v2639 = vld [vmem:[%s195 + $0x613] sm:$0x1]
      %v2640 = vld [vmem:[%s195 + $0x623] sm:$0x1]
      %v2641 = vld [vmem:[%s195 + $0x633] sm:$0x1]
      %v2642 = vld [vmem:[%s195 + $0x643] sm:$0x1]
      %v2643 = vld [vmem:[%s195 + $0x653] sm:$0x1]
      %v2644 = vld [vmem:[%s195 + $0x663] sm:$0x1]
      %v2645 = vld [vmem:[%s195 + $0x673] sm:$0x1]
      %v2646 = vld [vmem:[%s195 + $0x683] sm:$0x1]
      %v2647 = vld [vmem:[%s195 + $0x693] sm:$0x1]
      %v2648 = vld [vmem:[%s195 + $0x6a3] sm:$0x1]
      %v2649 = vld [vmem:[%s195 + $0x6b3] sm:$0x1]
      %v2650 = vld [vmem:[%s195 + $0x6c3] sm:$0x1]
      %v2651 = vld [vmem:[%s195 + $0x6d3] sm:$0x1]
      %v2652 = vld [vmem:[%s195 + $0x6e3] sm:$0x1]
      %v2653 = vld [vmem:[%s195 + $0x6f3] sm:$0x1]
      %v2654 = vld [vmem:[%s195 + $0x703] sm:$0x1]
      %v2655 = vld [vmem:[%s195 + $0x713] sm:$0x1]
      %v2656 = vld [vmem:[%s195 + $0x723] sm:$0x1]
      %v2657 = vld [vmem:[%s195 + $0x733] sm:$0x1]
      %v2658 = vld [vmem:[%s195 + $0x743] sm:$0x1]
      %v2659 = vld [vmem:[%s195 + $0x753] sm:$0x1]
      %v2660 = vld [vmem:[%s195 + $0x763] sm:$0x1]
      %v2661 = vld [vmem:[%s195 + $0x773] sm:$0x1]
      %v2662 = vld [vmem:[%s195 + $0x783] sm:$0x1]
      %v2663 = vld [vmem:[%s195 + $0x793] sm:$0x1]
      %v2664 = vld [vmem:[%s195 + $0x7a3] sm:$0x1]
      %v2665 = vld [vmem:[%s195 + $0x7b3] sm:$0x1]
      %v2666 = vld [vmem:[%s195 + $0x7c3] sm:$0x1]
      %v2667 = vld [vmem:[%s195 + $0x7d3] sm:$0x1]
      %v2668 = vld [vmem:[%s195 + $0x7e3] sm:$0x1]
      %v2669 = vld [vmem:[%s195 + $0x7f3] sm:$0x1]
      %v2686 = vrot.slane %v2518, 1
      %v2687 = vrot.slane %v2518, 2
      %v2688 = vrot.slane %v2518, 3
      %v2689 = vrot.slane %v2518, 4
      %v2690 = vrot.slane %v2518, 5
      %v2691 = vrot.slane %v2518, 6
      %v2692 = vrot.slane %v2518, 7
      %v2693 = vrot.slane %v2519, 1
      %v2694 = vrot.slane %v2519, 2
      %v2695 = vrot.slane %v2519, 3
      %v2696 = vrot.slane %v2519, 4
      %v2697 = vrot.slane %v2519, 5
      %v2698 = vrot.slane %v2519, 6
      %v2699 = vrot.slane %v2519, 7
      %v2700 = vrot.slane %v2521, 1
      %v2701 = vrot.slane %v2521, 2
      %v2702 = vrot.slane %v2521, 3
      %v2703 = vrot.slane %v2521, 4
      %v2704 = vrot.slane %v2521, 5
      %v2705 = vrot.slane %v2521, 6
      %v2706 = vrot.slane %v2521, 7
      %v2707 = vrot.slane %v2522, 1
      %v2708 = vrot.slane %v2522, 2
      %v2709 = vrot.slane %v2522, 3
      %v2710 = vrot.slane %v2522, 4
      %v2711 = vrot.slane %v2522, 5
      %v2712 = vrot.slane %v2522, 6
      %v2713 = vrot.slane %v2522, 7
      %v2714 = vrot.slane %v2524, 1
      %v2715 = vrot.slane %v2524, 2
      %v2716 = vrot.slane %v2524, 3
      %v2717 = vrot.slane %v2524, 4
      %v2718 = vrot.slane %v2524, 5
      %v2719 = vrot.slane %v2524, 6
      %v2720 = vrot.slane %v2524, 7
      %v2721 = vrot.slane %v2525, 1
      %v2722 = vrot.slane %v2525, 2
      %v2723 = vrot.slane %v2525, 3
      %v2724 = vrot.slane %v2525, 4
      %v2725 = vrot.slane %v2525, 5
      %v2726 = vrot.slane %v2525, 6
      %v2727 = vrot.slane %v2525, 7
      %v2728 = vrot.slane %v2527, 1
      %v2729 = vrot.slane %v2527, 2
      %v2730 = vrot.slane %v2527, 3
      %v2731 = vrot.slane %v2527, 4
      %v2732 = vrot.slane %v2527, 5
      %v2733 = vrot.slane %v2527, 6
      %v2734 = vrot.slane %v2527, 7
      %v2735 = vrot.slane %v2528, 1
      %v2736 = vrot.slane %v2528, 2
      %v2737 = vrot.slane %v2528, 3
      %v2738 = vrot.slane %v2528, 4
      %v2739 = vrot.slane %v2528, 5
      %v2740 = vrot.slane %v2528, 6
      %v2741 = vrot.slane %v2528, 7
      %v2742 = vrot.slane %v2530, 1
      %v2743 = vrot.slane %v2530, 2
      %v2744 = vrot.slane %v2530, 3
      %v2745 = vrot.slane %v2530, 4
      %v2746 = vrot.slane %v2530, 5
      %v2747 = vrot.slane %v2530, 6
      %v2748 = vrot.slane %v2530, 7
      %v2749 = vrot.slane %v2531, 1
      %v2750 = vrot.slane %v2531, 2
      %v2751 = vrot.slane %v2531, 3
      %v2752 = vrot.slane %v2531, 4
      %v2753 = vrot.slane %v2531, 5
      %v2754 = vrot.slane %v2531, 6
      %v2755 = vrot.slane %v2531, 7
      %v2756 = vrot.slane %v2533, 1
      %v2757 = vrot.slane %v2533, 2
      %v2758 = vrot.slane %v2533, 3
      %v2759 = vrot.slane %v2533, 4
      %v2760 = vrot.slane %v2533, 5
      %v2761 = vrot.slane %v2533, 6
      %v2762 = vrot.slane %v2533, 7
      %v2763 = vrot.slane %v2534, 1
      %v2764 = vrot.slane %v2534, 2
      %v2765 = vrot.slane %v2534, 3
      %v2766 = vrot.slane %v2534, 4
      %v2767 = vrot.slane %v2534, 5
      %v2768 = vrot.slane %v2534, 6
      %v2769 = vrot.slane %v2534, 7
      %v2770 = vrot.slane %v2536, 1
      %v2771 = vrot.slane %v2536, 2
      %v2772 = vrot.slane %v2536, 3
      %v2773 = vrot.slane %v2536, 4
      %v2774 = vrot.slane %v2536, 5
      %v2775 = vrot.slane %v2536, 6
      %v2776 = vrot.slane %v2536, 7
      %v2777 = vrot.slane %v2537, 1
      %v2778 = vrot.slane %v2537, 2
      %v2779 = vrot.slane %v2537, 3
      %v2780 = vrot.slane %v2537, 4
      %v2781 = vrot.slane %v2537, 5
      %v2782 = vrot.slane %v2537, 6
      %v2783 = vrot.slane %v2537, 7
      %v2784 = vrot.slane %v2539, 1
      %v2785 = vrot.slane %v2539, 2
      %v2786 = vrot.slane %v2539, 3
      %v2787 = vrot.slane %v2539, 4
      %v2788 = vrot.slane %v2539, 5
      %v2789 = vrot.slane %v2539, 6
      %v2790 = vrot.slane %v2539, 7
      %v2791 = vrot.slane %v2540, 1
      %v2792 = vrot.slane %v2540, 2
      %v2793 = vrot.slane %v2540, 3
      %v2794 = vrot.slane %v2540, 4
      %v2795 = vrot.slane %v2540, 5
      %v2796 = vrot.slane %v2540, 6
      %v2797 = vrot.slane %v2540, 7
      %v2926 = vmul.f32 %v2542, %v2518
      %v2927 = vmul.f32 %v2543, %v2686
      %v2928 = vmul.f32 %v2544, %v2687
      %v2929 = vmul.f32 %v2545, %v2688
      %v2930 = vmul.f32 %v2546, %v2689
      %v2931 = vmul.f32 %v2547, %v2690
      %v2932 = vmul.f32 %v2548, %v2691
      %v2933 = vmul.f32 %v2549, %v2692
      %v2934 = vmul.f32 %v2550, %v2519
      %v2935 = vmul.f32 %v2551, %v2693
      %v2936 = vmul.f32 %v2552, %v2694
      %v2937 = vmul.f32 %v2553, %v2695
      %v2938 = vmul.f32 %v2554, %v2696
      %v2939 = vmul.f32 %v2555, %v2697
      %v2940 = vmul.f32 %v2556, %v2698
      %v2941 = vmul.f32 %v2557, %v2699
      %v2942 = vmul.f32 %v2558, %v2521
      %v2943 = vmul.f32 %v2559, %v2700
      %v2944 = vmul.f32 %v2560, %v2701
      %v2945 = vmul.f32 %v2561, %v2702
      %v2946 = vmul.f32 %v2562, %v2703
      %v2947 = vmul.f32 %v2563, %v2704
      %v2948 = vmul.f32 %v2564, %v2705
      %v2949 = vmul.f32 %v2565, %v2706
      %v2950 = vmul.f32 %v2566, %v2522
      %v2951 = vmul.f32 %v2567, %v2707
      %v2952 = vmul.f32 %v2568, %v2708
      %v2953 = vmul.f32 %v2569, %v2709
      %v2954 = vmul.f32 %v2570, %v2710
      %v2955 = vmul.f32 %v2571, %v2711
      %v2956 = vmul.f32 %v2572, %v2712
      %v2957 = vmul.f32 %v2573, %v2713
      %v2958 = vmul.f32 %v2574, %v2524
      %v2959 = vmul.f32 %v2575, %v2714
      %v2960 = vmul.f32 %v2576, %v2715
      %v2961 = vmul.f32 %v2577, %v2716
      %v2962 = vmul.f32 %v2578, %v2717
      %v2963 = vmul.f32 %v2579, %v2718
      %v2964 = vmul.f32 %v2580, %v2719
      %v2965 = vmul.f32 %v2581, %v2720
      %v2966 = vmul.f32 %v2582, %v2525
      %v2967 = vmul.f32 %v2583, %v2721
      %v2968 = vmul.f32 %v2584, %v2722
      %v2969 = vmul.f32 %v2585, %v2723
      %v2970 = vmul.f32 %v2586, %v2724
      %v2971 = vmul.f32 %v2587, %v2725
      %v2972 = vmul.f32 %v2588, %v2726
      %v2973 = vmul.f32 %v2589, %v2727
      %v2974 = vmul.f32 %v2590, %v2527
      %v2975 = vmul.f32 %v2591, %v2728
      %v2976 = vmul.f32 %v2592, %v2729
      %v2977 = vmul.f32 %v2593, %v2730
      %v2978 = vmul.f32 %v2594, %v2731
      %v2979 = vmul.f32 %v2595, %v2732
      %v2980 = vmul.f32 %v2596, %v2733
      %v2981 = vmul.f32 %v2597, %v2734
      %v2982 = vmul.f32 %v2598, %v2528
      %v2983 = vmul.f32 %v2599, %v2735
      %v2984 = vmul.f32 %v2600, %v2736
      %v2985 = vmul.f32 %v2601, %v2737
      %v2986 = vmul.f32 %v2602, %v2738
      %v2987 = vmul.f32 %v2603, %v2739
      %v2988 = vmul.f32 %v2604, %v2740
      %v2989 = vmul.f32 %v2605, %v2741
      %v2990 = vmul.f32 %v2606, %v2530
      %v2991 = vmul.f32 %v2607, %v2742
      %v2992 = vmul.f32 %v2608, %v2743
      %v2993 = vmul.f32 %v2609, %v2744
      %v2994 = vmul.f32 %v2610, %v2745
      %v2995 = vmul.f32 %v2611, %v2746
      %v2996 = vmul.f32 %v2612, %v2747
      %v2997 = vmul.f32 %v2613, %v2748
      %v2998 = vmul.f32 %v2614, %v2531
      %v2999 = vmul.f32 %v2615, %v2749
      %v3000 = vmul.f32 %v2616, %v2750
      %v3001 = vmul.f32 %v2617, %v2751
      %v3002 = vmul.f32 %v2618, %v2752
      %v3003 = vmul.f32 %v2619, %v2753
      %v3004 = vmul.f32 %v2620, %v2754
      %v3005 = vmul.f32 %v2621, %v2755
      %v3006 = vmul.f32 %v2622, %v2533
      %v3007 = vmul.f32 %v2623, %v2756
      %v3008 = vmul.f32 %v2624, %v2757
      %v3009 = vmul.f32 %v2625, %v2758
      %v3010 = vmul.f32 %v2626, %v2759
      %v3011 = vmul.f32 %v2627, %v2760
      %v3012 = vmul.f32 %v2628, %v2761
      %v3013 = vmul.f32 %v2629, %v2762
      %v3014 = vmul.f32 %v2630, %v2534
      %v3015 = vmul.f32 %v2631, %v2763
      %v3016 = vmul.f32 %v2632, %v2764
      %v3017 = vmul.f32 %v2633, %v2765
      %v3018 = vmul.f32 %v2634, %v2766
      %v3019 = vmul.f32 %v2635, %v2767
      %v3020 = vmul.f32 %v2636, %v2768
      %v3021 = vmul.f32 %v2637, %v2769
      %v3022 = vmul.f32 %v2638, %v2536
      %v3023 = vmul.f32 %v2639, %v2770
      %v3024 = vmul.f32 %v2640, %v2771
      %v3025 = vmul.f32 %v2641, %v2772
      %v3026 = vmul.f32 %v2642, %v2773
      %v3027 = vmul.f32 %v2643, %v2774
      %v3028 = vmul.f32 %v2644, %v2775
      %v3029 = vmul.f32 %v2645, %v2776
      %v3030 = vmul.f32 %v2646, %v2537
      %v3031 = vmul.f32 %v2647, %v2777
      %v3032 = vmul.f32 %v2648, %v2778
      %v3033 = vmul.f32 %v2649, %v2779
      %v3034 = vmul.f32 %v2650, %v2780
      %v3035 = vmul.f32 %v2651, %v2781
      %v3036 = vmul.f32 %v2652, %v2782
      %v3037 = vmul.f32 %v2653, %v2783
      %v3038 = vmul.f32 %v2654, %v2539
      %v3039 = vmul.f32 %v2655, %v2784
      %v3040 = vmul.f32 %v2656, %v2785
      %v3041 = vmul.f32 %v2657, %v2786
      %v3042 = vmul.f32 %v2658, %v2787
      %v3043 = vmul.f32 %v2659, %v2788
      %v3044 = vmul.f32 %v2660, %v2789
      %v3045 = vmul.f32 %v2661, %v2790
      %v3046 = vmul.f32 %v2662, %v2540
      %v3047 = vmul.f32 %v2663, %v2791
      %v3048 = vmul.f32 %v2664, %v2792
      %v3049 = vmul.f32 %v2665, %v2793
      %v3050 = vmul.f32 %v2666, %v2794
      %v3051 = vmul.f32 %v2667, %v2795
      %v3052 = vmul.f32 %v2668, %v2796
      %v3053 = vmul.f32 %v2669, %v2797
      %v3054 = vld [vmem:[%s206] sm:$0xff]
      %v3055 = vld [vmem:[%s206 + $0x8] sm:$0xff]
      %v3056 = vld [vmem:[%s206 + $0x10] sm:$0xff]
      %v3057 = vld [vmem:[%s206 + $0x18] sm:$0xff]
      %v3058 = vld [vmem:[%s206 + $0x20] sm:$0xff]
      %v3059 = vld [vmem:[%s206 + $0x28] sm:$0xff]
      %v3060 = vld [vmem:[%s206 + $0x30] sm:$0xff]
      %v3061 = vld [vmem:[%s206 + $0x38] sm:$0xff]
      %v3062 = vld [vmem:[%s206 + $0x40] sm:$0xff]
      %v3063 = vld [vmem:[%s206 + $0x48] sm:$0xff]
      %v3064 = vld [vmem:[%s206 + $0x50] sm:$0xff]
      %v3065 = vld [vmem:[%s206 + $0x58] sm:$0xff]
      %v3066 = vld [vmem:[%s206 + $0x60] sm:$0xff]
      %v3067 = vld [vmem:[%s206 + $0x68] sm:$0xff]
      %v3068 = vld [vmem:[%s206 + $0x70] sm:$0xff]
      %v3069 = vld [vmem:[%s206 + $0x78] sm:$0xff]
      %v3198 = vrot.slane %v2927, 7
      %v3199 = vsel %vm876, %v3198, %v2926
      %v3200 = vrot.slane %v2928, 6
      %v3201 = vsel %vm879, %v3200, %v3199
      %v3202 = vrot.slane %v2929, 5
      %v3203 = vsel %vm882, %v3202, %v3201
      %v3204 = vrot.slane %v2930, 4
      %v3205 = vsel %vm885, %v3204, %v3203
      %v3206 = vrot.slane %v2931, 3
      %v3207 = vsel %vm888, %v3206, %v3205
      %v3208 = vrot.slane %v2932, 2
      %v3209 = vsel %vm891, %v3208, %v3207
      %v3210 = vrot.slane %v2933, 1
      %v3211 = vsel %vm894, %v3210, %v3209
      %v3212 = vrot.slane %v2935, 7
      %v3213 = vsel %vm876, %v3212, %v2934
      %v3214 = vrot.slane %v2936, 6
      %v3215 = vsel %vm879, %v3214, %v3213
      %v3216 = vrot.slane %v2937, 5
      %v3217 = vsel %vm882, %v3216, %v3215
      %v3218 = vrot.slane %v2938, 4
      %v3219 = vsel %vm885, %v3218, %v3217
      %v3220 = vrot.slane %v2939, 3
      %v3221 = vsel %vm888, %v3220, %v3219
      %v3222 = vrot.slane %v2940, 2
      %v3223 = vsel %vm891, %v3222, %v3221
      %v3224 = vrot.slane %v2941, 1
      %v3225 = vsel %vm894, %v3224, %v3223
      %v3226 = vrot.slane %v2943, 7
      %v3227 = vsel %vm876, %v3226, %v2942
      %v3228 = vrot.slane %v2944, 6
      %v3229 = vsel %vm879, %v3228, %v3227
      %v3230 = vrot.slane %v2945, 5
      %v3231 = vsel %vm882, %v3230, %v3229
      %v3232 = vrot.slane %v2946, 4
      %v3233 = vsel %vm885, %v3232, %v3231
      %v3234 = vrot.slane %v2947, 3
      %v3235 = vsel %vm888, %v3234, %v3233
      %v3236 = vrot.slane %v2948, 2
      %v3237 = vsel %vm891, %v3236, %v3235
      %v3238 = vrot.slane %v2949, 1
      %v3239 = vsel %vm894, %v3238, %v3237
      %v3240 = vrot.slane %v2951, 7
      %v3241 = vsel %vm876, %v3240, %v2950
      %v3242 = vrot.slane %v2952, 6
      %v3243 = vsel %vm879, %v3242, %v3241
      %v3244 = vrot.slane %v2953, 5
      %v3245 = vsel %vm882, %v3244, %v3243
      %v3246 = vrot.slane %v2954, 4
      %v3247 = vsel %vm885, %v3246, %v3245
      %v3248 = vrot.slane %v2955, 3
      %v3249 = vsel %vm888, %v3248, %v3247
      %v3250 = vrot.slane %v2956, 2
      %v3251 = vsel %vm891, %v3250, %v3249
      %v3252 = vrot.slane %v2957, 1
      %v3253 = vsel %vm894, %v3252, %v3251
      %v3254 = vrot.slane %v2959, 7
      %v3255 = vsel %vm876, %v3254, %v2958
      %v3256 = vrot.slane %v2960, 6
      %v3257 = vsel %vm879, %v3256, %v3255
      %v3258 = vrot.slane %v2961, 5
      %v3259 = vsel %vm882, %v3258, %v3257
      %v3260 = vrot.slane %v2962, 4
      %v3261 = vsel %vm885, %v3260, %v3259
      %v3262 = vrot.slane %v2963, 3
      %v3263 = vsel %vm888, %v3262, %v3261
      %v3264 = vrot.slane %v2964, 2
      %v3265 = vsel %vm891, %v3264, %v3263
      %v3266 = vrot.slane %v2965, 1
      %v3267 = vsel %vm894, %v3266, %v3265
      %v3268 = vrot.slane %v2967, 7
      %v3269 = vsel %vm876, %v3268, %v2966
      %v3270 = vrot.slane %v2968, 6
      %v3271 = vsel %vm879, %v3270, %v3269
      %v3272 = vrot.slane %v2969, 5
      %v3273 = vsel %vm882, %v3272, %v3271
      %v3274 = vrot.slane %v2970, 4
      %v3275 = vsel %vm885, %v3274, %v3273
      %v3276 = vrot.slane %v2971, 3
      %v3277 = vsel %vm888, %v3276, %v3275
      %v3278 = vrot.slane %v2972, 2
      %v3279 = vsel %vm891, %v3278, %v3277
      %v3280 = vrot.slane %v2973, 1
      %v3281 = vsel %vm894, %v3280, %v3279
      %v3282 = vrot.slane %v2975, 7
      %v3283 = vsel %vm876, %v3282, %v2974
      %v3284 = vrot.slane %v2976, 6
      %v3285 = vsel %vm879, %v3284, %v3283
      %v3286 = vrot.slane %v2977, 5
      %v3287 = vsel %vm882, %v3286, %v3285
      %v3288 = vrot.slane %v2978, 4
      %v3289 = vsel %vm885, %v3288, %v3287
      %v3290 = vrot.slane %v2979, 3
      %v3291 = vsel %vm888, %v3290, %v3289
      %v3292 = vrot.slane %v2980, 2
      %v3293 = vsel %vm891, %v3292, %v3291
      %v3294 = vrot.slane %v2981, 1
      %v3295 = vsel %vm894, %v3294, %v3293
      %v3296 = vrot.slane %v2983, 7
      %v3297 = vsel %vm876, %v3296, %v2982
      %v3298 = vrot.slane %v2984, 6
      %v3299 = vsel %vm879, %v3298, %v3297
      %v3300 = vrot.slane %v2985, 5
      %v3301 = vsel %vm882, %v3300, %v3299
      %v3302 = vrot.slane %v2986, 4
      %v3303 = vsel %vm885, %v3302, %v3301
      %v3304 = vrot.slane %v2987, 3
      %v3305 = vsel %vm888, %v3304, %v3303
      %v3306 = vrot.slane %v2988, 2
      %v3307 = vsel %vm891, %v3306, %v3305
      %v3308 = vrot.slane %v2989, 1
      %v3309 = vsel %vm894, %v3308, %v3307
      %v3310 = vrot.slane %v2991, 7
      %v3311 = vsel %vm876, %v3310, %v2990
      %v3312 = vrot.slane %v2992, 6
      %v3313 = vsel %vm879, %v3312, %v3311
      %v3314 = vrot.slane %v2993, 5
      %v3315 = vsel %vm882, %v3314, %v3313
      %v3316 = vrot.slane %v2994, 4
      %v3317 = vsel %vm885, %v3316, %v3315
      %v3318 = vrot.slane %v2995, 3
      %v3319 = vsel %vm888, %v3318, %v3317
      %v3320 = vrot.slane %v2996, 2
      %v3321 = vsel %vm891, %v3320, %v3319
      %v3322 = vrot.slane %v2997, 1
      %v3323 = vsel %vm894, %v3322, %v3321
      %v3324 = vrot.slane %v2999, 7
      %v3325 = vsel %vm876, %v3324, %v2998
      %v3326 = vrot.slane %v3000, 6
      %v3327 = vsel %vm879, %v3326, %v3325
      %v3328 = vrot.slane %v3001, 5
      %v3329 = vsel %vm882, %v3328, %v3327
      %v3330 = vrot.slane %v3002, 4
      %v3331 = vsel %vm885, %v3330, %v3329
      %v3332 = vrot.slane %v3003, 3
      %v3333 = vsel %vm888, %v3332, %v3331
      %v3334 = vrot.slane %v3004, 2
      %v3335 = vsel %vm891, %v3334, %v3333
      %v3336 = vrot.slane %v3005, 1
      %v3337 = vsel %vm894, %v3336, %v3335
      %v3338 = vrot.slane %v3007, 7
      %v3339 = vsel %vm876, %v3338, %v3006
      %v3340 = vrot.slane %v3008, 6
      %v3341 = vsel %vm879, %v3340, %v3339
      %v3342 = vrot.slane %v3009, 5
      %v3343 = vsel %vm882, %v3342, %v3341
      %v3344 = vrot.slane %v3010, 4
      %v3345 = vsel %vm885, %v3344, %v3343
      %v3346 = vrot.slane %v3011, 3
      %v3347 = vsel %vm888, %v3346, %v3345
      %v3348 = vrot.slane %v3012, 2
      %v3349 = vsel %vm891, %v3348, %v3347
      %v3350 = vrot.slane %v3013, 1
      %v3351 = vsel %vm894, %v3350, %v3349
      %v3352 = vrot.slane %v3015, 7
      %v3353 = vsel %vm876, %v3352, %v3014
      %v3354 = vrot.slane %v3016, 6
      %v3355 = vsel %vm879, %v3354, %v3353
      %v3356 = vrot.slane %v3017, 5
      %v3357 = vsel %vm882, %v3356, %v3355
      %v3358 = vrot.slane %v3018, 4
      %v3359 = vsel %vm885, %v3358, %v3357
      %v3360 = vrot.slane %v3019, 3
      %v3361 = vsel %vm888, %v3360, %v3359
      %v3362 = vrot.slane %v3020, 2
      %v3363 = vsel %vm891, %v3362, %v3361
      %v3364 = vrot.slane %v3021, 1
      %v3365 = vsel %vm894, %v3364, %v3363
      %v3366 = vrot.slane %v3023, 7
      %v3367 = vsel %vm876, %v3366, %v3022
      %v3368 = vrot.slane %v3024, 6
      %v3369 = vsel %vm879, %v3368, %v3367
      %v3370 = vrot.slane %v3025, 5
      %v3371 = vsel %vm882, %v3370, %v3369
      %v3372 = vrot.slane %v3026, 4
      %v3373 = vsel %vm885, %v3372, %v3371
      %v3374 = vrot.slane %v3027, 3
      %v3375 = vsel %vm888, %v3374, %v3373
      %v3376 = vrot.slane %v3028, 2
      %v3377 = vsel %vm891, %v3376, %v3375
      %v3378 = vrot.slane %v3029, 1
      %v3379 = vsel %vm894, %v3378, %v3377
      %v3380 = vrot.slane %v3031, 7
      %v3381 = vsel %vm876, %v3380, %v3030
      %v3382 = vrot.slane %v3032, 6
      %v3383 = vsel %vm879, %v3382, %v3381
      %v3384 = vrot.slane %v3033, 5
      %v3385 = vsel %vm882, %v3384, %v3383
      %v3386 = vrot.slane %v3034, 4
      %v3387 = vsel %vm885, %v3386, %v3385
      %v3388 = vrot.slane %v3035, 3
      %v3389 = vsel %vm888, %v3388, %v3387
      %v3390 = vrot.slane %v3036, 2
      %v3391 = vsel %vm891, %v3390, %v3389
      %v3392 = vrot.slane %v3037, 1
      %v3393 = vsel %vm894, %v3392, %v3391
      %v3394 = vrot.slane %v3039, 7
      %v3395 = vsel %vm876, %v3394, %v3038
      %v3396 = vrot.slane %v3040, 6
      %v3397 = vsel %vm879, %v3396, %v3395
      %v3398 = vrot.slane %v3041, 5
      %v3399 = vsel %vm882, %v3398, %v3397
      %v3400 = vrot.slane %v3042, 4
      %v3401 = vsel %vm885, %v3400, %v3399
      %v3402 = vrot.slane %v3043, 3
      %v3403 = vsel %vm888, %v3402, %v3401
      %v3404 = vrot.slane %v3044, 2
      %v3405 = vsel %vm891, %v3404, %v3403
      %v3406 = vrot.slane %v3045, 1
      %v3407 = vsel %vm894, %v3406, %v3405
      %v3408 = vrot.slane %v3047, 7
      %v3409 = vsel %vm876, %v3408, %v3046
      %v3410 = vrot.slane %v3048, 6
      %v3411 = vsel %vm879, %v3410, %v3409
      %v3412 = vrot.slane %v3049, 5
      %v3413 = vsel %vm882, %v3412, %v3411
      %v3414 = vrot.slane %v3050, 4
      %v3415 = vsel %vm885, %v3414, %v3413
      %v3416 = vrot.slane %v3051, 3
      %v3417 = vsel %vm888, %v3416, %v3415
      %v3418 = vrot.slane %v3052, 2
      %v3419 = vsel %vm891, %v3418, %v3417
      %v3420 = vrot.slane %v3053, 1
      %v3421 = vsel %vm894, %v3420, %v3419
      %v3438 = vadd.f32 %v3054, %v3211
      %v3439 = vadd.f32 %v3055, %v3225
      %v3440 = vadd.f32 %v3056, %v3239
      %v3441 = vadd.f32 %v3057, %v3253
      %v3442 = vadd.f32 %v3058, %v3267
      %v3443 = vadd.f32 %v3059, %v3281
      %v3444 = vadd.f32 %v3060, %v3295
      %v3445 = vadd.f32 %v3061, %v3309
      %v3446 = vadd.f32 %v3062, %v3323
      %v3447 = vadd.f32 %v3063, %v3337
      %v3448 = vadd.f32 %v3064, %v3351
      %v3449 = vadd.f32 %v3065, %v3365
      %v3450 = vadd.f32 %v3066, %v3379
      %v3451 = vadd.f32 %v3067, %v3393
      %v3452 = vadd.f32 %v3068, %v3407
      %v3453 = vadd.f32 %v3069, %v3421
      %3454 = vst.msk [vmem:[%s206] sm:$0xff] %vm1122, %v3438
      %3455 = vst.msk [vmem:[%s206 + $0x8] sm:$0xff] %vm1122, %v3439
      %3456 = vst.msk [vmem:[%s206 + $0x10] sm:$0xff] %vm1122, %v3440
      %3457 = vst.msk [vmem:[%s206 + $0x18] sm:$0xff] %vm1122, %v3441
      %3458 = vst.msk [vmem:[%s206 + $0x20] sm:$0xff] %vm1122, %v3442
      %3459 = vst.msk [vmem:[%s206 + $0x28] sm:$0xff] %vm1122, %v3443
      %3460 = vst.msk [vmem:[%s206 + $0x30] sm:$0xff] %vm1122, %v3444
      %3461 = vst.msk [vmem:[%s206 + $0x38] sm:$0xff] %vm1122, %v3445
      %3462 = vst.msk [vmem:[%s206 + $0x40] sm:$0xff] %vm1122, %v3446
      %3463 = vst.msk [vmem:[%s206 + $0x48] sm:$0xff] %vm1122, %v3447
      %3464 = vst.msk [vmem:[%s206 + $0x50] sm:$0xff] %vm1122, %v3448
      %3465 = vst.msk [vmem:[%s206 + $0x58] sm:$0xff] %vm1122, %v3449
      %3466 = vst.msk [vmem:[%s206 + $0x60] sm:$0xff] %vm1122, %v3450
      %3467 = vst.msk [vmem:[%s206 + $0x68] sm:$0xff] %vm1122, %v3451
      %3468 = vst.msk [vmem:[%s206 + $0x70] sm:$0xff] %vm1122, %v3452
      %3469 = vst.msk [vmem:[%s206 + $0x78] sm:$0xff] %vm1122, %v3453
      %v3470 = vld [vmem:[%s195 + $0x4] sm:$0x1]
      %v3471 = vld [vmem:[%s195 + $0x14] sm:$0x1]
      %v3472 = vld [vmem:[%s195 + $0x24] sm:$0x1]
      %v3473 = vld [vmem:[%s195 + $0x34] sm:$0x1]
      %v3474 = vld [vmem:[%s195 + $0x44] sm:$0x1]
      %v3475 = vld [vmem:[%s195 + $0x54] sm:$0x1]
      %v3476 = vld [vmem:[%s195 + $0x64] sm:$0x1]
      %v3477 = vld [vmem:[%s195 + $0x74] sm:$0x1]
      %v3478 = vld [vmem:[%s195 + $0x84] sm:$0x1]
      %v3479 = vld [vmem:[%s195 + $0x94] sm:$0x1]
      %v3480 = vld [vmem:[%s195 + $0xa4] sm:$0x1]
      %v3481 = vld [vmem:[%s195 + $0xb4] sm:$0x1]
      %v3482 = vld [vmem:[%s195 + $0xc4] sm:$0x1]
      %v3483 = vld [vmem:[%s195 + $0xd4] sm:$0x1]
      %v3484 = vld [vmem:[%s195 + $0xe4] sm:$0x1]
      %v3485 = vld [vmem:[%s195 + $0xf4] sm:$0x1]
      %v3486 = vld [vmem:[%s195 + $0x104] sm:$0x1]
      %v3487 = vld [vmem:[%s195 + $0x114] sm:$0x1]
      %v3488 = vld [vmem:[%s195 + $0x124] sm:$0x1]
      %v3489 = vld [vmem:[%s195 + $0x134] sm:$0x1]
      %v3490 = vld [vmem:[%s195 + $0x144] sm:$0x1]
      %v3491 = vld [vmem:[%s195 + $0x154] sm:$0x1]
      %v3492 = vld [vmem:[%s195 + $0x164] sm:$0x1]
      %v3493 = vld [vmem:[%s195 + $0x174] sm:$0x1]
      %v3494 = vld [vmem:[%s195 + $0x184] sm:$0x1]
      %v3495 = vld [vmem:[%s195 + $0x194] sm:$0x1]
      %v3496 = vld [vmem:[%s195 + $0x1a4] sm:$0x1]
      %v3497 = vld [vmem:[%s195 + $0x1b4] sm:$0x1]
      %v3498 = vld [vmem:[%s195 + $0x1c4] sm:$0x1]
      %v3499 = vld [vmem:[%s195 + $0x1d4] sm:$0x1]
      %v3500 = vld [vmem:[%s195 + $0x1e4] sm:$0x1]
      %v3501 = vld [vmem:[%s195 + $0x1f4] sm:$0x1]
      %v3502 = vld [vmem:[%s195 + $0x204] sm:$0x1]
      %v3503 = vld [vmem:[%s195 + $0x214] sm:$0x1]
      %v3504 = vld [vmem:[%s195 + $0x224] sm:$0x1]
      %v3505 = vld [vmem:[%s195 + $0x234] sm:$0x1]
      %v3506 = vld [vmem:[%s195 + $0x244] sm:$0x1]
      %v3507 = vld [vmem:[%s195 + $0x254] sm:$0x1]
      %v3508 = vld [vmem:[%s195 + $0x264] sm:$0x1]
      %v3509 = vld [vmem:[%s195 + $0x274] sm:$0x1]
      %v3510 = vld [vmem:[%s195 + $0x284] sm:$0x1]
      %v3511 = vld [vmem:[%s195 + $0x294] sm:$0x1]
      %v3512 = vld [vmem:[%s195 + $0x2a4] sm:$0x1]
      %v3513 = vld [vmem:[%s195 + $0x2b4] sm:$0x1]
      %v3514 = vld [vmem:[%s195 + $0x2c4] sm:$0x1]
      %v3515 = vld [vmem:[%s195 + $0x2d4] sm:$0x1]
      %v3516 = vld [vmem:[%s195 + $0x2e4] sm:$0x1]
      %v3517 = vld [vmem:[%s195 + $0x2f4] sm:$0x1]
      %v3518 = vld [vmem:[%s195 + $0x304] sm:$0x1]
      %v3519 = vld [vmem:[%s195 + $0x314] sm:$0x1]
      %v3520 = vld [vmem:[%s195 + $0x324] sm:$0x1]
      %v3521 = vld [vmem:[%s195 + $0x334] sm:$0x1]
      %v3522 = vld [vmem:[%s195 + $0x344] sm:$0x1]
      %v3523 = vld [vmem:[%s195 + $0x354] sm:$0x1]
      %v3524 = vld [vmem:[%s195 + $0x364] sm:$0x1]
      %v3525 = vld [vmem:[%s195 + $0x374] sm:$0x1]
      %v3526 = vld [vmem:[%s195 + $0x384] sm:$0x1]
      %v3527 = vld [vmem:[%s195 + $0x394] sm:$0x1]
      %v3528 = vld [vmem:[%s195 + $0x3a4] sm:$0x1]
      %v3529 = vld [vmem:[%s195 + $0x3b4] sm:$0x1]
      %v3530 = vld [vmem:[%s195 + $0x3c4] sm:$0x1]
      %v3531 = vld [vmem:[%s195 + $0x3d4] sm:$0x1]
      %v3532 = vld [vmem:[%s195 + $0x3e4] sm:$0x1]
      %v3533 = vld [vmem:[%s195 + $0x3f4] sm:$0x1]
      %v3534 = vld [vmem:[%s195 + $0x404] sm:$0x1]
      %v3535 = vld [vmem:[%s195 + $0x414] sm:$0x1]
      %v3536 = vld [vmem:[%s195 + $0x424] sm:$0x1]
      %v3537 = vld [vmem:[%s195 + $0x434] sm:$0x1]
      %v3538 = vld [vmem:[%s195 + $0x444] sm:$0x1]
      %v3539 = vld [vmem:[%s195 + $0x454] sm:$0x1]
      %v3540 = vld [vmem:[%s195 + $0x464] sm:$0x1]
      %v3541 = vld [vmem:[%s195 + $0x474] sm:$0x1]
      %v3542 = vld [vmem:[%s195 + $0x484] sm:$0x1]
      %v3543 = vld [vmem:[%s195 + $0x494] sm:$0x1]
      %v3544 = vld [vmem:[%s195 + $0x4a4] sm:$0x1]
      %v3545 = vld [vmem:[%s195 + $0x4b4] sm:$0x1]
      %v3546 = vld [vmem:[%s195 + $0x4c4] sm:$0x1]
      %v3547 = vld [vmem:[%s195 + $0x4d4] sm:$0x1]
      %v3548 = vld [vmem:[%s195 + $0x4e4] sm:$0x1]
      %v3549 = vld [vmem:[%s195 + $0x4f4] sm:$0x1]
      %v3550 = vld [vmem:[%s195 + $0x504] sm:$0x1]
      %v3551 = vld [vmem:[%s195 + $0x514] sm:$0x1]
      %v3552 = vld [vmem:[%s195 + $0x524] sm:$0x1]
      %v3553 = vld [vmem:[%s195 + $0x534] sm:$0x1]
      %v3554 = vld [vmem:[%s195 + $0x544] sm:$0x1]
      %v3555 = vld [vmem:[%s195 + $0x554] sm:$0x1]
      %v3556 = vld [vmem:[%s195 + $0x564] sm:$0x1]
      %v3557 = vld [vmem:[%s195 + $0x574] sm:$0x1]
      %v3558 = vld [vmem:[%s195 + $0x584] sm:$0x1]
      %v3559 = vld [vmem:[%s195 + $0x594] sm:$0x1]
      %v3560 = vld [vmem:[%s195 + $0x5a4] sm:$0x1]
      %v3561 = vld [vmem:[%s195 + $0x5b4] sm:$0x1]
      %v3562 = vld [vmem:[%s195 + $0x5c4] sm:$0x1]
      %v3563 = vld [vmem:[%s195 + $0x5d4] sm:$0x1]
      %v3564 = vld [vmem:[%s195 + $0x5e4] sm:$0x1]
      %v3565 = vld [vmem:[%s195 + $0x5f4] sm:$0x1]
      %v3566 = vld [vmem:[%s195 + $0x604] sm:$0x1]
      %v3567 = vld [vmem:[%s195 + $0x614] sm:$0x1]
      %v3568 = vld [vmem:[%s195 + $0x624] sm:$0x1]
      %v3569 = vld [vmem:[%s195 + $0x634] sm:$0x1]
      %v3570 = vld [vmem:[%s195 + $0x644] sm:$0x1]
      %v3571 = vld [vmem:[%s195 + $0x654] sm:$0x1]
      %v3572 = vld [vmem:[%s195 + $0x664] sm:$0x1]
      %v3573 = vld [vmem:[%s195 + $0x674] sm:$0x1]
      %v3574 = vld [vmem:[%s195 + $0x684] sm:$0x1]
      %v3575 = vld [vmem:[%s195 + $0x694] sm:$0x1]
      %v3576 = vld [vmem:[%s195 + $0x6a4] sm:$0x1]
      %v3577 = vld [vmem:[%s195 + $0x6b4] sm:$0x1]
      %v3578 = vld [vmem:[%s195 + $0x6c4] sm:$0x1]
      %v3579 = vld [vmem:[%s195 + $0x6d4] sm:$0x1]
      %v3580 = vld [vmem:[%s195 + $0x6e4] sm:$0x1]
      %v3581 = vld [vmem:[%s195 + $0x6f4] sm:$0x1]
      %v3582 = vld [vmem:[%s195 + $0x704] sm:$0x1]
      %v3583 = vld [vmem:[%s195 + $0x714] sm:$0x1]
      %v3584 = vld [vmem:[%s195 + $0x724] sm:$0x1]
      %v3585 = vld [vmem:[%s195 + $0x734] sm:$0x1]
      %v3586 = vld [vmem:[%s195 + $0x744] sm:$0x1]
      %v3587 = vld [vmem:[%s195 + $0x754] sm:$0x1]
      %v3588 = vld [vmem:[%s195 + $0x764] sm:$0x1]
      %v3589 = vld [vmem:[%s195 + $0x774] sm:$0x1]
      %v3590 = vld [vmem:[%s195 + $0x784] sm:$0x1]
      %v3591 = vld [vmem:[%s195 + $0x794] sm:$0x1]
      %v3592 = vld [vmem:[%s195 + $0x7a4] sm:$0x1]
      %v3593 = vld [vmem:[%s195 + $0x7b4] sm:$0x1]
      %v3594 = vld [vmem:[%s195 + $0x7c4] sm:$0x1]
      %v3595 = vld [vmem:[%s195 + $0x7d4] sm:$0x1]
      %v3596 = vld [vmem:[%s195 + $0x7e4] sm:$0x1]
      %v3597 = vld [vmem:[%s195 + $0x7f4] sm:$0x1]
      %v3614 = vmul.f32 %v3470, %v2686
      %v3615 = vmul.f32 %v3471, %v2687
      %v3616 = vmul.f32 %v3472, %v2688
      %v3617 = vmul.f32 %v3473, %v2689
      %v3618 = vmul.f32 %v3474, %v2690
      %v3619 = vmul.f32 %v3475, %v2691
      %v3620 = vmul.f32 %v3476, %v2692
      %v3621 = vmul.f32 %v3477, %v2519
      %v3622 = vmul.f32 %v3478, %v2693
      %v3623 = vmul.f32 %v3479, %v2694
      %v3624 = vmul.f32 %v3480, %v2695
      %v3625 = vmul.f32 %v3481, %v2696
      %v3626 = vmul.f32 %v3482, %v2697
      %v3627 = vmul.f32 %v3483, %v2698
      %v3628 = vmul.f32 %v3484, %v2699
      %v3629 = vmul.f32 %v3485, %v2520
      %v3630 = vmul.f32 %v3486, %v2700
      %v3631 = vmul.f32 %v3487, %v2701
      %v3632 = vmul.f32 %v3488, %v2702
      %v3633 = vmul.f32 %v3489, %v2703
      %v3634 = vmul.f32 %v3490, %v2704
      %v3635 = vmul.f32 %v3491, %v2705
      %v3636 = vmul.f32 %v3492, %v2706
      %v3637 = vmul.f32 %v3493, %v2522
      %v3638 = vmul.f32 %v3494, %v2707
      %v3639 = vmul.f32 %v3495, %v2708
      %v3640 = vmul.f32 %v3496, %v2709
      %v3641 = vmul.f32 %v3497, %v2710
      %v3642 = vmul.f32 %v3498, %v2711
      %v3643 = vmul.f32 %v3499, %v2712
      %v3644 = vmul.f32 %v3500, %v2713
      %v3645 = vmul.f32 %v3501, %v2523
      %v3646 = vmul.f32 %v3502, %v2714
      %v3647 = vmul.f32 %v3503, %v2715
      %v3648 = vmul.f32 %v3504, %v2716
      %v3649 = vmul.f32 %v3505, %v2717
      %v3650 = vmul.f32 %v3506, %v2718
      %v3651 = vmul.f32 %v3507, %v2719
      %v3652 = vmul.f32 %v3508, %v2720
      %v3653 = vmul.f32 %v3509, %v2525
      %v3654 = vmul.f32 %v3510, %v2721
      %v3655 = vmul.f32 %v3511, %v2722
      %v3656 = vmul.f32 %v3512, %v2723
      %v3657 = vmul.f32 %v3513, %v2724
      %v3658 = vmul.f32 %v3514, %v2725
      %v3659 = vmul.f32 %v3515, %v2726
      %v3660 = vmul.f32 %v3516, %v2727
      %v3661 = vmul.f32 %v3517, %v2526
      %v3662 = vmul.f32 %v3518, %v2728
      %v3663 = vmul.f32 %v3519, %v2729
      %v3664 = vmul.f32 %v3520, %v2730
      %v3665 = vmul.f32 %v3521, %v2731
      %v3666 = vmul.f32 %v3522, %v2732
      %v3667 = vmul.f32 %v3523, %v2733
      %v3668 = vmul.f32 %v3524, %v2734
      %v3669 = vmul.f32 %v3525, %v2528
      %v3670 = vmul.f32 %v3526, %v2735
      %v3671 = vmul.f32 %v3527, %v2736
      %v3672 = vmul.f32 %v3528, %v2737
      %v3673 = vmul.f32 %v3529, %v2738
      %v3674 = vmul.f32 %v3530, %v2739
      %v3675 = vmul.f32 %v3531, %v2740
      %v3676 = vmul.f32 %v3532, %v2741
      %v3677 = vmul.f32 %v3533, %v2529
      %v3678 = vmul.f32 %v3534, %v2742
      %v3679 = vmul.f32 %v3535, %v2743
      %v3680 = vmul.f32 %v3536, %v2744
      %v3681 = vmul.f32 %v3537, %v2745
      %v3682 = vmul.f32 %v3538, %v2746
      %v3683 = vmul.f32 %v3539, %v2747
      %v3684 = vmul.f32 %v3540, %v2748
      %v3685 = vmul.f32 %v3541, %v2531
      %v3686 = vmul.f32 %v3542, %v2749
      %v3687 = vmul.f32 %v3543, %v2750
      %v3688 = vmul.f32 %v3544, %v2751
      %v3689 = vmul.f32 %v3545, %v2752
      %v3690 = vmul.f32 %v3546, %v2753
      %v3691 = vmul.f32 %v3547, %v2754
      %v3692 = vmul.f32 %v3548, %v2755
      %v3693 = vmul.f32 %v3549, %v2532
      %v3694 = vmul.f32 %v3550, %v2756
      %v3695 = vmul.f32 %v3551, %v2757
      %v3696 = vmul.f32 %v3552, %v2758
      %v3697 = vmul.f32 %v3553, %v2759
      %v3698 = vmul.f32 %v3554, %v2760
      %v3699 = vmul.f32 %v3555, %v2761
      %v3700 = vmul.f32 %v3556, %v2762
      %v3701 = vmul.f32 %v3557, %v2534
      %v3702 = vmul.f32 %v3558, %v2763
      %v3703 = vmul.f32 %v3559, %v2764
      %v3704 = vmul.f32 %v3560, %v2765
      %v3705 = vmul.f32 %v3561, %v2766
      %v3706 = vmul.f32 %v3562, %v2767
      %v3707 = vmul.f32 %v3563, %v2768
      %v3708 = vmul.f32 %v3564, %v2769
      %v3709 = vmul.f32 %v3565, %v2535
      %v3710 = vmul.f32 %v3566, %v2770
      %v3711 = vmul.f32 %v3567, %v2771
      %v3712 = vmul.f32 %v3568, %v2772
      %v3713 = vmul.f32 %v3569, %v2773
      %v3714 = vmul.f32 %v3570, %v2774
      %v3715 = vmul.f32 %v3571, %v2775
      %v3716 = vmul.f32 %v3572, %v2776
      %v3717 = vmul.f32 %v3573, %v2537
      %v3718 = vmul.f32 %v3574, %v2777
      %v3719 = vmul.f32 %v3575, %v2778
      %v3720 = vmul.f32 %v3576, %v2779
      %v3721 = vmul.f32 %v3577, %v2780
      %v3722 = vmul.f32 %v3578, %v2781
      %v3723 = vmul.f32 %v3579, %v2782
      %v3724 = vmul.f32 %v3580, %v2783
      %v3725 = vmul.f32 %v3581, %v2538
      %v3726 = vmul.f32 %v3582, %v2784
      %v3727 = vmul.f32 %v3583, %v2785
      %v3728 = vmul.f32 %v3584, %v2786
      %v3729 = vmul.f32 %v3585, %v2787
      %v3730 = vmul.f32 %v3586, %v2788
      %v3731 = vmul.f32 %v3587, %v2789
      %v3732 = vmul.f32 %v3588, %v2790
      %v3733 = vmul.f32 %v3589, %v2540
      %v3734 = vmul.f32 %v3590, %v2791
      %v3735 = vmul.f32 %v3591, %v2792
      %v3736 = vmul.f32 %v3592, %v2793
      %v3737 = vmul.f32 %v3593, %v2794
      %v3738 = vmul.f32 %v3594, %v2795
      %v3739 = vmul.f32 %v3595, %v2796
      %v3740 = vmul.f32 %v3596, %v2797
      %v3741 = vmul.f32 %v3597, %v2541
      %v3742 = vld [vmem:[%s206] sm:$0xff]
      %v3743 = vld [vmem:[%s206 + $0x8] sm:$0xff]
      %v3744 = vld [vmem:[%s206 + $0x10] sm:$0xff]
      %v3745 = vld [vmem:[%s206 + $0x18] sm:$0xff]
      %v3746 = vld [vmem:[%s206 + $0x20] sm:$0xff]
      %v3747 = vld [vmem:[%s206 + $0x28] sm:$0xff]
      %v3748 = vld [vmem:[%s206 + $0x30] sm:$0xff]
      %v3749 = vld [vmem:[%s206 + $0x38] sm:$0xff]
      %v3750 = vld [vmem:[%s206 + $0x40] sm:$0xff]
      %v3751 = vld [vmem:[%s206 + $0x48] sm:$0xff]
      %v3752 = vld [vmem:[%s206 + $0x50] sm:$0xff]
      %v3753 = vld [vmem:[%s206 + $0x58] sm:$0xff]
      %v3754 = vld [vmem:[%s206 + $0x60] sm:$0xff]
      %v3755 = vld [vmem:[%s206 + $0x68] sm:$0xff]
      %v3756 = vld [vmem:[%s206 + $0x70] sm:$0xff]
      %v3757 = vld [vmem:[%s206 + $0x78] sm:$0xff]
      %v3886 = vrot.slane %v3615, 7
      %v3887 = vsel %vm876, %v3886, %v3614
      %v3888 = vrot.slane %v3616, 6
      %v3889 = vsel %vm879, %v3888, %v3887
      %v3890 = vrot.slane %v3617, 5
      %v3891 = vsel %vm882, %v3890, %v3889
      %v3892 = vrot.slane %v3618, 4
      %v3893 = vsel %vm885, %v3892, %v3891
      %v3894 = vrot.slane %v3619, 3
      %v3895 = vsel %vm888, %v3894, %v3893
      %v3896 = vrot.slane %v3620, 2
      %v3897 = vsel %vm891, %v3896, %v3895
      %v3898 = vrot.slane %v3621, 1
      %v3899 = vsel %vm894, %v3898, %v3897
      %v3900 = vrot.slane %v3623, 7
      %v3901 = vsel %vm876, %v3900, %v3622
      %v3902 = vrot.slane %v3624, 6
      %v3903 = vsel %vm879, %v3902, %v3901
      %v3904 = vrot.slane %v3625, 5
      %v3905 = vsel %vm882, %v3904, %v3903
      %v3906 = vrot.slane %v3626, 4
      %v3907 = vsel %vm885, %v3906, %v3905
      %v3908 = vrot.slane %v3627, 3
      %v3909 = vsel %vm888, %v3908, %v3907
      %v3910 = vrot.slane %v3628, 2
      %v3911 = vsel %vm891, %v3910, %v3909
      %v3912 = vrot.slane %v3629, 1
      %v3913 = vsel %vm894, %v3912, %v3911
      %v3914 = vrot.slane %v3631, 7
      %v3915 = vsel %vm876, %v3914, %v3630
      %v3916 = vrot.slane %v3632, 6
      %v3917 = vsel %vm879, %v3916, %v3915
      %v3918 = vrot.slane %v3633, 5
      %v3919 = vsel %vm882, %v3918, %v3917
      %v3920 = vrot.slane %v3634, 4
      %v3921 = vsel %vm885, %v3920, %v3919
      %v3922 = vrot.slane %v3635, 3
      %v3923 = vsel %vm888, %v3922, %v3921
      %v3924 = vrot.slane %v3636, 2
      %v3925 = vsel %vm891, %v3924, %v3923
      %v3926 = vrot.slane %v3637, 1
      %v3927 = vsel %vm894, %v3926, %v3925
      %v3928 = vrot.slane %v3639, 7
      %v3929 = vsel %vm876, %v3928, %v3638
      %v3930 = vrot.slane %v3640, 6
      %v3931 = vsel %vm879, %v3930, %v3929
      %v3932 = vrot.slane %v3641, 5
      %v3933 = vsel %vm882, %v3932, %v3931
      %v3934 = vrot.slane %v3642, 4
      %v3935 = vsel %vm885, %v3934, %v3933
      %v3936 = vrot.slane %v3643, 3
      %v3937 = vsel %vm888, %v3936, %v3935
      %v3938 = vrot.slane %v3644, 2
      %v3939 = vsel %vm891, %v3938, %v3937
      %v3940 = vrot.slane %v3645, 1
      %v3941 = vsel %vm894, %v3940, %v3939
      %v3942 = vrot.slane %v3647, 7
      %v3943 = vsel %vm876, %v3942, %v3646
      %v3944 = vrot.slane %v3648, 6
      %v3945 = vsel %vm879, %v3944, %v3943
      %v3946 = vrot.slane %v3649, 5
      %v3947 = vsel %vm882, %v3946, %v3945
      %v3948 = vrot.slane %v3650, 4
      %v3949 = vsel %vm885, %v3948, %v3947
      %v3950 = vrot.slane %v3651, 3
      %v3951 = vsel %vm888, %v3950, %v3949
      %v3952 = vrot.slane %v3652, 2
      %v3953 = vsel %vm891, %v3952, %v3951
      %v3954 = vrot.slane %v3653, 1
      %v3955 = vsel %vm894, %v3954, %v3953
      %v3956 = vrot.slane %v3655, 7
      %v3957 = vsel %vm876, %v3956, %v3654
      %v3958 = vrot.slane %v3656, 6
      %v3959 = vsel %vm879, %v3958, %v3957
      %v3960 = vrot.slane %v3657, 5
      %v3961 = vsel %vm882, %v3960, %v3959
      %v3962 = vrot.slane %v3658, 4
      %v3963 = vsel %vm885, %v3962, %v3961
      %v3964 = vrot.slane %v3659, 3
      %v3965 = vsel %vm888, %v3964, %v3963
      %v3966 = vrot.slane %v3660, 2
      %v3967 = vsel %vm891, %v3966, %v3965
      %v3968 = vrot.slane %v3661, 1
      %v3969 = vsel %vm894, %v3968, %v3967
      %v3970 = vrot.slane %v3663, 7
      %v3971 = vsel %vm876, %v3970, %v3662
      %v3972 = vrot.slane %v3664, 6
      %v3973 = vsel %vm879, %v3972, %v3971
      %v3974 = vrot.slane %v3665, 5
      %v3975 = vsel %vm882, %v3974, %v3973
      %v3976 = vrot.slane %v3666, 4
      %v3977 = vsel %vm885, %v3976, %v3975
      %v3978 = vrot.slane %v3667, 3
      %v3979 = vsel %vm888, %v3978, %v3977
      %v3980 = vrot.slane %v3668, 2
      %v3981 = vsel %vm891, %v3980, %v3979
      %v3982 = vrot.slane %v3669, 1
      %v3983 = vsel %vm894, %v3982, %v3981
      %v3984 = vrot.slane %v3671, 7
      %v3985 = vsel %vm876, %v3984, %v3670
      %v3986 = vrot.slane %v3672, 6
      %v3987 = vsel %vm879, %v3986, %v3985
      %v3988 = vrot.slane %v3673, 5
      %v3989 = vsel %vm882, %v3988, %v3987
      %v3990 = vrot.slane %v3674, 4
      %v3991 = vsel %vm885, %v3990, %v3989
      %v3992 = vrot.slane %v3675, 3
      %v3993 = vsel %vm888, %v3992, %v3991
      %v3994 = vrot.slane %v3676, 2
      %v3995 = vsel %vm891, %v3994, %v3993
      %v3996 = vrot.slane %v3677, 1
      %v3997 = vsel %vm894, %v3996, %v3995
      %v3998 = vrot.slane %v3679, 7
      %v3999 = vsel %vm876, %v3998, %v3678
      %v4000 = vrot.slane %v3680, 6
      %v4001 = vsel %vm879, %v4000, %v3999
      %v4002 = vrot.slane %v3681, 5
      %v4003 = vsel %vm882, %v4002, %v4001
      %v4004 = vrot.slane %v3682, 4
      %v4005 = vsel %vm885, %v4004, %v4003
      %v4006 = vrot.slane %v3683, 3
      %v4007 = vsel %vm888, %v4006, %v4005
      %v4008 = vrot.slane %v3684, 2
      %v4009 = vsel %vm891, %v4008, %v4007
      %v4010 = vrot.slane %v3685, 1
      %v4011 = vsel %vm894, %v4010, %v4009
      %v4012 = vrot.slane %v3687, 7
      %v4013 = vsel %vm876, %v4012, %v3686
      %v4014 = vrot.slane %v3688, 6
      %v4015 = vsel %vm879, %v4014, %v4013
      %v4016 = vrot.slane %v3689, 5
      %v4017 = vsel %vm882, %v4016, %v4015
      %v4018 = vrot.slane %v3690, 4
      %v4019 = vsel %vm885, %v4018, %v4017
      %v4020 = vrot.slane %v3691, 3
      %v4021 = vsel %vm888, %v4020, %v4019
      %v4022 = vrot.slane %v3692, 2
      %v4023 = vsel %vm891, %v4022, %v4021
      %v4024 = vrot.slane %v3693, 1
      %v4025 = vsel %vm894, %v4024, %v4023
      %v4026 = vrot.slane %v3695, 7
      %v4027 = vsel %vm876, %v4026, %v3694
      %v4028 = vrot.slane %v3696, 6
      %v4029 = vsel %vm879, %v4028, %v4027
      %v4030 = vrot.slane %v3697, 5
      %v4031 = vsel %vm882, %v4030, %v4029
      %v4032 = vrot.slane %v3698, 4
      %v4033 = vsel %vm885, %v4032, %v4031
      %v4034 = vrot.slane %v3699, 3
      %v4035 = vsel %vm888, %v4034, %v4033
      %v4036 = vrot.slane %v3700, 2
      %v4037 = vsel %vm891, %v4036, %v4035
      %v4038 = vrot.slane %v3701, 1
      %v4039 = vsel %vm894, %v4038, %v4037
      %v4040 = vrot.slane %v3703, 7
      %v4041 = vsel %vm876, %v4040, %v3702
      %v4042 = vrot.slane %v3704, 6
      %v4043 = vsel %vm879, %v4042, %v4041
      %v4044 = vrot.slane %v3705, 5
      %v4045 = vsel %vm882, %v4044, %v4043
      %v4046 = vrot.slane %v3706, 4
      %v4047 = vsel %vm885, %v4046, %v4045
      %v4048 = vrot.slane %v3707, 3
      %v4049 = vsel %vm888, %v4048, %v4047
      %v4050 = vrot.slane %v3708, 2
      %v4051 = vsel %vm891, %v4050, %v4049
      %v4052 = vrot.slane %v3709, 1
      %v4053 = vsel %vm894, %v4052, %v4051
      %v4054 = vrot.slane %v3711, 7
      %v4055 = vsel %vm876, %v4054, %v3710
      %v4056 = vrot.slane %v3712, 6
      %v4057 = vsel %vm879, %v4056, %v4055
      %v4058 = vrot.slane %v3713, 5
      %v4059 = vsel %vm882, %v4058, %v4057
      %v4060 = vrot.slane %v3714, 4
      %v4061 = vsel %vm885, %v4060, %v4059
      %v4062 = vrot.slane %v3715, 3
      %v4063 = vsel %vm888, %v4062, %v4061
      %v4064 = vrot.slane %v3716, 2
      %v4065 = vsel %vm891, %v4064, %v4063
      %v4066 = vrot.slane %v3717, 1
      %v4067 = vsel %vm894, %v4066, %v4065
      %v4068 = vrot.slane %v3719, 7
      %v4069 = vsel %vm876, %v4068, %v3718
      %v4070 = vrot.slane %v3720, 6
      %v4071 = vsel %vm879, %v4070, %v4069
      %v4072 = vrot.slane %v3721, 5
      %v4073 = vsel %vm882, %v4072, %v4071
      %v4074 = vrot.slane %v3722, 4
      %v4075 = vsel %vm885, %v4074, %v4073
      %v4076 = vrot.slane %v3723, 3
      %v4077 = vsel %vm888, %v4076, %v4075
      %v4078 = vrot.slane %v3724, 2
      %v4079 = vsel %vm891, %v4078, %v4077
      %v4080 = vrot.slane %v3725, 1
      %v4081 = vsel %vm894, %v4080, %v4079
      %v4082 = vrot.slane %v3727, 7
      %v4083 = vsel %vm876, %v4082, %v3726
      %v4084 = vrot.slane %v3728, 6
      %v4085 = vsel %vm879, %v4084, %v4083
      %v4086 = vrot.slane %v3729, 5
      %v4087 = vsel %vm882, %v4086, %v4085
      %v4088 = vrot.slane %v3730, 4
      %v4089 = vsel %vm885, %v4088, %v4087
      %v4090 = vrot.slane %v3731, 3
      %v4091 = vsel %vm888, %v4090, %v4089
      %v4092 = vrot.slane %v3732, 2
      %v4093 = vsel %vm891, %v4092, %v4091
      %v4094 = vrot.slane %v3733, 1
      %v4095 = vsel %vm894, %v4094, %v4093
      %v4096 = vrot.slane %v3735, 7
      %v4097 = vsel %vm876, %v4096, %v3734
      %v4098 = vrot.slane %v3736, 6
      %v4099 = vsel %vm879, %v4098, %v4097
      %v4100 = vrot.slane %v3737, 5
      %v4101 = vsel %vm882, %v4100, %v4099
      %v4102 = vrot.slane %v3738, 4
      %v4103 = vsel %vm885, %v4102, %v4101
      %v4104 = vrot.slane %v3739, 3
      %v4105 = vsel %vm888, %v4104, %v4103
      %v4106 = vrot.slane %v3740, 2
      %v4107 = vsel %vm891, %v4106, %v4105
      %v4108 = vrot.slane %v3741, 1
      %v4109 = vsel %vm894, %v4108, %v4107
      %v4126 = vadd.f32 %v3742, %v3899
      %v4127 = vadd.f32 %v3743, %v3913
      %v4128 = vadd.f32 %v3744, %v3927
      %v4129 = vadd.f32 %v3745, %v3941
      %v4130 = vadd.f32 %v3746, %v3955
      %v4131 = vadd.f32 %v3747, %v3969
      %v4132 = vadd.f32 %v3748, %v3983
      %v4133 = vadd.f32 %v3749, %v3997
      %v4134 = vadd.f32 %v3750, %v4011
      %v4135 = vadd.f32 %v3751, %v4025
      %v4136 = vadd.f32 %v3752, %v4039
      %v4137 = vadd.f32 %v3753, %v4053
      %v4138 = vadd.f32 %v3754, %v4067
      %v4139 = vadd.f32 %v3755, %v4081
      %v4140 = vadd.f32 %v3756, %v4095
      %v4141 = vadd.f32 %v3757, %v4109
      %4142 = vst.msk [vmem:[%s206] sm:$0xff] %vm1122, %v4126
      %4143 = vst.msk [vmem:[%s206 + $0x8] sm:$0xff] %vm1122, %v4127
      %4144 = vst.msk [vmem:[%s206 + $0x10] sm:$0xff] %vm1122, %v4128
      %4145 = vst.msk [vmem:[%s206 + $0x18] sm:$0xff] %vm1122, %v4129
      %4146 = vst.msk [vmem:[%s206 + $0x20] sm:$0xff] %vm1122, %v4130
      %4147 = vst.msk [vmem:[%s206 + $0x28] sm:$0xff] %vm1122, %v4131
      %4148 = vst.msk [vmem:[%s206 + $0x30] sm:$0xff] %vm1122, %v4132
      %4149 = vst.msk [vmem:[%s206 + $0x38] sm:$0xff] %vm1122, %v4133
      %4150 = vst.msk [vmem:[%s206 + $0x40] sm:$0xff] %vm1122, %v4134
      %4151 = vst.msk [vmem:[%s206 + $0x48] sm:$0xff] %vm1122, %v4135
      %4152 = vst.msk [vmem:[%s206 + $0x50] sm:$0xff] %vm1122, %v4136
      %4153 = vst.msk [vmem:[%s206 + $0x58] sm:$0xff] %vm1122, %v4137
      %4154 = vst.msk [vmem:[%s206 + $0x60] sm:$0xff] %vm1122, %v4138
      %4155 = vst.msk [vmem:[%s206 + $0x68] sm:$0xff] %vm1122, %v4139
      %4156 = vst.msk [vmem:[%s206 + $0x70] sm:$0xff] %vm1122, %v4140
      %4157 = vst.msk [vmem:[%s206 + $0x78] sm:$0xff] %vm1122, %v4141
      %v4158 = vld [vmem:[%s195 + $0x5] sm:$0x1]
      %v4159 = vld [vmem:[%s195 + $0x15] sm:$0x1]
      %v4160 = vld [vmem:[%s195 + $0x25] sm:$0x1]
      %v4161 = vld [vmem:[%s195 + $0x35] sm:$0x1]
      %v4162 = vld [vmem:[%s195 + $0x45] sm:$0x1]
      %v4163 = vld [vmem:[%s195 + $0x55] sm:$0x1]
      %v4164 = vld [vmem:[%s195 + $0x65] sm:$0x1]
      %v4165 = vld [vmem:[%s195 + $0x75] sm:$0x1]
      %v4166 = vld [vmem:[%s195 + $0x85] sm:$0x1]
      %v4167 = vld [vmem:[%s195 + $0x95] sm:$0x1]
      %v4168 = vld [vmem:[%s195 + $0xa5] sm:$0x1]
      %v4169 = vld [vmem:[%s195 + $0xb5] sm:$0x1]
      %v4170 = vld [vmem:[%s195 + $0xc5] sm:$0x1]
      %v4171 = vld [vmem:[%s195 + $0xd5] sm:$0x1]
      %v4172 = vld [vmem:[%s195 + $0xe5] sm:$0x1]
      %v4173 = vld [vmem:[%s195 + $0xf5] sm:$0x1]
      %v4174 = vld [vmem:[%s195 + $0x105] sm:$0x1]
      %v4175 = vld [vmem:[%s195 + $0x115] sm:$0x1]
      %v4176 = vld [vmem:[%s195 + $0x125] sm:$0x1]
      %v4177 = vld [vmem:[%s195 + $0x135] sm:$0x1]
      %v4178 = vld [vmem:[%s195 + $0x145] sm:$0x1]
      %v4179 = vld [vmem:[%s195 + $0x155] sm:$0x1]
      %v4180 = vld [vmem:[%s195 + $0x165] sm:$0x1]
      %v4181 = vld [vmem:[%s195 + $0x175] sm:$0x1]
      %v4182 = vld [vmem:[%s195 + $0x185] sm:$0x1]
      %v4183 = vld [vmem:[%s195 + $0x195] sm:$0x1]
      %v4184 = vld [vmem:[%s195 + $0x1a5] sm:$0x1]
      %v4185 = vld [vmem:[%s195 + $0x1b5] sm:$0x1]
      %v4186 = vld [vmem:[%s195 + $0x1c5] sm:$0x1]
      %v4187 = vld [vmem:[%s195 + $0x1d5] sm:$0x1]
      %v4188 = vld [vmem:[%s195 + $0x1e5] sm:$0x1]
      %v4189 = vld [vmem:[%s195 + $0x1f5] sm:$0x1]
      %v4190 = vld [vmem:[%s195 + $0x205] sm:$0x1]
      %v4191 = vld [vmem:[%s195 + $0x215] sm:$0x1]
      %v4192 = vld [vmem:[%s195 + $0x225] sm:$0x1]
      %v4193 = vld [vmem:[%s195 + $0x235] sm:$0x1]
      %v4194 = vld [vmem:[%s195 + $0x245] sm:$0x1]
      %v4195 = vld [vmem:[%s195 + $0x255] sm:$0x1]
      %v4196 = vld [vmem:[%s195 + $0x265] sm:$0x1]
      %v4197 = vld [vmem:[%s195 + $0x275] sm:$0x1]
      %v4198 = vld [vmem:[%s195 + $0x285] sm:$0x1]
      %v4199 = vld [vmem:[%s195 + $0x295] sm:$0x1]
      %v4200 = vld [vmem:[%s195 + $0x2a5] sm:$0x1]
      %v4201 = vld [vmem:[%s195 + $0x2b5] sm:$0x1]
      %v4202 = vld [vmem:[%s195 + $0x2c5] sm:$0x1]
      %v4203 = vld [vmem:[%s195 + $0x2d5] sm:$0x1]
      %v4204 = vld [vmem:[%s195 + $0x2e5] sm:$0x1]
      %v4205 = vld [vmem:[%s195 + $0x2f5] sm:$0x1]
      %v4206 = vld [vmem:[%s195 + $0x305] sm:$0x1]
      %v4207 = vld [vmem:[%s195 + $0x315] sm:$0x1]
      %v4208 = vld [vmem:[%s195 + $0x325] sm:$0x1]
      %v4209 = vld [vmem:[%s195 + $0x335] sm:$0x1]
      %v4210 = vld [vmem:[%s195 + $0x345] sm:$0x1]
      %v4211 = vld [vmem:[%s195 + $0x355] sm:$0x1]
      %v4212 = vld [vmem:[%s195 + $0x365] sm:$0x1]
      %v4213 = vld [vmem:[%s195 + $0x375] sm:$0x1]
      %v4214 = vld [vmem:[%s195 + $0x385] sm:$0x1]
      %v4215 = vld [vmem:[%s195 + $0x395] sm:$0x1]
      %v4216 = vld [vmem:[%s195 + $0x3a5] sm:$0x1]
      %v4217 = vld [vmem:[%s195 + $0x3b5] sm:$0x1]
      %v4218 = vld [vmem:[%s195 + $0x3c5] sm:$0x1]
      %v4219 = vld [vmem:[%s195 + $0x3d5] sm:$0x1]
      %v4220 = vld [vmem:[%s195 + $0x3e5] sm:$0x1]
      %v4221 = vld [vmem:[%s195 + $0x3f5] sm:$0x1]
      %v4222 = vld [vmem:[%s195 + $0x405] sm:$0x1]
      %v4223 = vld [vmem:[%s195 + $0x415] sm:$0x1]
      %v4224 = vld [vmem:[%s195 + $0x425] sm:$0x1]
      %v4225 = vld [vmem:[%s195 + $0x435] sm:$0x1]
      %v4226 = vld [vmem:[%s195 + $0x445] sm:$0x1]
      %v4227 = vld [vmem:[%s195 + $0x455] sm:$0x1]
      %v4228 = vld [vmem:[%s195 + $0x465] sm:$0x1]
      %v4229 = vld [vmem:[%s195 + $0x475] sm:$0x1]
      %v4230 = vld [vmem:[%s195 + $0x485] sm:$0x1]
      %v4231 = vld [vmem:[%s195 + $0x495] sm:$0x1]
      %v4232 = vld [vmem:[%s195 + $0x4a5] sm:$0x1]
      %v4233 = vld [vmem:[%s195 + $0x4b5] sm:$0x1]
      %v4234 = vld [vmem:[%s195 + $0x4c5] sm:$0x1]
      %v4235 = vld [vmem:[%s195 + $0x4d5] sm:$0x1]
      %v4236 = vld [vmem:[%s195 + $0x4e5] sm:$0x1]
      %v4237 = vld [vmem:[%s195 + $0x4f5] sm:$0x1]
      %v4238 = vld [vmem:[%s195 + $0x505] sm:$0x1]
      %v4239 = vld [vmem:[%s195 + $0x515] sm:$0x1]
      %v4240 = vld [vmem:[%s195 + $0x525] sm:$0x1]
      %v4241 = vld [vmem:[%s195 + $0x535] sm:$0x1]
      %v4242 = vld [vmem:[%s195 + $0x545] sm:$0x1]
      %v4243 = vld [vmem:[%s195 + $0x555] sm:$0x1]
      %v4244 = vld [vmem:[%s195 + $0x565] sm:$0x1]
      %v4245 = vld [vmem:[%s195 + $0x575] sm:$0x1]
      %v4246 = vld [vmem:[%s195 + $0x585] sm:$0x1]
      %v4247 = vld [vmem:[%s195 + $0x595] sm:$0x1]
      %v4248 = vld [vmem:[%s195 + $0x5a5] sm:$0x1]
      %v4249 = vld [vmem:[%s195 + $0x5b5] sm:$0x1]
      %v4250 = vld [vmem:[%s195 + $0x5c5] sm:$0x1]
      %v4251 = vld [vmem:[%s195 + $0x5d5] sm:$0x1]
      %v4252 = vld [vmem:[%s195 + $0x5e5] sm:$0x1]
      %v4253 = vld [vmem:[%s195 + $0x5f5] sm:$0x1]
      %v4254 = vld [vmem:[%s195 + $0x605] sm:$0x1]
      %v4255 = vld [vmem:[%s195 + $0x615] sm:$0x1]
      %v4256 = vld [vmem:[%s195 + $0x625] sm:$0x1]
      %v4257 = vld [vmem:[%s195 + $0x635] sm:$0x1]
      %v4258 = vld [vmem:[%s195 + $0x645] sm:$0x1]
      %v4259 = vld [vmem:[%s195 + $0x655] sm:$0x1]
      %v4260 = vld [vmem:[%s195 + $0x665] sm:$0x1]
      %v4261 = vld [vmem:[%s195 + $0x675] sm:$0x1]
      %v4262 = vld [vmem:[%s195 + $0x685] sm:$0x1]
      %v4263 = vld [vmem:[%s195 + $0x695] sm:$0x1]
      %v4264 = vld [vmem:[%s195 + $0x6a5] sm:$0x1]
      %v4265 = vld [vmem:[%s195 + $0x6b5] sm:$0x1]
      %v4266 = vld [vmem:[%s195 + $0x6c5] sm:$0x1]
      %v4267 = vld [vmem:[%s195 + $0x6d5] sm:$0x1]
      %v4268 = vld [vmem:[%s195 + $0x6e5] sm:$0x1]
      %v4269 = vld [vmem:[%s195 + $0x6f5] sm:$0x1]
      %v4270 = vld [vmem:[%s195 + $0x705] sm:$0x1]
      %v4271 = vld [vmem:[%s195 + $0x715] sm:$0x1]
      %v4272 = vld [vmem:[%s195 + $0x725] sm:$0x1]
      %v4273 = vld [vmem:[%s195 + $0x735] sm:$0x1]
      %v4274 = vld [vmem:[%s195 + $0x745] sm:$0x1]
      %v4275 = vld [vmem:[%s195 + $0x755] sm:$0x1]
      %v4276 = vld [vmem:[%s195 + $0x765] sm:$0x1]
      %v4277 = vld [vmem:[%s195 + $0x775] sm:$0x1]
      %v4278 = vld [vmem:[%s195 + $0x785] sm:$0x1]
      %v4279 = vld [vmem:[%s195 + $0x795] sm:$0x1]
      %v4280 = vld [vmem:[%s195 + $0x7a5] sm:$0x1]
      %v4281 = vld [vmem:[%s195 + $0x7b5] sm:$0x1]
      %v4282 = vld [vmem:[%s195 + $0x7c5] sm:$0x1]
      %v4283 = vld [vmem:[%s195 + $0x7d5] sm:$0x1]
      %v4284 = vld [vmem:[%s195 + $0x7e5] sm:$0x1]
      %v4285 = vld [vmem:[%s195 + $0x7f5] sm:$0x1]
      %v4286 = vrot.slane %v2520, 1
      %v4287 = vrot.slane %v2523, 1
      %v4288 = vrot.slane %v2526, 1
      %v4289 = vrot.slane %v2529, 1
      %v4290 = vrot.slane %v2532, 1
      %v4291 = vrot.slane %v2535, 1
      %v4292 = vrot.slane %v2538, 1
      %v4293 = vrot.slane %v2541, 1
      %v4302 = vmul.f32 %v4158, %v2687
      %v4303 = vmul.f32 %v4159, %v2688
      %v4304 = vmul.f32 %v4160, %v2689
      %v4305 = vmul.f32 %v4161, %v2690
      %v4306 = vmul.f32 %v4162, %v2691
      %v4307 = vmul.f32 %v4163, %v2692
      %v4308 = vmul.f32 %v4164, %v2519
      %v4309 = vmul.f32 %v4165, %v2693
      %v4310 = vmul.f32 %v4166, %v2694
      %v4311 = vmul.f32 %v4167, %v2695
      %v4312 = vmul.f32 %v4168, %v2696
      %v4313 = vmul.f32 %v4169, %v2697
      %v4314 = vmul.f32 %v4170, %v2698
      %v4315 = vmul.f32 %v4171, %v2699
      %v4316 = vmul.f32 %v4172, %v2520
      %v4317 = vmul.f32 %v4173, %v4286
      %v4318 = vmul.f32 %v4174, %v2701
      %v4319 = vmul.f32 %v4175, %v2702
      %v4320 = vmul.f32 %v4176, %v2703
      %v4321 = vmul.f32 %v4177, %v2704
      %v4322 = vmul.f32 %v4178, %v2705
      %v4323 = vmul.f32 %v4179, %v2706
      %v4324 = vmul.f32 %v4180, %v2522
      %v4325 = vmul.f32 %v4181, %v2707
      %v4326 = vmul.f32 %v4182, %v2708
      %v4327 = vmul.f32 %v4183, %v2709
      %v4328 = vmul.f32 %v4184, %v2710
      %v4329 = vmul.f32 %v4185, %v2711
      %v4330 = vmul.f32 %v4186, %v2712
      %v4331 = vmul.f32 %v4187, %v2713
      %v4332 = vmul.f32 %v4188, %v2523
      %v4333 = vmul.f32 %v4189, %v4287
      %v4334 = vmul.f32 %v4190, %v2715
      %v4335 = vmul.f32 %v4191, %v2716
      %v4336 = vmul.f32 %v4192, %v2717
      %v4337 = vmul.f32 %v4193, %v2718
      %v4338 = vmul.f32 %v4194, %v2719
      %v4339 = vmul.f32 %v4195, %v2720
      %v4340 = vmul.f32 %v4196, %v2525
      %v4341 = vmul.f32 %v4197, %v2721
      %v4342 = vmul.f32 %v4198, %v2722
      %v4343 = vmul.f32 %v4199, %v2723
      %v4344 = vmul.f32 %v4200, %v2724
      %v4345 = vmul.f32 %v4201, %v2725
      %v4346 = vmul.f32 %v4202, %v2726
      %v4347 = vmul.f32 %v4203, %v2727
      %v4348 = vmul.f32 %v4204, %v2526
      %v4349 = vmul.f32 %v4205, %v4288
      %v4350 = vmul.f32 %v4206, %v2729
      %v4351 = vmul.f32 %v4207, %v2730
      %v4352 = vmul.f32 %v4208, %v2731
      %v4353 = vmul.f32 %v4209, %v2732
      %v4354 = vmul.f32 %v4210, %v2733
      %v4355 = vmul.f32 %v4211, %v2734
      %v4356 = vmul.f32 %v4212, %v2528
      %v4357 = vmul.f32 %v4213, %v2735
      %v4358 = vmul.f32 %v4214, %v2736
      %v4359 = vmul.f32 %v4215, %v2737
      %v4360 = vmul.f32 %v4216, %v2738
      %v4361 = vmul.f32 %v4217, %v2739
      %v4362 = vmul.f32 %v4218, %v2740
      %v4363 = vmul.f32 %v4219, %v2741
      %v4364 = vmul.f32 %v4220, %v2529
      %v4365 = vmul.f32 %v4221, %v4289
      %v4366 = vmul.f32 %v4222, %v2743
      %v4367 = vmul.f32 %v4223, %v2744
      %v4368 = vmul.f32 %v4224, %v2745
      %v4369 = vmul.f32 %v4225, %v2746
      %v4370 = vmul.f32 %v4226, %v2747
      %v4371 = vmul.f32 %v4227, %v2748
      %v4372 = vmul.f32 %v4228, %v2531
      %v4373 = vmul.f32 %v4229, %v2749
      %v4374 = vmul.f32 %v4230, %v2750
      %v4375 = vmul.f32 %v4231, %v2751
      %v4376 = vmul.f32 %v4232, %v2752
      %v4377 = vmul.f32 %v4233, %v2753
      %v4378 = vmul.f32 %v4234, %v2754
      %v4379 = vmul.f32 %v4235, %v2755
      %v4380 = vmul.f32 %v4236, %v2532
      %v4381 = vmul.f32 %v4237, %v4290
      %v4382 = vmul.f32 %v4238, %v2757
      %v4383 = vmul.f32 %v4239, %v2758
      %v4384 = vmul.f32 %v4240, %v2759
      %v4385 = vmul.f32 %v4241, %v2760
      %v4386 = vmul.f32 %v4242, %v2761
      %v4387 = vmul.f32 %v4243, %v2762
      %v4388 = vmul.f32 %v4244, %v2534
      %v4389 = vmul.f32 %v4245, %v2763
      %v4390 = vmul.f32 %v4246, %v2764
      %v4391 = vmul.f32 %v4247, %v2765
      %v4392 = vmul.f32 %v4248, %v2766
      %v4393 = vmul.f32 %v4249, %v2767
      %v4394 = vmul.f32 %v4250, %v2768
      %v4395 = vmul.f32 %v4251, %v2769
      %v4396 = vmul.f32 %v4252, %v2535
      %v4397 = vmul.f32 %v4253, %v4291
      %v4398 = vmul.f32 %v4254, %v2771
      %v4399 = vmul.f32 %v4255, %v2772
      %v4400 = vmul.f32 %v4256, %v2773
      %v4401 = vmul.f32 %v4257, %v2774
      %v4402 = vmul.f32 %v4258, %v2775
      %v4403 = vmul.f32 %v4259, %v2776
      %v4404 = vmul.f32 %v4260, %v2537
      %v4405 = vmul.f32 %v4261, %v2777
      %v4406 = vmul.f32 %v4262, %v2778
      %v4407 = vmul.f32 %v4263, %v2779
      %v4408 = vmul.f32 %v4264, %v2780
      %v4409 = vmul.f32 %v4265, %v2781
      %v4410 = vmul.f32 %v4266, %v2782
      %v4411 = vmul.f32 %v4267, %v2783
      %v4412 = vmul.f32 %v4268, %v2538
      %v4413 = vmul.f32 %v4269, %v4292
      %v4414 = vmul.f32 %v4270, %v2785
      %v4415 = vmul.f32 %v4271, %v2786
      %v4416 = vmul.f32 %v4272, %v2787
      %v4417 = vmul.f32 %v4273, %v2788
      %v4418 = vmul.f32 %v4274, %v2789
      %v4419 = vmul.f32 %v4275, %v2790
      %v4420 = vmul.f32 %v4276, %v2540
      %v4421 = vmul.f32 %v4277, %v2791
      %v4422 = vmul.f32 %v4278, %v2792
      %v4423 = vmul.f32 %v4279, %v2793
      %v4424 = vmul.f32 %v4280, %v2794
      %v4425 = vmul.f32 %v4281, %v2795
      %v4426 = vmul.f32 %v4282, %v2796
      %v4427 = vmul.f32 %v4283, %v2797
      %v4428 = vmul.f32 %v4284, %v2541
      %v4429 = vmul.f32 %v4285, %v4293
      %v4430 = vld [vmem:[%s206] sm:$0xff]
      %v4431 = vld [vmem:[%s206 + $0x8] sm:$0xff]
      %v4432 = vld [vmem:[%s206 + $0x10] sm:$0xff]
      %v4433 = vld [vmem:[%s206 + $0x18] sm:$0xff]
      %v4434 = vld [vmem:[%s206 + $0x20] sm:$0xff]
      %v4435 = vld [vmem:[%s206 + $0x28] sm:$0xff]
      %v4436 = vld [vmem:[%s206 + $0x30] sm:$0xff]
      %v4437 = vld [vmem:[%s206 + $0x38] sm:$0xff]
      %v4438 = vld [vmem:[%s206 + $0x40] sm:$0xff]
      %v4439 = vld [vmem:[%s206 + $0x48] sm:$0xff]
      %v4440 = vld [vmem:[%s206 + $0x50] sm:$0xff]
      %v4441 = vld [vmem:[%s206 + $0x58] sm:$0xff]
      %v4442 = vld [vmem:[%s206 + $0x60] sm:$0xff]
      %v4443 = vld [vmem:[%s206 + $0x68] sm:$0xff]
      %v4444 = vld [vmem:[%s206 + $0x70] sm:$0xff]
      %v4445 = vld [vmem:[%s206 + $0x78] sm:$0xff]
      %v4574 = vrot.slane %v4303, 7
      %v4575 = vsel %vm876, %v4574, %v4302
      %v4576 = vrot.slane %v4304, 6
      %v4577 = vsel %vm879, %v4576, %v4575
      %v4578 = vrot.slane %v4305, 5
      %v4579 = vsel %vm882, %v4578, %v4577
      %v4580 = vrot.slane %v4306, 4
      %v4581 = vsel %vm885, %v4580, %v4579
      %v4582 = vrot.slane %v4307, 3
      %v4583 = vsel %vm888, %v4582, %v4581
      %v4584 = vrot.slane %v4308, 2
      %v4585 = vsel %vm891, %v4584, %v4583
      %v4586 = vrot.slane %v4309, 1
      %v4587 = vsel %vm894, %v4586, %v4585
      %v4588 = vrot.slane %v4311, 7
      %v4589 = vsel %vm876, %v4588, %v4310
      %v4590 = vrot.slane %v4312, 6
      %v4591 = vsel %vm879, %v4590, %v4589
      %v4592 = vrot.slane %v4313, 5
      %v4593 = vsel %vm882, %v4592, %v4591
      %v4594 = vrot.slane %v4314, 4
      %v4595 = vsel %vm885, %v4594, %v4593
      %v4596 = vrot.slane %v4315, 3
      %v4597 = vsel %vm888, %v4596, %v4595
      %v4598 = vrot.slane %v4316, 2
      %v4599 = vsel %vm891, %v4598, %v4597
      %v4600 = vrot.slane %v4317, 1
      %v4601 = vsel %vm894, %v4600, %v4599
      %v4602 = vrot.slane %v4319, 7
      %v4603 = vsel %vm876, %v4602, %v4318
      %v4604 = vrot.slane %v4320, 6
      %v4605 = vsel %vm879, %v4604, %v4603
      %v4606 = vrot.slane %v4321, 5
      %v4607 = vsel %vm882, %v4606, %v4605
      %v4608 = vrot.slane %v4322, 4
      %v4609 = vsel %vm885, %v4608, %v4607
      %v4610 = vrot.slane %v4323, 3
      %v4611 = vsel %vm888, %v4610, %v4609
      %v4612 = vrot.slane %v4324, 2
      %v4613 = vsel %vm891, %v4612, %v4611
      %v4614 = vrot.slane %v4325, 1
      %v4615 = vsel %vm894, %v4614, %v4613
      %v4616 = vrot.slane %v4327, 7
      %v4617 = vsel %vm876, %v4616, %v4326
      %v4618 = vrot.slane %v4328, 6
      %v4619 = vsel %vm879, %v4618, %v4617
      %v4620 = vrot.slane %v4329, 5
      %v4621 = vsel %vm882, %v4620, %v4619
      %v4622 = vrot.slane %v4330, 4
      %v4623 = vsel %vm885, %v4622, %v4621
      %v4624 = vrot.slane %v4331, 3
      %v4625 = vsel %vm888, %v4624, %v4623
      %v4626 = vrot.slane %v4332, 2
      %v4627 = vsel %vm891, %v4626, %v4625
      %v4628 = vrot.slane %v4333, 1
      %v4629 = vsel %vm894, %v4628, %v4627
      %v4630 = vrot.slane %v4335, 7
      %v4631 = vsel %vm876, %v4630, %v4334
      %v4632 = vrot.slane %v4336, 6
      %v4633 = vsel %vm879, %v4632, %v4631
      %v4634 = vrot.slane %v4337, 5
      %v4635 = vsel %vm882, %v4634, %v4633
      %v4636 = vrot.slane %v4338, 4
      %v4637 = vsel %vm885, %v4636, %v4635
      %v4638 = vrot.slane %v4339, 3
      %v4639 = vsel %vm888, %v4638, %v4637
      %v4640 = vrot.slane %v4340, 2
      %v4641 = vsel %vm891, %v4640, %v4639
      %v4642 = vrot.slane %v4341, 1
      %v4643 = vsel %vm894, %v4642, %v4641
      %v4644 = vrot.slane %v4343, 7
      %v4645 = vsel %vm876, %v4644, %v4342
      %v4646 = vrot.slane %v4344, 6
      %v4647 = vsel %vm879, %v4646, %v4645
      %v4648 = vrot.slane %v4345, 5
      %v4649 = vsel %vm882, %v4648, %v4647
      %v4650 = vrot.slane %v4346, 4
      %v4651 = vsel %vm885, %v4650, %v4649
      %v4652 = vrot.slane %v4347, 3
      %v4653 = vsel %vm888, %v4652, %v4651
      %v4654 = vrot.slane %v4348, 2
      %v4655 = vsel %vm891, %v4654, %v4653
      %v4656 = vrot.slane %v4349, 1
      %v4657 = vsel %vm894, %v4656, %v4655
      %v4658 = vrot.slane %v4351, 7
      %v4659 = vsel %vm876, %v4658, %v4350
      %v4660 = vrot.slane %v4352, 6
      %v4661 = vsel %vm879, %v4660, %v4659
      %v4662 = vrot.slane %v4353, 5
      %v4663 = vsel %vm882, %v4662, %v4661
      %v4664 = vrot.slane %v4354, 4
      %v4665 = vsel %vm885, %v4664, %v4663
      %v4666 = vrot.slane %v4355, 3
      %v4667 = vsel %vm888, %v4666, %v4665
      %v4668 = vrot.slane %v4356, 2
      %v4669 = vsel %vm891, %v4668, %v4667
      %v4670 = vrot.slane %v4357, 1
      %v4671 = vsel %vm894, %v4670, %v4669
      %v4672 = vrot.slane %v4359, 7
      %v4673 = vsel %vm876, %v4672, %v4358
      %v4674 = vrot.slane %v4360, 6
      %v4675 = vsel %vm879, %v4674, %v4673
      %v4676 = vrot.slane %v4361, 5
      %v4677 = vsel %vm882, %v4676, %v4675
      %v4678 = vrot.slane %v4362, 4
      %v4679 = vsel %vm885, %v4678, %v4677
      %v4680 = vrot.slane %v4363, 3
      %v4681 = vsel %vm888, %v4680, %v4679
      %v4682 = vrot.slane %v4364, 2
      %v4683 = vsel %vm891, %v4682, %v4681
      %v4684 = vrot.slane %v4365, 1
      %v4685 = vsel %vm894, %v4684, %v4683
      %v4686 = vrot.slane %v4367, 7
      %v4687 = vsel %vm876, %v4686, %v4366
      %v4688 = vrot.slane %v4368, 6
      %v4689 = vsel %vm879, %v4688, %v4687
      %v4690 = vrot.slane %v4369, 5
      %v4691 = vsel %vm882, %v4690, %v4689
      %v4692 = vrot.slane %v4370, 4
      %v4693 = vsel %vm885, %v4692, %v4691
      %v4694 = vrot.slane %v4371, 3
      %v4695 = vsel %vm888, %v4694, %v4693
      %v4696 = vrot.slane %v4372, 2
      %v4697 = vsel %vm891, %v4696, %v4695
      %v4698 = vrot.slane %v4373, 1
      %v4699 = vsel %vm894, %v4698, %v4697
      %v4700 = vrot.slane %v4375, 7
      %v4701 = vsel %vm876, %v4700, %v4374
      %v4702 = vrot.slane %v4376, 6
      %v4703 = vsel %vm879, %v4702, %v4701
      %v4704 = vrot.slane %v4377, 5
      %v4705 = vsel %vm882, %v4704, %v4703
      %v4706 = vrot.slane %v4378, 4
      %v4707 = vsel %vm885, %v4706, %v4705
      %v4708 = vrot.slane %v4379, 3
      %v4709 = vsel %vm888, %v4708, %v4707
      %v4710 = vrot.slane %v4380, 2
      %v4711 = vsel %vm891, %v4710, %v4709
      %v4712 = vrot.slane %v4381, 1
      %v4713 = vsel %vm894, %v4712, %v4711
      %v4714 = vrot.slane %v4383, 7
      %v4715 = vsel %vm876, %v4714, %v4382
      %v4716 = vrot.slane %v4384, 6
      %v4717 = vsel %vm879, %v4716, %v4715
      %v4718 = vrot.slane %v4385, 5
      %v4719 = vsel %vm882, %v4718, %v4717
      %v4720 = vrot.slane %v4386, 4
      %v4721 = vsel %vm885, %v4720, %v4719
      %v4722 = vrot.slane %v4387, 3
      %v4723 = vsel %vm888, %v4722, %v4721
      %v4724 = vrot.slane %v4388, 2
      %v4725 = vsel %vm891, %v4724, %v4723
      %v4726 = vrot.slane %v4389, 1
      %v4727 = vsel %vm894, %v4726, %v4725
      %v4728 = vrot.slane %v4391, 7
      %v4729 = vsel %vm876, %v4728, %v4390
      %v4730 = vrot.slane %v4392, 6
      %v4731 = vsel %vm879, %v4730, %v4729
      %v4732 = vrot.slane %v4393, 5
      %v4733 = vsel %vm882, %v4732, %v4731
      %v4734 = vrot.slane %v4394, 4
      %v4735 = vsel %vm885, %v4734, %v4733
      %v4736 = vrot.slane %v4395, 3
      %v4737 = vsel %vm888, %v4736, %v4735
      %v4738 = vrot.slane %v4396, 2
      %v4739 = vsel %vm891, %v4738, %v4737
      %v4740 = vrot.slane %v4397, 1
      %v4741 = vsel %vm894, %v4740, %v4739
      %v4742 = vrot.slane %v4399, 7
      %v4743 = vsel %vm876, %v4742, %v4398
      %v4744 = vrot.slane %v4400, 6
      %v4745 = vsel %vm879, %v4744, %v4743
      %v4746 = vrot.slane %v4401, 5
      %v4747 = vsel %vm882, %v4746, %v4745
      %v4748 = vrot.slane %v4402, 4
      %v4749 = vsel %vm885, %v4748, %v4747
      %v4750 = vrot.slane %v4403, 3
      %v4751 = vsel %vm888, %v4750, %v4749
      %v4752 = vrot.slane %v4404, 2
      %v4753 = vsel %vm891, %v4752, %v4751
      %v4754 = vrot.slane %v4405, 1
      %v4755 = vsel %vm894, %v4754, %v4753
      %v4756 = vrot.slane %v4407, 7
      %v4757 = vsel %vm876, %v4756, %v4406
      %v4758 = vrot.slane %v4408, 6
      %v4759 = vsel %vm879, %v4758, %v4757
      %v4760 = vrot.slane %v4409, 5
      %v4761 = vsel %vm882, %v4760, %v4759
      %v4762 = vrot.slane %v4410, 4
      %v4763 = vsel %vm885, %v4762, %v4761
      %v4764 = vrot.slane %v4411, 3
      %v4765 = vsel %vm888, %v4764, %v4763
      %v4766 = vrot.slane %v4412, 2
      %v4767 = vsel %vm891, %v4766, %v4765
      %v4768 = vrot.slane %v4413, 1
      %v4769 = vsel %vm894, %v4768, %v4767
      %v4770 = vrot.slane %v4415, 7
      %v4771 = vsel %vm876, %v4770, %v4414
      %v4772 = vrot.slane %v4416, 6
      %v4773 = vsel %vm879, %v4772, %v4771
      %v4774 = vrot.slane %v4417, 5
      %v4775 = vsel %vm882, %v4774, %v4773
      %v4776 = vrot.slane %v4418, 4
      %v4777 = vsel %vm885, %v4776, %v4775
      %v4778 = vrot.slane %v4419, 3
      %v4779 = vsel %vm888, %v4778, %v4777
      %v4780 = vrot.slane %v4420, 2
      %v4781 = vsel %vm891, %v4780, %v4779
      %v4782 = vrot.slane %v4421, 1
      %v4783 = vsel %vm894, %v4782, %v4781
      %v4784 = vrot.slane %v4423, 7
      %v4785 = vsel %vm876, %v4784, %v4422
      %v4786 = vrot.slane %v4424, 6
      %v4787 = vsel %vm879, %v4786, %v4785
      %v4788 = vrot.slane %v4425, 5
      %v4789 = vsel %vm882, %v4788, %v4787
      %v4790 = vrot.slane %v4426, 4
      %v4791 = vsel %vm885, %v4790, %v4789
      %v4792 = vrot.slane %v4427, 3
      %v4793 = vsel %vm888, %v4792, %v4791
      %v4794 = vrot.slane %v4428, 2
      %v4795 = vsel %vm891, %v4794, %v4793
      %v4796 = vrot.slane %v4429, 1
      %v4797 = vsel %vm894, %v4796, %v4795
      %v4814 = vadd.f32 %v4430, %v4587
      %v4815 = vadd.f32 %v4431, %v4601
      %v4816 = vadd.f32 %v4432, %v4615
      %v4817 = vadd.f32 %v4433, %v4629
      %v4818 = vadd.f32 %v4434, %v4643
      %v4819 = vadd.f32 %v4435, %v4657
      %v4820 = vadd.f32 %v4436, %v4671
      %v4821 = vadd.f32 %v4437, %v4685
      %v4822 = vadd.f32 %v4438, %v4699
      %v4823 = vadd.f32 %v4439, %v4713
      %v4824 = vadd.f32 %v4440, %v4727
      %v4825 = vadd.f32 %v4441, %v4741
      %v4826 = vadd.f32 %v4442, %v4755
      %v4827 = vadd.f32 %v4443, %v4769
      %v4828 = vadd.f32 %v4444, %v4783
      %v4829 = vadd.f32 %v4445, %v4797
      %4830 = vst.msk [vmem:[%s206] sm:$0xff] %vm1122, %v4814
      %4831 = vst.msk [vmem:[%s206 + $0x8] sm:$0xff] %vm1122, %v4815
      %4832 = vst.msk [vmem:[%s206 + $0x10] sm:$0xff] %vm1122, %v4816
      %4833 = vst.msk [vmem:[%s206 + $0x18] sm:$0xff] %vm1122, %v4817
      %4834 = vst.msk [vmem:[%s206 + $0x20] sm:$0xff] %vm1122, %v4818
      %4835 = vst.msk [vmem:[%s206 + $0x28] sm:$0xff] %vm1122, %v4819
      %4836 = vst.msk [vmem:[%s206 + $0x30] sm:$0xff] %vm1122, %v4820
      %4837 = vst.msk [vmem:[%s206 + $0x38] sm:$0xff] %vm1122, %v4821
      %4838 = vst.msk [vmem:[%s206 + $0x40] sm:$0xff] %vm1122, %v4822
      %4839 = vst.msk [vmem:[%s206 + $0x48] sm:$0xff] %vm1122, %v4823
      %4840 = vst.msk [vmem:[%s206 + $0x50] sm:$0xff] %vm1122, %v4824
      %4841 = vst.msk [vmem:[%s206 + $0x58] sm:$0xff] %vm1122, %v4825
      %4842 = vst.msk [vmem:[%s206 + $0x60] sm:$0xff] %vm1122, %v4826
      %4843 = vst.msk [vmem:[%s206 + $0x68] sm:$0xff] %vm1122, %v4827
      %4844 = vst.msk [vmem:[%s206 + $0x70] sm:$0xff] %vm1122, %v4828
      %4845 = vst.msk [vmem:[%s206 + $0x78] sm:$0xff] %vm1122, %v4829
      %s4846 = sadd.s32 %s208, 2
      %s4847 = smul.u32 %s4846, 24
      %s4848 = scalar_lea.vmem %s185, %s4847
      %v4849 = vld [vmem:[%s4848] sm:$0xff]
      %v4850 = vld [vmem:[%s4848 + $0x8] sm:$0xff]
      %v4851 = vld [vmem:[%s4848 + $0x10] sm:$0x3]
      %v4852 = vld [vmem:[%s4848 + $0x18] sm:$0xff]
      %v4853 = vld [vmem:[%s4848 + $0x20] sm:$0xff]
      %v4854 = vld [vmem:[%s4848 + $0x28] sm:$0x3]
      %v4855 = vld [vmem:[%s4848 + $0x30] sm:$0xff]
      %v4856 = vld [vmem:[%s4848 + $0x38] sm:$0xff]
      %v4857 = vld [vmem:[%s4848 + $0x40] sm:$0x3]
      %v4858 = vld [vmem:[%s4848 + $0x48] sm:$0xff]
      %v4859 = vld [vmem:[%s4848 + $0x50] sm:$0xff]
      %v4860 = vld [vmem:[%s4848 + $0x58] sm:$0x3]
      %v4861 = vld [vmem:[%s4848 + $0x60] sm:$0xff]
      %v4862 = vld [vmem:[%s4848 + $0x68] sm:$0xff]
      %v4863 = vld [vmem:[%s4848 + $0x70] sm:$0x3]
      %v4864 = vld [vmem:[%s4848 + $0x78] sm:$0xff]
      %v4865 = vld [vmem:[%s4848 + $0x80] sm:$0xff]
      %v4866 = vld [vmem:[%s4848 + $0x88] sm:$0x3]
      %v4867 = vld [vmem:[%s4848 + $0x90] sm:$0xff]
      %v4868 = vld [vmem:[%s4848 + $0x98] sm:$0xff]
      %v4869 = vld [vmem:[%s4848 + $0xa0] sm:$0x3]
      %v4870 = vld [vmem:[%s4848 + $0xa8] sm:$0xff]
      %v4871 = vld [vmem:[%s4848 + $0xb0] sm:$0xff]
      %v4872 = vld [vmem:[%s4848 + $0xb8] sm:$0x3]
      %v4873 = vld [vmem:[%s195 + $0x6] sm:$0x1]
      %v4874 = vld [vmem:[%s195 + $0x16] sm:$0x1]
      %v4875 = vld [vmem:[%s195 + $0x26] sm:$0x1]
      %v4876 = vld [vmem:[%s195 + $0x36] sm:$0x1]
      %v4877 = vld [vmem:[%s195 + $0x46] sm:$0x1]
      %v4878 = vld [vmem:[%s195 + $0x56] sm:$0x1]
      %v4879 = vld [vmem:[%s195 + $0x66] sm:$0x1]
      %v4880 = vld [vmem:[%s195 + $0x76] sm:$0x1]
      %v4881 = vld [vmem:[%s195 + $0x86] sm:$0x1]
      %v4882 = vld [vmem:[%s195 + $0x96] sm:$0x1]
      %v4883 = vld [vmem:[%s195 + $0xa6] sm:$0x1]
      %v4884 = vld [vmem:[%s195 + $0xb6] sm:$0x1]
      %v4885 = vld [vmem:[%s195 + $0xc6] sm:$0x1]
      %v4886 = vld [vmem:[%s195 + $0xd6] sm:$0x1]
      %v4887 = vld [vmem:[%s195 + $0xe6] sm:$0x1]
      %v4888 = vld [vmem:[%s195 + $0xf6] sm:$0x1]
      %v4889 = vld [vmem:[%s195 + $0x106] sm:$0x1]
      %v4890 = vld [vmem:[%s195 + $0x116] sm:$0x1]
      %v4891 = vld [vmem:[%s195 + $0x126] sm:$0x1]
      %v4892 = vld [vmem:[%s195 + $0x136] sm:$0x1]
      %v4893 = vld [vmem:[%s195 + $0x146] sm:$0x1]
      %v4894 = vld [vmem:[%s195 + $0x156] sm:$0x1]
      %v4895 = vld [vmem:[%s195 + $0x166] sm:$0x1]
      %v4896 = vld [vmem:[%s195 + $0x176] sm:$0x1]
      %v4897 = vld [vmem:[%s195 + $0x186] sm:$0x1]
      %v4898 = vld [vmem:[%s195 + $0x196] sm:$0x1]
      %v4899 = vld [vmem:[%s195 + $0x1a6] sm:$0x1]
      %v4900 = vld [vmem:[%s195 + $0x1b6] sm:$0x1]
      %v4901 = vld [vmem:[%s195 + $0x1c6] sm:$0x1]
      %v4902 = vld [vmem:[%s195 + $0x1d6] sm:$0x1]
      %v4903 = vld [vmem:[%s195 + $0x1e6] sm:$0x1]
      %v4904 = vld [vmem:[%s195 + $0x1f6] sm:$0x1]
      %v4905 = vld [vmem:[%s195 + $0x206] sm:$0x1]
      %v4906 = vld [vmem:[%s195 + $0x216] sm:$0x1]
      %v4907 = vld [vmem:[%s195 + $0x226] sm:$0x1]
      %v4908 = vld [vmem:[%s195 + $0x236] sm:$0x1]
      %v4909 = vld [vmem:[%s195 + $0x246] sm:$0x1]
      %v4910 = vld [vmem:[%s195 + $0x256] sm:$0x1]
      %v4911 = vld [vmem:[%s195 + $0x266] sm:$0x1]
      %v4912 = vld [vmem:[%s195 + $0x276] sm:$0x1]
      %v4913 = vld [vmem:[%s195 + $0x286] sm:$0x1]
      %v4914 = vld [vmem:[%s195 + $0x296] sm:$0x1]
      %v4915 = vld [vmem:[%s195 + $0x2a6] sm:$0x1]
      %v4916 = vld [vmem:[%s195 + $0x2b6] sm:$0x1]
      %v4917 = vld [vmem:[%s195 + $0x2c6] sm:$0x1]
      %v4918 = vld [vmem:[%s195 + $0x2d6] sm:$0x1]
      %v4919 = vld [vmem:[%s195 + $0x2e6] sm:$0x1]
      %v4920 = vld [vmem:[%s195 + $0x2f6] sm:$0x1]
      %v4921 = vld [vmem:[%s195 + $0x306] sm:$0x1]
      %v4922 = vld [vmem:[%s195 + $0x316] sm:$0x1]
      %v4923 = vld [vmem:[%s195 + $0x326] sm:$0x1]
      %v4924 = vld [vmem:[%s195 + $0x336] sm:$0x1]
      %v4925 = vld [vmem:[%s195 + $0x346] sm:$0x1]
      %v4926 = vld [vmem:[%s195 + $0x356] sm:$0x1]
      %v4927 = vld [vmem:[%s195 + $0x366] sm:$0x1]
      %v4928 = vld [vmem:[%s195 + $0x376] sm:$0x1]
      %v4929 = vld [vmem:[%s195 + $0x386] sm:$0x1]
      %v4930 = vld [vmem:[%s195 + $0x396] sm:$0x1]
      %v4931 = vld [vmem:[%s195 + $0x3a6] sm:$0x1]
      %v4932 = vld [vmem:[%s195 + $0x3b6] sm:$0x1]
      %v4933 = vld [vmem:[%s195 + $0x3c6] sm:$0x1]
      %v4934 = vld [vmem:[%s195 + $0x3d6] sm:$0x1]
      %v4935 = vld [vmem:[%s195 + $0x3e6] sm:$0x1]
      %v4936 = vld [vmem:[%s195 + $0x3f6] sm:$0x1]
      %v4937 = vld [vmem:[%s195 + $0x406] sm:$0x1]
      %v4938 = vld [vmem:[%s195 + $0x416] sm:$0x1]
      %v4939 = vld [vmem:[%s195 + $0x426] sm:$0x1]
      %v4940 = vld [vmem:[%s195 + $0x436] sm:$0x1]
      %v4941 = vld [vmem:[%s195 + $0x446] sm:$0x1]
      %v4942 = vld [vmem:[%s195 + $0x456] sm:$0x1]
      %v4943 = vld [vmem:[%s195 + $0x466] sm:$0x1]
      %v4944 = vld [vmem:[%s195 + $0x476] sm:$0x1]
      %v4945 = vld [vmem:[%s195 + $0x486] sm:$0x1]
      %v4946 = vld [vmem:[%s195 + $0x496] sm:$0x1]
      %v4947 = vld [vmem:[%s195 + $0x4a6] sm:$0x1]
      %v4948 = vld [vmem:[%s195 + $0x4b6] sm:$0x1]
      %v4949 = vld [vmem:[%s195 + $0x4c6] sm:$0x1]
      %v4950 = vld [vmem:[%s195 + $0x4d6] sm:$0x1]
      %v4951 = vld [vmem:[%s195 + $0x4e6] sm:$0x1]
      %v4952 = vld [vmem:[%s195 + $0x4f6] sm:$0x1]
      %v4953 = vld [vmem:[%s195 + $0x506] sm:$0x1]
      %v4954 = vld [vmem:[%s195 + $0x516] sm:$0x1]
      %v4955 = vld [vmem:[%s195 + $0x526] sm:$0x1]
      %v4956 = vld [vmem:[%s195 + $0x536] sm:$0x1]
      %v4957 = vld [vmem:[%s195 + $0x546] sm:$0x1]
      %v4958 = vld [vmem:[%s195 + $0x556] sm:$0x1]
      %v4959 = vld [vmem:[%s195 + $0x566] sm:$0x1]
      %v4960 = vld [vmem:[%s195 + $0x576] sm:$0x1]
      %v4961 = vld [vmem:[%s195 + $0x586] sm:$0x1]
      %v4962 = vld [vmem:[%s195 + $0x596] sm:$0x1]
      %v4963 = vld [vmem:[%s195 + $0x5a6] sm:$0x1]
      %v4964 = vld [vmem:[%s195 + $0x5b6] sm:$0x1]
      %v4965 = vld [vmem:[%s195 + $0x5c6] sm:$0x1]
      %v4966 = vld [vmem:[%s195 + $0x5d6] sm:$0x1]
      %v4967 = vld [vmem:[%s195 + $0x5e6] sm:$0x1]
      %v4968 = vld [vmem:[%s195 + $0x5f6] sm:$0x1]
      %v4969 = vld [vmem:[%s195 + $0x606] sm:$0x1]
      %v4970 = vld [vmem:[%s195 + $0x616] sm:$0x1]
      %v4971 = vld [vmem:[%s195 + $0x626] sm:$0x1]
      %v4972 = vld [vmem:[%s195 + $0x636] sm:$0x1]
      %v4973 = vld [vmem:[%s195 + $0x646] sm:$0x1]
      %v4974 = vld [vmem:[%s195 + $0x656] sm:$0x1]
      %v4975 = vld [vmem:[%s195 + $0x666] sm:$0x1]
      %v4976 = vld [vmem:[%s195 + $0x676] sm:$0x1]
      %v4977 = vld [vmem:[%s195 + $0x686] sm:$0x1]
      %v4978 = vld [vmem:[%s195 + $0x696] sm:$0x1]
      %v4979 = vld [vmem:[%s195 + $0x6a6] sm:$0x1]
      %v4980 = vld [vmem:[%s195 + $0x6b6] sm:$0x1]
      %v4981 = vld [vmem:[%s195 + $0x6c6] sm:$0x1]
      %v4982 = vld [vmem:[%s195 + $0x6d6] sm:$0x1]
      %v4983 = vld [vmem:[%s195 + $0x6e6] sm:$0x1]
      %v4984 = vld [vmem:[%s195 + $0x6f6] sm:$0x1]
      %v4985 = vld [vmem:[%s195 + $0x706] sm:$0x1]
      %v4986 = vld [vmem:[%s195 + $0x716] sm:$0x1]
      %v4987 = vld [vmem:[%s195 + $0x726] sm:$0x1]
      %v4988 = vld [vmem:[%s195 + $0x736] sm:$0x1]
      %v4989 = vld [vmem:[%s195 + $0x746] sm:$0x1]
      %v4990 = vld [vmem:[%s195 + $0x756] sm:$0x1]
      %v4991 = vld [vmem:[%s195 + $0x766] sm:$0x1]
      %v4992 = vld [vmem:[%s195 + $0x776] sm:$0x1]
      %v4993 = vld [vmem:[%s195 + $0x786] sm:$0x1]
      %v4994 = vld [vmem:[%s195 + $0x796] sm:$0x1]
      %v4995 = vld [vmem:[%s195 + $0x7a6] sm:$0x1]
      %v4996 = vld [vmem:[%s195 + $0x7b6] sm:$0x1]
      %v4997 = vld [vmem:[%s195 + $0x7c6] sm:$0x1]
      %v4998 = vld [vmem:[%s195 + $0x7d6] sm:$0x1]
      %v4999 = vld [vmem:[%s195 + $0x7e6] sm:$0x1]
      %v5000 = vld [vmem:[%s195 + $0x7f6] sm:$0x1]
      %v5017 = vrot.slane %v4849, 1
      %v5018 = vrot.slane %v4849, 2
      %v5019 = vrot.slane %v4849, 3
      %v5020 = vrot.slane %v4849, 4
      %v5021 = vrot.slane %v4849, 5
      %v5022 = vrot.slane %v4849, 6
      %v5023 = vrot.slane %v4849, 7
      %v5024 = vrot.slane %v4850, 1
      %v5025 = vrot.slane %v4850, 2
      %v5026 = vrot.slane %v4850, 3
      %v5027 = vrot.slane %v4850, 4
      %v5028 = vrot.slane %v4850, 5
      %v5029 = vrot.slane %v4850, 6
      %v5030 = vrot.slane %v4850, 7
      %v5031 = vrot.slane %v4852, 1
      %v5032 = vrot.slane %v4852, 2
      %v5033 = vrot.slane %v4852, 3
      %v5034 = vrot.slane %v4852, 4
      %v5035 = vrot.slane %v4852, 5
      %v5036 = vrot.slane %v4852, 6
      %v5037 = vrot.slane %v4852, 7
      %v5038 = vrot.slane %v4853, 1
      %v5039 = vrot.slane %v4853, 2
      %v5040 = vrot.slane %v4853, 3
      %v5041 = vrot.slane %v4853, 4
      %v5042 = vrot.slane %v4853, 5
      %v5043 = vrot.slane %v4853, 6
      %v5044 = vrot.slane %v4853, 7
      %v5045 = vrot.slane %v4855, 1
      %v5046 = vrot.slane %v4855, 2
      %v5047 = vrot.slane %v4855, 3
      %v5048 = vrot.slane %v4855, 4
      %v5049 = vrot.slane %v4855, 5
      %v5050 = vrot.slane %v4855, 6
      %v5051 = vrot.slane %v4855, 7
      %v5052 = vrot.slane %v4856, 1
      %v5053 = vrot.slane %v4856, 2
      %v5054 = vrot.slane %v4856, 3
      %v5055 = vrot.slane %v4856, 4
      %v5056 = vrot.slane %v4856, 5
      %v5057 = vrot.slane %v4856, 6
      %v5058 = vrot.slane %v4856, 7
      %v5059 = vrot.slane %v4858, 1
      %v5060 = vrot.slane %v4858, 2
      %v5061 = vrot.slane %v4858, 3
      %v5062 = vrot.slane %v4858, 4
      %v5063 = vrot.slane %v4858, 5
      %v5064 = vrot.slane %v4858, 6
      %v5065 = vrot.slane %v4858, 7
      %v5066 = vrot.slane %v4859, 1
      %v5067 = vrot.slane %v4859, 2
      %v5068 = vrot.slane %v4859, 3
      %v5069 = vrot.slane %v4859, 4
      %v5070 = vrot.slane %v4859, 5
      %v5071 = vrot.slane %v4859, 6
      %v5072 = vrot.slane %v4859, 7
      %v5073 = vrot.slane %v4861, 1
      %v5074 = vrot.slane %v4861, 2
      %v5075 = vrot.slane %v4861, 3
      %v5076 = vrot.slane %v4861, 4
      %v5077 = vrot.slane %v4861, 5
      %v5078 = vrot.slane %v4861, 6
      %v5079 = vrot.slane %v4861, 7
      %v5080 = vrot.slane %v4862, 1
      %v5081 = vrot.slane %v4862, 2
      %v5082 = vrot.slane %v4862, 3
      %v5083 = vrot.slane %v4862, 4
      %v5084 = vrot.slane %v4862, 5
      %v5085 = vrot.slane %v4862, 6
      %v5086 = vrot.slane %v4862, 7
      %v5087 = vrot.slane %v4864, 1
      %v5088 = vrot.slane %v4864, 2
      %v5089 = vrot.slane %v4864, 3
      %v5090 = vrot.slane %v4864, 4
      %v5091 = vrot.slane %v4864, 5
      %v5092 = vrot.slane %v4864, 6
      %v5093 = vrot.slane %v4864, 7
      %v5094 = vrot.slane %v4865, 1
      %v5095 = vrot.slane %v4865, 2
      %v5096 = vrot.slane %v4865, 3
      %v5097 = vrot.slane %v4865, 4
      %v5098 = vrot.slane %v4865, 5
      %v5099 = vrot.slane %v4865, 6
      %v5100 = vrot.slane %v4865, 7
      %v5101 = vrot.slane %v4867, 1
      %v5102 = vrot.slane %v4867, 2
      %v5103 = vrot.slane %v4867, 3
      %v5104 = vrot.slane %v4867, 4
      %v5105 = vrot.slane %v4867, 5
      %v5106 = vrot.slane %v4867, 6
      %v5107 = vrot.slane %v4867, 7
      %v5108 = vrot.slane %v4868, 1
      %v5109 = vrot.slane %v4868, 2
      %v5110 = vrot.slane %v4868, 3
      %v5111 = vrot.slane %v4868, 4
      %v5112 = vrot.slane %v4868, 5
      %v5113 = vrot.slane %v4868, 6
      %v5114 = vrot.slane %v4868, 7
      %v5115 = vrot.slane %v4870, 1
      %v5116 = vrot.slane %v4870, 2
      %v5117 = vrot.slane %v4870, 3
      %v5118 = vrot.slane %v4870, 4
      %v5119 = vrot.slane %v4870, 5
      %v5120 = vrot.slane %v4870, 6
      %v5121 = vrot.slane %v4870, 7
      %v5122 = vrot.slane %v4871, 1
      %v5123 = vrot.slane %v4871, 2
      %v5124 = vrot.slane %v4871, 3
      %v5125 = vrot.slane %v4871, 4
      %v5126 = vrot.slane %v4871, 5
      %v5127 = vrot.slane %v4871, 6
      %v5128 = vrot.slane %v4871, 7
      %v5257 = vmul.f32 %v4873, %v4849
      %v5258 = vmul.f32 %v4874, %v5017
      %v5259 = vmul.f32 %v4875, %v5018
      %v5260 = vmul.f32 %v4876, %v5019
      %v5261 = vmul.f32 %v4877, %v5020
      %v5262 = vmul.f32 %v4878, %v5021
      %v5263 = vmul.f32 %v4879, %v5022
      %v5264 = vmul.f32 %v4880, %v5023
      %v5265 = vmul.f32 %v4881, %v4850
      %v5266 = vmul.f32 %v4882, %v5024
      %v5267 = vmul.f32 %v4883, %v5025
      %v5268 = vmul.f32 %v4884, %v5026
      %v5269 = vmul.f32 %v4885, %v5027
      %v5270 = vmul.f32 %v4886, %v5028
      %v5271 = vmul.f32 %v4887, %v5029
      %v5272 = vmul.f32 %v4888, %v5030
      %v5273 = vmul.f32 %v4889, %v4852
      %v5274 = vmul.f32 %v4890, %v5031
      %v5275 = vmul.f32 %v4891, %v5032
      %v5276 = vmul.f32 %v4892, %v5033
      %v5277 = vmul.f32 %v4893, %v5034
      %v5278 = vmul.f32 %v4894, %v5035
      %v5279 = vmul.f32 %v4895, %v5036
      %v5280 = vmul.f32 %v4896, %v5037
      %v5281 = vmul.f32 %v4897, %v4853
      %v5282 = vmul.f32 %v4898, %v5038
      %v5283 = vmul.f32 %v4899, %v5039
      %v5284 = vmul.f32 %v4900, %v5040
      %v5285 = vmul.f32 %v4901, %v5041
      %v5286 = vmul.f32 %v4902, %v5042
      %v5287 = vmul.f32 %v4903, %v5043
      %v5288 = vmul.f32 %v4904, %v5044
      %v5289 = vmul.f32 %v4905, %v4855
      %v5290 = vmul.f32 %v4906, %v5045
      %v5291 = vmul.f32 %v4907, %v5046
      %v5292 = vmul.f32 %v4908, %v5047
      %v5293 = vmul.f32 %v4909, %v5048
      %v5294 = vmul.f32 %v4910, %v5049
      %v5295 = vmul.f32 %v4911, %v5050
      %v5296 = vmul.f32 %v4912, %v5051
      %v5297 = vmul.f32 %v4913, %v4856
      %v5298 = vmul.f32 %v4914, %v5052
      %v5299 = vmul.f32 %v4915, %v5053
      %v5300 = vmul.f32 %v4916, %v5054
      %v5301 = vmul.f32 %v4917, %v5055
      %v5302 = vmul.f32 %v4918, %v5056
      %v5303 = vmul.f32 %v4919, %v5057
      %v5304 = vmul.f32 %v4920, %v5058
      %v5305 = vmul.f32 %v4921, %v4858
      %v5306 = vmul.f32 %v4922, %v5059
      %v5307 = vmul.f32 %v4923, %v5060
      %v5308 = vmul.f32 %v4924, %v5061
      %v5309 = vmul.f32 %v4925, %v5062
      %v5310 = vmul.f32 %v4926, %v5063
      %v5311 = vmul.f32 %v4927, %v5064
      %v5312 = vmul.f32 %v4928, %v5065
      %v5313 = vmul.f32 %v4929, %v4859
      %v5314 = vmul.f32 %v4930, %v5066
      %v5315 = vmul.f32 %v4931, %v5067
      %v5316 = vmul.f32 %v4932, %v5068
      %v5317 = vmul.f32 %v4933, %v5069
      %v5318 = vmul.f32 %v4934, %v5070
      %v5319 = vmul.f32 %v4935, %v5071
      %v5320 = vmul.f32 %v4936, %v5072
      %v5321 = vmul.f32 %v4937, %v4861
      %v5322 = vmul.f32 %v4938, %v5073
      %v5323 = vmul.f32 %v4939, %v5074
      %v5324 = vmul.f32 %v4940, %v5075
      %v5325 = vmul.f32 %v4941, %v5076
      %v5326 = vmul.f32 %v4942, %v5077
      %v5327 = vmul.f32 %v4943, %v5078
      %v5328 = vmul.f32 %v4944, %v5079
      %v5329 = vmul.f32 %v4945, %v4862
      %v5330 = vmul.f32 %v4946, %v5080
      %v5331 = vmul.f32 %v4947, %v5081
      %v5332 = vmul.f32 %v4948, %v5082
      %v5333 = vmul.f32 %v4949, %v5083
      %v5334 = vmul.f32 %v4950, %v5084
      %v5335 = vmul.f32 %v4951, %v5085
      %v5336 = vmul.f32 %v4952, %v5086
      %v5337 = vmul.f32 %v4953, %v4864
      %v5338 = vmul.f32 %v4954, %v5087
      %v5339 = vmul.f32 %v4955, %v5088
      %v5340 = vmul.f32 %v4956, %v5089
      %v5341 = vmul.f32 %v4957, %v5090
      %v5342 = vmul.f32 %v4958, %v5091
      %v5343 = vmul.f32 %v4959, %v5092
      %v5344 = vmul.f32 %v4960, %v5093
      %v5345 = vmul.f32 %v4961, %v4865
      %v5346 = vmul.f32 %v4962, %v5094
      %v5347 = vmul.f32 %v4963, %v5095
      %v5348 = vmul.f32 %v4964, %v5096
      %v5349 = vmul.f32 %v4965, %v5097
      %v5350 = vmul.f32 %v4966, %v5098
      %v5351 = vmul.f32 %v4967, %v5099
      %v5352 = vmul.f32 %v4968, %v5100
      %v5353 = vmul.f32 %v4969, %v4867
      %v5354 = vmul.f32 %v4970, %v5101
      %v5355 = vmul.f32 %v4971, %v5102
      %v5356 = vmul.f32 %v4972, %v5103
      %v5357 = vmul.f32 %v4973, %v5104
      %v5358 = vmul.f32 %v4974, %v5105
      %v5359 = vmul.f32 %v4975, %v5106
      %v5360 = vmul.f32 %v4976, %v5107
      %v5361 = vmul.f32 %v4977, %v4868
      %v5362 = vmul.f32 %v4978, %v5108
      %v5363 = vmul.f32 %v4979, %v5109
      %v5364 = vmul.f32 %v4980, %v5110
      %v5365 = vmul.f32 %v4981, %v5111
      %v5366 = vmul.f32 %v4982, %v5112
      %v5367 = vmul.f32 %v4983, %v5113
      %v5368 = vmul.f32 %v4984, %v5114
      %v5369 = vmul.f32 %v4985, %v4870
      %v5370 = vmul.f32 %v4986, %v5115
      %v5371 = vmul.f32 %v4987, %v5116
      %v5372 = vmul.f32 %v4988, %v5117
      %v5373 = vmul.f32 %v4989, %v5118
      %v5374 = vmul.f32 %v4990, %v5119
      %v5375 = vmul.f32 %v4991, %v5120
      %v5376 = vmul.f32 %v4992, %v5121
      %v5377 = vmul.f32 %v4993, %v4871
      %v5378 = vmul.f32 %v4994, %v5122
      %v5379 = vmul.f32 %v4995, %v5123
      %v5380 = vmul.f32 %v4996, %v5124
      %v5381 = vmul.f32 %v4997, %v5125
      %v5382 = vmul.f32 %v4998, %v5126
      %v5383 = vmul.f32 %v4999, %v5127
      %v5384 = vmul.f32 %v5000, %v5128
      %v5385 = vld [vmem:[%s206] sm:$0xff]
      %v5386 = vld [vmem:[%s206 + $0x8] sm:$0xff]
      %v5387 = vld [vmem:[%s206 + $0x10] sm:$0xff]
      %v5388 = vld [vmem:[%s206 + $0x18] sm:$0xff]
      %v5389 = vld [vmem:[%s206 + $0x20] sm:$0xff]
      %v5390 = vld [vmem:[%s206 + $0x28] sm:$0xff]
      %v5391 = vld [vmem:[%s206 + $0x30] sm:$0xff]
      %v5392 = vld [vmem:[%s206 + $0x38] sm:$0xff]
      %v5393 = vld [vmem:[%s206 + $0x40] sm:$0xff]
      %v5394 = vld [vmem:[%s206 + $0x48] sm:$0xff]
      %v5395 = vld [vmem:[%s206 + $0x50] sm:$0xff]
      %v5396 = vld [vmem:[%s206 + $0x58] sm:$0xff]
      %v5397 = vld [vmem:[%s206 + $0x60] sm:$0xff]
      %v5398 = vld [vmem:[%s206 + $0x68] sm:$0xff]
      %v5399 = vld [vmem:[%s206 + $0x70] sm:$0xff]
      %v5400 = vld [vmem:[%s206 + $0x78] sm:$0xff]
      %v5529 = vrot.slane %v5258, 7
      %v5530 = vsel %vm876, %v5529, %v5257
      %v5531 = vrot.slane %v5259, 6
      %v5532 = vsel %vm879, %v5531, %v5530
      %v5533 = vrot.slane %v5260, 5
      %v5534 = vsel %vm882, %v5533, %v5532
      %v5535 = vrot.slane %v5261, 4
      %v5536 = vsel %vm885, %v5535, %v5534
      %v5537 = vrot.slane %v5262, 3
      %v5538 = vsel %vm888, %v5537, %v5536
      %v5539 = vrot.slane %v5263, 2
      %v5540 = vsel %vm891, %v5539, %v5538
      %v5541 = vrot.slane %v5264, 1
      %v5542 = vsel %vm894, %v5541, %v5540
      %v5543 = vrot.slane %v5266, 7
      %v5544 = vsel %vm876, %v5543, %v5265
      %v5545 = vrot.slane %v5267, 6
      %v5546 = vsel %vm879, %v5545, %v5544
      %v5547 = vrot.slane %v5268, 5
      %v5548 = vsel %vm882, %v5547, %v5546
      %v5549 = vrot.slane %v5269, 4
      %v5550 = vsel %vm885, %v5549, %v5548
      %v5551 = vrot.slane %v5270, 3
      %v5552 = vsel %vm888, %v5551, %v5550
      %v5553 = vrot.slane %v5271, 2
      %v5554 = vsel %vm891, %v5553, %v5552
      %v5555 = vrot.slane %v5272, 1
      %v5556 = vsel %vm894, %v5555, %v5554
      %v5557 = vrot.slane %v5274, 7
      %v5558 = vsel %vm876, %v5557, %v5273
      %v5559 = vrot.slane %v5275, 6
      %v5560 = vsel %vm879, %v5559, %v5558
      %v5561 = vrot.slane %v5276, 5
      %v5562 = vsel %vm882, %v5561, %v5560
      %v5563 = vrot.slane %v5277, 4
      %v5564 = vsel %vm885, %v5563, %v5562
      %v5565 = vrot.slane %v5278, 3
      %v5566 = vsel %vm888, %v5565, %v5564
      %v5567 = vrot.slane %v5279, 2
      %v5568 = vsel %vm891, %v5567, %v5566
      %v5569 = vrot.slane %v5280, 1
      %v5570 = vsel %vm894, %v5569, %v5568
      %v5571 = vrot.slane %v5282, 7
      %v5572 = vsel %vm876, %v5571, %v5281
      %v5573 = vrot.slane %v5283, 6
      %v5574 = vsel %vm879, %v5573, %v5572
      %v5575 = vrot.slane %v5284, 5
      %v5576 = vsel %vm882, %v5575, %v5574
      %v5577 = vrot.slane %v5285, 4
      %v5578 = vsel %vm885, %v5577, %v5576
      %v5579 = vrot.slane %v5286, 3
      %v5580 = vsel %vm888, %v5579, %v5578
      %v5581 = vrot.slane %v5287, 2
      %v5582 = vsel %vm891, %v5581, %v5580
      %v5583 = vrot.slane %v5288, 1
      %v5584 = vsel %vm894, %v5583, %v5582
      %v5585 = vrot.slane %v5290, 7
      %v5586 = vsel %vm876, %v5585, %v5289
      %v5587 = vrot.slane %v5291, 6
      %v5588 = vsel %vm879, %v5587, %v5586
      %v5589 = vrot.slane %v5292, 5
      %v5590 = vsel %vm882, %v5589, %v5588
      %v5591 = vrot.slane %v5293, 4
      %v5592 = vsel %vm885, %v5591, %v5590
      %v5593 = vrot.slane %v5294, 3
      %v5594 = vsel %vm888, %v5593, %v5592
      %v5595 = vrot.slane %v5295, 2
      %v5596 = vsel %vm891, %v5595, %v5594
      %v5597 = vrot.slane %v5296, 1
      %v5598 = vsel %vm894, %v5597, %v5596
      %v5599 = vrot.slane %v5298, 7
      %v5600 = vsel %vm876, %v5599, %v5297
      %v5601 = vrot.slane %v5299, 6
      %v5602 = vsel %vm879, %v5601, %v5600
      %v5603 = vrot.slane %v5300, 5
      %v5604 = vsel %vm882, %v5603, %v5602
      %v5605 = vrot.slane %v5301, 4
      %v5606 = vsel %vm885, %v5605, %v5604
      %v5607 = vrot.slane %v5302, 3
      %v5608 = vsel %vm888, %v5607, %v5606
      %v5609 = vrot.slane %v5303, 2
      %v5610 = vsel %vm891, %v5609, %v5608
      %v5611 = vrot.slane %v5304, 1
      %v5612 = vsel %vm894, %v5611, %v5610
      %v5613 = vrot.slane %v5306, 7
      %v5614 = vsel %vm876, %v5613, %v5305
      %v5615 = vrot.slane %v5307, 6
      %v5616 = vsel %vm879, %v5615, %v5614
      %v5617 = vrot.slane %v5308, 5
      %v5618 = vsel %vm882, %v5617, %v5616
      %v5619 = vrot.slane %v5309, 4
      %v5620 = vsel %vm885, %v5619, %v5618
      %v5621 = vrot.slane %v5310, 3
      %v5622 = vsel %vm888, %v5621, %v5620
      %v5623 = vrot.slane %v5311, 2
      %v5624 = vsel %vm891, %v5623, %v5622
      %v5625 = vrot.slane %v5312, 1
      %v5626 = vsel %vm894, %v5625, %v5624
      %v5627 = vrot.slane %v5314, 7
      %v5628 = vsel %vm876, %v5627, %v5313
      %v5629 = vrot.slane %v5315, 6
      %v5630 = vsel %vm879, %v5629, %v5628
      %v5631 = vrot.slane %v5316, 5
      %v5632 = vsel %vm882, %v5631, %v5630
      %v5633 = vrot.slane %v5317, 4
      %v5634 = vsel %vm885, %v5633, %v5632
      %v5635 = vrot.slane %v5318, 3
      %v5636 = vsel %vm888, %v5635, %v5634
      %v5637 = vrot.slane %v5319, 2
      %v5638 = vsel %vm891, %v5637, %v5636
      %v5639 = vrot.slane %v5320, 1
      %v5640 = vsel %vm894, %v5639, %v5638
      %v5641 = vrot.slane %v5322, 7
      %v5642 = vsel %vm876, %v5641, %v5321
      %v5643 = vrot.slane %v5323, 6
      %v5644 = vsel %vm879, %v5643, %v5642
      %v5645 = vrot.slane %v5324, 5
      %v5646 = vsel %vm882, %v5645, %v5644
      %v5647 = vrot.slane %v5325, 4
      %v5648 = vsel %vm885, %v5647, %v5646
      %v5649 = vrot.slane %v5326, 3
      %v5650 = vsel %vm888, %v5649, %v5648
      %v5651 = vrot.slane %v5327, 2
      %v5652 = vsel %vm891, %v5651, %v5650
      %v5653 = vrot.slane %v5328, 1
      %v5654 = vsel %vm894, %v5653, %v5652
      %v5655 = vrot.slane %v5330, 7
      %v5656 = vsel %vm876, %v5655, %v5329
      %v5657 = vrot.slane %v5331, 6
      %v5658 = vsel %vm879, %v5657, %v5656
      %v5659 = vrot.slane %v5332, 5
      %v5660 = vsel %vm882, %v5659, %v5658
      %v5661 = vrot.slane %v5333, 4
      %v5662 = vsel %vm885, %v5661, %v5660
      %v5663 = vrot.slane %v5334, 3
      %v5664 = vsel %vm888, %v5663, %v5662
      %v5665 = vrot.slane %v5335, 2
      %v5666 = vsel %vm891, %v5665, %v5664
      %v5667 = vrot.slane %v5336, 1
      %v5668 = vsel %vm894, %v5667, %v5666
      %v5669 = vrot.slane %v5338, 7
      %v5670 = vsel %vm876, %v5669, %v5337
      %v5671 = vrot.slane %v5339, 6
      %v5672 = vsel %vm879, %v5671, %v5670
      %v5673 = vrot.slane %v5340, 5
      %v5674 = vsel %vm882, %v5673, %v5672
      %v5675 = vrot.slane %v5341, 4
      %v5676 = vsel %vm885, %v5675, %v5674
      %v5677 = vrot.slane %v5342, 3
      %v5678 = vsel %vm888, %v5677, %v5676
      %v5679 = vrot.slane %v5343, 2
      %v5680 = vsel %vm891, %v5679, %v5678
      %v5681 = vrot.slane %v5344, 1
      %v5682 = vsel %vm894, %v5681, %v5680
      %v5683 = vrot.slane %v5346, 7
      %v5684 = vsel %vm876, %v5683, %v5345
      %v5685 = vrot.slane %v5347, 6
      %v5686 = vsel %vm879, %v5685, %v5684
      %v5687 = vrot.slane %v5348, 5
      %v5688 = vsel %vm882, %v5687, %v5686
      %v5689 = vrot.slane %v5349, 4
      %v5690 = vsel %vm885, %v5689, %v5688
      %v5691 = vrot.slane %v5350, 3
      %v5692 = vsel %vm888, %v5691, %v5690
      %v5693 = vrot.slane %v5351, 2
      %v5694 = vsel %vm891, %v5693, %v5692
      %v5695 = vrot.slane %v5352, 1
      %v5696 = vsel %vm894, %v5695, %v5694
      %v5697 = vrot.slane %v5354, 7
      %v5698 = vsel %vm876, %v5697, %v5353
      %v5699 = vrot.slane %v5355, 6
      %v5700 = vsel %vm879, %v5699, %v5698
      %v5701 = vrot.slane %v5356, 5
      %v5702 = vsel %vm882, %v5701, %v5700
      %v5703 = vrot.slane %v5357, 4
      %v5704 = vsel %vm885, %v5703, %v5702
      %v5705 = vrot.slane %v5358, 3
      %v5706 = vsel %vm888, %v5705, %v5704
      %v5707 = vrot.slane %v5359, 2
      %v5708 = vsel %vm891, %v5707, %v5706
      %v5709 = vrot.slane %v5360, 1
      %v5710 = vsel %vm894, %v5709, %v5708
      %v5711 = vrot.slane %v5362, 7
      %v5712 = vsel %vm876, %v5711, %v5361
      %v5713 = vrot.slane %v5363, 6
      %v5714 = vsel %vm879, %v5713, %v5712
      %v5715 = vrot.slane %v5364, 5
      %v5716 = vsel %vm882, %v5715, %v5714
      %v5717 = vrot.slane %v5365, 4
      %v5718 = vsel %vm885, %v5717, %v5716
      %v5719 = vrot.slane %v5366, 3
      %v5720 = vsel %vm888, %v5719, %v5718
      %v5721 = vrot.slane %v5367, 2
      %v5722 = vsel %vm891, %v5721, %v5720
      %v5723 = vrot.slane %v5368, 1
      %v5724 = vsel %vm894, %v5723, %v5722
      %v5725 = vrot.slane %v5370, 7
      %v5726 = vsel %vm876, %v5725, %v5369
      %v5727 = vrot.slane %v5371, 6
      %v5728 = vsel %vm879, %v5727, %v5726
      %v5729 = vrot.slane %v5372, 5
      %v5730 = vsel %vm882, %v5729, %v5728
      %v5731 = vrot.slane %v5373, 4
      %v5732 = vsel %vm885, %v5731, %v5730
      %v5733 = vrot.slane %v5374, 3
      %v5734 = vsel %vm888, %v5733, %v5732
      %v5735 = vrot.slane %v5375, 2
      %v5736 = vsel %vm891, %v5735, %v5734
      %v5737 = vrot.slane %v5376, 1
      %v5738 = vsel %vm894, %v5737, %v5736
      %v5739 = vrot.slane %v5378, 7
      %v5740 = vsel %vm876, %v5739, %v5377
      %v5741 = vrot.slane %v5379, 6
      %v5742 = vsel %vm879, %v5741, %v5740
      %v5743 = vrot.slane %v5380, 5
      %v5744 = vsel %vm882, %v5743, %v5742
      %v5745 = vrot.slane %v5381, 4
      %v5746 = vsel %vm885, %v5745, %v5744
      %v5747 = vrot.slane %v5382, 3
      %v5748 = vsel %vm888, %v5747, %v5746
      %v5749 = vrot.slane %v5383, 2
      %v5750 = vsel %vm891, %v5749, %v5748
      %v5751 = vrot.slane %v5384, 1
      %v5752 = vsel %vm894, %v5751, %v5750
      %v5769 = vadd.f32 %v5385, %v5542
      %v5770 = vadd.f32 %v5386, %v5556
      %v5771 = vadd.f32 %v5387, %v5570
      %v5772 = vadd.f32 %v5388, %v5584
      %v5773 = vadd.f32 %v5389, %v5598
      %v5774 = vadd.f32 %v5390, %v5612
      %v5775 = vadd.f32 %v5391, %v5626
      %v5776 = vadd.f32 %v5392, %v5640
      %v5777 = vadd.f32 %v5393, %v5654
      %v5778 = vadd.f32 %v5394, %v5668
      %v5779 = vadd.f32 %v5395, %v5682
      %v5780 = vadd.f32 %v5396, %v5696
      %v5781 = vadd.f32 %v5397, %v5710
      %v5782 = vadd.f32 %v5398, %v5724
      %v5783 = vadd.f32 %v5399, %v5738
      %v5784 = vadd.f32 %v5400, %v5752
      %5785 = vst.msk [vmem:[%s206] sm:$0xff] %vm1122, %v5769
      %5786 = vst.msk [vmem:[%s206 + $0x8] sm:$0xff] %vm1122, %v5770
      %5787 = vst.msk [vmem:[%s206 + $0x10] sm:$0xff] %vm1122, %v5771
      %5788 = vst.msk [vmem:[%s206 + $0x18] sm:$0xff] %vm1122, %v5772
      %5789 = vst.msk [vmem:[%s206 + $0x20] sm:$0xff] %vm1122, %v5773
      %5790 = vst.msk [vmem:[%s206 + $0x28] sm:$0xff] %vm1122, %v5774
      %5791 = vst.msk [vmem:[%s206 + $0x30] sm:$0xff] %vm1122, %v5775
      %5792 = vst.msk [vmem:[%s206 + $0x38] sm:$0xff] %vm1122, %v5776
      %5793 = vst.msk [vmem:[%s206 + $0x40] sm:$0xff] %vm1122, %v5777
      %5794 = vst.msk [vmem:[%s206 + $0x48] sm:$0xff] %vm1122, %v5778
      %5795 = vst.msk [vmem:[%s206 + $0x50] sm:$0xff] %vm1122, %v5779
      %5796 = vst.msk [vmem:[%s206 + $0x58] sm:$0xff] %vm1122, %v5780
      %5797 = vst.msk [vmem:[%s206 + $0x60] sm:$0xff] %vm1122, %v5781
      %5798 = vst.msk [vmem:[%s206 + $0x68] sm:$0xff] %vm1122, %v5782
      %5799 = vst.msk [vmem:[%s206 + $0x70] sm:$0xff] %vm1122, %v5783
      %5800 = vst.msk [vmem:[%s206 + $0x78] sm:$0xff] %vm1122, %v5784
      %v5801 = vld [vmem:[%s195 + $0x7] sm:$0x1]
      %v5802 = vld [vmem:[%s195 + $0x17] sm:$0x1]
      %v5803 = vld [vmem:[%s195 + $0x27] sm:$0x1]
      %v5804 = vld [vmem:[%s195 + $0x37] sm:$0x1]
      %v5805 = vld [vmem:[%s195 + $0x47] sm:$0x1]
      %v5806 = vld [vmem:[%s195 + $0x57] sm:$0x1]
      %v5807 = vld [vmem:[%s195 + $0x67] sm:$0x1]
      %v5808 = vld [vmem:[%s195 + $0x77] sm:$0x1]
      %v5809 = vld [vmem:[%s195 + $0x87] sm:$0x1]
      %v5810 = vld [vmem:[%s195 + $0x97] sm:$0x1]
      %v5811 = vld [vmem:[%s195 + $0xa7] sm:$0x1]
      %v5812 = vld [vmem:[%s195 + $0xb7] sm:$0x1]
      %v5813 = vld [vmem:[%s195 + $0xc7] sm:$0x1]
      %v5814 = vld [vmem:[%s195 + $0xd7] sm:$0x1]
      %v5815 = vld [vmem:[%s195 + $0xe7] sm:$0x1]
      %v5816 = vld [vmem:[%s195 + $0xf7] sm:$0x1]
      %v5817 = vld [vmem:[%s195 + $0x107] sm:$0x1]
      %v5818 = vld [vmem:[%s195 + $0x117] sm:$0x1]
      %v5819 = vld [vmem:[%s195 + $0x127] sm:$0x1]
      %v5820 = vld [vmem:[%s195 + $0x137] sm:$0x1]
      %v5821 = vld [vmem:[%s195 + $0x147] sm:$0x1]
      %v5822 = vld [vmem:[%s195 + $0x157] sm:$0x1]
      %v5823 = vld [vmem:[%s195 + $0x167] sm:$0x1]
      %v5824 = vld [vmem:[%s195 + $0x177] sm:$0x1]
      %v5825 = vld [vmem:[%s195 + $0x187] sm:$0x1]
      %v5826 = vld [vmem:[%s195 + $0x197] sm:$0x1]
      %v5827 = vld [vmem:[%s195 + $0x1a7] sm:$0x1]
      %v5828 = vld [vmem:[%s195 + $0x1b7] sm:$0x1]
      %v5829 = vld [vmem:[%s195 + $0x1c7] sm:$0x1]
      %v5830 = vld [vmem:[%s195 + $0x1d7] sm:$0x1]
      %v5831 = vld [vmem:[%s195 + $0x1e7] sm:$0x1]
      %v5832 = vld [vmem:[%s195 + $0x1f7] sm:$0x1]
      %v5833 = vld [vmem:[%s195 + $0x207] sm:$0x1]
      %v5834 = vld [vmem:[%s195 + $0x217] sm:$0x1]
      %v5835 = vld [vmem:[%s195 + $0x227] sm:$0x1]
      %v5836 = vld [vmem:[%s195 + $0x237] sm:$0x1]
      %v5837 = vld [vmem:[%s195 + $0x247] sm:$0x1]
      %v5838 = vld [vmem:[%s195 + $0x257] sm:$0x1]
      %v5839 = vld [vmem:[%s195 + $0x267] sm:$0x1]
      %v5840 = vld [vmem:[%s195 + $0x277] sm:$0x1]
      %v5841 = vld [vmem:[%s195 + $0x287] sm:$0x1]
      %v5842 = vld [vmem:[%s195 + $0x297] sm:$0x1]
      %v5843 = vld [vmem:[%s195 + $0x2a7] sm:$0x1]
      %v5844 = vld [vmem:[%s195 + $0x2b7] sm:$0x1]
      %v5845 = vld [vmem:[%s195 + $0x2c7] sm:$0x1]
      %v5846 = vld [vmem:[%s195 + $0x2d7] sm:$0x1]
      %v5847 = vld [vmem:[%s195 + $0x2e7] sm:$0x1]
      %v5848 = vld [vmem:[%s195 + $0x2f7] sm:$0x1]
      %v5849 = vld [vmem:[%s195 + $0x307] sm:$0x1]
      %v5850 = vld [vmem:[%s195 + $0x317] sm:$0x1]
      %v5851 = vld [vmem:[%s195 + $0x327] sm:$0x1]
      %v5852 = vld [vmem:[%s195 + $0x337] sm:$0x1]
      %v5853 = vld [vmem:[%s195 + $0x347] sm:$0x1]
      %v5854 = vld [vmem:[%s195 + $0x357] sm:$0x1]
      %v5855 = vld [vmem:[%s195 + $0x367] sm:$0x1]
      %v5856 = vld [vmem:[%s195 + $0x377] sm:$0x1]
      %v5857 = vld [vmem:[%s195 + $0x387] sm:$0x1]
      %v5858 = vld [vmem:[%s195 + $0x397] sm:$0x1]
      %v5859 = vld [vmem:[%s195 + $0x3a7] sm:$0x1]
      %v5860 = vld [vmem:[%s195 + $0x3b7] sm:$0x1]
      %v5861 = vld [vmem:[%s195 + $0x3c7] sm:$0x1]
      %v5862 = vld [vmem:[%s195 + $0x3d7] sm:$0x1]
      %v5863 = vld [vmem:[%s195 + $0x3e7] sm:$0x1]
      %v5864 = vld [vmem:[%s195 + $0x3f7] sm:$0x1]
      %v5865 = vld [vmem:[%s195 + $0x407] sm:$0x1]
      %v5866 = vld [vmem:[%s195 + $0x417] sm:$0x1]
      %v5867 = vld [vmem:[%s195 + $0x427] sm:$0x1]
      %v5868 = vld [vmem:[%s195 + $0x437] sm:$0x1]
      %v5869 = vld [vmem:[%s195 + $0x447] sm:$0x1]
      %v5870 = vld [vmem:[%s195 + $0x457] sm:$0x1]
      %v5871 = vld [vmem:[%s195 + $0x467] sm:$0x1]
      %v5872 = vld [vmem:[%s195 + $0x477] sm:$0x1]
      %v5873 = vld [vmem:[%s195 + $0x487] sm:$0x1]
      %v5874 = vld [vmem:[%s195 + $0x497] sm:$0x1]
      %v5875 = vld [vmem:[%s195 + $0x4a7] sm:$0x1]
      %v5876 = vld [vmem:[%s195 + $0x4b7] sm:$0x1]
      %v5877 = vld [vmem:[%s195 + $0x4c7] sm:$0x1]
      %v5878 = vld [vmem:[%s195 + $0x4d7] sm:$0x1]
      %v5879 = vld [vmem:[%s195 + $0x4e7] sm:$0x1]
      %v5880 = vld [vmem:[%s195 + $0x4f7] sm:$0x1]
      %v5881 = vld [vmem:[%s195 + $0x507] sm:$0x1]
      %v5882 = vld [vmem:[%s195 + $0x517] sm:$0x1]
      %v5883 = vld [vmem:[%s195 + $0x527] sm:$0x1]
      %v5884 = vld [vmem:[%s195 + $0x537] sm:$0x1]
      %v5885 = vld [vmem:[%s195 + $0x547] sm:$0x1]
      %v5886 = vld [vmem:[%s195 + $0x557] sm:$0x1]
      %v5887 = vld [vmem:[%s195 + $0x567] sm:$0x1]
      %v5888 = vld [vmem:[%s195 + $0x577] sm:$0x1]
      %v5889 = vld [vmem:[%s195 + $0x587] sm:$0x1]
      %v5890 = vld [vmem:[%s195 + $0x597] sm:$0x1]
      %v5891 = vld [vmem:[%s195 + $0x5a7] sm:$0x1]
      %v5892 = vld [vmem:[%s195 + $0x5b7] sm:$0x1]
      %v5893 = vld [vmem:[%s195 + $0x5c7] sm:$0x1]
      %v5894 = vld [vmem:[%s195 + $0x5d7] sm:$0x1]
      %v5895 = vld [vmem:[%s195 + $0x5e7] sm:$0x1]
      %v5896 = vld [vmem:[%s195 + $0x5f7] sm:$0x1]
      %v5897 = vld [vmem:[%s195 + $0x607] sm:$0x1]
      %v5898 = vld [vmem:[%s195 + $0x617] sm:$0x1]
      %v5899 = vld [vmem:[%s195 + $0x627] sm:$0x1]
      %v5900 = vld [vmem:[%s195 + $0x637] sm:$0x1]
      %v5901 = vld [vmem:[%s195 + $0x647] sm:$0x1]
      %v5902 = vld [vmem:[%s195 + $0x657] sm:$0x1]
      %v5903 = vld [vmem:[%s195 + $0x667] sm:$0x1]
      %v5904 = vld [vmem:[%s195 + $0x677] sm:$0x1]
      %v5905 = vld [vmem:[%s195 + $0x687] sm:$0x1]
      %v5906 = vld [vmem:[%s195 + $0x697] sm:$0x1]
      %v5907 = vld [vmem:[%s195 + $0x6a7] sm:$0x1]
      %v5908 = vld [vmem:[%s195 + $0x6b7] sm:$0x1]
      %v5909 = vld [vmem:[%s195 + $0x6c7] sm:$0x1]
      %v5910 = vld [vmem:[%s195 + $0x6d7] sm:$0x1]
      %v5911 = vld [vmem:[%s195 + $0x6e7] sm:$0x1]
      %v5912 = vld [vmem:[%s195 + $0x6f7] sm:$0x1]
      %v5913 = vld [vmem:[%s195 + $0x707] sm:$0x1]
      %v5914 = vld [vmem:[%s195 + $0x717] sm:$0x1]
      %v5915 = vld [vmem:[%s195 + $0x727] sm:$0x1]
      %v5916 = vld [vmem:[%s195 + $0x737] sm:$0x1]
      %v5917 = vld [vmem:[%s195 + $0x747] sm:$0x1]
      %v5918 = vld [vmem:[%s195 + $0x757] sm:$0x1]
      %v5919 = vld [vmem:[%s195 + $0x767] sm:$0x1]
      %v5920 = vld [vmem:[%s195 + $0x777] sm:$0x1]
      %v5921 = vld [vmem:[%s195 + $0x787] sm:$0x1]
      %v5922 = vld [vmem:[%s195 + $0x797] sm:$0x1]
      %v5923 = vld [vmem:[%s195 + $0x7a7] sm:$0x1]
      %v5924 = vld [vmem:[%s195 + $0x7b7] sm:$0x1]
      %v5925 = vld [vmem:[%s195 + $0x7c7] sm:$0x1]
      %v5926 = vld [vmem:[%s195 + $0x7d7] sm:$0x1]
      %v5927 = vld [vmem:[%s195 + $0x7e7] sm:$0x1]
      %v5928 = vld [vmem:[%s195 + $0x7f7] sm:$0x1]
      %v5945 = vmul.f32 %v5801, %v5017
      %v5946 = vmul.f32 %v5802, %v5018
      %v5947 = vmul.f32 %v5803, %v5019
      %v5948 = vmul.f32 %v5804, %v5020
      %v5949 = vmul.f32 %v5805, %v5021
      %v5950 = vmul.f32 %v5806, %v5022
      %v5951 = vmul.f32 %v5807, %v5023
      %v5952 = vmul.f32 %v5808, %v4850
      %v5953 = vmul.f32 %v5809, %v5024
      %v5954 = vmul.f32 %v5810, %v5025
      %v5955 = vmul.f32 %v5811, %v5026
      %v5956 = vmul.f32 %v5812, %v5027
      %v5957 = vmul.f32 %v5813, %v5028
      %v5958 = vmul.f32 %v5814, %v5029
      %v5959 = vmul.f32 %v5815, %v5030
      %v5960 = vmul.f32 %v5816, %v4851
      %v5961 = vmul.f32 %v5817, %v5031
      %v5962 = vmul.f32 %v5818, %v5032
      %v5963 = vmul.f32 %v5819, %v5033
      %v5964 = vmul.f32 %v5820, %v5034
      %v5965 = vmul.f32 %v5821, %v5035
      %v5966 = vmul.f32 %v5822, %v5036
      %v5967 = vmul.f32 %v5823, %v5037
      %v5968 = vmul.f32 %v5824, %v4853
      %v5969 = vmul.f32 %v5825, %v5038
      %v5970 = vmul.f32 %v5826, %v5039
      %v5971 = vmul.f32 %v5827, %v5040
      %v5972 = vmul.f32 %v5828, %v5041
      %v5973 = vmul.f32 %v5829, %v5042
      %v5974 = vmul.f32 %v5830, %v5043
      %v5975 = vmul.f32 %v5831, %v5044
      %v5976 = vmul.f32 %v5832, %v4854
      %v5977 = vmul.f32 %v5833, %v5045
      %v5978 = vmul.f32 %v5834, %v5046
      %v5979 = vmul.f32 %v5835, %v5047
      %v5980 = vmul.f32 %v5836, %v5048
      %v5981 = vmul.f32 %v5837, %v5049
      %v5982 = vmul.f32 %v5838, %v5050
      %v5983 = vmul.f32 %v5839, %v5051
      %v5984 = vmul.f32 %v5840, %v4856
      %v5985 = vmul.f32 %v5841, %v5052
      %v5986 = vmul.f32 %v5842, %v5053
      %v5987 = vmul.f32 %v5843, %v5054
      %v5988 = vmul.f32 %v5844, %v5055
      %v5989 = vmul.f32 %v5845, %v5056
      %v5990 = vmul.f32 %v5846, %v5057
      %v5991 = vmul.f32 %v5847, %v5058
      %v5992 = vmul.f32 %v5848, %v4857
      %v5993 = vmul.f32 %v5849, %v5059
      %v5994 = vmul.f32 %v5850, %v5060
      %v5995 = vmul.f32 %v5851, %v5061
      %v5996 = vmul.f32 %v5852, %v5062
      %v5997 = vmul.f32 %v5853, %v5063
      %v5998 = vmul.f32 %v5854, %v5064
      %v5999 = vmul.f32 %v5855, %v5065
      %v6000 = vmul.f32 %v5856, %v4859
      %v6001 = vmul.f32 %v5857, %v5066
      %v6002 = vmul.f32 %v5858, %v5067
      %v6003 = vmul.f32 %v5859, %v5068
      %v6004 = vmul.f32 %v5860, %v5069
      %v6005 = vmul.f32 %v5861, %v5070
      %v6006 = vmul.f32 %v5862, %v5071
      %v6007 = vmul.f32 %v5863, %v5072
      %v6008 = vmul.f32 %v5864, %v4860
      %v6009 = vmul.f32 %v5865, %v5073
      %v6010 = vmul.f32 %v5866, %v5074
      %v6011 = vmul.f32 %v5867, %v5075
      %v6012 = vmul.f32 %v5868, %v5076
      %v6013 = vmul.f32 %v5869, %v5077
      %v6014 = vmul.f32 %v5870, %v5078
      %v6015 = vmul.f32 %v5871, %v5079
      %v6016 = vmul.f32 %v5872, %v4862
      %v6017 = vmul.f32 %v5873, %v5080
      %v6018 = vmul.f32 %v5874, %v5081
      %v6019 = vmul.f32 %v5875, %v5082
      %v6020 = vmul.f32 %v5876, %v5083
      %v6021 = vmul.f32 %v5877, %v5084
      %v6022 = vmul.f32 %v5878, %v5085
      %v6023 = vmul.f32 %v5879, %v5086
      %v6024 = vmul.f32 %v5880, %v4863
      %v6025 = vmul.f32 %v5881, %v5087
      %v6026 = vmul.f32 %v5882, %v5088
      %v6027 = vmul.f32 %v5883, %v5089
      %v6028 = vmul.f32 %v5884, %v5090
      %v6029 = vmul.f32 %v5885, %v5091
      %v6030 = vmul.f32 %v5886, %v5092
      %v6031 = vmul.f32 %v5887, %v5093
      %v6032 = vmul.f32 %v5888, %v4865
      %v6033 = vmul.f32 %v5889, %v5094
      %v6034 = vmul.f32 %v5890, %v5095
      %v6035 = vmul.f32 %v5891, %v5096
      %v6036 = vmul.f32 %v5892, %v5097
      %v6037 = vmul.f32 %v5893, %v5098
      %v6038 = vmul.f32 %v5894, %v5099
      %v6039 = vmul.f32 %v5895, %v5100
      %v6040 = vmul.f32 %v5896, %v4866
      %v6041 = vmul.f32 %v5897, %v5101
      %v6042 = vmul.f32 %v5898, %v5102
      %v6043 = vmul.f32 %v5899, %v5103
      %v6044 = vmul.f32 %v5900, %v5104
      %v6045 = vmul.f32 %v5901, %v5105
      %v6046 = vmul.f32 %v5902, %v5106
      %v6047 = vmul.f32 %v5903, %v5107
      %v6048 = vmul.f32 %v5904, %v4868
      %v6049 = vmul.f32 %v5905, %v5108
      %v6050 = vmul.f32 %v5906, %v5109
      %v6051 = vmul.f32 %v5907, %v5110
      %v6052 = vmul.f32 %v5908, %v5111
      %v6053 = vmul.f32 %v5909, %v5112
      %v6054 = vmul.f32 %v5910, %v5113
      %v6055 = vmul.f32 %v5911, %v5114
      %v6056 = vmul.f32 %v5912, %v4869
      %v6057 = vmul.f32 %v5913, %v5115
      %v6058 = vmul.f32 %v5914, %v5116
      %v6059 = vmul.f32 %v5915, %v5117
      %v6060 = vmul.f32 %v5916, %v5118
      %v6061 = vmul.f32 %v5917, %v5119
      %v6062 = vmul.f32 %v5918, %v5120
      %v6063 = vmul.f32 %v5919, %v5121
      %v6064 = vmul.f32 %v5920, %v4871
      %v6065 = vmul.f32 %v5921, %v5122
      %v6066 = vmul.f32 %v5922, %v5123
      %v6067 = vmul.f32 %v5923, %v5124
      %v6068 = vmul.f32 %v5924, %v5125
      %v6069 = vmul.f32 %v5925, %v5126
      %v6070 = vmul.f32 %v5926, %v5127
      %v6071 = vmul.f32 %v5927, %v5128
      %v6072 = vmul.f32 %v5928, %v4872
      %v6073 = vld [vmem:[%s206] sm:$0xff]
      %v6074 = vld [vmem:[%s206 + $0x8] sm:$0xff]
      %v6075 = vld [vmem:[%s206 + $0x10] sm:$0xff]
      %v6076 = vld [vmem:[%s206 + $0x18] sm:$0xff]
      %v6077 = vld [vmem:[%s206 + $0x20] sm:$0xff]
      %v6078 = vld [vmem:[%s206 + $0x28] sm:$0xff]
      %v6079 = vld [vmem:[%s206 + $0x30] sm:$0xff]
      %v6080 = vld [vmem:[%s206 + $0x38] sm:$0xff]
      %v6081 = vld [vmem:[%s206 + $0x40] sm:$0xff]
      %v6082 = vld [vmem:[%s206 + $0x48] sm:$0xff]
      %v6083 = vld [vmem:[%s206 + $0x50] sm:$0xff]
      %v6084 = vld [vmem:[%s206 + $0x58] sm:$0xff]
      %v6085 = vld [vmem:[%s206 + $0x60] sm:$0xff]
      %v6086 = vld [vmem:[%s206 + $0x68] sm:$0xff]
      %v6087 = vld [vmem:[%s206 + $0x70] sm:$0xff]
      %v6088 = vld [vmem:[%s206 + $0x78] sm:$0xff]
      %v6217 = vrot.slane %v5946, 7
      %v6218 = vsel %vm876, %v6217, %v5945
      %v6219 = vrot.slane %v5947, 6
      %v6220 = vsel %vm879, %v6219, %v6218
      %v6221 = vrot.slane %v5948, 5
      %v6222 = vsel %vm882, %v6221, %v6220
      %v6223 = vrot.slane %v5949, 4
      %v6224 = vsel %vm885, %v6223, %v6222
      %v6225 = vrot.slane %v5950, 3
      %v6226 = vsel %vm888, %v6225, %v6224
      %v6227 = vrot.slane %v5951, 2
      %v6228 = vsel %vm891, %v6227, %v6226
      %v6229 = vrot.slane %v5952, 1
      %v6230 = vsel %vm894, %v6229, %v6228
      %v6231 = vrot.slane %v5954, 7
      %v6232 = vsel %vm876, %v6231, %v5953
      %v6233 = vrot.slane %v5955, 6
      %v6234 = vsel %vm879, %v6233, %v6232
      %v6235 = vrot.slane %v5956, 5
      %v6236 = vsel %vm882, %v6235, %v6234
      %v6237 = vrot.slane %v5957, 4
      %v6238 = vsel %vm885, %v6237, %v6236
      %v6239 = vrot.slane %v5958, 3
      %v6240 = vsel %vm888, %v6239, %v6238
      %v6241 = vrot.slane %v5959, 2
      %v6242 = vsel %vm891, %v6241, %v6240
      %v6243 = vrot.slane %v5960, 1
      %v6244 = vsel %vm894, %v6243, %v6242
      %v6245 = vrot.slane %v5962, 7
      %v6246 = vsel %vm876, %v6245, %v5961
      %v6247 = vrot.slane %v5963, 6
      %v6248 = vsel %vm879, %v6247, %v6246
      %v6249 = vrot.slane %v5964, 5
      %v6250 = vsel %vm882, %v6249, %v6248
      %v6251 = vrot.slane %v5965, 4
      %v6252 = vsel %vm885, %v6251, %v6250
      %v6253 = vrot.slane %v5966, 3
      %v6254 = vsel %vm888, %v6253, %v6252
      %v6255 = vrot.slane %v5967, 2
      %v6256 = vsel %vm891, %v6255, %v6254
      %v6257 = vrot.slane %v5968, 1
      %v6258 = vsel %vm894, %v6257, %v6256
      %v6259 = vrot.slane %v5970, 7
      %v6260 = vsel %vm876, %v6259, %v5969
      %v6261 = vrot.slane %v5971, 6
      %v6262 = vsel %vm879, %v6261, %v6260
      %v6263 = vrot.slane %v5972, 5
      %v6264 = vsel %vm882, %v6263, %v6262
      %v6265 = vrot.slane %v5973, 4
      %v6266 = vsel %vm885, %v6265, %v6264
      %v6267 = vrot.slane %v5974, 3
      %v6268 = vsel %vm888, %v6267, %v6266
      %v6269 = vrot.slane %v5975, 2
      %v6270 = vsel %vm891, %v6269, %v6268
      %v6271 = vrot.slane %v5976, 1
      %v6272 = vsel %vm894, %v6271, %v6270
      %v6273 = vrot.slane %v5978, 7
      %v6274 = vsel %vm876, %v6273, %v5977
      %v6275 = vrot.slane %v5979, 6
      %v6276 = vsel %vm879, %v6275, %v6274
      %v6277 = vrot.slane %v5980, 5
      %v6278 = vsel %vm882, %v6277, %v6276
      %v6279 = vrot.slane %v5981, 4
      %v6280 = vsel %vm885, %v6279, %v6278
      %v6281 = vrot.slane %v5982, 3
      %v6282 = vsel %vm888, %v6281, %v6280
      %v6283 = vrot.slane %v5983, 2
      %v6284 = vsel %vm891, %v6283, %v6282
      %v6285 = vrot.slane %v5984, 1
      %v6286 = vsel %vm894, %v6285, %v6284
      %v6287 = vrot.slane %v5986, 7
      %v6288 = vsel %vm876, %v6287, %v5985
      %v6289 = vrot.slane %v5987, 6
      %v6290 = vsel %vm879, %v6289, %v6288
      %v6291 = vrot.slane %v5988, 5
      %v6292 = vsel %vm882, %v6291, %v6290
      %v6293 = vrot.slane %v5989, 4
      %v6294 = vsel %vm885, %v6293, %v6292
      %v6295 = vrot.slane %v5990, 3
      %v6296 = vsel %vm888, %v6295, %v6294
      %v6297 = vrot.slane %v5991, 2
      %v6298 = vsel %vm891, %v6297, %v6296
      %v6299 = vrot.slane %v5992, 1
      %v6300 = vsel %vm894, %v6299, %v6298
      %v6301 = vrot.slane %v5994, 7
      %v6302 = vsel %vm876, %v6301, %v5993
      %v6303 = vrot.slane %v5995, 6
      %v6304 = vsel %vm879, %v6303, %v6302
      %v6305 = vrot.slane %v5996, 5
      %v6306 = vsel %vm882, %v6305, %v6304
      %v6307 = vrot.slane %v5997, 4
      %v6308 = vsel %vm885, %v6307, %v6306
      %v6309 = vrot.slane %v5998, 3
      %v6310 = vsel %vm888, %v6309, %v6308
      %v6311 = vrot.slane %v5999, 2
      %v6312 = vsel %vm891, %v6311, %v6310
      %v6313 = vrot.slane %v6000, 1
      %v6314 = vsel %vm894, %v6313, %v6312
      %v6315 = vrot.slane %v6002, 7
      %v6316 = vsel %vm876, %v6315, %v6001
      %v6317 = vrot.slane %v6003, 6
      %v6318 = vsel %vm879, %v6317, %v6316
      %v6319 = vrot.slane %v6004, 5
      %v6320 = vsel %vm882, %v6319, %v6318
      %v6321 = vrot.slane %v6005, 4
      %v6322 = vsel %vm885, %v6321, %v6320
      %v6323 = vrot.slane %v6006, 3
      %v6324 = vsel %vm888, %v6323, %v6322
      %v6325 = vrot.slane %v6007, 2
      %v6326 = vsel %vm891, %v6325, %v6324
      %v6327 = vrot.slane %v6008, 1
      %v6328 = vsel %vm894, %v6327, %v6326
      %v6329 = vrot.slane %v6010, 7
      %v6330 = vsel %vm876, %v6329, %v6009
      %v6331 = vrot.slane %v6011, 6
      %v6332 = vsel %vm879, %v6331, %v6330
      %v6333 = vrot.slane %v6012, 5
      %v6334 = vsel %vm882, %v6333, %v6332
      %v6335 = vrot.slane %v6013, 4
      %v6336 = vsel %vm885, %v6335, %v6334
      %v6337 = vrot.slane %v6014, 3
      %v6338 = vsel %vm888, %v6337, %v6336
      %v6339 = vrot.slane %v6015, 2
      %v6340 = vsel %vm891, %v6339, %v6338
      %v6341 = vrot.slane %v6016, 1
      %v6342 = vsel %vm894, %v6341, %v6340
      %v6343 = vrot.slane %v6018, 7
      %v6344 = vsel %vm876, %v6343, %v6017
      %v6345 = vrot.slane %v6019, 6
      %v6346 = vsel %vm879, %v6345, %v6344
      %v6347 = vrot.slane %v6020, 5
      %v6348 = vsel %vm882, %v6347, %v6346
      %v6349 = vrot.slane %v6021, 4
      %v6350 = vsel %vm885, %v6349, %v6348
      %v6351 = vrot.slane %v6022, 3
      %v6352 = vsel %vm888, %v6351, %v6350
      %v6353 = vrot.slane %v6023, 2
      %v6354 = vsel %vm891, %v6353, %v6352
      %v6355 = vrot.slane %v6024, 1
      %v6356 = vsel %vm894, %v6355, %v6354
      %v6357 = vrot.slane %v6026, 7
      %v6358 = vsel %vm876, %v6357, %v6025
      %v6359 = vrot.slane %v6027, 6
      %v6360 = vsel %vm879, %v6359, %v6358
      %v6361 = vrot.slane %v6028, 5
      %v6362 = vsel %vm882, %v6361, %v6360
      %v6363 = vrot.slane %v6029, 4
      %v6364 = vsel %vm885, %v6363, %v6362
      %v6365 = vrot.slane %v6030, 3
      %v6366 = vsel %vm888, %v6365, %v6364
      %v6367 = vrot.slane %v6031, 2
      %v6368 = vsel %vm891, %v6367, %v6366
      %v6369 = vrot.slane %v6032, 1
      %v6370 = vsel %vm894, %v6369, %v6368
      %v6371 = vrot.slane %v6034, 7
      %v6372 = vsel %vm876, %v6371, %v6033
      %v6373 = vrot.slane %v6035, 6
      %v6374 = vsel %vm879, %v6373, %v6372
      %v6375 = vrot.slane %v6036, 5
      %v6376 = vsel %vm882, %v6375, %v6374
      %v6377 = vrot.slane %v6037, 4
      %v6378 = vsel %vm885, %v6377, %v6376
      %v6379 = vrot.slane %v6038, 3
      %v6380 = vsel %vm888, %v6379, %v6378
      %v6381 = vrot.slane %v6039, 2
      %v6382 = vsel %vm891, %v6381, %v6380
      %v6383 = vrot.slane %v6040, 1
      %v6384 = vsel %vm894, %v6383, %v6382
      %v6385 = vrot.slane %v6042, 7
      %v6386 = vsel %vm876, %v6385, %v6041
      %v6387 = vrot.slane %v6043, 6
      %v6388 = vsel %vm879, %v6387, %v6386
      %v6389 = vrot.slane %v6044, 5
      %v6390 = vsel %vm882, %v6389, %v6388
      %v6391 = vrot.slane %v6045, 4
      %v6392 = vsel %vm885, %v6391, %v6390
      %v6393 = vrot.slane %v6046, 3
      %v6394 = vsel %vm888, %v6393, %v6392
      %v6395 = vrot.slane %v6047, 2
      %v6396 = vsel %vm891, %v6395, %v6394
      %v6397 = vrot.slane %v6048, 1
      %v6398 = vsel %vm894, %v6397, %v6396
      %v6399 = vrot.slane %v6050, 7
      %v6400 = vsel %vm876, %v6399, %v6049
      %v6401 = vrot.slane %v6051, 6
      %v6402 = vsel %vm879, %v6401, %v6400
      %v6403 = vrot.slane %v6052, 5
      %v6404 = vsel %vm882, %v6403, %v6402
      %v6405 = vrot.slane %v6053, 4
      %v6406 = vsel %vm885, %v6405, %v6404
      %v6407 = vrot.slane %v6054, 3
      %v6408 = vsel %vm888, %v6407, %v6406
      %v6409 = vrot.slane %v6055, 2
      %v6410 = vsel %vm891, %v6409, %v6408
      %v6411 = vrot.slane %v6056, 1
      %v6412 = vsel %vm894, %v6411, %v6410
      %v6413 = vrot.slane %v6058, 7
      %v6414 = vsel %vm876, %v6413, %v6057
      %v6415 = vrot.slane %v6059, 6
      %v6416 = vsel %vm879, %v6415, %v6414
      %v6417 = vrot.slane %v6060, 5
      %v6418 = vsel %vm882, %v6417, %v6416
      %v6419 = vrot.slane %v6061, 4
      %v6420 = vsel %vm885, %v6419, %v6418
      %v6421 = vrot.slane %v6062, 3
      %v6422 = vsel %vm888, %v6421, %v6420
      %v6423 = vrot.slane %v6063, 2
      %v6424 = vsel %vm891, %v6423, %v6422
      %v6425 = vrot.slane %v6064, 1
      %v6426 = vsel %vm894, %v6425, %v6424
      %v6427 = vrot.slane %v6066, 7
      %v6428 = vsel %vm876, %v6427, %v6065
      %v6429 = vrot.slane %v6067, 6
      %v6430 = vsel %vm879, %v6429, %v6428
      %v6431 = vrot.slane %v6068, 5
      %v6432 = vsel %vm882, %v6431, %v6430
      %v6433 = vrot.slane %v6069, 4
      %v6434 = vsel %vm885, %v6433, %v6432
      %v6435 = vrot.slane %v6070, 3
      %v6436 = vsel %vm888, %v6435, %v6434
      %v6437 = vrot.slane %v6071, 2
      %v6438 = vsel %vm891, %v6437, %v6436
      %v6439 = vrot.slane %v6072, 1
      %v6440 = vsel %vm894, %v6439, %v6438
      %v6457 = vadd.f32 %v6073, %v6230
      %v6458 = vadd.f32 %v6074, %v6244
      %v6459 = vadd.f32 %v6075, %v6258
      %v6460 = vadd.f32 %v6076, %v6272
      %v6461 = vadd.f32 %v6077, %v6286
      %v6462 = vadd.f32 %v6078, %v6300
      %v6463 = vadd.f32 %v6079, %v6314
      %v6464 = vadd.f32 %v6080, %v6328
      %v6465 = vadd.f32 %v6081, %v6342
      %v6466 = vadd.f32 %v6082, %v6356
      %v6467 = vadd.f32 %v6083, %v6370
      %v6468 = vadd.f32 %v6084, %v6384
      %v6469 = vadd.f32 %v6085, %v6398
      %v6470 = vadd.f32 %v6086, %v6412
      %v6471 = vadd.f32 %v6087, %v6426
      %v6472 = vadd.f32 %v6088, %v6440
      %6473 = vst.msk [vmem:[%s206] sm:$0xff] %vm1122, %v6457
      %6474 = vst.msk [vmem:[%s206 + $0x8] sm:$0xff] %vm1122, %v6458
      %6475 = vst.msk [vmem:[%s206 + $0x10] sm:$0xff] %vm1122, %v6459
      %6476 = vst.msk [vmem:[%s206 + $0x18] sm:$0xff] %vm1122, %v6460
      %6477 = vst.msk [vmem:[%s206 + $0x20] sm:$0xff] %vm1122, %v6461
      %6478 = vst.msk [vmem:[%s206 + $0x28] sm:$0xff] %vm1122, %v6462
      %6479 = vst.msk [vmem:[%s206 + $0x30] sm:$0xff] %vm1122, %v6463
      %6480 = vst.msk [vmem:[%s206 + $0x38] sm:$0xff] %vm1122, %v6464
      %6481 = vst.msk [vmem:[%s206 + $0x40] sm:$0xff] %vm1122, %v6465
      %6482 = vst.msk [vmem:[%s206 + $0x48] sm:$0xff] %vm1122, %v6466
      %6483 = vst.msk [vmem:[%s206 + $0x50] sm:$0xff] %vm1122, %v6467
      %6484 = vst.msk [vmem:[%s206 + $0x58] sm:$0xff] %vm1122, %v6468
      %6485 = vst.msk [vmem:[%s206 + $0x60] sm:$0xff] %vm1122, %v6469
      %6486 = vst.msk [vmem:[%s206 + $0x68] sm:$0xff] %vm1122, %v6470
      %6487 = vst.msk [vmem:[%s206 + $0x70] sm:$0xff] %vm1122, %v6471
      %6488 = vst.msk [vmem:[%s206 + $0x78] sm:$0xff] %vm1122, %v6472
      %v6489 = vld [vmem:[%s195 + $0x8] sm:$0x1]
      %v6490 = vld [vmem:[%s195 + $0x18] sm:$0x1]
      %v6491 = vld [vmem:[%s195 + $0x28] sm:$0x1]
      %v6492 = vld [vmem:[%s195 + $0x38] sm:$0x1]
      %v6493 = vld [vmem:[%s195 + $0x48] sm:$0x1]
      %v6494 = vld [vmem:[%s195 + $0x58] sm:$0x1]
      %v6495 = vld [vmem:[%s195 + $0x68] sm:$0x1]
      %v6496 = vld [vmem:[%s195 + $0x78] sm:$0x1]
      %v6497 = vld [vmem:[%s195 + $0x88] sm:$0x1]
      %v6498 = vld [vmem:[%s195 + $0x98] sm:$0x1]
      %v6499 = vld [vmem:[%s195 + $0xa8] sm:$0x1]
      %v6500 = vld [vmem:[%s195 + $0xb8] sm:$0x1]
      %v6501 = vld [vmem:[%s195 + $0xc8] sm:$0x1]
      %v6502 = vld [vmem:[%s195 + $0xd8] sm:$0x1]
      %v6503 = vld [vmem:[%s195 + $0xe8] sm:$0x1]
      %v6504 = vld [vmem:[%s195 + $0xf8] sm:$0x1]
      %v6505 = vld [vmem:[%s195 + $0x108] sm:$0x1]
      %v6506 = vld [vmem:[%s195 + $0x118] sm:$0x1]
      %v6507 = vld [vmem:[%s195 + $0x128] sm:$0x1]
      %v6508 = vld [vmem:[%s195 + $0x138] sm:$0x1]
      %v6509 = vld [vmem:[%s195 + $0x148] sm:$0x1]
      %v6510 = vld [vmem:[%s195 + $0x158] sm:$0x1]
      %v6511 = vld [vmem:[%s195 + $0x168] sm:$0x1]
      %v6512 = vld [vmem:[%s195 + $0x178] sm:$0x1]
      %v6513 = vld [vmem:[%s195 + $0x188] sm:$0x1]
      %v6514 = vld [vmem:[%s195 + $0x198] sm:$0x1]
      %v6515 = vld [vmem:[%s195 + $0x1a8] sm:$0x1]
      %v6516 = vld [vmem:[%s195 + $0x1b8] sm:$0x1]
      %v6517 = vld [vmem:[%s195 + $0x1c8] sm:$0x1]
      %v6518 = vld [vmem:[%s195 + $0x1d8] sm:$0x1]
      %v6519 = vld [vmem:[%s195 + $0x1e8] sm:$0x1]
      %v6520 = vld [vmem:[%s195 + $0x1f8] sm:$0x1]
      %v6521 = vld [vmem:[%s195 + $0x208] sm:$0x1]
      %v6522 = vld [vmem:[%s195 + $0x218] sm:$0x1]
      %v6523 = vld [vmem:[%s195 + $0x228] sm:$0x1]
      %v6524 = vld [vmem:[%s195 + $0x238] sm:$0x1]
      %v6525 = vld [vmem:[%s195 + $0x248] sm:$0x1]
      %v6526 = vld [vmem:[%s195 + $0x258] sm:$0x1]
      %v6527 = vld [vmem:[%s195 + $0x268] sm:$0x1]
      %v6528 = vld [vmem:[%s195 + $0x278] sm:$0x1]
      %v6529 = vld [vmem:[%s195 + $0x288] sm:$0x1]
      %v6530 = vld [vmem:[%s195 + $0x298] sm:$0x1]
      %v6531 = vld [vmem:[%s195 + $0x2a8] sm:$0x1]
      %v6532 = vld [vmem:[%s195 + $0x2b8] sm:$0x1]
      %v6533 = vld [vmem:[%s195 + $0x2c8] sm:$0x1]
      %v6534 = vld [vmem:[%s195 + $0x2d8] sm:$0x1]
      %v6535 = vld [vmem:[%s195 + $0x2e8] sm:$0x1]
      %v6536 = vld [vmem:[%s195 + $0x2f8] sm:$0x1]
      %v6537 = vld [vmem:[%s195 + $0x308] sm:$0x1]
      %v6538 = vld [vmem:[%s195 + $0x318] sm:$0x1]
      %v6539 = vld [vmem:[%s195 + $0x328] sm:$0x1]
      %v6540 = vld [vmem:[%s195 + $0x338] sm:$0x1]
      %v6541 = vld [vmem:[%s195 + $0x348] sm:$0x1]
      %v6542 = vld [vmem:[%s195 + $0x358] sm:$0x1]
      %v6543 = vld [vmem:[%s195 + $0x368] sm:$0x1]
      %v6544 = vld [vmem:[%s195 + $0x378] sm:$0x1]
      %v6545 = vld [vmem:[%s195 + $0x388] sm:$0x1]
      %v6546 = vld [vmem:[%s195 + $0x398] sm:$0x1]
      %v6547 = vld [vmem:[%s195 + $0x3a8] sm:$0x1]
      %v6548 = vld [vmem:[%s195 + $0x3b8] sm:$0x1]
      %v6549 = vld [vmem:[%s195 + $0x3c8] sm:$0x1]
      %v6550 = vld [vmem:[%s195 + $0x3d8] sm:$0x1]
      %v6551 = vld [vmem:[%s195 + $0x3e8] sm:$0x1]
      %v6552 = vld [vmem:[%s195 + $0x3f8] sm:$0x1]
      %v6553 = vld [vmem:[%s195 + $0x408] sm:$0x1]
      %v6554 = vld [vmem:[%s195 + $0x418] sm:$0x1]
      %v6555 = vld [vmem:[%s195 + $0x428] sm:$0x1]
      %v6556 = vld [vmem:[%s195 + $0x438] sm:$0x1]
      %v6557 = vld [vmem:[%s195 + $0x448] sm:$0x1]
      %v6558 = vld [vmem:[%s195 + $0x458] sm:$0x1]
      %v6559 = vld [vmem:[%s195 + $0x468] sm:$0x1]
      %v6560 = vld [vmem:[%s195 + $0x478] sm:$0x1]
      %v6561 = vld [vmem:[%s195 + $0x488] sm:$0x1]
      %v6562 = vld [vmem:[%s195 + $0x498] sm:$0x1]
      %v6563 = vld [vmem:[%s195 + $0x4a8] sm:$0x1]
      %v6564 = vld [vmem:[%s195 + $0x4b8] sm:$0x1]
      %v6565 = vld [vmem:[%s195 + $0x4c8] sm:$0x1]
      %v6566 = vld [vmem:[%s195 + $0x4d8] sm:$0x1]
      %v6567 = vld [vmem:[%s195 + $0x4e8] sm:$0x1]
      %v6568 = vld [vmem:[%s195 + $0x4f8] sm:$0x1]
      %v6569 = vld [vmem:[%s195 + $0x508] sm:$0x1]
      %v6570 = vld [vmem:[%s195 + $0x518] sm:$0x1]
      %v6571 = vld [vmem:[%s195 + $0x528] sm:$0x1]
      %v6572 = vld [vmem:[%s195 + $0x538] sm:$0x1]
      %v6573 = vld [vmem:[%s195 + $0x548] sm:$0x1]
      %v6574 = vld [vmem:[%s195 + $0x558] sm:$0x1]
      %v6575 = vld [vmem:[%s195 + $0x568] sm:$0x1]
      %v6576 = vld [vmem:[%s195 + $0x578] sm:$0x1]
      %v6577 = vld [vmem:[%s195 + $0x588] sm:$0x1]
      %v6578 = vld [vmem:[%s195 + $0x598] sm:$0x1]
      %v6579 = vld [vmem:[%s195 + $0x5a8] sm:$0x1]
      %v6580 = vld [vmem:[%s195 + $0x5b8] sm:$0x1]
      %v6581 = vld [vmem:[%s195 + $0x5c8] sm:$0x1]
      %v6582 = vld [vmem:[%s195 + $0x5d8] sm:$0x1]
      %v6583 = vld [vmem:[%s195 + $0x5e8] sm:$0x1]
      %v6584 = vld [vmem:[%s195 + $0x5f8] sm:$0x1]
      %v6585 = vld [vmem:[%s195 + $0x608] sm:$0x1]
      %v6586 = vld [vmem:[%s195 + $0x618] sm:$0x1]
      %v6587 = vld [vmem:[%s195 + $0x628] sm:$0x1]
      %v6588 = vld [vmem:[%s195 + $0x638] sm:$0x1]
      %v6589 = vld [vmem:[%s195 + $0x648] sm:$0x1]
      %v6590 = vld [vmem:[%s195 + $0x658] sm:$0x1]
      %v6591 = vld [vmem:[%s195 + $0x668] sm:$0x1]
      %v6592 = vld [vmem:[%s195 + $0x678] sm:$0x1]
      %v6593 = vld [vmem:[%s195 + $0x688] sm:$0x1]
      %v6594 = vld [vmem:[%s195 + $0x698] sm:$0x1]
      %v6595 = vld [vmem:[%s195 + $0x6a8] sm:$0x1]
      %v6596 = vld [vmem:[%s195 + $0x6b8] sm:$0x1]
      %v6597 = vld [vmem:[%s195 + $0x6c8] sm:$0x1]
      %v6598 = vld [vmem:[%s195 + $0x6d8] sm:$0x1]
      %v6599 = vld [vmem:[%s195 + $0x6e8] sm:$0x1]
      %v6600 = vld [vmem:[%s195 + $0x6f8] sm:$0x1]
      %v6601 = vld [vmem:[%s195 + $0x708] sm:$0x1]
      %v6602 = vld [vmem:[%s195 + $0x718] sm:$0x1]
      %v6603 = vld [vmem:[%s195 + $0x728] sm:$0x1]
      %v6604 = vld [vmem:[%s195 + $0x738] sm:$0x1]
      %v6605 = vld [vmem:[%s195 + $0x748] sm:$0x1]
      %v6606 = vld [vmem:[%s195 + $0x758] sm:$0x1]
      %v6607 = vld [vmem:[%s195 + $0x768] sm:$0x1]
      %v6608 = vld [vmem:[%s195 + $0x778] sm:$0x1]
      %v6609 = vld [vmem:[%s195 + $0x788] sm:$0x1]
      %v6610 = vld [vmem:[%s195 + $0x798] sm:$0x1]
      %v6611 = vld [vmem:[%s195 + $0x7a8] sm:$0x1]
      %v6612 = vld [vmem:[%s195 + $0x7b8] sm:$0x1]
      %v6613 = vld [vmem:[%s195 + $0x7c8] sm:$0x1]
      %v6614 = vld [vmem:[%s195 + $0x7d8] sm:$0x1]
      %v6615 = vld [vmem:[%s195 + $0x7e8] sm:$0x1]
      %v6616 = vld [vmem:[%s195 + $0x7f8] sm:$0x1]
      %v6617 = vrot.slane %v4851, 1
      %v6618 = vrot.slane %v4854, 1
      %v6619 = vrot.slane %v4857, 1
      %v6620 = vrot.slane %v4860, 1
      %v6621 = vrot.slane %v4863, 1
      %v6622 = vrot.slane %v4866, 1
      %v6623 = vrot.slane %v4869, 1
      %v6624 = vrot.slane %v4872, 1
      %v6633 = vmul.f32 %v6489, %v5018
      %v6634 = vmul.f32 %v6490, %v5019
      %v6635 = vmul.f32 %v6491, %v5020
      %v6636 = vmul.f32 %v6492, %v5021
      %v6637 = vmul.f32 %v6493, %v5022
      %v6638 = vmul.f32 %v6494, %v5023
      %v6639 = vmul.f32 %v6495, %v4850
      %v6640 = vmul.f32 %v6496, %v5024
      %v6641 = vmul.f32 %v6497, %v5025
      %v6642 = vmul.f32 %v6498, %v5026
      %v6643 = vmul.f32 %v6499, %v5027
      %v6644 = vmul.f32 %v6500, %v5028
      %v6645 = vmul.f32 %v6501, %v5029
      %v6646 = vmul.f32 %v6502, %v5030
      %v6647 = vmul.f32 %v6503, %v4851
      %v6648 = vmul.f32 %v6504, %v6617
      %v6649 = vmul.f32 %v6505, %v5032
      %v6650 = vmul.f32 %v6506, %v5033
      %v6651 = vmul.f32 %v6507, %v5034
      %v6652 = vmul.f32 %v6508, %v5035
      %v6653 = vmul.f32 %v6509, %v5036
      %v6654 = vmul.f32 %v6510, %v5037
      %v6655 = vmul.f32 %v6511, %v4853
      %v6656 = vmul.f32 %v6512, %v5038
      %v6657 = vmul.f32 %v6513, %v5039
      %v6658 = vmul.f32 %v6514, %v5040
      %v6659 = vmul.f32 %v6515, %v5041
      %v6660 = vmul.f32 %v6516, %v5042
      %v6661 = vmul.f32 %v6517, %v5043
      %v6662 = vmul.f32 %v6518, %v5044
      %v6663 = vmul.f32 %v6519, %v4854
      %v6664 = vmul.f32 %v6520, %v6618
      %v6665 = vmul.f32 %v6521, %v5046
      %v6666 = vmul.f32 %v6522, %v5047
      %v6667 = vmul.f32 %v6523, %v5048
      %v6668 = vmul.f32 %v6524, %v5049
      %v6669 = vmul.f32 %v6525, %v5050
      %v6670 = vmul.f32 %v6526, %v5051
      %v6671 = vmul.f32 %v6527, %v4856
      %v6672 = vmul.f32 %v6528, %v5052
      %v6673 = vmul.f32 %v6529, %v5053
      %v6674 = vmul.f32 %v6530, %v5054
      %v6675 = vmul.f32 %v6531, %v5055
      %v6676 = vmul.f32 %v6532, %v5056
      %v6677 = vmul.f32 %v6533, %v5057
      %v6678 = vmul.f32 %v6534, %v5058
      %v6679 = vmul.f32 %v6535, %v4857
      %v6680 = vmul.f32 %v6536, %v6619
      %v6681 = vmul.f32 %v6537, %v5060
      %v6682 = vmul.f32 %v6538, %v5061
      %v6683 = vmul.f32 %v6539, %v5062
      %v6684 = vmul.f32 %v6540, %v5063
      %v6685 = vmul.f32 %v6541, %v5064
      %v6686 = vmul.f32 %v6542, %v5065
      %v6687 = vmul.f32 %v6543, %v4859
      %v6688 = vmul.f32 %v6544, %v5066
      %v6689 = vmul.f32 %v6545, %v5067
      %v6690 = vmul.f32 %v6546, %v5068
      %v6691 = vmul.f32 %v6547, %v5069
      %v6692 = vmul.f32 %v6548, %v5070
      %v6693 = vmul.f32 %v6549, %v5071
      %v6694 = vmul.f32 %v6550, %v5072
      %v6695 = vmul.f32 %v6551, %v4860
      %v6696 = vmul.f32 %v6552, %v6620
      %v6697 = vmul.f32 %v6553, %v5074
      %v6698 = vmul.f32 %v6554, %v5075
      %v6699 = vmul.f32 %v6555, %v5076
      %v6700 = vmul.f32 %v6556, %v5077
      %v6701 = vmul.f32 %v6557, %v5078
      %v6702 = vmul.f32 %v6558, %v5079
      %v6703 = vmul.f32 %v6559, %v4862
      %v6704 = vmul.f32 %v6560, %v5080
      %v6705 = vmul.f32 %v6561, %v5081
      %v6706 = vmul.f32 %v6562, %v5082
      %v6707 = vmul.f32 %v6563, %v5083
      %v6708 = vmul.f32 %v6564, %v5084
      %v6709 = vmul.f32 %v6565, %v5085
      %v6710 = vmul.f32 %v6566, %v5086
      %v6711 = vmul.f32 %v6567, %v4863
      %v6712 = vmul.f32 %v6568, %v6621
      %v6713 = vmul.f32 %v6569, %v5088
      %v6714 = vmul.f32 %v6570, %v5089
      %v6715 = vmul.f32 %v6571, %v5090
      %v6716 = vmul.f32 %v6572, %v5091
      %v6717 = vmul.f32 %v6573, %v5092
      %v6718 = vmul.f32 %v6574, %v5093
      %v6719 = vmul.f32 %v6575, %v4865
      %v6720 = vmul.f32 %v6576, %v5094
      %v6721 = vmul.f32 %v6577, %v5095
      %v6722 = vmul.f32 %v6578, %v5096
      %v6723 = vmul.f32 %v6579, %v5097
      %v6724 = vmul.f32 %v6580, %v5098
      %v6725 = vmul.f32 %v6581, %v5099
      %v6726 = vmul.f32 %v6582, %v5100
      %v6727 = vmul.f32 %v6583, %v4866
      %v6728 = vmul.f32 %v6584, %v6622
      %v6729 = vmul.f32 %v6585, %v5102
      %v6730 = vmul.f32 %v6586, %v5103
      %v6731 = vmul.f32 %v6587, %v5104
      %v6732 = vmul.f32 %v6588, %v5105
      %v6733 = vmul.f32 %v6589, %v5106
      %v6734 = vmul.f32 %v6590, %v5107
      %v6735 = vmul.f32 %v6591, %v4868
      %v6736 = vmul.f32 %v6592, %v5108
      %v6737 = vmul.f32 %v6593, %v5109
      %v6738 = vmul.f32 %v6594, %v5110
      %v6739 = vmul.f32 %v6595, %v5111
      %v6740 = vmul.f32 %v6596, %v5112
      %v6741 = vmul.f32 %v6597, %v5113
      %v6742 = vmul.f32 %v6598, %v5114
      %v6743 = vmul.f32 %v6599, %v4869
      %v6744 = vmul.f32 %v6600, %v6623
      %v6745 = vmul.f32 %v6601, %v5116
      %v6746 = vmul.f32 %v6602, %v5117
      %v6747 = vmul.f32 %v6603, %v5118
      %v6748 = vmul.f32 %v6604, %v5119
      %v6749 = vmul.f32 %v6605, %v5120
      %v6750 = vmul.f32 %v6606, %v5121
      %v6751 = vmul.f32 %v6607, %v4871
      %v6752 = vmul.f32 %v6608, %v5122
      %v6753 = vmul.f32 %v6609, %v5123
      %v6754 = vmul.f32 %v6610, %v5124
      %v6755 = vmul.f32 %v6611, %v5125
      %v6756 = vmul.f32 %v6612, %v5126
      %v6757 = vmul.f32 %v6613, %v5127
      %v6758 = vmul.f32 %v6614, %v5128
      %v6759 = vmul.f32 %v6615, %v4872
      %v6760 = vmul.f32 %v6616, %v6624
      %v6761 = vld [vmem:[%s206] sm:$0xff]
      %v6762 = vld [vmem:[%s206 + $0x8] sm:$0xff]
      %v6763 = vld [vmem:[%s206 + $0x10] sm:$0xff]
      %v6764 = vld [vmem:[%s206 + $0x18] sm:$0xff]
      %v6765 = vld [vmem:[%s206 + $0x20] sm:$0xff]
      %v6766 = vld [vmem:[%s206 + $0x28] sm:$0xff]
      %v6767 = vld [vmem:[%s206 + $0x30] sm:$0xff]
      %v6768 = vld [vmem:[%s206 + $0x38] sm:$0xff]
      %v6769 = vld [vmem:[%s206 + $0x40] sm:$0xff]
      %v6770 = vld [vmem:[%s206 + $0x48] sm:$0xff]
      %v6771 = vld [vmem:[%s206 + $0x50] sm:$0xff]
      %v6772 = vld [vmem:[%s206 + $0x58] sm:$0xff]
      %v6773 = vld [vmem:[%s206 + $0x60] sm:$0xff]
      %v6774 = vld [vmem:[%s206 + $0x68] sm:$0xff]
      %v6775 = vld [vmem:[%s206 + $0x70] sm:$0xff]
      %v6776 = vld [vmem:[%s206 + $0x78] sm:$0xff]
      %v6905 = vrot.slane %v6634, 7
      %v6906 = vsel %vm876, %v6905, %v6633
      %v6907 = vrot.slane %v6635, 6
      %v6908 = vsel %vm879, %v6907, %v6906
      %v6909 = vrot.slane %v6636, 5
      %v6910 = vsel %vm882, %v6909, %v6908
      %v6911 = vrot.slane %v6637, 4
      %v6912 = vsel %vm885, %v6911, %v6910
      %v6913 = vrot.slane %v6638, 3
      %v6914 = vsel %vm888, %v6913, %v6912
      %v6915 = vrot.slane %v6639, 2
      %v6916 = vsel %vm891, %v6915, %v6914
      %v6917 = vrot.slane %v6640, 1
      %v6918 = vsel %vm894, %v6917, %v6916
      %v6919 = vrot.slane %v6642, 7
      %v6920 = vsel %vm876, %v6919, %v6641
      %v6921 = vrot.slane %v6643, 6
      %v6922 = vsel %vm879, %v6921, %v6920
      %v6923 = vrot.slane %v6644, 5
      %v6924 = vsel %vm882, %v6923, %v6922
      %v6925 = vrot.slane %v6645, 4
      %v6926 = vsel %vm885, %v6925, %v6924
      %v6927 = vrot.slane %v6646, 3
      %v6928 = vsel %vm888, %v6927, %v6926
      %v6929 = vrot.slane %v6647, 2
      %v6930 = vsel %vm891, %v6929, %v6928
      %v6931 = vrot.slane %v6648, 1
      %v6932 = vsel %vm894, %v6931, %v6930
      %v6933 = vrot.slane %v6650, 7
      %v6934 = vsel %vm876, %v6933, %v6649
      %v6935 = vrot.slane %v6651, 6
      %v6936 = vsel %vm879, %v6935, %v6934
      %v6937 = vrot.slane %v6652, 5
      %v6938 = vsel %vm882, %v6937, %v6936
      %v6939 = vrot.slane %v6653, 4
      %v6940 = vsel %vm885, %v6939, %v6938
      %v6941 = vrot.slane %v6654, 3
      %v6942 = vsel %vm888, %v6941, %v6940
      %v6943 = vrot.slane %v6655, 2
      %v6944 = vsel %vm891, %v6943, %v6942
      %v6945 = vrot.slane %v6656, 1
      %v6946 = vsel %vm894, %v6945, %v6944
      %v6947 = vrot.slane %v6658, 7
      %v6948 = vsel %vm876, %v6947, %v6657
      %v6949 = vrot.slane %v6659, 6
      %v6950 = vsel %vm879, %v6949, %v6948
      %v6951 = vrot.slane %v6660, 5
      %v6952 = vsel %vm882, %v6951, %v6950
      %v6953 = vrot.slane %v6661, 4
      %v6954 = vsel %vm885, %v6953, %v6952
      %v6955 = vrot.slane %v6662, 3
      %v6956 = vsel %vm888, %v6955, %v6954
      %v6957 = vrot.slane %v6663, 2
      %v6958 = vsel %vm891, %v6957, %v6956
      %v6959 = vrot.slane %v6664, 1
      %v6960 = vsel %vm894, %v6959, %v6958
      %v6961 = vrot.slane %v6666, 7
      %v6962 = vsel %vm876, %v6961, %v6665
      %v6963 = vrot.slane %v6667, 6
      %v6964 = vsel %vm879, %v6963, %v6962
      %v6965 = vrot.slane %v6668, 5
      %v6966 = vsel %vm882, %v6965, %v6964
      %v6967 = vrot.slane %v6669, 4
      %v6968 = vsel %vm885, %v6967, %v6966
      %v6969 = vrot.slane %v6670, 3
      %v6970 = vsel %vm888, %v6969, %v6968
      %v6971 = vrot.slane %v6671, 2
      %v6972 = vsel %vm891, %v6971, %v6970
      %v6973 = vrot.slane %v6672, 1
      %v6974 = vsel %vm894, %v6973, %v6972
      %v6975 = vrot.slane %v6674, 7
      %v6976 = vsel %vm876, %v6975, %v6673
      %v6977 = vrot.slane %v6675, 6
      %v6978 = vsel %vm879, %v6977, %v6976
      %v6979 = vrot.slane %v6676, 5
      %v6980 = vsel %vm882, %v6979, %v6978
      %v6981 = vrot.slane %v6677, 4
      %v6982 = vsel %vm885, %v6981, %v6980
      %v6983 = vrot.slane %v6678, 3
      %v6984 = vsel %vm888, %v6983, %v6982
      %v6985 = vrot.slane %v6679, 2
      %v6986 = vsel %vm891, %v6985, %v6984
      %v6987 = vrot.slane %v6680, 1
      %v6988 = vsel %vm894, %v6987, %v6986
      %v6989 = vrot.slane %v6682, 7
      %v6990 = vsel %vm876, %v6989, %v6681
      %v6991 = vrot.slane %v6683, 6
      %v6992 = vsel %vm879, %v6991, %v6990
      %v6993 = vrot.slane %v6684, 5
      %v6994 = vsel %vm882, %v6993, %v6992
      %v6995 = vrot.slane %v6685, 4
      %v6996 = vsel %vm885, %v6995, %v6994
      %v6997 = vrot.slane %v6686, 3
      %v6998 = vsel %vm888, %v6997, %v6996
      %v6999 = vrot.slane %v6687, 2
      %v7000 = vsel %vm891, %v6999, %v6998
      %v7001 = vrot.slane %v6688, 1
      %v7002 = vsel %vm894, %v7001, %v7000
      %v7003 = vrot.slane %v6690, 7
      %v7004 = vsel %vm876, %v7003, %v6689
      %v7005 = vrot.slane %v6691, 6
      %v7006 = vsel %vm879, %v7005, %v7004
      %v7007 = vrot.slane %v6692, 5
      %v7008 = vsel %vm882, %v7007, %v7006
      %v7009 = vrot.slane %v6693, 4
      %v7010 = vsel %vm885, %v7009, %v7008
      %v7011 = vrot.slane %v6694, 3
      %v7012 = vsel %vm888, %v7011, %v7010
      %v7013 = vrot.slane %v6695, 2
      %v7014 = vsel %vm891, %v7013, %v7012
      %v7015 = vrot.slane %v6696, 1
      %v7016 = vsel %vm894, %v7015, %v7014
      %v7017 = vrot.slane %v6698, 7
      %v7018 = vsel %vm876, %v7017, %v6697
      %v7019 = vrot.slane %v6699, 6
      %v7020 = vsel %vm879, %v7019, %v7018
      %v7021 = vrot.slane %v6700, 5
      %v7022 = vsel %vm882, %v7021, %v7020
      %v7023 = vrot.slane %v6701, 4
      %v7024 = vsel %vm885, %v7023, %v7022
      %v7025 = vrot.slane %v6702, 3
      %v7026 = vsel %vm888, %v7025, %v7024
      %v7027 = vrot.slane %v6703, 2
      %v7028 = vsel %vm891, %v7027, %v7026
      %v7029 = vrot.slane %v6704, 1
      %v7030 = vsel %vm894, %v7029, %v7028
      %v7031 = vrot.slane %v6706, 7
      %v7032 = vsel %vm876, %v7031, %v6705
      %v7033 = vrot.slane %v6707, 6
      %v7034 = vsel %vm879, %v7033, %v7032
      %v7035 = vrot.slane %v6708, 5
      %v7036 = vsel %vm882, %v7035, %v7034
      %v7037 = vrot.slane %v6709, 4
      %v7038 = vsel %vm885, %v7037, %v7036
      %v7039 = vrot.slane %v6710, 3
      %v7040 = vsel %vm888, %v7039, %v7038
      %v7041 = vrot.slane %v6711, 2
      %v7042 = vsel %vm891, %v7041, %v7040
      %v7043 = vrot.slane %v6712, 1
      %v7044 = vsel %vm894, %v7043, %v7042
      %v7045 = vrot.slane %v6714, 7
      %v7046 = vsel %vm876, %v7045, %v6713
      %v7047 = vrot.slane %v6715, 6
      %v7048 = vsel %vm879, %v7047, %v7046
      %v7049 = vrot.slane %v6716, 5
      %v7050 = vsel %vm882, %v7049, %v7048
      %v7051 = vrot.slane %v6717, 4
      %v7052 = vsel %vm885, %v7051, %v7050
      %v7053 = vrot.slane %v6718, 3
      %v7054 = vsel %vm888, %v7053, %v7052
      %v7055 = vrot.slane %v6719, 2
      %v7056 = vsel %vm891, %v7055, %v7054
      %v7057 = vrot.slane %v6720, 1
      %v7058 = vsel %vm894, %v7057, %v7056
      %v7059 = vrot.slane %v6722, 7
      %v7060 = vsel %vm876, %v7059, %v6721
      %v7061 = vrot.slane %v6723, 6
      %v7062 = vsel %vm879, %v7061, %v7060
      %v7063 = vrot.slane %v6724, 5
      %v7064 = vsel %vm882, %v7063, %v7062
      %v7065 = vrot.slane %v6725, 4
      %v7066 = vsel %vm885, %v7065, %v7064
      %v7067 = vrot.slane %v6726, 3
      %v7068 = vsel %vm888, %v7067, %v7066
      %v7069 = vrot.slane %v6727, 2
      %v7070 = vsel %vm891, %v7069, %v7068
      %v7071 = vrot.slane %v6728, 1
      %v7072 = vsel %vm894, %v7071, %v7070
      %v7073 = vrot.slane %v6730, 7
      %v7074 = vsel %vm876, %v7073, %v6729
      %v7075 = vrot.slane %v6731, 6
      %v7076 = vsel %vm879, %v7075, %v7074
      %v7077 = vrot.slane %v6732, 5
      %v7078 = vsel %vm882, %v7077, %v7076
      %v7079 = vrot.slane %v6733, 4
      %v7080 = vsel %vm885, %v7079, %v7078
      %v7081 = vrot.slane %v6734, 3
      %v7082 = vsel %vm888, %v7081, %v7080
      %v7083 = vrot.slane %v6735, 2
      %v7084 = vsel %vm891, %v7083, %v7082
      %v7085 = vrot.slane %v6736, 1
      %v7086 = vsel %vm894, %v7085, %v7084
      %v7087 = vrot.slane %v6738, 7
      %v7088 = vsel %vm876, %v7087, %v6737
      %v7089 = vrot.slane %v6739, 6
      %v7090 = vsel %vm879, %v7089, %v7088
      %v7091 = vrot.slane %v6740, 5
      %v7092 = vsel %vm882, %v7091, %v7090
      %v7093 = vrot.slane %v6741, 4
      %v7094 = vsel %vm885, %v7093, %v7092
      %v7095 = vrot.slane %v6742, 3
      %v7096 = vsel %vm888, %v7095, %v7094
      %v7097 = vrot.slane %v6743, 2
      %v7098 = vsel %vm891, %v7097, %v7096
      %v7099 = vrot.slane %v6744, 1
      %v7100 = vsel %vm894, %v7099, %v7098
      %v7101 = vrot.slane %v6746, 7
      %v7102 = vsel %vm876, %v7101, %v6745
      %v7103 = vrot.slane %v6747, 6
      %v7104 = vsel %vm879, %v7103, %v7102
      %v7105 = vrot.slane %v6748, 5
      %v7106 = vsel %vm882, %v7105, %v7104
      %v7107 = vrot.slane %v6749, 4
      %v7108 = vsel %vm885, %v7107, %v7106
      %v7109 = vrot.slane %v6750, 3
      %v7110 = vsel %vm888, %v7109, %v7108
      %v7111 = vrot.slane %v6751, 2
      %v7112 = vsel %vm891, %v7111, %v7110
      %v7113 = vrot.slane %v6752, 1
      %v7114 = vsel %vm894, %v7113, %v7112
      %v7115 = vrot.slane %v6754, 7
      %v7116 = vsel %vm876, %v7115, %v6753
      %v7117 = vrot.slane %v6755, 6
      %v7118 = vsel %vm879, %v7117, %v7116
      %v7119 = vrot.slane %v6756, 5
      %v7120 = vsel %vm882, %v7119, %v7118
      %v7121 = vrot.slane %v6757, 4
      %v7122 = vsel %vm885, %v7121, %v7120
      %v7123 = vrot.slane %v6758, 3
      %v7124 = vsel %vm888, %v7123, %v7122
      %v7125 = vrot.slane %v6759, 2
      %v7126 = vsel %vm891, %v7125, %v7124
      %v7127 = vrot.slane %v6760, 1
      %v7128 = vsel %vm894, %v7127, %v7126
      %v7145 = vadd.f32 %v6761, %v6918
      %v7146 = vadd.f32 %v6762, %v6932
      %v7147 = vadd.f32 %v6763, %v6946
      %v7148 = vadd.f32 %v6764, %v6960
      %v7149 = vadd.f32 %v6765, %v6974
      %v7150 = vadd.f32 %v6766, %v6988
      %v7151 = vadd.f32 %v6767, %v7002
      %v7152 = vadd.f32 %v6768, %v7016
      %v7153 = vadd.f32 %v6769, %v7030
      %v7154 = vadd.f32 %v6770, %v7044
      %v7155 = vadd.f32 %v6771, %v7058
      %v7156 = vadd.f32 %v6772, %v7072
      %v7157 = vadd.f32 %v6773, %v7086
      %v7158 = vadd.f32 %v6774, %v7100
      %v7159 = vadd.f32 %v6775, %v7114
      %v7160 = vadd.f32 %v6776, %v7128
      %7161 = vst.msk [vmem:[%s206] sm:$0xff] %vm1122, %v7145
      %7162 = vst.msk [vmem:[%s206 + $0x8] sm:$0xff] %vm1122, %v7146
      %7163 = vst.msk [vmem:[%s206 + $0x10] sm:$0xff] %vm1122, %v7147
      %7164 = vst.msk [vmem:[%s206 + $0x18] sm:$0xff] %vm1122, %v7148
      %7165 = vst.msk [vmem:[%s206 + $0x20] sm:$0xff] %vm1122, %v7149
      %7166 = vst.msk [vmem:[%s206 + $0x28] sm:$0xff] %vm1122, %v7150
      %7167 = vst.msk [vmem:[%s206 + $0x30] sm:$0xff] %vm1122, %v7151
      %7168 = vst.msk [vmem:[%s206 + $0x38] sm:$0xff] %vm1122, %v7152
      %7169 = vst.msk [vmem:[%s206 + $0x40] sm:$0xff] %vm1122, %v7153
      %7170 = vst.msk [vmem:[%s206 + $0x48] sm:$0xff] %vm1122, %v7154
      %7171 = vst.msk [vmem:[%s206 + $0x50] sm:$0xff] %vm1122, %v7155
      %7172 = vst.msk [vmem:[%s206 + $0x58] sm:$0xff] %vm1122, %v7156
      %7173 = vst.msk [vmem:[%s206 + $0x60] sm:$0xff] %vm1122, %v7157
      %7174 = vst.msk [vmem:[%s206 + $0x68] sm:$0xff] %vm1122, %v7158
      %7175 = vst.msk [vmem:[%s206 + $0x70] sm:$0xff] %vm1122, %v7159
      %7176 = vst.msk [vmem:[%s206 + $0x78] sm:$0xff] %vm1122, %v7160
      %s7177 = smul.u32 8, %s18
      %p7178 = scmp.lt.s32.totalorder %s17, 1
      %s7179 = scalar_select %p7178, %s17, 1
      %p7180 = scmp.lt.s32.totalorder %s7177, 15
      %s7181 = scalar_select %p7180, %s7177, 15
      %s7182 = smul.addr %s7181, 2
      %s7183 = smul.addr %s7179, 32
      %s7184 = sadd.s32 %s7182, %s7183
      %s7185 = smul.addr %s7184, 8
      %s7186 = scalar_lea.vmem %s2, %s7185
      // Predicated region
      $region29: #{involution_pallas.3} parent=27 // pred_check
        %p7187 = pneg %p99
      $region30: #{involution_pallas.3} parent=27 // pred_check_branch
        %7189 = sbr.rel (%p7187) target = $region32
      $region31: #{involution_pallas.3} parent=27 // pred_region
        %s7190 = smul.u32 8, %s18
      $region32: #{involution_pallas.3} parent=27 // pred_fallthru
        _
    $region28: #{involution_pallas.3} parent=5 // pred_fallthru
      _
    %p7191 = scmp.le.s32.totalorder 2, %s8
    // Predicated region
    $region33: #{involution_pallas.3} parent=5 // pred_check
      %p7192 = pneg %p7191
    $region34: #{involution_pallas.3} parent=5 // pred_check_branch
      %7194 = sbr.rel (%p7192) target = $region36
    $region35: #{involution_pallas.3} parent=5 // pred_region
      %s7195 = ssub.s32 %s8, 2
      // Predicated region
      $region37: #{involution_pallas.3} parent=35 // pred_check
        %p7196 = pneg %p105
      $region38: #{involution_pallas.3} parent=35 // pred_check_branch
        %7198 = sbr.rel (%p7196) target = $region40
      $region39: #{involution_pallas.3} parent=35 // pred_region
        %s7199 = smul.u32 8, %s20
        %p7200 = scmp.lt.s32.totalorder %s19, 1
        %s7201 = scalar_select %p7200, %s19, 1
        %p7202 = scmp.lt.s32.totalorder %s7199, 15
        %s7203 = scalar_select %p7202, %s7199, 15
        %s7204 = smul.addr %s7203, 2
        %s7205 = smul.addr %s7201, 32
        %s7206 = sadd.s32 %s7204, %s7205
        %s7207 = smul.addr %s7206, 8
        %s7208 = scalar_lea.vmem %s2, %s7207
      $region40: #{involution_pallas.3} parent=35 // pred_fallthru
        _
    $region36: #{involution_pallas.3} parent=5 // pred_fallthru
      _
  $region6: #{involution_pallas.3} parent=0 // loop_footer
    %s12 = sadd.s32 1, %s8
  $region7: #{involution_pallas.3} parent=0 // loop_footer_branch
    %7 = sbr.rel target = $region3
  $region8: #{involution_pallas.3} parent=0 // loop_exit
    _

</llo_original>
